<compile_context>
chip_gen: v5e
topology: v5e:2x2
jax: 0.10.0
libtpu: 0.0.40
codegen_flags: <defaults>
</compile_context>

<pallas_src>
import functools
import math

import jax
import jax.numpy as jnp
from jax.experimental import pallas as pl
from jax.experimental.pallas import tpu as pltpu


D_MODEL = 128
N_HEAD = 8
HEAD_DIM = D_MODEL // N_HEAD
N_LAYERS = 4
D_FF = 512
HIDDEN = 64
BRANCH_C = D_MODEL // 4
KERNEL_SIZES = (3, 5, 7, 11)
BRANCH_NAMES = ("small", "medium", "large", "xlarge")
MAX_K = 11
PAD = 8                      # sublane-aligned zero padding of the conv scratch
LN_EPS = 1e-5
BN_EPS = 1e-5
OUT_LANES = 128              # lane-dense output slab (10 meaningful lanes)
NUM_OUT = 10


# ----------------------------- in-kernel helpers -----------------------------

def _ln(x, g, b):
    mean = jnp.mean(x, axis=-1, keepdims=True)
    var = jnp.mean(jnp.square(x - mean), axis=-1, keepdims=True)
    return (x - mean) * jax.lax.rsqrt(var + LN_EPS) * g + b


def _softplus(y):   # matches torch.nn.Softplus(beta=1, threshold=20)
    return jnp.where(y > 20.0, y, jnp.log1p(jnp.exp(jnp.minimum(y, 20.0))))


def _mm(x, w):
    """bf16 MXU matmul with f32 accumulation (weights pre-cast to bf16)."""
    return jnp.dot(x.astype(jnp.bfloat16), w, preferred_element_type=jnp.float32)


# -------------------------- the single fused kernel ---------------------------

def _fused_kernel(xcol_ref, w1_ref, b1_ref, w2_ref, b2_ref,
                  pw_ref, pb_ref, pg_ref, pbeta_ref, pe_ref,
                  wqkv_ref, bqkv_ref, wo_ref, bo_ref,
                  g1_ref, be1_ref, wf1_ref, bf1_ref, wf2_ref, bf2_ref,
                  g2_ref, be2_ref, gf_ref, bf_ref,
                  wh1_ref, bh1_ref, gh_ref, beh_ref, wh2_ref, bh2_ref,
                  o_ref, h_sc, h1p_sc, *, seq, sig_len):
    layer = pl.program_id(1)
    base = PAD - MAX_K // 2          # first centred-tap window offset (>= 0)

    # -------------- encoder prologue: runs once per batch block ---------------
    @pl.when(layer == 0)
    def _encoder():
        # conv1 (all 4 branches) as ONE im2col matmul: (S*L,11)@(11,128).
        h1 = _mm(xcol_ref[...], w1_ref[...])
        h1 = jnp.maximum(h1 + b1_ref[...], 0.0)                  # (S*L, 128)

        # zero only the 2*PAD boundary slabs, store conv1 output once.
        h1p_sc[:, :PAD, :] = jnp.zeros((seq, PAD, D_MODEL), jnp.float32)
        h1p_sc[:, PAD + sig_len:, :] = jnp.zeros((seq, PAD, D_MODEL), jnp.float32)
        h1p_sc[:, PAD:PAD + sig_len, :] = h1.reshape(seq, sig_len, D_MODEL)

        # conv2: 11 lane-dense matmuls against per-tap block-diagonal weights.
        acc2 = jnp.zeros((seq * sig_len, D_MODEL), jnp.float32)
        for j in range(MAX_K):
            win = h1p_sc[:, base + j: base + j + sig_len, :]
            win = win.reshape(seq * sig_len, D_MODEL)
            acc2 = acc2 + _mm(win, w2_ref[j])
        h2 = jnp.maximum(acc2 + b2_ref[...], 0.0)

        # AdaptiveAvgPool1d(1) == mean over length.
        feat = jnp.mean(h2.reshape(seq, sig_len, D_MODEL), axis=1)   # (S, 128)

        # projection Linear + LayerNorm (Dropout=identity) + positional enc.
        proj = _mm(feat, pw_ref[...]) + pb_ref[...]
        h_sc[...] = _ln(proj, pg_ref[...], pbeta_ref[...]) + pe_ref[...]

    # -------------- one transformer encoder layer (every grid step) -----------
    h = h_sc[...]
    qkv = _mm(h, wqkv_ref[0]) + bqkv_ref[0]        # 1/sqrt(dh) folded into wq/bq
    q = qkv[:, :D_MODEL]
    k = qkv[:, D_MODEL:2 * D_MODEL]
    v = qkv[:, 2 * D_MODEL:]

    # head-batched attention: attention is per batch block, so no mask needed.
    qh = jnp.stack([q[:, i * HEAD_DIM:(i + 1) * HEAD_DIM] for i in range(N_HEAD)], 0)
    kh = jnp.stack([k[:, i * HEAD_DIM:(i + 1) * HEAD_DIM] for i in range(N_HEAD)], 0)
    vh = jnp.stack([v[:, i * HEAD_DIM:(i + 1) * HEAD_DIM] for i in range(N_HEAD)], 0)

    s = jnp.einsum("hqd,hkd->hqk", qh.astype(jnp.bfloat16), kh.astype(jnp.bfloat16),
                   preferred_element_type=jnp.float32)             # (H, S, S)
    m = jnp.max(s, axis=-1, keepdims=True)
    e = jnp.exp(s - m)
    p = e / jnp.sum(e, axis=-1, keepdims=True)                     # exact softmax
    av = jnp.einsum("hqk,hkd->hqd", p.astype(jnp.bfloat16), vh.astype(jnp.bfloat16),
                    preferred_element_type=jnp.float32)            # (H, S, dh)
    attn = jnp.concatenate([av[i] for i in range(N_HEAD)], axis=-1)
    attn = _mm(attn, wo_ref[0]) + bo_ref[0]

    # post-norm residual blocks (PyTorch TransformerEncoderLayer default).
    h = _ln(h + attn, g1_ref[0], be1_ref[0])
    ff = jnp.maximum(_mm(h, wf1_ref[0]) + bf1_ref[0], 0.0)
    ff = _mm(ff, wf2_ref[0]) + bf2_ref[0]
    h = _ln(h + ff, g2_ref[0], be2_ref[0])
    h_sc[...] = h

    # -------------- final LayerNorm + fused heads epilogue --------------------
    @pl.when(layer == pl.num_programs(1) - 1)
    def _heads():
        hf = _ln(h, gf_ref[...], bf_ref[...])      # SequenceTransformer.norm

        t = _mm(hf, wh1_ref[...]) + bh1_ref[...]                   # (S, 256)
        parts = []
        for i in range(4):
            sl = t[:, i * HIDDEN:(i + 1) * HIDDEN]
            mu = jnp.mean(sl, axis=-1, keepdims=True)
            var = jnp.mean(jnp.square(sl - mu), axis=-1, keepdims=True)
            parts.append((sl - mu) * jax.lax.rsqrt(var + LN_EPS))
        tn = jnp.concatenate(parts, axis=-1) * gh_ref[...] + beh_ref[...]
        tn = jnp.maximum(tn, 0.0)

        y = _mm(tn, wh2_ref[...]) + bh2_ref[...]                   # (S, 8)

        logits = y[:, 0:2]
        unc_c = _softplus(y[:, 2:4]) + 1e-6
        pos = 1.0 / (1.0 + jnp.exp(-y[:, 4:6]))
        unc_p = _softplus(y[:, 6:8]) + 1e-6

        mmax = jnp.max(logits, axis=-1, keepdims=True)
        ee = jnp.exp(logits - mmax)
        probs = ee / jnp.sum(ee, axis=-1, keepdims=True)
        wpos = pos * probs[:, 1:2]

        vals = jnp.concatenate([logits, probs, unc_c, wpos, unc_p], axis=-1)
        o_ref[...] = jnp.concatenate(
            [vals, jnp.zeros((seq, OUT_LANES - NUM_OUT), jnp.float32)], axis=-1)


# ----------------------------- weight preparation -----------------------------

def _fold_bn(w_tap, bias, bn):
    # eval-mode BatchNorm folded into the preceding conv (out-channel last).
    scale = bn["g"] / jnp.sqrt(bn["v"] + BN_EPS)
    return w_tap * scale, (bias - bn["m"]) * scale + bn["b"]


def positional_encoding(seq_len, d_model):
    position = jnp.arange(seq_len, dtype=jnp.float32)[:, None]
    div_term = jnp.exp(jnp.arange(0, d_model, 2, dtype=jnp.float32)
                       * (-math.log(10000.0) / d_model))
    pe = jnp.zeros((seq_len, d_model), jnp.float32)
    pe = pe.at[:, 0::2].set(jnp.sin(position * div_term))
    pe = pe.at[:, 1::2].set(jnp.cos(position * div_term))
    return pe


def prepare_params(params, seq_len):
    """One-time (outside jit) packing of module params into kernel layout."""
    pk = {}

    # encoder: BN folded, centre-aligned taps, branch-block-diagonal conv2.
    w1cat = jnp.zeros((MAX_K, D_MODEL), jnp.float32)
    b1cat = jnp.zeros((D_MODEL,), jnp.float32)
    w2blk = jnp.zeros((MAX_K, D_MODEL, D_MODEL), jnp.float32)
    b2cat = jnp.zeros((D_MODEL,), jnp.float32)
    for bi, (name, ksz) in enumerate(zip(BRANCH_NAMES, KERNEL_SIZES)):
        p = params["enc"][name]
        pad = (ksz - 1) // 2
        c0 = bi * BRANCH_C
        r0 = MAX_K // 2 - pad
        w1_tap = jnp.transpose(p["w1"][:, 0, :], (1, 0))           # (k, C)
        w1e, b1e = _fold_bn(w1_tap, p["b1"], p["bn1"])
        w2_tap = jnp.transpose(p["w2"], (2, 1, 0))                 # (k, Cin, Cout)
        w2e, b2e = _fold_bn(w2_tap, p["b2"], p["bn2"])
        w1cat = w1cat.at[r0:r0 + ksz, c0:c0 + BRANCH_C].set(w1e)
        b1cat = b1cat.at[c0:c0 + BRANCH_C].set(b1e)
        w2blk = w2blk.at[r0:r0 + ksz, c0:c0 + BRANCH_C, c0:c0 + BRANCH_C].set(w2e)
        b2cat = b2cat.at[c0:c0 + BRANCH_C].set(b2e)
    pk["w1"] = w1cat.astype(jnp.bfloat16)
    pk["b1"] = b1cat.reshape(1, D_MODEL)
    pk["w2"] = w2blk.astype(jnp.bfloat16)
    pk["b2"] = b2cat.reshape(1, D_MODEL)
    pk["pw"] = params["proj_w"].astype(jnp.bfloat16)
    pk["pb"] = params["proj_b"].reshape(1, D_MODEL)
    pk["pg"] = params["proj_ln_g"].reshape(1, D_MODEL)
    pk["pbeta"] = params["proj_ln_b"].reshape(1, D_MODEL)
    pk["pe"] = positional_encoding(seq_len, D_MODEL)

    # transformer layers: fused QKV with 1/sqrt(dh) folded into wq/bq, bf16.
    scale = 1.0 / math.sqrt(HEAD_DIM)
    lyrs = params["layers"]
    pk["wqkv"] = jnp.stack([jnp.concatenate([l["wq"] * scale, l["wk"], l["wv"]], 1)
                            for l in lyrs]).astype(jnp.bfloat16)
    pk["bqkv"] = jnp.stack([jnp.concatenate([l["bq"] * scale, l["bk"], l["bv"]])[None]
                            for l in lyrs])
    pk["wo"] = jnp.stack([l["wo"] for l in lyrs]).astype(jnp.bfloat16)
    pk["bo"] = jnp.stack([l["bo"][None] for l in lyrs])
    pk["g1"] = jnp.stack([l["ln1_g"][None] for l in lyrs])
    pk["be1"] = jnp.stack([l["ln1_b"][None] for l in lyrs])
    pk["wf1"] = jnp.stack([l["w1"] for l in lyrs]).astype(jnp.bfloat16)
    pk["bf1"] = jnp.stack([l["b1"][None] for l in lyrs])
    pk["wf2"] = jnp.stack([l["w2"] for l in lyrs]).astype(jnp.bfloat16)
    pk["bf2"] = jnp.stack([l["b2"][None] for l in lyrs])
    pk["g2"] = jnp.stack([l["ln2_g"][None] for l in lyrs])
    pk["be2"] = jnp.stack([l["ln2_b"][None] for l in lyrs])
    pk["gf"] = params["final_ln_g"].reshape(1, D_MODEL)
    pk["bf"] = params["final_ln_b"].reshape(1, D_MODEL)

    # heads: stacked first linear, per-head LN params, block-diag second linear.
    head_names = ("cls", "cls_unc", "pos", "pos_unc")
    pk["wh1"] = jnp.concatenate([params[n]["w1"] for n in head_names],
                                axis=1).astype(jnp.bfloat16)
    pk["bh1"] = jnp.concatenate([params[n]["b1"] for n in head_names]).reshape(1, -1)
    pk["gh"] = jnp.concatenate([params[n]["ln_g"] for n in head_names]).reshape(1, -1)
    pk["beh"] = jnp.concatenate([params[n]["ln_b"] for n in head_names]).reshape(1, -1)
    wh2 = jnp.zeros((4 * HIDDEN, 8), jnp.float32)
    bh2 = jnp.zeros((8,), jnp.float32)
    for i, n in enumerate(head_names):
        wh2 = wh2.at[i * HIDDEN:(i + 1) * HIDDEN, 2 * i:2 * i + 2].set(params[n]["w2"])
        bh2 = bh2.at[2 * i:2 * i + 2].set(params[n]["b2"])
    pk["wh2"] = wh2.astype(jnp.bfloat16)
    pk["bh2"] = bh2.reshape(1, 8)
    return pk


# ----------------------------- forward pass -----------------------------------

def _const_spec(shape):
    nd = len(shape)
    return pl.BlockSpec(shape, lambda b, l, _n=nd: (0,) * _n)


def _batch_spec(shape):
    nd = len(shape)
    return pl.BlockSpec(shape, lambda b, l, _n=nd: (b,) + (0,) * (_n - 1))


def _layer_spec(shape):
    nd = len(shape)
    return pl.BlockSpec((1,) + shape, lambda b, l, _n=nd: (l,) + (0,) * _n)


def two_stage_forward(x, pk):
    """x: [B, S, signal_length] float32, pk: prepare_params(...). Eval mode."""
    B, S, L = x.shape
    N = B * S
    half = MAX_K // 2

    # tiny per-call im2col for conv1 (heavy weight packing lives in prepare_params)
    xpad = jnp.pad(x.reshape(N, L), ((0, 0), (half, half)))
    xcol = jnp.stack([xpad[:, j:j + L] for j in range(MAX_K)], axis=-1)
    xcol = xcol.reshape(N * L, MAX_K)

    out = pl.pallas_call(
        functools.partial(_fused_kernel, seq=S, sig_len=L),
        out_shape=jax.ShapeDtypeStruct((N, OUT_LANES), jnp.float32),
        grid=(B, N_LAYERS),
        in_specs=[
            _batch_spec((S * L, MAX_K)),              # xcol
            _const_spec((MAX_K, D_MODEL)),            # conv1 w
            _const_spec((1, D_MODEL)),                # conv1 b
            _const_spec((MAX_K, D_MODEL, D_MODEL)),   # conv2 w (block-diag)
            _const_spec((1, D_MODEL)),                # conv2 b
            _const_spec((D_MODEL, D_MODEL)),          # proj w
            _const_spec((1, D_MODEL)),                # proj b
            _const_spec((1, D_MODEL)),                # proj ln g
            _const_spec((1, D_MODEL)),                # proj ln b
            _const_spec((S, D_MODEL)),                # positional encoding
            _layer_spec((D_MODEL, 3 * D_MODEL)),      # wqkv
            _layer_spec((1, 3 * D_MODEL)),            # bqkv
            _layer_spec((D_MODEL, D_MODEL)),          # wo
            _layer_spec((1, D_MODEL)),                # bo
            _layer_spec((1, D_MODEL)),                # ln1 g
            _layer_spec((1, D_MODEL)),                # ln1 b
            _layer_spec((D_MODEL, D_FF)),             # ffn w1
            _layer_spec((1, D_FF)),                   # ffn b1
            _layer_spec((D_FF, D_MODEL)),             # ffn w2
            _layer_spec((1, D_MODEL)),                # ffn b2
            _layer_spec((1, D_MODEL)),                # ln2 g
            _layer_spec((1, D_MODEL)),                # ln2 b
            _const_spec((1, D_MODEL)),                # final ln g
            _const_spec((1, D_MODEL)),                # final ln b
            _const_spec((D_MODEL, 4 * HIDDEN)),       # heads w1
            _const_spec((1, 4 * HIDDEN)),             # heads b1
            _const_spec((1, 4 * HIDDEN)),             # heads ln g
            _const_spec((1, 4 * HIDDEN)),             # heads ln b
            _const_spec((4 * HIDDEN, 8)),             # heads w2 (block-diag)
            _const_spec((1, 8)),                      # heads b2
        ],
        out_specs=_batch_spec((S, OUT_LANES)),
        scratch_shapes=[
            pltpu.VMEM((S, D_MODEL), jnp.float32),                 # resident activation
            pltpu.VMEM((S, L + 2 * PAD, D_MODEL), jnp.float32),    # padded conv scratch
        ],
        compiler_params=pltpu.CompilerParams(
            dimension_semantics=("parallel", "arbitrary")),
    )(xcol,
      pk["w1"], pk["b1"], pk["w2"], pk["b2"],
      pk["pw"], pk["pb"], pk["pg"], pk["pbeta"], pk["pe"],
      pk["wqkv"], pk["bqkv"], pk["wo"], pk["bo"],
      pk["g1"], pk["be1"], pk["wf1"], pk["bf1"], pk["wf2"], pk["bf2"],
      pk["g2"], pk["be2"], pk["gf"], pk["bf"],
      pk["wh1"], pk["bh1"], pk["gh"], pk["beh"], pk["wh2"], pk["bh2"])

    return {
        "defect_logits": out[:, 0:2].reshape(B, S, 2),
        "defect_probs": out[:, 2:4].reshape(B, S, 2),
        "defect_uncertainty": out[:, 4:6].reshape(B, S, 2),
        "position_preds": out[:, 6:8].reshape(B, S, 2),   # weighted by P(defect), as in PyTorch
        "position_uncertainty": out[:, 8:10].reshape(B, S, 2),
        "attention_weights": None,
    }
    # TODO(synk): the training path (_compute_loss over Python dict/list targets)
    # is host-side control flow with no clean Pallas equivalent; only the
    # inference (targets=None) branch is kernelized.


# ----------------------------- parameter init ----------------------------------

class ParamGen:
    def __init__(self, seed):
        self.key = jax.random.PRNGKey(seed)

    def normal(self, shape, scale=0.05):
        self.key, sub = jax.random.split(self.key)
        return (jax.random.normal(sub, shape) * scale).astype(jnp.float32)

    @staticmethod
    def zeros(shape):
        return jnp.zeros(shape, jnp.float32)

    @staticmethod
    def ones(shape):
        return jnp.ones(shape, jnp.float32)


def init_params(d_model=D_MODEL, hidden=HIDDEN, nlayers=N_LAYERS, dff=D_FF):
    pg = ParamGen(1234)
    c = d_model // 4

    def bn(ch):
        return {"g": pg.ones((ch,)), "b": pg.normal((ch,), 0.02),
                "m": pg.normal((ch,), 0.02), "v": pg.ones((ch,))}

    enc = {}
    for name, k in zip(BRANCH_NAMES, KERNEL_SIZES):
        enc[name] = {
            "w1": pg.normal((c, 1, k), 0.2), "b1": pg.normal((c,), 0.05), "bn1": bn(c),
            "w2": pg.normal((c, c, k), 0.05), "b2": pg.normal((c,), 0.05), "bn2": bn(c),
        }

    layers = []
    for _ in range(nlayers):
        layers.append({
            "wq": pg.normal((d_model, d_model)), "bq": pg.zeros((d_model,)),
            "wk": pg.normal((d_model, d_model)), "bk": pg.zeros((d_model,)),
            "wv": pg.normal((d_model, d_model)), "bv": pg.zeros((d_model,)),
            "wo": pg.normal((d_model, d_model)), "bo": pg.zeros((d_model,)),
            "ln1_g": pg.ones((d_model,)), "ln1_b": pg.zeros((d_model,)),
            "w1": pg.normal((d_model, dff)), "b1": pg.zeros((dff,)),
            "w2": pg.normal((dff, d_model)), "b2": pg.zeros((d_model,)),
            "ln2_g": pg.ones((d_model,)), "ln2_b": pg.zeros((d_model,)),
        })

    def head():
        return {"w1": pg.normal((d_model, hidden)), "b1": pg.zeros((hidden,)),
                "ln_g": pg.ones((hidden,)), "ln_b": pg.zeros((hidden,)),
                "w2": pg.normal((hidden, 2)), "b2": pg.zeros((2,))}

    return {
        "enc": enc,
        "proj_w": pg.normal((d_model, d_model)), "proj_b": pg.zeros((d_model,)),
        "proj_ln_g": pg.ones((d_model,)), "proj_ln_b": pg.zeros((d_model,)),
        "layers": layers,
        "final_ln_g": pg.ones((d_model,)), "final_ln_b": pg.zeros((d_model,)),
        "cls": head(), "cls_unc": head(), "pos": head(), "pos_unc": head(),
    }


# ----------------------------- main --------------------------------------------

if __name__ == "__main__":
    B, S, SIGNAL_LEN = 2, 8, 16
    x = jax.random.normal(jax.random.PRNGKey(0), (B, S, SIGNAL_LEN),
                          dtype=jnp.float32)
    params = init_params()
    packed = prepare_params(params, seq_len=S)   # one-time packing, outside jit

    fwd = jax.jit(two_stage_forward)
    out = fwd(x, packed)
    out = jax.block_until_ready(out)

    # light sanity checks on shapes / finiteness
    assert out["defect_logits"].shape == (B, S, 2)
    assert out["defect_probs"].shape == (B, S, 2)
    assert out["position_preds"].shape == (B, S, 2)
    assert out["position_uncertainty"].shape == (B, S, 2)
    for k in ("defect_logits", "defect_probs", "defect_uncertainty",
              "position_preds", "position_uncertainty"):
        assert bool(jnp.all(jnp.isfinite(out[k])))
    assert bool(jnp.all(jnp.abs(jnp.sum(out["defect_probs"], -1) - 1.0) < 1e-5))
    assert bool(jnp.all(out["defect_uncertainty"] > 0.0))
    assert bool(jnp.all(out["position_uncertainty"] > 0.0))

    print("KERNEL_OK")
</pallas_src>

<mosaic_0001>
module attributes {stable_mosaic.version = 11 : i64} {
  func.func @_fused_kernel(%arg0: i32, %arg1: i32, %arg2: memref<128x11xf32, #tpu.memory_space<vmem>>, %arg3: memref<11x128xbf16, #tpu.memory_space<vmem>>, %arg4: memref<1x128xf32, #tpu.memory_space<vmem>>, %arg5: memref<11x128x128xbf16, #tpu.memory_space<vmem>>, %arg6: memref<1x128xf32, #tpu.memory_space<vmem>>, %arg7: memref<128x128xbf16, #tpu.memory_space<vmem>>, %arg8: memref<1x128xf32, #tpu.memory_space<vmem>>, %arg9: memref<1x128xf32, #tpu.memory_space<vmem>>, %arg10: memref<1x128xf32, #tpu.memory_space<vmem>>, %arg11: memref<8x128xf32, #tpu.memory_space<vmem>>, %arg12: memref<1x128x384xbf16, #tpu.memory_space<vmem>>, %arg13: memref<1x1x384xf32, #tpu.memory_space<vmem>>, %arg14: memref<1x128x128xbf16, #tpu.memory_space<vmem>>, %arg15: memref<1x1x128xf32, #tpu.memory_space<vmem>>, %arg16: memref<1x1x128xf32, #tpu.memory_space<vmem>>, %arg17: memref<1x1x128xf32, #tpu.memory_space<vmem>>, %arg18: memref<1x128x512xbf16, #tpu.memory_space<vmem>>, %arg19: memref<1x1x512xf32, #tpu.memory_space<vmem>>, %arg20: memref<1x512x128xbf16, #tpu.memory_space<vmem>>, %arg21: memref<1x1x128xf32, #tpu.memory_space<vmem>>, %arg22: memref<1x1x128xf32, #tpu.memory_space<vmem>>, %arg23: memref<1x1x128xf32, #tpu.memory_space<vmem>>, %arg24: memref<1x128xf32, #tpu.memory_space<vmem>>, %arg25: memref<1x128xf32, #tpu.memory_space<vmem>>, %arg26: memref<128x256xbf16, #tpu.memory_space<vmem>>, %arg27: memref<1x256xf32, #tpu.memory_space<vmem>>, %arg28: memref<1x256xf32, #tpu.memory_space<vmem>>, %arg29: memref<1x256xf32, #tpu.memory_space<vmem>>, %arg30: memref<256x8xbf16, #tpu.memory_space<vmem>>, %arg31: memref<1x8xf32, #tpu.memory_space<vmem>>, %arg32: memref<8x128xf32, #tpu.memory_space<vmem>>, %arg33: memref<8x128xf32, #tpu.memory_space<vmem>>, %arg34: memref<8x32x128xf32, #tpu.memory_space<vmem>>) attributes {dimension_semantics = [#tpu.dimension_semantics<parallel>, #tpu.dimension_semantics<arbitrary>], iteration_bounds = array<i64: 2, 4>, scalar_prefetch = 0 : i64, scratch_operands = 2 : i64, tpu.core_type = #tpu.core_type<tc>, window_params = [{transform_indices = @transform_0, window_bounds = array<i64: 128, 11>}, {pipeline_mode = #tpu.pipeline_mode<synchronous>, transform_indices = @transform_1, window_bounds = array<i64: 11, 128>}, {pipeline_mode = #tpu.pipeline_mode<synchronous>, transform_indices = @transform_2, window_bounds = array<i64: 1, 128>}, {pipeline_mode = #tpu.pipeline_mode<synchronous>, transform_indices = @transform_3, window_bounds = array<i64: 11, 128, 128>}, {pipeline_mode = #tpu.pipeline_mode<synchronous>, transform_indices = @transform_4, window_bounds = array<i64: 1, 128>}, {pipeline_mode = #tpu.pipeline_mode<synchronous>, transform_indices = @transform_5, window_bounds = array<i64: 128, 128>}, {pipeline_mode = #tpu.pipeline_mode<synchronous>, transform_indices = @transform_6, window_bounds = array<i64: 1, 128>}, {pipeline_mode = #tpu.pipeline_mode<synchronous>, transform_indices = @transform_7, window_bounds = array<i64: 1, 128>}, {pipeline_mode = #tpu.pipeline_mode<synchronous>, transform_indices = @transform_8, window_bounds = array<i64: 1, 128>}, {pipeline_mode = #tpu.pipeline_mode<synchronous>, transform_indices = @transform_9, window_bounds = array<i64: 8, 128>}, {transform_indices = @transform_10, window_bounds = array<i64: 1, 128, 384>}, {transform_indices = @transform_11, window_bounds = array<i64: 1, 1, 384>}, {transform_indices = @transform_12, window_bounds = array<i64: 1, 128, 128>}, {transform_indices = @transform_13, window_bounds = array<i64: 1, 1, 128>}, {transform_indices = @transform_14, window_bounds = array<i64: 1, 1, 128>}, {transform_indices = @transform_15, window_bounds = array<i64: 1, 1, 128>}, {transform_indices = @transform_16, window_bounds = array<i64: 1, 128, 512>}, {transform_indices = @transform_17, window_bounds = array<i64: 1, 1, 512>}, {transform_indices = @transform_18, window_bounds = array<i64: 1, 512, 128>}, {transform_indices = @transform_19, window_bounds = array<i64: 1, 1, 128>}, {transform_indices = @transform_20, window_bounds = array<i64: 1, 1, 128>}, {transform_indices = @transform_21, window_bounds = array<i64: 1, 1, 128>}, {pipeline_mode = #tpu.pipeline_mode<synchronous>, transform_indices = @transform_22, window_bounds = array<i64: 1, 128>}, {pipeline_mode = #tpu.pipeline_mode<synchronous>, transform_indices = @transform_23, window_bounds = array<i64: 1, 128>}, {pipeline_mode = #tpu.pipeline_mode<synchronous>, transform_indices = @transform_24, window_bounds = array<i64: 128, 256>}, {pipeline_mode = #tpu.pipeline_mode<synchronous>, transform_indices = @transform_25, window_bounds = array<i64: 1, 256>}, {pipeline_mode = #tpu.pipeline_mode<synchronous>, transform_indices = @transform_26, window_bounds = array<i64: 1, 256>}, {pipeline_mode = #tpu.pipeline_mode<synchronous>, transform_indices = @transform_27, window_bounds = array<i64: 1, 256>}, {pipeline_mode = #tpu.pipeline_mode<synchronous>, transform_indices = @transform_28, window_bounds = array<i64: 256, 8>}, {pipeline_mode = #tpu.pipeline_mode<synchronous>, transform_indices = @transform_29, window_bounds = array<i64: 1, 8>}, {transform_indices = @transform_30, window_bounds = array<i64: 8, 128>}]} {
    %c0_i32 = arith.constant 0 : i32
    %0 = arith.cmpi eq, %arg1, %c0_i32 : i32
    %1 = arith.extui %0 : i1 to i32
    %c0_i32_0 = arith.constant 0 : i32
    %2 = arith.cmpi ne, %1, %c0_i32_0 : i32
    scf.if %2 {
      %c0_59 = arith.constant 0 : index
      %c0_60 = arith.constant 0 : index
      %182 = vector.load %arg2[%c0_59, %c0_60] : memref<128x11xf32, #tpu.memory_space<vmem>>, vector<128x11xf32>
      %c0_61 = arith.constant 0 : index
      %c0_62 = arith.constant 0 : index
      %183 = vector.load %arg3[%c0_61, %c0_62] : memref<11x128xbf16, #tpu.memory_space<vmem>>, vector<11x128xbf16>
      %184 = arith.truncf %182 : vector<128x11xf32> to vector<128x11xbf16>
      %cst_63 = arith.constant dense<0.000000e+00> : vector<128x128xf32>
      %185 = tpu.matmul %184, %183, %cst_63 {dimension_numbers = #tpu.dot_dimension_numbers<[1], [0], [0], [1], [0, 0, 1, 1], [], []>} : vector<128x11xbf16>, vector<11x128xbf16>, vector<128x128xf32> -> vector<128x128xf32>
      %c0_64 = arith.constant 0 : index
      %c0_65 = arith.constant 0 : index
      %186 = vector.load %arg4[%c0_64, %c0_65] : memref<1x128xf32, #tpu.memory_space<vmem>>, vector<1x128xf32>
      %187 = vector.broadcast %186 : vector<1x128xf32> to vector<128x128xf32>
      %188 = arith.addf %185, %187 : vector<128x128xf32>
      %cst_66 = arith.constant 0.000000e+00 : f32
      %189 = vector.broadcast %cst_66 : f32 to vector<128x128xf32>
      %190 = arith.maximumf %188, %189 : vector<128x128xf32>
      %cst_67 = arith.constant 0.000000e+00 : f32
      %191 = vector.broadcast %cst_67 : f32 to vector<8x8x128xf32>
      %c0_68 = arith.constant 0 : index
      %c0_69 = arith.constant 0 : index
      %c0_70 = arith.constant 0 : index
      %192 = vector.load %arg34[%c0_68, %c0_69, %c0_70] : memref<8x32x128xf32, #tpu.memory_space<vmem>>, vector<8x8x128xf32>
      tpu.vector_store %arg34[%c0_68, %c0_69, %c0_70], %191 {strides = array<i32>} : memref<8x32x128xf32, #tpu.memory_space<vmem>>, vector<8x8x128xf32>,
      %cst_71 = arith.constant 0.000000e+00 : f32
      %193 = vector.broadcast %cst_71 : f32 to vector<8x8x128xf32>
      %c0_72 = arith.constant 0 : index
      %c24 = arith.constant 24 : index
      %c0_73 = arith.constant 0 : index
      %194 = vector.load %arg34[%c0_72, %c24, %c0_73] : memref<8x32x128xf32, #tpu.memory_space<vmem>>, vector<8x8x128xf32>
      tpu.vector_store %arg34[%c0_72, %c24, %c0_73], %193 {strides = array<i32>} : memref<8x32x128xf32, #tpu.memory_space<vmem>>, vector<8x8x128xf32>,
      %195 = vector.shape_cast %190 : vector<128x128xf32> to vector<8x16x128xf32>
      %c0_74 = arith.constant 0 : index
      %c8 = arith.constant 8 : index
      %c0_75 = arith.constant 0 : index
      %196 = vector.load %arg34[%c0_74, %c8, %c0_75] : memref<8x32x128xf32, #tpu.memory_space<vmem>>, vector<8x16x128xf32>
      tpu.vector_store %arg34[%c0_74, %c8, %c0_75], %195 {strides = array<i32>} : memref<8x32x128xf32, #tpu.memory_space<vmem>>, vector<8x16x128xf32>,
      %cst_76 = arith.constant 0.000000e+00 : f32
      %197 = vector.broadcast %cst_76 : f32 to vector<128x128xf32>
      %c0_77 = arith.constant 0 : index
      %c3 = arith.constant 3 : index
      %c0_78 = arith.constant 0 : index
      %198 = vector.load %arg34[%c0_77, %c3, %c0_78] : memref<8x32x128xf32, #tpu.memory_space<vmem>>, vector<8x16x128xf32>
      %199 = vector.shape_cast %198 : vector<8x16x128xf32> to vector<128x128xf32>
      %c0_79 = arith.constant 0 : index
      %c0_80 = arith.constant 0 : index
      %c0_81 = arith.constant 0 : index
      %200 = vector.load %arg5[%c0_79, %c0_80, %c0_81] : memref<11x128x128xbf16, #tpu.memory_space<vmem>>, vector<1x128x128xbf16>
      %201 = vector.shape_cast %200 : vector<1x128x128xbf16> to vector<128x128xbf16>
      %202 = arith.truncf %199 : vector<128x128xf32> to vector<128x128xbf16>
      %cst_82 = arith.constant dense<0.000000e+00> : vector<128x128xf32>
      %203 = tpu.matmul %202, %201, %cst_82 {dimension_numbers = #tpu.dot_dimension_numbers<[1], [0], [0], [1], [0, 0, 1, 1], [], []>} : vector<128x128xbf16>, vector<128x128xbf16>, vector<128x128xf32> -> vector<128x128xf32>
      %204 = arith.addf %197, %203 : vector<128x128xf32>
      %c0_83 = arith.constant 0 : index
      %c4 = arith.constant 4 : index
      %c0_84 = arith.constant 0 : index
      %205 = vector.load %arg34[%c0_83, %c4, %c0_84] : memref<8x32x128xf32, #tpu.memory_space<vmem>>, vector<8x16x128xf32>
      %206 = vector.shape_cast %205 : vector<8x16x128xf32> to vector<128x128xf32>
      %c1 = arith.constant 1 : index
      %c0_85 = arith.constant 0 : index
      %c0_86 = arith.constant 0 : index
      %207 = vector.load %arg5[%c1, %c0_85, %c0_86] : memref<11x128x128xbf16, #tpu.memory_space<vmem>>, vector<1x128x128xbf16>
      %208 = vector.shape_cast %207 : vector<1x128x128xbf16> to vector<128x128xbf16>
      %209 = arith.truncf %206 : vector<128x128xf32> to vector<128x128xbf16>
      %cst_87 = arith.constant dense<0.000000e+00> : vector<128x128xf32>
      %210 = tpu.matmul %209, %208, %cst_87 {dimension_numbers = #tpu.dot_dimension_numbers<[1], [0], [0], [1], [0, 0, 1, 1], [], []>} : vector<128x128xbf16>, vector<128x128xbf16>, vector<128x128xf32> -> vector<128x128xf32>
      %211 = arith.addf %204, %210 : vector<128x128xf32>
      %c0_88 = arith.constant 0 : index
      %c5 = arith.constant 5 : index
      %c0_89 = arith.constant 0 : index
      %212 = vector.load %arg34[%c0_88, %c5, %c0_89] : memref<8x32x128xf32, #tpu.memory_space<vmem>>, vector<8x16x128xf32>
      %213 = vector.shape_cast %212 : vector<8x16x128xf32> to vector<128x128xf32>
      %c2 = arith.constant 2 : index
      %c0_90 = arith.constant 0 : index
      %c0_91 = arith.constant 0 : index
      %214 = vector.load %arg5[%c2, %c0_90, %c0_91] : memref<11x128x128xbf16, #tpu.memory_space<vmem>>, vector<1x128x128xbf16>
      %215 = vector.shape_cast %214 : vector<1x128x128xbf16> to vector<128x128xbf16>
      %216 = arith.truncf %213 : vector<128x128xf32> to vector<128x128xbf16>
      %cst_92 = arith.constant dense<0.000000e+00> : vector<128x128xf32>
      %217 = tpu.matmul %216, %215, %cst_92 {dimension_numbers = #tpu.dot_dimension_numbers<[1], [0], [0], [1], [0, 0, 1, 1], [], []>} : vector<128x128xbf16>, vector<128x128xbf16>, vector<128x128xf32> -> vector<128x128xf32>
      %218 = arith.addf %211, %217 : vector<128x128xf32>
      %c0_93 = arith.constant 0 : index
      %c6 = arith.constant 6 : index
      %c0_94 = arith.constant 0 : index
      %219 = vector.load %arg34[%c0_93, %c6, %c0_94] : memref<8x32x128xf32, #tpu.memory_space<vmem>>, vector<8x16x128xf32>
      %220 = vector.shape_cast %219 : vector<8x16x128xf32> to vector<128x128xf32>
      %c3_95 = arith.constant 3 : index
      %c0_96 = arith.constant 0 : index
      %c0_97 = arith.constant 0 : index
      %221 = vector.load %arg5[%c3_95, %c0_96, %c0_97] : memref<11x128x128xbf16, #tpu.memory_space<vmem>>, vector<1x128x128xbf16>
      %222 = vector.shape_cast %221 : vector<1x128x128xbf16> to vector<128x128xbf16>
      %223 = arith.truncf %220 : vector<128x128xf32> to vector<128x128xbf16>
      %cst_98 = arith.constant dense<0.000000e+00> : vector<128x128xf32>
      %224 = tpu.matmul %223, %222, %cst_98 {dimension_numbers = #tpu.dot_dimension_numbers<[1], [0], [0], [1], [0, 0, 1, 1], [], []>} : vector<128x128xbf16>, vector<128x128xbf16>, vector<128x128xf32> -> vector<128x128xf32>
      %225 = arith.addf %218, %224 : vector<128x128xf32>
      %c0_99 = arith.constant 0 : index
      %c7 = arith.constant 7 : index
      %c0_100 = arith.constant 0 : index
      %226 = vector.load %arg34[%c0_99, %c7, %c0_100] : memref<8x32x128xf32, #tpu.memory_space<vmem>>, vector<8x16x128xf32>
      %227 = vector.shape_cast %226 : vector<8x16x128xf32> to vector<128x128xf32>
      %c4_101 = arith.constant 4 : index
      %c0_102 = arith.constant 0 : index
      %c0_103 = arith.constant 0 : index
      %228 = vector.load %arg5[%c4_101, %c0_102, %c0_103] : memref<11x128x128xbf16, #tpu.memory_space<vmem>>, vector<1x128x128xbf16>
      %229 = vector.shape_cast %228 : vector<1x128x128xbf16> to vector<128x128xbf16>
      %230 = arith.truncf %227 : vector<128x128xf32> to vector<128x128xbf16>
      %cst_104 = arith.constant dense<0.000000e+00> : vector<128x128xf32>
      %231 = tpu.matmul %230, %229, %cst_104 {dimension_numbers = #tpu.dot_dimension_numbers<[1], [0], [0], [1], [0, 0, 1, 1], [], []>} : vector<128x128xbf16>, vector<128x128xbf16>, vector<128x128xf32> -> vector<128x128xf32>
      %232 = arith.addf %225, %231 : vector<128x128xf32>
      %c0_105 = arith.constant 0 : index
      %c8_106 = arith.constant 8 : index
      %c0_107 = arith.constant 0 : index
      %233 = vector.load %arg34[%c0_105, %c8_106, %c0_107] : memref<8x32x128xf32, #tpu.memory_space<vmem>>, vector<8x16x128xf32>
      %234 = vector.shape_cast %233 : vector<8x16x128xf32> to vector<128x128xf32>
      %c5_108 = arith.constant 5 : index
      %c0_109 = arith.constant 0 : index
      %c0_110 = arith.constant 0 : index
      %235 = vector.load %arg5[%c5_108, %c0_109, %c0_110] : memref<11x128x128xbf16, #tpu.memory_space<vmem>>, vector<1x128x128xbf16>
      %236 = vector.shape_cast %235 : vector<1x128x128xbf16> to vector<128x128xbf16>
      %237 = arith.truncf %234 : vector<128x128xf32> to vector<128x128xbf16>
      %cst_111 = arith.constant dense<0.000000e+00> : vector<128x128xf32>
      %238 = tpu.matmul %237, %236, %cst_111 {dimension_numbers = #tpu.dot_dimension_numbers<[1], [0], [0], [1], [0, 0, 1, 1], [], []>} : vector<128x128xbf16>, vector<128x128xbf16>, vector<128x128xf32> -> vector<128x128xf32>
      %239 = arith.addf %232, %238 : vector<128x128xf32>
      %c0_112 = arith.constant 0 : index
      %c9 = arith.constant 9 : index
      %c0_113 = arith.constant 0 : index
      %240 = vector.load %arg34[%c0_112, %c9, %c0_113] : memref<8x32x128xf32, #tpu.memory_space<vmem>>, vector<8x16x128xf32>
      %241 = vector.shape_cast %240 : vector<8x16x128xf32> to vector<128x128xf32>
      %c6_114 = arith.constant 6 : index
      %c0_115 = arith.constant 0 : index
      %c0_116 = arith.constant 0 : index
      %242 = vector.load %arg5[%c6_114, %c0_115, %c0_116] : memref<11x128x128xbf16, #tpu.memory_space<vmem>>, vector<1x128x128xbf16>
      %243 = vector.shape_cast %242 : vector<1x128x128xbf16> to vector<128x128xbf16>
      %244 = arith.truncf %241 : vector<128x128xf32> to vector<128x128xbf16>
      %cst_117 = arith.constant dense<0.000000e+00> : vector<128x128xf32>
      %245 = tpu.matmul %244, %243, %cst_117 {dimension_numbers = #tpu.dot_dimension_numbers<[1], [0], [0], [1], [0, 0, 1, 1], [], []>} : vector<128x128xbf16>, vector<128x128xbf16>, vector<128x128xf32> -> vector<128x128xf32>
      %246 = arith.addf %239, %245 : vector<128x128xf32>
      %c0_118 = arith.constant 0 : index
      %c10 = arith.constant 10 : index
      %c0_119 = arith.constant 0 : index
      %247 = vector.load %arg34[%c0_118, %c10, %c0_119] : memref<8x32x128xf32, #tpu.memory_space<vmem>>, vector<8x16x128xf32>
      %248 = vector.shape_cast %247 : vector<8x16x128xf32> to vector<128x128xf32>
      %c7_120 = arith.constant 7 : index
      %c0_121 = arith.constant 0 : index
      %c0_122 = arith.constant 0 : index
      %249 = vector.load %arg5[%c7_120, %c0_121, %c0_122] : memref<11x128x128xbf16, #tpu.memory_space<vmem>>, vector<1x128x128xbf16>
      %250 = vector.shape_cast %249 : vector<1x128x128xbf16> to vector<128x128xbf16>
      %251 = arith.truncf %248 : vector<128x128xf32> to vector<128x128xbf16>
      %cst_123 = arith.constant dense<0.000000e+00> : vector<128x128xf32>
      %252 = tpu.matmul %251, %250, %cst_123 {dimension_numbers = #tpu.dot_dimension_numbers<[1], [0], [0], [1], [0, 0, 1, 1], [], []>} : vector<128x128xbf16>, vector<128x128xbf16>, vector<128x128xf32> -> vector<128x128xf32>
      %253 = arith.addf %246, %252 : vector<128x128xf32>
      %c0_124 = arith.constant 0 : index
      %c11 = arith.constant 11 : index
      %c0_125 = arith.constant 0 : index
      %254 = vector.load %arg34[%c0_124, %c11, %c0_125] : memref<8x32x128xf32, #tpu.memory_space<vmem>>, vector<8x16x128xf32>
      %255 = vector.shape_cast %254 : vector<8x16x128xf32> to vector<128x128xf32>
      %c8_126 = arith.constant 8 : index
      %c0_127 = arith.constant 0 : index
      %c0_128 = arith.constant 0 : index
      %256 = vector.load %arg5[%c8_126, %c0_127, %c0_128] : memref<11x128x128xbf16, #tpu.memory_space<vmem>>, vector<1x128x128xbf16>
      %257 = vector.shape_cast %256 : vector<1x128x128xbf16> to vector<128x128xbf16>
      %258 = arith.truncf %255 : vector<128x128xf32> to vector<128x128xbf16>
      %cst_129 = arith.constant dense<0.000000e+00> : vector<128x128xf32>
      %259 = tpu.matmul %258, %257, %cst_129 {dimension_numbers = #tpu.dot_dimension_numbers<[1], [0], [0], [1], [0, 0, 1, 1], [], []>} : vector<128x128xbf16>, vector<128x128xbf16>, vector<128x128xf32> -> vector<128x128xf32>
      %260 = arith.addf %253, %259 : vector<128x128xf32>
      %c0_130 = arith.constant 0 : index
      %c12 = arith.constant 12 : index
      %c0_131 = arith.constant 0 : index
      %261 = vector.load %arg34[%c0_130, %c12, %c0_131] : memref<8x32x128xf32, #tpu.memory_space<vmem>>, vector<8x16x128xf32>
      %262 = vector.shape_cast %261 : vector<8x16x128xf32> to vector<128x128xf32>
      %c9_132 = arith.constant 9 : index
      %c0_133 = arith.constant 0 : index
      %c0_134 = arith.constant 0 : index
      %263 = vector.load %arg5[%c9_132, %c0_133, %c0_134] : memref<11x128x128xbf16, #tpu.memory_space<vmem>>, vector<1x128x128xbf16>
      %264 = vector.shape_cast %263 : vector<1x128x128xbf16> to vector<128x128xbf16>
      %265 = arith.truncf %262 : vector<128x128xf32> to vector<128x128xbf16>
      %cst_135 = arith.constant dense<0.000000e+00> : vector<128x128xf32>
      %266 = tpu.matmul %265, %264, %cst_135 {dimension_numbers = #tpu.dot_dimension_numbers<[1], [0], [0], [1], [0, 0, 1, 1], [], []>} : vector<128x128xbf16>, vector<128x128xbf16>, vector<128x128xf32> -> vector<128x128xf32>
      %267 = arith.addf %260, %266 : vector<128x128xf32>
      %c0_136 = arith.constant 0 : index
      %c13 = arith.constant 13 : index
      %c0_137 = arith.constant 0 : index
      %268 = vector.load %arg34[%c0_136, %c13, %c0_137] : memref<8x32x128xf32, #tpu.memory_space<vmem>>, vector<8x16x128xf32>
      %269 = vector.shape_cast %268 : vector<8x16x128xf32> to vector<128x128xf32>
      %c10_138 = arith.constant 10 : index
      %c0_139 = arith.constant 0 : index
      %c0_140 = arith.constant 0 : index
      %270 = vector.load %arg5[%c10_138, %c0_139, %c0_140] : memref<11x128x128xbf16, #tpu.memory_space<vmem>>, vector<1x128x128xbf16>
      %271 = vector.shape_cast %270 : vector<1x128x128xbf16> to vector<128x128xbf16>
      %272 = arith.truncf %269 : vector<128x128xf32> to vector<128x128xbf16>
      %cst_141 = arith.constant dense<0.000000e+00> : vector<128x128xf32>
      %273 = tpu.matmul %272, %271, %cst_141 {dimension_numbers = #tpu.dot_dimension_numbers<[1], [0], [0], [1], [0, 0, 1, 1], [], []>} : vector<128x128xbf16>, vector<128x128xbf16>, vector<128x128xf32> -> vector<128x128xf32>
      %274 = arith.addf %267, %273 : vector<128x128xf32>
      %c0_142 = arith.constant 0 : index
      %c0_143 = arith.constant 0 : index
      %275 = vector.load %arg6[%c0_142, %c0_143] : memref<1x128xf32, #tpu.memory_space<vmem>>, vector<1x128xf32>
      %276 = vector.broadcast %275 : vector<1x128xf32> to vector<128x128xf32>
      %277 = arith.addf %274, %276 : vector<128x128xf32>
      %cst_144 = arith.constant 0.000000e+00 : f32
      %278 = vector.broadcast %cst_144 : f32 to vector<128x128xf32>
      %279 = arith.maximumf %277, %278 : vector<128x128xf32>
      %280 = vector.shape_cast %279 : vector<128x128xf32> to vector<8x16x128xf32>
      %cst_145 = arith.constant dense<0.000000e+00> : vector<8x128xf32>
      %281 = vector.multi_reduction <add>, %280, %cst_145 [1] : vector<8x16x128xf32> to vector<8x128xf32>
      %cst_146 = arith.constant 1.600000e+01 : f32
      %282 = vector.broadcast %cst_146 : f32 to vector<8x128xf32>
      %283 = arith.divf %281, %282 : vector<8x128xf32>
      %c0_147 = arith.constant 0 : index
      %c0_148 = arith.constant 0 : index
      %284 = vector.load %arg7[%c0_147, %c0_148] : memref<128x128xbf16, #tpu.memory_space<vmem>>, vector<128x128xbf16>
      %285 = arith.truncf %283 : vector<8x128xf32> to vector<8x128xbf16>
      %cst_149 = arith.constant dense<0.000000e+00> : vector<8x128xf32>
      %286 = tpu.matmul %285, %284, %cst_149 {dimension_numbers = #tpu.dot_dimension_numbers<[1], [0], [0], [1], [0, 0, 1, 1], [], []>} : vector<8x128xbf16>, vector<128x128xbf16>, vector<8x128xf32> -> vector<8x128xf32>
      %c0_150 = arith.constant 0 : index
      %c0_151 = arith.constant 0 : index
      %287 = vector.load %arg8[%c0_150, %c0_151] : memref<1x128xf32, #tpu.memory_space<vmem>>, vector<1x128xf32>
      %288 = vector.broadcast %287 : vector<1x128xf32> to vector<8x128xf32>
      %289 = arith.addf %286, %288 : vector<8x128xf32>
      %c0_152 = arith.constant 0 : index
      %c0_153 = arith.constant 0 : index
      %290 = vector.load %arg9[%c0_152, %c0_153] : memref<1x128xf32, #tpu.memory_space<vmem>>, vector<1x128xf32>
      %c0_154 = arith.constant 0 : index
      %c0_155 = arith.constant 0 : index
      %291 = vector.load %arg10[%c0_154, %c0_155] : memref<1x128xf32, #tpu.memory_space<vmem>>, vector<1x128xf32>
      %cst_156 = arith.constant dense<0.000000e+00> : vector<8xf32>
      %292 = vector.multi_reduction <add>, %289, %cst_156 [1] : vector<8x128xf32> to vector<8xf32>
      %293 = vector.shape_cast %292 : vector<8xf32> to vector<8x1xf32>
      %cst_157 = arith.constant 1.280000e+02 : f32
      %294 = vector.broadcast %cst_157 : f32 to vector<8x1xf32>
      %295 = arith.divf %293, %294 : vector<8x1xf32>
      %296 = vector.broadcast %295 : vector<8x1xf32> to vector<8x128xf32>
      %297 = arith.subf %289, %296 : vector<8x128xf32>
      %298 = arith.mulf %297, %297 : vector<8x128xf32>
      %cst_158 = arith.constant dense<0.000000e+00> : vector<8xf32>
      %299 = vector.multi_reduction <add>, %298, %cst_158 [1] : vector<8x128xf32> to vector<8xf32>
      %300 = vector.shape_cast %299 : vector<8xf32> to vector<8x1xf32>
      %cst_159 = arith.constant 1.280000e+02 : f32
      %301 = vector.broadcast %cst_159 : f32 to vector<8x1xf32>
      %302 = arith.divf %300, %301 : vector<8x1xf32>
      %303 = vector.broadcast %295 : vector<8x1xf32> to vector<8x128xf32>
      %304 = arith.subf %289, %303 : vector<8x128xf32>
      %cst_160 = arith.constant 9.99999974E-6 : f32
      %305 = vector.broadcast %cst_160 : f32 to vector<8x1xf32>
      %306 = arith.addf %302, %305 : vector<8x1xf32>
      %307 = math.rsqrt %306 : vector<8x1xf32>
      %308 = vector.broadcast %307 : vector<8x1xf32> to vector<8x128xf32>
      %309 = arith.mulf %304, %308 : vector<8x128xf32>
      %310 = vector.broadcast %290 : vector<1x128xf32> to vector<8x128xf32>
      %311 = arith.mulf %309, %310 : vector<8x128xf32>
      %312 = vector.broadcast %291 : vector<1x128xf32> to vector<8x128xf32>
      %313 = arith.addf %311, %312 : vector<8x128xf32>
      %c0_161 = arith.constant 0 : index
      %c0_162 = arith.constant 0 : index
      %314 = vector.load %arg11[%c0_161, %c0_162] : memref<8x128xf32, #tpu.memory_space<vmem>>, vector<8x128xf32>
      %315 = arith.addf %313, %314 : vector<8x128xf32>
      %c0_163 = arith.constant 0 : index
      %c0_164 = arith.constant 0 : index
      %316 = vector.load %arg33[%c0_163, %c0_164] : memref<8x128xf32, #tpu.memory_space<vmem>>, vector<8x128xf32>
      tpu.vector_store %arg33[%c0_163, %c0_164], %315 {strides = array<i32>} : memref<8x128xf32, #tpu.memory_space<vmem>>, vector<8x128xf32>,
    } else {
    }
    %c0 = arith.constant 0 : index
    %c0_1 = arith.constant 0 : index
    %3 = vector.load %arg33[%c0, %c0_1] : memref<8x128xf32, #tpu.memory_space<vmem>>, vector<8x128xf32>
    %c0_2 = arith.constant 0 : index
    %c0_3 = arith.constant 0 : index
    %c0_4 = arith.constant 0 : index
    %4 = vector.load %arg12[%c0_2, %c0_3, %c0_4] : memref<1x128x384xbf16, #tpu.memory_space<vmem>>, vector<1x128x384xbf16>
    %5 = vector.shape_cast %4 : vector<1x128x384xbf16> to vector<128x384xbf16>
    %6 = arith.truncf %3 : vector<8x128xf32> to vector<8x128xbf16>
    %cst = arith.constant dense<0.000000e+00> : vector<8x384xf32>
    %7 = tpu.matmul %6, %5, %cst {dimension_numbers = #tpu.dot_dimension_numbers<[1], [0], [0], [1], [0, 0, 1, 1], [], []>} : vector<8x128xbf16>, vector<128x384xbf16>, vector<8x384xf32> -> vector<8x384xf32>
    %c0_5 = arith.constant 0 : index
    %c0_6 = arith.constant 0 : index
    %c0_7 = arith.constant 0 : index
    %8 = vector.load %arg13[%c0_5, %c0_6, %c0_7] : memref<1x1x384xf32, #tpu.memory_space<vmem>>, vector<1x1x384xf32>
    %9 = vector.shape_cast %8 : vector<1x1x384xf32> to vector<1x384xf32>
    %10 = vector.broadcast %9 : vector<1x384xf32> to vector<8x384xf32>
    %11 = arith.addf %7, %10 : vector<8x384xf32>
    %12 = vector.extract_strided_slice %11 {offsets = [0, 0], sizes = [8, 128], strides = [1, 1]} : vector<8x384xf32> to vector<8x128xf32>
    %13 = vector.extract_strided_slice %11 {offsets = [0, 128], sizes = [8, 128], strides = [1, 1]} : vector<8x384xf32> to vector<8x128xf32>
    %14 = vector.extract_strided_slice %11 {offsets = [0, 256], sizes = [8, 128], strides = [1, 1]} : vector<8x384xf32> to vector<8x128xf32>
    %15 = vector.extract_strided_slice %12 {offsets = [0, 0], sizes = [8, 16], strides = [1, 1]} : vector<8x128xf32> to vector<8x16xf32>
    %16 = vector.extract_strided_slice %12 {offsets = [0, 16], sizes = [8, 16], strides = [1, 1]} : vector<8x128xf32> to vector<8x16xf32>
    %17 = vector.extract_strided_slice %12 {offsets = [0, 32], sizes = [8, 16], strides = [1, 1]} : vector<8x128xf32> to vector<8x16xf32>
    %18 = vector.extract_strided_slice %12 {offsets = [0, 48], sizes = [8, 16], strides = [1, 1]} : vector<8x128xf32> to vector<8x16xf32>
    %19 = vector.extract_strided_slice %12 {offsets = [0, 64], sizes = [8, 16], strides = [1, 1]} : vector<8x128xf32> to vector<8x16xf32>
    %20 = vector.extract_strided_slice %12 {offsets = [0, 80], sizes = [8, 16], strides = [1, 1]} : vector<8x128xf32> to vector<8x16xf32>
    %21 = vector.extract_strided_slice %12 {offsets = [0, 96], sizes = [8, 16], strides = [1, 1]} : vector<8x128xf32> to vector<8x16xf32>
    %22 = vector.extract_strided_slice %12 {offsets = [0, 112], sizes = [8, 16], strides = [1, 1]} : vector<8x128xf32> to vector<8x16xf32>
    %23 = vector.shape_cast %15 : vector<8x16xf32> to vector<1x8x16xf32>
    %24 = vector.shape_cast %16 : vector<8x16xf32> to vector<1x8x16xf32>
    %25 = vector.shape_cast %17 : vector<8x16xf32> to vector<1x8x16xf32>
    %26 = vector.shape_cast %18 : vector<8x16xf32> to vector<1x8x16xf32>
    %27 = vector.shape_cast %19 : vector<8x16xf32> to vector<1x8x16xf32>
    %28 = vector.shape_cast %20 : vector<8x16xf32> to vector<1x8x16xf32>
    %29 = vector.shape_cast %21 : vector<8x16xf32> to vector<1x8x16xf32>
    %30 = vector.shape_cast %22 : vector<8x16xf32> to vector<1x8x16xf32>
    %31 = tpu.concatenate %23, %24, %25, %26, %27, %28, %29, %30 in 0 : vector<1x8x16xf32>, vector<1x8x16xf32>, vector<1x8x16xf32>, vector<1x8x16xf32>, vector<1x8x16xf32>, vector<1x8x16xf32>, vector<1x8x16xf32>, vector<1x8x16xf32> -> vector<8x8x16xf32>
    %32 = vector.extract_strided_slice %13 {offsets = [0, 0], sizes = [8, 16], strides = [1, 1]} : vector<8x128xf32> to vector<8x16xf32>
    %33 = vector.extract_strided_slice %13 {offsets = [0, 16], sizes = [8, 16], strides = [1, 1]} : vector<8x128xf32> to vector<8x16xf32>
    %34 = vector.extract_strided_slice %13 {offsets = [0, 32], sizes = [8, 16], strides = [1, 1]} : vector<8x128xf32> to vector<8x16xf32>
    %35 = vector.extract_strided_slice %13 {offsets = [0, 48], sizes = [8, 16], strides = [1, 1]} : vector<8x128xf32> to vector<8x16xf32>
    %36 = vector.extract_strided_slice %13 {offsets = [0, 64], sizes = [8, 16], strides = [1, 1]} : vector<8x128xf32> to vector<8x16xf32>
    %37 = vector.extract_strided_slice %13 {offsets = [0, 80], sizes = [8, 16], strides = [1, 1]} : vector<8x128xf32> to vector<8x16xf32>
    %38 = vector.extract_strided_slice %13 {offsets = [0, 96], sizes = [8, 16], strides = [1, 1]} : vector<8x128xf32> to vector<8x16xf32>
    %39 = vector.extract_strided_slice %13 {offsets = [0, 112], sizes = [8, 16], strides = [1, 1]} : vector<8x128xf32> to vector<8x16xf32>
    %40 = vector.shape_cast %32 : vector<8x16xf32> to vector<1x8x16xf32>
    %41 = vector.shape_cast %33 : vector<8x16xf32> to vector<1x8x16xf32>
    %42 = vector.shape_cast %34 : vector<8x16xf32> to vector<1x8x16xf32>
    %43 = vector.shape_cast %35 : vector<8x16xf32> to vector<1x8x16xf32>
    %44 = vector.shape_cast %36 : vector<8x16xf32> to vector<1x8x16xf32>
    %45 = vector.shape_cast %37 : vector<8x16xf32> to vector<1x8x16xf32>
    %46 = vector.shape_cast %38 : vector<8x16xf32> to vector<1x8x16xf32>
    %47 = vector.shape_cast %39 : vector<8x16xf32> to vector<1x8x16xf32>
    %48 = tpu.concatenate %40, %41, %42, %43, %44, %45, %46, %47 in 0 : vector<1x8x16xf32>, vector<1x8x16xf32>, vector<1x8x16xf32>, vector<1x8x16xf32>, vector<1x8x16xf32>, vector<1x8x16xf32>, vector<1x8x16xf32>, vector<1x8x16xf32> -> vector<8x8x16xf32>
    %49 = vector.extract_strided_slice %14 {offsets = [0, 0], sizes = [8, 16], strides = [1, 1]} : vector<8x128xf32> to vector<8x16xf32>
    %50 = vector.extract_strided_slice %14 {offsets = [0, 16], sizes = [8, 16], strides = [1, 1]} : vector<8x128xf32> to vector<8x16xf32>
    %51 = vector.extract_strided_slice %14 {offsets = [0, 32], sizes = [8, 16], strides = [1, 1]} : vector<8x128xf32> to vector<8x16xf32>
    %52 = vector.extract_strided_slice %14 {offsets = [0, 48], sizes = [8, 16], strides = [1, 1]} : vector<8x128xf32> to vector<8x16xf32>
    %53 = vector.extract_strided_slice %14 {offsets = [0, 64], sizes = [8, 16], strides = [1, 1]} : vector<8x128xf32> to vector<8x16xf32>
    %54 = vector.extract_strided_slice %14 {offsets = [0, 80], sizes = [8, 16], strides = [1, 1]} : vector<8x128xf32> to vector<8x16xf32>
    %55 = vector.extract_strided_slice %14 {offsets = [0, 96], sizes = [8, 16], strides = [1, 1]} : vector<8x128xf32> to vector<8x16xf32>
    %56 = vector.extract_strided_slice %14 {offsets = [0, 112], sizes = [8, 16], strides = [1, 1]} : vector<8x128xf32> to vector<8x16xf32>
    %57 = vector.shape_cast %49 : vector<8x16xf32> to vector<1x8x16xf32>
    %58 = vector.shape_cast %50 : vector<8x16xf32> to vector<1x8x16xf32>
    %59 = vector.shape_cast %51 : vector<8x16xf32> to vector<1x8x16xf32>
    %60 = vector.shape_cast %52 : vector<8x16xf32> to vector<1x8x16xf32>
    %61 = vector.shape_cast %53 : vector<8x16xf32> to vector<1x8x16xf32>
    %62 = vector.shape_cast %54 : vector<8x16xf32> to vector<1x8x16xf32>
    %63 = vector.shape_cast %55 : vector<8x16xf32> to vector<1x8x16xf32>
    %64 = vector.shape_cast %56 : vector<8x16xf32> to vector<1x8x16xf32>
    %65 = tpu.concatenate %57, %58, %59, %60, %61, %62, %63, %64 in 0 : vector<1x8x16xf32>, vector<1x8x16xf32>, vector<1x8x16xf32>, vector<1x8x16xf32>, vector<1x8x16xf32>, vector<1x8x16xf32>, vector<1x8x16xf32>, vector<1x8x16xf32> -> vector<8x8x16xf32>
    %66 = arith.truncf %31 : vector<8x8x16xf32> to vector<8x8x16xbf16>
    %67 = arith.truncf %48 : vector<8x8x16xf32> to vector<8x8x16xbf16>
    "tpu.trace_start"() <{level = 10 : i32, message = "hqd,hkd->hqk"}> : () -> ()
    %cst_8 = arith.constant dense<0.000000e+00> : vector<8x8x8xf32>
    %68 = tpu.matmul %66, %67, %cst_8 {dimension_numbers = #tpu.dot_dimension_numbers<[2], [2], [1], [1], [0, 0, 0, 1, 1, 1], [0], [0]>} : vector<8x8x16xbf16>, vector<8x8x16xbf16>, vector<8x8x8xf32> -> vector<8x8x8xf32>
    "tpu.trace_stop"() : () -> ()
    %cst_9 = arith.constant dense<0xFF800000> : vector<8x8xf32>
    %69 = vector.multi_reduction <maximumf>, %68, %cst_9 [2] : vector<8x8x8xf32> to vector<8x8xf32>
    %70 = vector.shape_cast %69 : vector<8x8xf32> to vector<8x8x1xf32>
    %71 = vector.broadcast %70 : vector<8x8x1xf32> to vector<8x8x8xf32>
    %72 = arith.subf %68, %71 : vector<8x8x8xf32>
    %73 = math.exp %72 : vector<8x8x8xf32>
    %cst_10 = arith.constant dense<0.000000e+00> : vector<8x8xf32>
    %74 = vector.multi_reduction <add>, %73, %cst_10 [2] : vector<8x8x8xf32> to vector<8x8xf32>
    %75 = vector.shape_cast %74 : vector<8x8xf32> to vector<8x8x1xf32>
    %76 = vector.broadcast %75 : vector<8x8x1xf32> to vector<8x8x8xf32>
    %77 = arith.divf %73, %76 : vector<8x8x8xf32>
    %78 = arith.truncf %77 : vector<8x8x8xf32> to vector<8x8x8xbf16>
    %79 = arith.truncf %65 : vector<8x8x16xf32> to vector<8x8x16xbf16>
    "tpu.trace_start"() <{level = 10 : i32, message = "hqk,hkd->hqd"}> : () -> ()
    %cst_11 = arith.constant dense<0.000000e+00> : vector<8x8x16xf32>
    %80 = tpu.matmul %78, %79, %cst_11 {dimension_numbers = #tpu.dot_dimension_numbers<[2], [1], [1], [2], [0, 0, 0, 1, 1, 2], [0], [0]>} : vector<8x8x8xbf16>, vector<8x8x16xbf16>, vector<8x8x16xf32> -> vector<8x8x16xf32>
    "tpu.trace_stop"() : () -> ()
    %81 = vector.extract_strided_slice %80 {offsets = [0, 0, 0], sizes = [1, 8, 16], strides = [1, 1, 1]} : vector<8x8x16xf32> to vector<1x8x16xf32>
    %82 = vector.shape_cast %81 : vector<1x8x16xf32> to vector<8x16xf32>
    %83 = vector.extract_strided_slice %80 {offsets = [1, 0, 0], sizes = [1, 8, 16], strides = [1, 1, 1]} : vector<8x8x16xf32> to vector<1x8x16xf32>
    %84 = vector.shape_cast %83 : vector<1x8x16xf32> to vector<8x16xf32>
    %85 = vector.extract_strided_slice %80 {offsets = [2, 0, 0], sizes = [1, 8, 16], strides = [1, 1, 1]} : vector<8x8x16xf32> to vector<1x8x16xf32>
    %86 = vector.shape_cast %85 : vector<1x8x16xf32> to vector<8x16xf32>
    %87 = vector.extract_strided_slice %80 {offsets = [3, 0, 0], sizes = [1, 8, 16], strides = [1, 1, 1]} : vector<8x8x16xf32> to vector<1x8x16xf32>
    %88 = vector.shape_cast %87 : vector<1x8x16xf32> to vector<8x16xf32>
    %89 = vector.extract_strided_slice %80 {offsets = [4, 0, 0], sizes = [1, 8, 16], strides = [1, 1, 1]} : vector<8x8x16xf32> to vector<1x8x16xf32>
    %90 = vector.shape_cast %89 : vector<1x8x16xf32> to vector<8x16xf32>
    %91 = vector.extract_strided_slice %80 {offsets = [5, 0, 0], sizes = [1, 8, 16], strides = [1, 1, 1]} : vector<8x8x16xf32> to vector<1x8x16xf32>
    %92 = vector.shape_cast %91 : vector<1x8x16xf32> to vector<8x16xf32>
    %93 = vector.extract_strided_slice %80 {offsets = [6, 0, 0], sizes = [1, 8, 16], strides = [1, 1, 1]} : vector<8x8x16xf32> to vector<1x8x16xf32>
    %94 = vector.shape_cast %93 : vector<1x8x16xf32> to vector<8x16xf32>
    %95 = vector.extract_strided_slice %80 {offsets = [7, 0, 0], sizes = [1, 8, 16], strides = [1, 1, 1]} : vector<8x8x16xf32> to vector<1x8x16xf32>
    %96 = vector.shape_cast %95 : vector<1x8x16xf32> to vector<8x16xf32>
    %97 = tpu.concatenate %82, %84, %86, %88, %90, %92, %94, %96 in 1 : vector<8x16xf32>, vector<8x16xf32>, vector<8x16xf32>, vector<8x16xf32>, vector<8x16xf32>, vector<8x16xf32>, vector<8x16xf32>, vector<8x16xf32> -> vector<8x128xf32>
    %c0_12 = arith.constant 0 : index
    %c0_13 = arith.constant 0 : index
    %c0_14 = arith.constant 0 : index
    %98 = vector.load %arg14[%c0_12, %c0_13, %c0_14] : memref<1x128x128xbf16, #tpu.memory_space<vmem>>, vector<1x128x128xbf16>
    %99 = vector.shape_cast %98 : vector<1x128x128xbf16> to vector<128x128xbf16>
    %100 = arith.truncf %97 : vector<8x128xf32> to vector<8x128xbf16>
    %cst_15 = arith.constant dense<0.000000e+00> : vector<8x128xf32>
    %101 = tpu.matmul %100, %99, %cst_15 {dimension_numbers = #tpu.dot_dimension_numbers<[1], [0], [0], [1], [0, 0, 1, 1], [], []>} : vector<8x128xbf16>, vector<128x128xbf16>, vector<8x128xf32> -> vector<8x128xf32>
    %c0_16 = arith.constant 0 : index
    %c0_17 = arith.constant 0 : index
    %c0_18 = arith.constant 0 : index
    %102 = vector.load %arg15[%c0_16, %c0_17, %c0_18] : memref<1x1x128xf32, #tpu.memory_space<vmem>>, vector<1x1x128xf32>
    %103 = vector.shape_cast %102 : vector<1x1x128xf32> to vector<1x128xf32>
    %104 = vector.broadcast %103 : vector<1x128xf32> to vector<8x128xf32>
    %105 = arith.addf %101, %104 : vector<8x128xf32>
    %106 = arith.addf %3, %105 : vector<8x128xf32>
    %c0_19 = arith.constant 0 : index
    %c0_20 = arith.constant 0 : index
    %c0_21 = arith.constant 0 : index
    %107 = vector.load %arg16[%c0_19, %c0_20, %c0_21] : memref<1x1x128xf32, #tpu.memory_space<vmem>>, vector<1x1x128xf32>
    %108 = vector.shape_cast %107 : vector<1x1x128xf32> to vector<1x128xf32>
    %c0_22 = arith.constant 0 : index
    %c0_23 = arith.constant 0 : index
    %c0_24 = arith.constant 0 : index
    %109 = vector.load %arg17[%c0_22, %c0_23, %c0_24] : memref<1x1x128xf32, #tpu.memory_space<vmem>>, vector<1x1x128xf32>
    %110 = vector.shape_cast %109 : vector<1x1x128xf32> to vector<1x128xf32>
    %cst_25 = arith.constant dense<0.000000e+00> : vector<8xf32>
    %111 = vector.multi_reduction <add>, %106, %cst_25 [1] : vector<8x128xf32> to vector<8xf32>
    %112 = vector.shape_cast %111 : vector<8xf32> to vector<8x1xf32>
    %cst_26 = arith.constant 1.280000e+02 : f32
    %113 = vector.broadcast %cst_26 : f32 to vector<8x1xf32>
    %114 = arith.divf %112, %113 : vector<8x1xf32>
    %115 = vector.broadcast %114 : vector<8x1xf32> to vector<8x128xf32>
    %116 = arith.subf %106, %115 : vector<8x128xf32>
    %117 = arith.mulf %116, %116 : vector<8x128xf32>
    %cst_27 = arith.constant dense<0.000000e+00> : vector<8xf32>
    %118 = vector.multi_reduction <add>, %117, %cst_27 [1] : vector<8x128xf32> to vector<8xf32>
    %119 = vector.shape_cast %118 : vector<8xf32> to vector<8x1xf32>
    %cst_28 = arith.constant 1.280000e+02 : f32
    %120 = vector.broadcast %cst_28 : f32 to vector<8x1xf32>
    %121 = arith.divf %119, %120 : vector<8x1xf32>
    %122 = vector.broadcast %114 : vector<8x1xf32> to vector<8x128xf32>
    %123 = arith.subf %106, %122 : vector<8x128xf32>
    %cst_29 = arith.constant 9.99999974E-6 : f32
    %124 = vector.broadcast %cst_29 : f32 to vector<8x1xf32>
    %125 = arith.addf %121, %124 : vector<8x1xf32>
    %126 = math.rsqrt %125 : vector<8x1xf32>
    %127 = vector.broadcast %126 : vector<8x1xf32> to vector<8x128xf32>
    %128 = arith.mulf %123, %127 : vector<8x128xf32>
    %129 = vector.broadcast %108 : vector<1x128xf32> to vector<8x128xf32>
    %130 = arith.mulf %128, %129 : vector<8x128xf32>
    %131 = vector.broadcast %110 : vector<1x128xf32> to vector<8x128xf32>
    %132 = arith.addf %130, %131 : vector<8x128xf32>
    %c0_30 = arith.constant 0 : index
    %c0_31 = arith.constant 0 : index
    %c0_32 = arith.constant 0 : index
    %133 = vector.load %arg18[%c0_30, %c0_31, %c0_32] : memref<1x128x512xbf16, #tpu.memory_space<vmem>>, vector<1x128x512xbf16>
    %134 = vector.shape_cast %133 : vector<1x128x512xbf16> to vector<128x512xbf16>
    %135 = arith.truncf %132 : vector<8x128xf32> to vector<8x128xbf16>
    %cst_33 = arith.constant dense<0.000000e+00> : vector<8x512xf32>
    %136 = tpu.matmul %135, %134, %cst_33 {dimension_numbers = #tpu.dot_dimension_numbers<[1], [0], [0], [1], [0, 0, 1, 1], [], []>} : vector<8x128xbf16>, vector<128x512xbf16>, vector<8x512xf32> -> vector<8x512xf32>
    %c0_34 = arith.constant 0 : index
    %c0_35 = arith.constant 0 : index
    %c0_36 = arith.constant 0 : index
    %137 = vector.load %arg19[%c0_34, %c0_35, %c0_36] : memref<1x1x512xf32, #tpu.memory_space<vmem>>, vector<1x1x512xf32>
    %138 = vector.shape_cast %137 : vector<1x1x512xf32> to vector<1x512xf32>
    %139 = vector.broadcast %138 : vector<1x512xf32> to vector<8x512xf32>
    %140 = arith.addf %136, %139 : vector<8x512xf32>
    %cst_37 = arith.constant 0.000000e+00 : f32
    %141 = vector.broadcast %cst_37 : f32 to vector<8x512xf32>
    %142 = arith.maximumf %140, %141 : vector<8x512xf32>
    %c0_38 = arith.constant 0 : index
    %c0_39 = arith.constant 0 : index
    %c0_40 = arith.constant 0 : index
    %143 = vector.load %arg20[%c0_38, %c0_39, %c0_40] : memref<1x512x128xbf16, #tpu.memory_space<vmem>>, vector<1x512x128xbf16>
    %144 = vector.shape_cast %143 : vector<1x512x128xbf16> to vector<512x128xbf16>
    %145 = arith.truncf %142 : vector<8x512xf32> to vector<8x512xbf16>
    %cst_41 = arith.constant dense<0.000000e+00> : vector<8x128xf32>
    %146 = tpu.matmul %145, %144, %cst_41 {dimension_numbers = #tpu.dot_dimension_numbers<[1], [0], [0], [1], [0, 0, 1, 1], [], []>} : vector<8x512xbf16>, vector<512x128xbf16>, vector<8x128xf32> -> vector<8x128xf32>
    %c0_42 = arith.constant 0 : index
    %c0_43 = arith.constant 0 : index
    %c0_44 = arith.constant 0 : index
    %147 = vector.load %arg21[%c0_42, %c0_43, %c0_44] : memref<1x1x128xf32, #tpu.memory_space<vmem>>, vector<1x1x128xf32>
    %148 = vector.shape_cast %147 : vector<1x1x128xf32> to vector<1x128xf32>
    %149 = vector.broadcast %148 : vector<1x128xf32> to vector<8x128xf32>
    %150 = arith.addf %146, %149 : vector<8x128xf32>
    %151 = arith.addf %132, %150 : vector<8x128xf32>
    %c0_45 = arith.constant 0 : index
    %c0_46 = arith.constant 0 : index
    %c0_47 = arith.constant 0 : index
    %152 = vector.load %arg22[%c0_45, %c0_46, %c0_47] : memref<1x1x128xf32, #tpu.memory_space<vmem>>, vector<1x1x128xf32>
    %153 = vector.shape_cast %152 : vector<1x1x128xf32> to vector<1x128xf32>
    %c0_48 = arith.constant 0 : index
    %c0_49 = arith.constant 0 : index
    %c0_50 = arith.constant 0 : index
    %154 = vector.load %arg23[%c0_48, %c0_49, %c0_50] : memref<1x1x128xf32, #tpu.memory_space<vmem>>, vector<1x1x128xf32>
    %155 = vector.shape_cast %154 : vector<1x1x128xf32> to vector<1x128xf32>
    %cst_51 = arith.constant dense<0.000000e+00> : vector<8xf32>
    %156 = vector.multi_reduction <add>, %151, %cst_51 [1] : vector<8x128xf32> to vector<8xf32>
    %157 = vector.shape_cast %156 : vector<8xf32> to vector<8x1xf32>
    %cst_52 = arith.constant 1.280000e+02 : f32
    %158 = vector.broadcast %cst_52 : f32 to vector<8x1xf32>
    %159 = arith.divf %157, %158 : vector<8x1xf32>
    %160 = vector.broadcast %159 : vector<8x1xf32> to vector<8x128xf32>
    %161 = arith.subf %151, %160 : vector<8x128xf32>
    %162 = arith.mulf %161, %161 : vector<8x128xf32>
    %cst_53 = arith.constant dense<0.000000e+00> : vector<8xf32>
    %163 = vector.multi_reduction <add>, %162, %cst_53 [1] : vector<8x128xf32> to vector<8xf32>
    %164 = vector.shape_cast %163 : vector<8xf32> to vector<8x1xf32>
    %cst_54 = arith.constant 1.280000e+02 : f32
    %165 = vector.broadcast %cst_54 : f32 to vector<8x1xf32>
    %166 = arith.divf %164, %165 : vector<8x1xf32>
    %167 = vector.broadcast %159 : vector<8x1xf32> to vector<8x128xf32>
    %168 = arith.subf %151, %167 : vector<8x128xf32>
    %cst_55 = arith.constant 9.99999974E-6 : f32
    %169 = vector.broadcast %cst_55 : f32 to vector<8x1xf32>
    %170 = arith.addf %166, %169 : vector<8x1xf32>
    %171 = math.rsqrt %170 : vector<8x1xf32>
    %172 = vector.broadcast %171 : vector<8x1xf32> to vector<8x128xf32>
    %173 = arith.mulf %168, %172 : vector<8x128xf32>
    %174 = vector.broadcast %153 : vector<1x128xf32> to vector<8x128xf32>
    %175 = arith.mulf %173, %174 : vector<8x128xf32>
    %176 = vector.broadcast %155 : vector<1x128xf32> to vector<8x128xf32>
    %177 = arith.addf %175, %176 : vector<8x128xf32>
    %c0_56 = arith.constant 0 : index
    %c0_57 = arith.constant 0 : index
    %178 = vector.load %arg33[%c0_56, %c0_57] : memref<8x128xf32, #tpu.memory_space<vmem>>, vector<8x128xf32>
    tpu.vector_store %arg33[%c0_56, %c0_57], %177 {strides = array<i32>} : memref<8x128xf32, #tpu.memory_space<vmem>>, vector<8x128xf32>,
    %c3_i32 = arith.constant 3 : i32
    %179 = arith.cmpi eq, %arg1, %c3_i32 : i32
    %180 = arith.extui %179 : i1 to i32
    %c0_i32_58 = arith.constant 0 : i32
    %181 = arith.cmpi ne, %180, %c0_i32_58 : i32
    scf.if %181 {
      %c0_59 = arith.constant 0 : index
      %c0_60 = arith.constant 0 : index
      %182 = vector.load %arg24[%c0_59, %c0_60] : memref<1x128xf32, #tpu.memory_space<vmem>>, vector<1x128xf32>
      %c0_61 = arith.constant 0 : index
      %c0_62 = arith.constant 0 : index
      %183 = vector.load %arg25[%c0_61, %c0_62] : memref<1x128xf32, #tpu.memory_space<vmem>>, vector<1x128xf32>
      %cst_63 = arith.constant dense<0.000000e+00> : vector<8xf32>
      %184 = vector.multi_reduction <add>, %177, %cst_63 [1] : vector<8x128xf32> to vector<8xf32>
      %185 = vector.shape_cast %184 : vector<8xf32> to vector<8x1xf32>
      %cst_64 = arith.constant 1.280000e+02 : f32
      %186 = vector.broadcast %cst_64 : f32 to vector<8x1xf32>
      %187 = arith.divf %185, %186 : vector<8x1xf32>
      %188 = vector.broadcast %187 : vector<8x1xf32> to vector<8x128xf32>
      %189 = arith.subf %177, %188 : vector<8x128xf32>
      %190 = arith.mulf %189, %189 : vector<8x128xf32>
      %cst_65 = arith.constant dense<0.000000e+00> : vector<8xf32>
      %191 = vector.multi_reduction <add>, %190, %cst_65 [1] : vector<8x128xf32> to vector<8xf32>
      %192 = vector.shape_cast %191 : vector<8xf32> to vector<8x1xf32>
      %cst_66 = arith.constant 1.280000e+02 : f32
      %193 = vector.broadcast %cst_66 : f32 to vector<8x1xf32>
      %194 = arith.divf %192, %193 : vector<8x1xf32>
      %195 = vector.broadcast %187 : vector<8x1xf32> to vector<8x128xf32>
      %196 = arith.subf %177, %195 : vector<8x128xf32>
      %cst_67 = arith.constant 9.99999974E-6 : f32
      %197 = vector.broadcast %cst_67 : f32 to vector<8x1xf32>
      %198 = arith.addf %194, %197 : vector<8x1xf32>
      %199 = math.rsqrt %198 : vector<8x1xf32>
      %200 = vector.broadcast %199 : vector<8x1xf32> to vector<8x128xf32>
      %201 = arith.mulf %196, %200 : vector<8x128xf32>
      %202 = vector.broadcast %182 : vector<1x128xf32> to vector<8x128xf32>
      %203 = arith.mulf %201, %202 : vector<8x128xf32>
      %204 = vector.broadcast %183 : vector<1x128xf32> to vector<8x128xf32>
      %205 = arith.addf %203, %204 : vector<8x128xf32>
      %c0_68 = arith.constant 0 : index
      %c0_69 = arith.constant 0 : index
      %206 = vector.load %arg26[%c0_68, %c0_69] : memref<128x256xbf16, #tpu.memory_space<vmem>>, vector<128x256xbf16>
      %207 = arith.truncf %205 : vector<8x128xf32> to vector<8x128xbf16>
      %cst_70 = arith.constant dense<0.000000e+00> : vector<8x256xf32>
      %208 = tpu.matmul %207, %206, %cst_70 {dimension_numbers = #tpu.dot_dimension_numbers<[1], [0], [0], [1], [0, 0, 1, 1], [], []>} : vector<8x128xbf16>, vector<128x256xbf16>, vector<8x256xf32> -> vector<8x256xf32>
      %c0_71 = arith.constant 0 : index
      %c0_72 = arith.constant 0 : index
      %209 = vector.load %arg27[%c0_71, %c0_72] : memref<1x256xf32, #tpu.memory_space<vmem>>, vector<1x256xf32>
      %210 = vector.broadcast %209 : vector<1x256xf32> to vector<8x256xf32>
      %211 = arith.addf %208, %210 : vector<8x256xf32>
      %212 = vector.extract_strided_slice %211 {offsets = [0, 0], sizes = [8, 64], strides = [1, 1]} : vector<8x256xf32> to vector<8x64xf32>
      %cst_73 = arith.constant dense<0.000000e+00> : vector<8xf32>
      %213 = vector.multi_reduction <add>, %212, %cst_73 [1] : vector<8x64xf32> to vector<8xf32>
      %214 = vector.shape_cast %213 : vector<8xf32> to vector<8x1xf32>
      %cst_74 = arith.constant 6.400000e+01 : f32
      %215 = vector.broadcast %cst_74 : f32 to vector<8x1xf32>
      %216 = arith.divf %214, %215 : vector<8x1xf32>
      %217 = vector.broadcast %216 : vector<8x1xf32> to vector<8x64xf32>
      %218 = arith.subf %212, %217 : vector<8x64xf32>
      %219 = arith.mulf %218, %218 : vector<8x64xf32>
      %cst_75 = arith.constant dense<0.000000e+00> : vector<8xf32>
      %220 = vector.multi_reduction <add>, %219, %cst_75 [1] : vector<8x64xf32> to vector<8xf32>
      %221 = vector.shape_cast %220 : vector<8xf32> to vector<8x1xf32>
      %cst_76 = arith.constant 6.400000e+01 : f32
      %222 = vector.broadcast %cst_76 : f32 to vector<8x1xf32>
      %223 = arith.divf %221, %222 : vector<8x1xf32>
      %224 = vector.broadcast %216 : vector<8x1xf32> to vector<8x64xf32>
      %225 = arith.subf %212, %224 : vector<8x64xf32>
      %cst_77 = arith.constant 9.99999974E-6 : f32
      %226 = vector.broadcast %cst_77 : f32 to vector<8x1xf32>
      %227 = arith.addf %223, %226 : vector<8x1xf32>
      %228 = math.rsqrt %227 : vector<8x1xf32>
      %229 = vector.broadcast %228 : vector<8x1xf32> to vector<8x64xf32>
      %230 = arith.mulf %225, %229 : vector<8x64xf32>
      %231 = vector.extract_strided_slice %211 {offsets = [0, 64], sizes = [8, 64], strides = [1, 1]} : vector<8x256xf32> to vector<8x64xf32>
      %cst_78 = arith.constant dense<0.000000e+00> : vector<8xf32>
      %232 = vector.multi_reduction <add>, %231, %cst_78 [1] : vector<8x64xf32> to vector<8xf32>
      %233 = vector.shape_cast %232 : vector<8xf32> to vector<8x1xf32>
      %cst_79 = arith.constant 6.400000e+01 : f32
      %234 = vector.broadcast %cst_79 : f32 to vector<8x1xf32>
      %235 = arith.divf %233, %234 : vector<8x1xf32>
      %236 = vector.broadcast %235 : vector<8x1xf32> to vector<8x64xf32>
      %237 = arith.subf %231, %236 : vector<8x64xf32>
      %238 = arith.mulf %237, %237 : vector<8x64xf32>
      %cst_80 = arith.constant dense<0.000000e+00> : vector<8xf32>
      %239 = vector.multi_reduction <add>, %238, %cst_80 [1] : vector<8x64xf32> to vector<8xf32>
      %240 = vector.shape_cast %239 : vector<8xf32> to vector<8x1xf32>
      %cst_81 = arith.constant 6.400000e+01 : f32
      %241 = vector.broadcast %cst_81 : f32 to vector<8x1xf32>
      %242 = arith.divf %240, %241 : vector<8x1xf32>
      %243 = vector.broadcast %235 : vector<8x1xf32> to vector<8x64xf32>
      %244 = arith.subf %231, %243 : vector<8x64xf32>
      %cst_82 = arith.constant 9.99999974E-6 : f32
      %245 = vector.broadcast %cst_82 : f32 to vector<8x1xf32>
      %246 = arith.addf %242, %245 : vector<8x1xf32>
      %247 = math.rsqrt %246 : vector<8x1xf32>
      %248 = vector.broadcast %247 : vector<8x1xf32> to vector<8x64xf32>
      %249 = arith.mulf %244, %248 : vector<8x64xf32>
      %250 = vector.extract_strided_slice %211 {offsets = [0, 128], sizes = [8, 64], strides = [1, 1]} : vector<8x256xf32> to vector<8x64xf32>
      %cst_83 = arith.constant dense<0.000000e+00> : vector<8xf32>
      %251 = vector.multi_reduction <add>, %250, %cst_83 [1] : vector<8x64xf32> to vector<8xf32>
      %252 = vector.shape_cast %251 : vector<8xf32> to vector<8x1xf32>
      %cst_84 = arith.constant 6.400000e+01 : f32
      %253 = vector.broadcast %cst_84 : f32 to vector<8x1xf32>
      %254 = arith.divf %252, %253 : vector<8x1xf32>
      %255 = vector.broadcast %254 : vector<8x1xf32> to vector<8x64xf32>
      %256 = arith.subf %250, %255 : vector<8x64xf32>
      %257 = arith.mulf %256, %256 : vector<8x64xf32>
      %cst_85 = arith.constant dense<0.000000e+00> : vector<8xf32>
      %258 = vector.multi_reduction <add>, %257, %cst_85 [1] : vector<8x64xf32> to vector<8xf32>
      %259 = vector.shape_cast %258 : vector<8xf32> to vector<8x1xf32>
      %cst_86 = arith.constant 6.400000e+01 : f32
      %260 = vector.broadcast %cst_86 : f32 to vector<8x1xf32>
      %261 = arith.divf %259, %260 : vector<8x1xf32>
      %262 = vector.broadcast %254 : vector<8x1xf32> to vector<8x64xf32>
      %263 = arith.subf %250, %262 : vector<8x64xf32>
      %cst_87 = arith.constant 9.99999974E-6 : f32
      %264 = vector.broadcast %cst_87 : f32 to vector<8x1xf32>
      %265 = arith.addf %261, %264 : vector<8x1xf32>
      %266 = math.rsqrt %265 : vector<8x1xf32>
      %267 = vector.broadcast %266 : vector<8x1xf32> to vector<8x64xf32>
      %268 = arith.mulf %263, %267 : vector<8x64xf32>
      %269 = vector.extract_strided_slice %211 {offsets = [0, 192], sizes = [8, 64], strides = [1, 1]} : vector<8x256xf32> to vector<8x64xf32>
      %cst_88 = arith.constant dense<0.000000e+00> : vector<8xf32>
      %270 = vector.multi_reduction <add>, %269, %cst_88 [1] : vector<8x64xf32> to vector<8xf32>
      %271 = vector.shape_cast %270 : vector<8xf32> to vector<8x1xf32>
      %cst_89 = arith.constant 6.400000e+01 : f32
      %272 = vector.broadcast %cst_89 : f32 to vector<8x1xf32>
      %273 = arith.divf %271, %272 : vector<8x1xf32>
      %274 = vector.broadcast %273 : vector<8x1xf32> to vector<8x64xf32>
      %275 = arith.subf %269, %274 : vector<8x64xf32>
      %276 = arith.mulf %275, %275 : vector<8x64xf32>
      %cst_90 = arith.constant dense<0.000000e+00> : vector<8xf32>
      %277 = vector.multi_reduction <add>, %276, %cst_90 [1] : vector<8x64xf32> to vector<8xf32>
      %278 = vector.shape_cast %277 : vector<8xf32> to vector<8x1xf32>
      %cst_91 = arith.constant 6.400000e+01 : f32
      %279 = vector.broadcast %cst_91 : f32 to vector<8x1xf32>
      %280 = arith.divf %278, %279 : vector<8x1xf32>
      %281 = vector.broadcast %273 : vector<8x1xf32> to vector<8x64xf32>
      %282 = arith.subf %269, %281 : vector<8x64xf32>
      %cst_92 = arith.constant 9.99999974E-6 : f32
      %283 = vector.broadcast %cst_92 : f32 to vector<8x1xf32>
      %284 = arith.addf %280, %283 : vector<8x1xf32>
      %285 = math.rsqrt %284 : vector<8x1xf32>
      %286 = vector.broadcast %285 : vector<8x1xf32> to vector<8x64xf32>
      %287 = arith.mulf %282, %286 : vector<8x64xf32>
      %288 = tpu.concatenate %230, %249, %268, %287 in 1 : vector<8x64xf32>, vector<8x64xf32>, vector<8x64xf32>, vector<8x64xf32> -> vector<8x256xf32>
      %c0_93 = arith.constant 0 : index
      %c0_94 = arith.constant 0 : index
      %289 = vector.load %arg28[%c0_93, %c0_94] : memref<1x256xf32, #tpu.memory_space<vmem>>, vector<1x256xf32>
      %290 = vector.broadcast %289 : vector<1x256xf32> to vector<8x256xf32>
      %291 = arith.mulf %288, %290 : vector<8x256xf32>
      %c0_95 = arith.constant 0 : index
      %c0_96 = arith.constant 0 : index
      %292 = vector.load %arg29[%c0_95, %c0_96] : memref<1x256xf32, #tpu.memory_space<vmem>>, vector<1x256xf32>
      %293 = vector.broadcast %292 : vector<1x256xf32> to vector<8x256xf32>
      %294 = arith.addf %291, %293 : vector<8x256xf32>
      %cst_97 = arith.constant 0.000000e+00 : f32
      %295 = vector.broadcast %cst_97 : f32 to vector<8x256xf32>
      %296 = arith.maximumf %294, %295 : vector<8x256xf32>
      %c0_98 = arith.constant 0 : index
      %c0_99 = arith.constant 0 : index
      %297 = vector.load %arg30[%c0_98, %c0_99] : memref<256x8xbf16, #tpu.memory_space<vmem>>, vector<256x8xbf16>
      %298 = arith.truncf %296 : vector<8x256xf32> to vector<8x256xbf16>
      %cst_100 = arith.constant dense<0.000000e+00> : vector<8x8xf32>
      %299 = tpu.matmul %298, %297, %cst_100 {dimension_numbers = #tpu.dot_dimension_numbers<[1], [0], [0], [1], [0, 0, 1, 1], [], []>} : vector<8x256xbf16>, vector<256x8xbf16>, vector<8x8xf32> -> vector<8x8xf32>
      %c0_101 = arith.constant 0 : index
      %c0_102 = arith.constant 0 : index
      %300 = vector.load %arg31[%c0_101, %c0_102] : memref<1x8xf32, #tpu.memory_space<vmem>>, vector<1x8xf32>
      %301 = vector.broadcast %300 : vector<1x8xf32> to vector<8x8xf32>
      %302 = arith.addf %299, %301 : vector<8x8xf32>
      %303 = vector.extract_strided_slice %302 {offsets = [0, 0], sizes = [8, 2], strides = [1, 1]} : vector<8x8xf32> to vector<8x2xf32>
      %304 = vector.extract_strided_slice %302 {offsets = [0, 2], sizes = [8, 2], strides = [1, 1]} : vector<8x8xf32> to vector<8x2xf32>
      %cst_103 = arith.constant 2.000000e+01 : f32
      %305 = vector.broadcast %cst_103 : f32 to vector<8x2xf32>
      %306 = arith.cmpf ogt, %304, %305 : vector<8x2xf32>
      %cst_104 = arith.constant 2.000000e+01 : f32
      %307 = vector.broadcast %cst_104 : f32 to vector<8x2xf32>
      %308 = arith.minimumf %304, %307 : vector<8x2xf32>
      %309 = math.exp %308 : vector<8x2xf32>
      %310 = math.log1p %309 : vector<8x2xf32>
      %311 = arith.select %306, %304, %310 : vector<8x2xi1>, vector<8x2xf32>
      %cst_105 = arith.constant 9.99999997E-7 : f32
      %312 = vector.broadcast %cst_105 : f32 to vector<8x2xf32>
      %313 = arith.addf %311, %312 : vector<8x2xf32>
      %314 = vector.extract_strided_slice %302 {offsets = [0, 4], sizes = [8, 2], strides = [1, 1]} : vector<8x8xf32> to vector<8x2xf32>
      %cst_106 = arith.constant 0.000000e+00 : f32
      %315 = vector.broadcast %cst_106 : f32 to vector<8x2xf32>
      %316 = arith.subf %315, %314 : vector<8x2xf32>
      %317 = math.exp %316 : vector<8x2xf32>
      %cst_107 = arith.constant 1.000000e+00 : f32
      %318 = vector.broadcast %cst_107 : f32 to vector<8x2xf32>
      %319 = arith.addf %318, %317 : vector<8x2xf32>
      %cst_108 = arith.constant 1.000000e+00 : f32
      %320 = vector.broadcast %cst_108 : f32 to vector<8x2xf32>
      %321 = arith.divf %320, %319 : vector<8x2xf32>
      %322 = vector.extract_strided_slice %302 {offsets = [0, 6], sizes = [8, 2], strides = [1, 1]} : vector<8x8xf32> to vector<8x2xf32>
      %cst_109 = arith.constant 2.000000e+01 : f32
      %323 = vector.broadcast %cst_109 : f32 to vector<8x2xf32>
      %324 = arith.cmpf ogt, %322, %323 : vector<8x2xf32>
      %cst_110 = arith.constant 2.000000e+01 : f32
      %325 = vector.broadcast %cst_110 : f32 to vector<8x2xf32>
      %326 = arith.minimumf %322, %325 : vector<8x2xf32>
      %327 = math.exp %326 : vector<8x2xf32>
      %328 = math.log1p %327 : vector<8x2xf32>
      %329 = arith.select %324, %322, %328 : vector<8x2xi1>, vector<8x2xf32>
      %cst_111 = arith.constant 9.99999997E-7 : f32
      %330 = vector.broadcast %cst_111 : f32 to vector<8x2xf32>
      %331 = arith.addf %329, %330 : vector<8x2xf32>
      %cst_112 = arith.constant dense<0xFF800000> : vector<8xf32>
      %332 = vector.multi_reduction <maximumf>, %303, %cst_112 [1] : vector<8x2xf32> to vector<8xf32>
      %333 = vector.shape_cast %332 : vector<8xf32> to vector<8x1xf32>
      %334 = vector.broadcast %333 : vector<8x1xf32> to vector<8x2xf32>
      %335 = arith.subf %303, %334 : vector<8x2xf32>
      %336 = math.exp %335 : vector<8x2xf32>
      %cst_113 = arith.constant dense<0.000000e+00> : vector<8xf32>
      %337 = vector.multi_reduction <add>, %336, %cst_113 [1] : vector<8x2xf32> to vector<8xf32>
      %338 = vector.shape_cast %337 : vector<8xf32> to vector<8x1xf32>
      %339 = vector.broadcast %338 : vector<8x1xf32> to vector<8x2xf32>
      %340 = arith.divf %336, %339 : vector<8x2xf32>
      %341 = vector.extract_strided_slice %340 {offsets = [0, 1], sizes = [8, 1], strides = [1, 1]} : vector<8x2xf32> to vector<8x1xf32>
      %342 = vector.broadcast %341 : vector<8x1xf32> to vector<8x2xf32>
      %343 = arith.mulf %321, %342 : vector<8x2xf32>
      %344 = tpu.concatenate %303, %340, %313, %343, %331 in 1 : vector<8x2xf32>, vector<8x2xf32>, vector<8x2xf32>, vector<8x2xf32>, vector<8x2xf32> -> vector<8x10xf32>
      %cst_114 = arith.constant 0.000000e+00 : f32
      %345 = vector.broadcast %cst_114 : f32 to vector<8x118xf32>
      %346 = tpu.concatenate %344, %345 in 1 : vector<8x10xf32>, vector<8x118xf32> -> vector<8x128xf32>
      %c0_115 = arith.constant 0 : index
      %c0_116 = arith.constant 0 : index
      %347 = vector.load %arg32[%c0_115, %c0_116] : memref<8x128xf32, #tpu.memory_space<vmem>>, vector<8x128xf32>
      tpu.vector_store %arg32[%c0_115, %c0_116], %346 {strides = array<i32>} : memref<8x128xf32, #tpu.memory_space<vmem>>, vector<8x128xf32>,
    } else {
    }
    return
  }
  func.func @transform_0(%arg0: i32, %arg1: i32) -> (i32, i32) {
    %c0_i32 = arith.constant 0 : i32
    %c0_i32_0 = arith.constant 0 : i32
    return %arg0, %c0_i32 : i32, i32
  }
  func.func @transform_1(%arg0: i32, %arg1: i32) -> (i32, i32) {
    %c0_i32 = arith.constant 0 : i32
    %c0_i32_0 = arith.constant 0 : i32
    %c0_i32_1 = arith.constant 0 : i32
    return %c0_i32, %c0_i32_0 : i32, i32
  }
  func.func @transform_2(%arg0: i32, %arg1: i32) -> (i32, i32) {
    %c0_i32 = arith.constant 0 : i32
    %c0_i32_0 = arith.constant 0 : i32
    %c0_i32_1 = arith.constant 0 : i32
    return %c0_i32, %c0_i32_0 : i32, i32
  }
  func.func @transform_3(%arg0: i32, %arg1: i32) -> (i32, i32, i32) {
    %c0_i32 = arith.constant 0 : i32
    %c0_i32_0 = arith.constant 0 : i32
    %c0_i32_1 = arith.constant 0 : i32
    %c0_i32_2 = arith.constant 0 : i32
    return %c0_i32, %c0_i32_0, %c0_i32_1 : i32, i32, i32
  }
  func.func @transform_4(%arg0: i32, %arg1: i32) -> (i32, i32) {
    %c0_i32 = arith.constant 0 : i32
    %c0_i32_0 = arith.constant 0 : i32
    %c0_i32_1 = arith.constant 0 : i32
    return %c0_i32, %c0_i32_0 : i32, i32
  }
  func.func @transform_5(%arg0: i32, %arg1: i32) -> (i32, i32) {
    %c0_i32 = arith.constant 0 : i32
    %c0_i32_0 = arith.constant 0 : i32
    %c0_i32_1 = arith.constant 0 : i32
    return %c0_i32, %c0_i32_0 : i32, i32
  }
  func.func @transform_6(%arg0: i32, %arg1: i32) -> (i32, i32) {
    %c0_i32 = arith.constant 0 : i32
    %c0_i32_0 = arith.constant 0 : i32
    %c0_i32_1 = arith.constant 0 : i32
    return %c0_i32, %c0_i32_0 : i32, i32
  }
  func.func @transform_7(%arg0: i32, %arg1: i32) -> (i32, i32) {
    %c0_i32 = arith.constant 0 : i32
    %c0_i32_0 = arith.constant 0 : i32
    %c0_i32_1 = arith.constant 0 : i32
    return %c0_i32, %c0_i32_0 : i32, i32
  }
  func.func @transform_8(%arg0: i32, %arg1: i32) -> (i32, i32) {
    %c0_i32 = arith.constant 0 : i32
    %c0_i32_0 = arith.constant 0 : i32
    %c0_i32_1 = arith.constant 0 : i32
    return %c0_i32, %c0_i32_0 : i32, i32
  }
  func.func @transform_9(%arg0: i32, %arg1: i32) -> (i32, i32) {
    %c0_i32 = arith.constant 0 : i32
    %c0_i32_0 = arith.constant 0 : i32
    %c0_i32_1 = arith.constant 0 : i32
    return %c0_i32, %c0_i32_0 : i32, i32
  }
  func.func @transform_10(%arg0: i32, %arg1: i32) -> (i32, i32, i32) {
    %c0_i32 = arith.constant 0 : i32
    %c0_i32_0 = arith.constant 0 : i32
    %c0_i32_1 = arith.constant 0 : i32
    return %arg1, %c0_i32, %c0_i32_0 : i32, i32, i32
  }
  func.func @transform_11(%arg0: i32, %arg1: i32) -> (i32, i32, i32) {
    %c0_i32 = arith.constant 0 : i32
    %c0_i32_0 = arith.constant 0 : i32
    %c0_i32_1 = arith.constant 0 : i32
    return %arg1, %c0_i32, %c0_i32_0 : i32, i32, i32
  }
  func.func @transform_12(%arg0: i32, %arg1: i32) -> (i32, i32, i32) {
    %c0_i32 = arith.constant 0 : i32
    %c0_i32_0 = arith.constant 0 : i32
    %c0_i32_1 = arith.constant 0 : i32
    return %arg1, %c0_i32, %c0_i32_0 : i32, i32, i32
  }
  func.func @transform_13(%arg0: i32, %arg1: i32) -> (i32, i32, i32) {
    %c0_i32 = arith.constant 0 : i32
    %c0_i32_0 = arith.constant 0 : i32
    %c0_i32_1 = arith.constant 0 : i32
    return %arg1, %c0_i32, %c0_i32_0 : i32, i32, i32
  }
  func.func @transform_14(%arg0: i32, %arg1: i32) -> (i32, i32, i32) {
    %c0_i32 = arith.constant 0 : i32
    %c0_i32_0 = arith.constant 0 : i32
    %c0_i32_1 = arith.constant 0 : i32
    return %arg1, %c0_i32, %c0_i32_0 : i32, i32, i32
  }
  func.func @transform_15(%arg0: i32, %arg1: i32) -> (i32, i32, i32) {
    %c0_i32 = arith.constant 0 : i32
    %c0_i32_0 = arith.constant 0 : i32
    %c0_i32_1 = arith.constant 0 : i32
    return %arg1, %c0_i32, %c0_i32_0 : i32, i32, i32
  }
  func.func @transform_16(%arg0: i32, %arg1: i32) -> (i32, i32, i32) {
    %c0_i32 = arith.constant 0 : i32
    %c0_i32_0 = arith.constant 0 : i32
    %c0_i32_1 = arith.constant 0 : i32
    return %arg1, %c0_i32, %c0_i32_0 : i32, i32, i32
  }
  func.func @transform_17(%arg0: i32, %arg1: i32) -> (i32, i32, i32) {
    %c0_i32 = arith.constant 0 : i32
    %c0_i32_0 = arith.constant 0 : i32
    %c0_i32_1 = arith.constant 0 : i32
    return %arg1, %c0_i32, %c0_i32_0 : i32, i32, i32
  }
  func.func @transform_18(%arg0: i32, %arg1: i32) -> (i32, i32, i32) {
    %c0_i32 = arith.constant 0 : i32
    %c0_i32_0 = arith.constant 0 : i32
    %c0_i32_1 = arith.constant 0 : i32
    return %arg1, %c0_i32, %c0_i32_0 : i32, i32, i32
  }
  func.func @transform_19(%arg0: i32, %arg1: i32) -> (i32, i32, i32) {
    %c0_i32 = arith.constant 0 : i32
    %c0_i32_0 = arith.constant 0 : i32
    %c0_i32_1 = arith.constant 0 : i32
    return %arg1, %c0_i32, %c0_i32_0 : i32, i32, i32
  }
  func.func @transform_20(%arg0: i32, %arg1: i32) -> (i32, i32, i32) {
    %c0_i32 = arith.constant 0 : i32
    %c0_i32_0 = arith.constant 0 : i32
    %c0_i32_1 = arith.constant 0 : i32
    return %arg1, %c0_i32, %c0_i32_0 : i32, i32, i32
  }
  func.func @transform_21(%arg0: i32, %arg1: i32) -> (i32, i32, i32) {
    %c0_i32 = arith.constant 0 : i32
    %c0_i32_0 = arith.constant 0 : i32
    %c0_i32_1 = arith.constant 0 : i32
    return %arg1, %c0_i32, %c0_i32_0 : i32, i32, i32
  }
  func.func @transform_22(%arg0: i32, %arg1: i32) -> (i32, i32) {
    %c0_i32 = arith.constant 0 : i32
    %c0_i32_0 = arith.constant 0 : i32
    %c0_i32_1 = arith.constant 0 : i32
    return %c0_i32, %c0_i32_0 : i32, i32
  }
  func.func @transform_23(%arg0: i32, %arg1: i32) -> (i32, i32) {
    %c0_i32 = arith.constant 0 : i32
    %c0_i32_0 = arith.constant 0 : i32
    %c0_i32_1 = arith.constant 0 : i32
    return %c0_i32, %c0_i32_0 : i32, i32
  }
  func.func @transform_24(%arg0: i32, %arg1: i32) -> (i32, i32) {
    %c0_i32 = arith.constant 0 : i32
    %c0_i32_0 = arith.constant 0 : i32
    %c0_i32_1 = arith.constant 0 : i32
    return %c0_i32, %c0_i32_0 : i32, i32
  }
  func.func @transform_25(%arg0: i32, %arg1: i32) -> (i32, i32) {
    %c0_i32 = arith.constant 0 : i32
    %c0_i32_0 = arith.constant 0 : i32
    %c0_i32_1 = arith.constant 0 : i32
    return %c0_i32, %c0_i32_0 : i32, i32
  }
  func.func @transform_26(%arg0: i32, %arg1: i32) -> (i32, i32) {
    %c0_i32 = arith.constant 0 : i32
    %c0_i32_0 = arith.constant 0 : i32
    %c0_i32_1 = arith.constant 0 : i32
    return %c0_i32, %c0_i32_0 : i32, i32
  }
  func.func @transform_27(%arg0: i32, %arg1: i32) -> (i32, i32) {
    %c0_i32 = arith.constant 0 : i32
    %c0_i32_0 = arith.constant 0 : i32
    %c0_i32_1 = arith.constant 0 : i32
    return %c0_i32, %c0_i32_0 : i32, i32
  }
  func.func @transform_28(%arg0: i32, %arg1: i32) -> (i32, i32) {
    %c0_i32 = arith.constant 0 : i32
    %c0_i32_0 = arith.constant 0 : i32
    %c0_i32_1 = arith.constant 0 : i32
    return %c0_i32, %c0_i32_0 : i32, i32
  }
  func.func @transform_29(%arg0: i32, %arg1: i32) -> (i32, i32) {
    %c0_i32 = arith.constant 0 : i32
    %c0_i32_0 = arith.constant 0 : i32
    %c0_i32_1 = arith.constant 0 : i32
    return %c0_i32, %c0_i32_0 : i32, i32
  }
  func.func @transform_30(%arg0: i32, %arg1: i32) -> (i32, i32) {
    %c0_i32 = arith.constant 0 : i32
    %c0_i32_0 = arith.constant 0 : i32
    return %arg0, %c0_i32 : i32, i32
  }
}

</mosaic_0001>

<llo_original>
// kernel: two_stage_forward.1
$region0: #{two_stage_forward.1}
  #allocation0 [shape = 'u32[]', space=smem, size = 0x4, offset = 0x4, fixed_abs, tag = 'smem constant byte address 0x4 - core index']
  #allocation1 [shape = 'u32[72,128]{1,0:T(1,128)}', space=vmem, size = 0x9000, scoped, tag = 'internal scratch']
  #allocation2 [shape = 'f32[8,128]{1,0:T(8,128)}', space=vmem, size = 0x1000, scoped, tag = 'scratch operand']
  #allocation3 [shape = 'f32[8,32,128]{2,1,0:T(8,128)}', space=vmem, size = 0x20000, scoped, tag = 'scratch operand']
  %s0 = inlined_call_operand.smem [shape: u32[31], index: -1, kind: input, shape index: {}]
  %s1 = sld [smem:[%s0]]
  %s2 = scalar_lea.smem %s0, 1
  %s3 = sld [smem:[%s2]]
  %s4 = scalar_lea.smem %s0, 2
  %s5 = sld [smem:[%s4]]
  %s6 = scalar_lea.smem %s0, 3
  %s7 = sld [smem:[%s6]]
  %s8 = scalar_lea.smem %s0, 4
  %s9 = sld [smem:[%s8]]
  %s10 = scalar_lea.smem %s0, 5
  %s11 = sld [smem:[%s10]]
  %s12 = scalar_lea.smem %s0, 6
  %s13 = sld [smem:[%s12]]
  %s14 = scalar_lea.smem %s0, 7
  %s15 = sld [smem:[%s14]]
  %s16 = scalar_lea.smem %s0, 8
  %s17 = sld [smem:[%s16]]
  %s18 = scalar_lea.smem %s0, 9
  %s19 = sld [smem:[%s18]]
  %s20 = scalar_lea.smem %s0, 10
  %s21 = sld [smem:[%s20]]
  %s22 = scalar_lea.smem %s0, 11
  %s23 = sld [smem:[%s22]]
  %s24 = scalar_lea.smem %s0, 12
  %s25 = sld [smem:[%s24]]
  %s26 = scalar_lea.smem %s0, 13
  %s27 = sld [smem:[%s26]]
  %s28 = scalar_lea.smem %s0, 14
  %s29 = sld [smem:[%s28]]
  %s30 = scalar_lea.smem %s0, 15
  %s31 = sld [smem:[%s30]]
  %s32 = scalar_lea.smem %s0, 16
  %s33 = sld [smem:[%s32]]
  %s34 = scalar_lea.smem %s0, 17
  %s35 = sld [smem:[%s34]]
  %s36 = scalar_lea.smem %s0, 18
  %s37 = sld [smem:[%s36]]
  %s38 = scalar_lea.smem %s0, 19
  %s39 = sld [smem:[%s38]]
  %s40 = scalar_lea.smem %s0, 20
  %s41 = sld [smem:[%s40]]
  %s42 = scalar_lea.smem %s0, 21
  %s43 = sld [smem:[%s42]]
  %s44 = scalar_lea.smem %s0, 22
  %s45 = sld [smem:[%s44]]
  %s46 = scalar_lea.smem %s0, 23
  %s47 = sld [smem:[%s46]]
  %s48 = scalar_lea.smem %s0, 24
  %s49 = sld [smem:[%s48]]
  %s50 = scalar_lea.smem %s0, 25
  %s51 = sld [smem:[%s50]]
  %s52 = scalar_lea.smem %s0, 26
  %s53 = sld [smem:[%s52]]
  %s54 = scalar_lea.smem %s0, 27
  %s55 = sld [smem:[%s54]]
  %s56 = scalar_lea.smem %s0, 28
  %s57 = sld [smem:[%s56]]
  %s58 = scalar_lea.smem %s0, 29
  %s59 = sld [smem:[%s58]]
  %s60 = scalar_lea.smem %s0, 30
  %s61 = sld [smem:[%s60]]
  %s62 = sld [smem:[#allocation0]]
  $region249: #{two_stage_forward.1} parent=0
    _
  %s64 = ssub.s32 1, %s62
  %s65 = scalar_select 0, %s64, %s62
  $region1: #{two_stage_forward.1} parent=0
    #allocation4 [shape = 'u8[4096]{0}', space=vmem, size = 0x1000, scoped, tag = 'input window, operand 1, single buffered']
    #allocation5 [shape = 's32[2]{0}', space=sflag, size = 0x8, scoped, tag = 'scoped memory for two_stage_forward.1']
    #allocation6 [shape = 'u8[512]{0}', space=vmem, size = 0x400, scoped, tag = 'input window, operand 2, single buffered']
    #allocation7 [shape = 's32[1]{0}', space=sflag, size = 0x4, scoped, tag = 'scoped memory for two_stage_forward.1']
    #allocation8 [shape = 'u8[512]{0}', space=vmem, size = 0x400, scoped, tag = 'input window, operand 4, single buffered']
    #allocation9 [shape = 'u8[32768]{0}', space=vmem, size = 0x8000, scoped, tag = 'input window, operand 5, single buffered']
    #allocation10 [shape = 's32[1]{0}', space=sflag, size = 0x4, scoped, tag = 'scoped memory for two_stage_forward.1']
    #allocation11 [shape = 'u8[512]{0}', space=vmem, size = 0x400, scoped, tag = 'input window, operand 6, single buffered']
    #allocation12 [shape = 'u8[512]{0}', space=vmem, size = 0x400, scoped, tag = 'input window, operand 7, single buffered']
    #allocation13 [shape = 's32[1]{0}', space=sflag, size = 0x4, scoped, tag = 'scoped memory for two_stage_forward.1']
    #allocation14 [shape = 'u8[512]{0}', space=vmem, size = 0x400, scoped, tag = 'input window, operand 8, single buffered']
    #allocation15 [shape = 'u8[4096]{0}', space=vmem, size = 0x1000, scoped, tag = 'input window, operand 9, single buffered']
    #allocation16 [shape = 's32[1]{0}', space=sflag, size = 0x4, scoped, tag = 'scoped memory for two_stage_forward.1']
    #allocation17 [shape = 'u8[196608]{0}', space=vmem, size = 0x30000, scoped, tag = 'input window, operand 10']
    #allocation18 [shape = 'u8[65536]{0}', space=vmem, size = 0x10000, scoped, tag = 'input window, operand 12']
    #allocation19 [shape = 'u8[1024]{0}', space=vmem, size = 0x400, scoped, tag = 'input window, operand 13']
    #allocation20 [shape = 'u8[1024]{0}', space=vmem, size = 0x400, scoped, tag = 'input window, operand 14']
    #allocation21 [shape = 'u8[262144]{0}', space=vmem, size = 0x40000, scoped, tag = 'input window, operand 16']
    #allocation22 [shape = 'u8[262144]{0}', space=vmem, size = 0x40000, scoped, tag = 'input window, operand 18']
    #allocation23 [shape = 'u8[1024]{0}', space=vmem, size = 0x400, scoped, tag = 'input window, operand 19']
    #allocation24 [shape = 'u8[1024]{0}', space=vmem, size = 0x400, scoped, tag = 'input window, operand 20']
    #allocation25 [shape = 'u8[1024]{0}', space=vmem, size = 0x400, scoped, tag = 'input window, operand 21']
    #allocation26 [shape = 'u8[512]{0}', space=vmem, size = 0x400, scoped, tag = 'input window, operand 22, single buffered']
    #allocation27 [shape = 'u8[512]{0}', space=vmem, size = 0x400, scoped, tag = 'input window, operand 23, single buffered']
    #allocation28 [shape = 'u8[1024]{0}', space=vmem, size = 0x400, scoped, tag = 'input window, operand 26, single buffered']
    #allocation29 [shape = 'u8[1024]{0}', space=vmem, size = 0x400, scoped, tag = 'input window, operand 27, single buffered']
    #allocation30 [shape = 'u8[512]{0}', space=vmem, size = 0x400, scoped, tag = 'input window, operand 29, single buffered']
    #allocation31 [shape = 's32[1]{0}', space=sflag, size = 0x4, scoped, tag = 'scoped memory for two_stage_forward.1']
    %66 = vsyncpa [#allocation5], 0
    %67 = vsyncpa [#allocation7], 0
    %68 = vsyncpa [#allocation10], 0
    %69 = vsyncpa [#allocation13], 0
    %70 = vsyncpa [#allocation16], 0
    %71 = vsyncpa [#allocation31], 0
    loop: start=0, step=1, limit=10
    $region2: #{two_stage_forward.1} parent=1 // loop_pre_header
      _
    $region3: #{two_stage_forward.1} parent=1 // loop_header
      %s73 = sphi 0, %s77
      %p74 = scmp.ge.s32.totalorder %s73, 10
      %s80 = sphi 0, %s92
      %s81 = sphi 0, %s88
      %s82 = sphi 0, %s80
      %s83 = sphi 0, %s81
      %s84 = sphi 0, %s82
      %s85 = sphi 0, %s83
      %s95 = sphi 0, %s97
      %s98 = sphi 0, %s95
      %s99 = sphi 0, %s98
      %s115 = sphi 0, %s99
      %s119 = sphi 0, %s119
      %s121 = sphi 0, %s119
      %s122 = sphi 0, %s121
      %s136 = sphi 0, %s122
      %s140 = sphi 0, %s140
      %s142 = sphi 0, %s140
      %s143 = sphi 0, %s142
      %s157 = sphi 0, %s143
      %s161 = sphi 0, %s161
      %s163 = sphi 0, %s161
      %s164 = sphi 0, %s163
      %s178 = sphi 0, %s164
      %s182 = sphi 0, %s182
      %s184 = sphi 0, %s182
      %s185 = sphi 0, %s184
      %s199 = sphi 0, %s185
      %s203 = sphi 0, %s203
      %s205 = sphi 0, %s203
      %s206 = sphi 0, %s205
      %s220 = sphi 0, %s206
      %s224 = sphi 0, %s224
      %s226 = sphi 0, %s224
      %s227 = sphi 0, %s226
      %s241 = sphi 0, %s227
      %s245 = sphi 0, %s245
      %s247 = sphi 0, %s245
      %s248 = sphi 0, %s247
      %s262 = sphi 0, %s248
      %s266 = sphi 0, %s266
      %s268 = sphi 0, %s266
      %s269 = sphi 0, %s268
      %s283 = sphi 0, %s269
      %s287 = sphi 0, %s287
      %s289 = sphi 0, %s287
      %s290 = sphi 0, %s289
      %s304 = sphi 0, %s290
      %s310 = sphi 0, %s312
      %s313 = sphi 0, %s310
      %s314 = sphi 0, %s313
      %s330 = sphi 0, %s314
      %s336 = sphi 0, %s338
      %s339 = sphi 0, %s336
      %s340 = sphi 0, %s339
      %s356 = sphi 0, %s340
      %s362 = sphi 0, %s364
      %s365 = sphi 0, %s362
      %s366 = sphi 0, %s365
      %s382 = sphi 0, %s366
      %s388 = sphi 0, %s390
      %s391 = sphi 0, %s388
      %s392 = sphi 0, %s391
      %s408 = sphi 0, %s392
      %s414 = sphi 0, %s416
      %s417 = sphi 0, %s414
      %s418 = sphi 0, %s417
      %s434 = sphi 0, %s418
      %s440 = sphi 0, %s442
      %s443 = sphi 0, %s440
      %s444 = sphi 0, %s443
      %s460 = sphi 0, %s444
      %s466 = sphi 0, %s468
      %s469 = sphi 0, %s466
      %s470 = sphi 0, %s469
      %s486 = sphi 0, %s470
      %s492 = sphi 0, %s494
      %s495 = sphi 0, %s492
      %s496 = sphi 0, %s495
      %s512 = sphi 0, %s496
      %s518 = sphi 0, %s520
      %s521 = sphi 0, %s518
      %s522 = sphi 0, %s521
      %s538 = sphi 0, %s522
      %s544 = sphi 0, %s546
      %s547 = sphi 0, %s544
      %s548 = sphi 0, %s547
      %s564 = sphi 0, %s548
      %s570 = sphi 0, %s572
      %s573 = sphi 0, %s570
      %s574 = sphi 0, %s573
      %s590 = sphi 0, %s574
      %s596 = sphi 0, %s598
      %s599 = sphi 0, %s596
      %s600 = sphi 0, %s599
      %s616 = sphi 0, %s600
      %s620 = sphi 0, %s620
      %s622 = sphi 0, %s620
      %s623 = sphi 0, %s622
      %s637 = sphi 0, %s623
      %s641 = sphi 0, %s641
      %s643 = sphi 0, %s641
      %s644 = sphi 0, %s643
      %s658 = sphi 0, %s644
      %s662 = sphi 0, %s662
      %s664 = sphi 0, %s662
      %s665 = sphi 0, %s664
      %s679 = sphi 0, %s665
      %s683 = sphi 0, %s683
      %s685 = sphi 0, %s683
      %s686 = sphi 0, %s685
      %s700 = sphi 0, %s686
      %s704 = sphi 0, %s704
      %s706 = sphi 0, %s704
      %s707 = sphi 0, %s706
      %s721 = sphi 0, %s707
      %s725 = sphi 0, %s725
      %s727 = sphi 0, %s725
      %s728 = sphi 0, %s727
      %s742 = sphi 0, %s728
      %s746 = sphi 0, %s746
      %s748 = sphi 0, %s746
      %s749 = sphi 0, %s748
      %s763 = sphi 0, %s749
      %s767 = sphi 0, %s767
      %s769 = sphi 0, %s767
      %s770 = sphi 0, %s769
      %s784 = sphi 0, %s770
      %s790 = sphi 0, %s792
      %s793 = sphi 0, %s790
      %s794 = sphi 0, %s793
      %s810 = sphi 0, %s794
    $region4: #{two_stage_forward.1} parent=1 // loop_header_branch
      %76 = sbr.rel (%p74) target = $region8
    $region5: #{two_stage_forward.1} parent=1 // loop_body
      %s78 = ssub.s32 %s73, 1
      %s79 = ssub.s32 %s73, 2
      %s86 = sadd.s32 1, %s81
      %p87 = scmp.ge.s32.totalorder %s86, 4
      %s88 = scalar_select %p87, 0, %s86
      %s89 = sadd.s32 1, %s80
      %s90 = scalar_select %p87, %s89, %s80
      %p91 = scmp.ge.s32.totalorder %s90, 2
      %s92 = scalar_select %p91, 0, %s90
      %s93 = ssub.s32 %s80, %s92
      %p94 = scmp.eq.s32.totalorder %s93, 0
      %s96 = sadd.s32 %s95, 1
      %s97 = scalar_select %p94, %s95, %s96
      %p100 = pneg %p94
      %p101 = scmp.eq.s32.totalorder %s73, 7
      %p102 = por %p100, %p101
      %p103 = scmp.ne.s32.totalorder %s95, %s98
      %p104 = scmp.eq.s32.totalorder %s73, 0
      %p105 = por %p103, %p104
      %p106 = scmp.ne.s32.totalorder %s95, %s98
      %p107 = scmp.eq.s32.totalorder %s78, 7
      %p108 = por %p106, %p107
      %p109 = scmp.ne.s32.totalorder %s98, %s99
      %p110 = scmp.eq.s32.totalorder %s78, 0
      %p111 = por %p109, %p110
      %p112 = scmp.ne.s32.totalorder %s98, %s99
      %p113 = scmp.eq.s32.totalorder %s79, 7
      %p114 = por %p112, %p113
      %p116 = scmp.ne.s32.totalorder %s99, %s115
      %p117 = scmp.eq.s32.totalorder %s79, 0
      %p118 = por %p116, %p117
      %s120 = sadd.s32 %s119, 1
      %p123 = scmp.eq.s32.totalorder %s73, 7
      %p124 = scmp.ne.s32.totalorder %s119, %s121
      %p125 = scmp.eq.s32.totalorder %s73, 0
      %p126 = por %p124, %p125
      %p127 = scmp.ne.s32.totalorder %s119, %s121
      %p128 = scmp.eq.s32.totalorder %s78, 7
      %p129 = por %p127, %p128
      %p130 = scmp.ne.s32.totalorder %s121, %s122
      %p131 = scmp.eq.s32.totalorder %s78, 0
      %p132 = por %p130, %p131
      %p133 = scmp.ne.s32.totalorder %s121, %s122
      %p134 = scmp.eq.s32.totalorder %s79, 7
      %p135 = por %p133, %p134
      %p137 = scmp.ne.s32.totalorder %s122, %s136
      %p138 = scmp.eq.s32.totalorder %s79, 0
      %p139 = por %p137, %p138
      %s141 = sadd.s32 %s140, 1
      %p144 = scmp.eq.s32.totalorder %s73, 7
      %p145 = scmp.ne.s32.totalorder %s140, %s142
      %p146 = scmp.eq.s32.totalorder %s73, 0
      %p147 = por %p145, %p146
      %p148 = scmp.ne.s32.totalorder %s140, %s142
      %p149 = scmp.eq.s32.totalorder %s78, 7
      %p150 = por %p148, %p149
      %p151 = scmp.ne.s32.totalorder %s142, %s143
      %p152 = scmp.eq.s32.totalorder %s78, 0
      %p153 = por %p151, %p152
      %p154 = scmp.ne.s32.totalorder %s142, %s143
      %p155 = scmp.eq.s32.totalorder %s79, 7
      %p156 = por %p154, %p155
      %p158 = scmp.ne.s32.totalorder %s143, %s157
      %p159 = scmp.eq.s32.totalorder %s79, 0
      %p160 = por %p158, %p159
      %s162 = sadd.s32 %s161, 1
      %p165 = scmp.eq.s32.totalorder %s73, 7
      %p166 = scmp.ne.s32.totalorder %s161, %s163
      %p167 = scmp.eq.s32.totalorder %s73, 0
      %p168 = por %p166, %p167
      %p169 = scmp.ne.s32.totalorder %s161, %s163
      %p170 = scmp.eq.s32.totalorder %s78, 7
      %p171 = por %p169, %p170
      %p172 = scmp.ne.s32.totalorder %s163, %s164
      %p173 = scmp.eq.s32.totalorder %s78, 0
      %p174 = por %p172, %p173
      %p175 = scmp.ne.s32.totalorder %s163, %s164
      %p176 = scmp.eq.s32.totalorder %s79, 7
      %p177 = por %p175, %p176
      %p179 = scmp.ne.s32.totalorder %s164, %s178
      %p180 = scmp.eq.s32.totalorder %s79, 0
      %p181 = por %p179, %p180
      %s183 = sadd.s32 %s182, 1
      %p186 = scmp.eq.s32.totalorder %s73, 7
      %p187 = scmp.ne.s32.totalorder %s182, %s184
      %p188 = scmp.eq.s32.totalorder %s73, 0
      %p189 = por %p187, %p188
      %p190 = scmp.ne.s32.totalorder %s182, %s184
      %p191 = scmp.eq.s32.totalorder %s78, 7
      %p192 = por %p190, %p191
      %p193 = scmp.ne.s32.totalorder %s184, %s185
      %p194 = scmp.eq.s32.totalorder %s78, 0
      %p195 = por %p193, %p194
      %p196 = scmp.ne.s32.totalorder %s184, %s185
      %p197 = scmp.eq.s32.totalorder %s79, 7
      %p198 = por %p196, %p197
      %p200 = scmp.ne.s32.totalorder %s185, %s199
      %p201 = scmp.eq.s32.totalorder %s79, 0
      %p202 = por %p200, %p201
      %s204 = sadd.s32 %s203, 1
      %p207 = scmp.eq.s32.totalorder %s73, 7
      %p208 = scmp.ne.s32.totalorder %s203, %s205
      %p209 = scmp.eq.s32.totalorder %s73, 0
      %p210 = por %p208, %p209
      %p211 = scmp.ne.s32.totalorder %s203, %s205
      %p212 = scmp.eq.s32.totalorder %s78, 7
      %p213 = por %p211, %p212
      %p214 = scmp.ne.s32.totalorder %s205, %s206
      %p215 = scmp.eq.s32.totalorder %s78, 0
      %p216 = por %p214, %p215
      %p217 = scmp.ne.s32.totalorder %s205, %s206
      %p218 = scmp.eq.s32.totalorder %s79, 7
      %p219 = por %p217, %p218
      %p221 = scmp.ne.s32.totalorder %s206, %s220
      %p222 = scmp.eq.s32.totalorder %s79, 0
      %p223 = por %p221, %p222
      %s225 = sadd.s32 %s224, 1
      %p228 = scmp.eq.s32.totalorder %s73, 7
      %p229 = scmp.ne.s32.totalorder %s224, %s226
      %p230 = scmp.eq.s32.totalorder %s73, 0
      %p231 = por %p229, %p230
      %p232 = scmp.ne.s32.totalorder %s224, %s226
      %p233 = scmp.eq.s32.totalorder %s78, 7
      %p234 = por %p232, %p233
      %p235 = scmp.ne.s32.totalorder %s226, %s227
      %p236 = scmp.eq.s32.totalorder %s78, 0
      %p237 = por %p235, %p236
      %p238 = scmp.ne.s32.totalorder %s226, %s227
      %p239 = scmp.eq.s32.totalorder %s79, 7
      %p240 = por %p238, %p239
      %p242 = scmp.ne.s32.totalorder %s227, %s241
      %p243 = scmp.eq.s32.totalorder %s79, 0
      %p244 = por %p242, %p243
      %s246 = sadd.s32 %s245, 1
      %p249 = scmp.eq.s32.totalorder %s73, 7
      %p250 = scmp.ne.s32.totalorder %s245, %s247
      %p251 = scmp.eq.s32.totalorder %s73, 0
      %p252 = por %p250, %p251
      %p253 = scmp.ne.s32.totalorder %s245, %s247
      %p254 = scmp.eq.s32.totalorder %s78, 7
      %p255 = por %p253, %p254
      %p256 = scmp.ne.s32.totalorder %s247, %s248
      %p257 = scmp.eq.s32.totalorder %s78, 0
      %p258 = por %p256, %p257
      %p259 = scmp.ne.s32.totalorder %s247, %s248
      %p260 = scmp.eq.s32.totalorder %s79, 7
      %p261 = por %p259, %p260
      %p263 = scmp.ne.s32.totalorder %s248, %s262
      %p264 = scmp.eq.s32.totalorder %s79, 0
      %p265 = por %p263, %p264
      %s267 = sadd.s32 %s266, 1
      %p270 = scmp.eq.s32.totalorder %s73, 7
      %p271 = scmp.ne.s32.totalorder %s266, %s268
      %p272 = scmp.eq.s32.totalorder %s73, 0
      %p273 = por %p271, %p272
      %p274 = scmp.ne.s32.totalorder %s266, %s268
      %p275 = scmp.eq.s32.totalorder %s78, 7
      %p276 = por %p274, %p275
      %p277 = scmp.ne.s32.totalorder %s268, %s269
      %p278 = scmp.eq.s32.totalorder %s78, 0
      %p279 = por %p277, %p278
      %p280 = scmp.ne.s32.totalorder %s268, %s269
      %p281 = scmp.eq.s32.totalorder %s79, 7
      %p282 = por %p280, %p281
      %p284 = scmp.ne.s32.totalorder %s269, %s283
      %p285 = scmp.eq.s32.totalorder %s79, 0
      %p286 = por %p284, %p285
      %s288 = sadd.s32 %s287, 1
      %p291 = scmp.eq.s32.totalorder %s73, 7
      %p292 = scmp.ne.s32.totalorder %s287, %s289
      %p293 = scmp.eq.s32.totalorder %s73, 0
      %p294 = por %p292, %p293
      %p295 = scmp.ne.s32.totalorder %s287, %s289
      %p296 = scmp.eq.s32.totalorder %s78, 7
      %p297 = por %p295, %p296
      %p298 = scmp.ne.s32.totalorder %s289, %s290
      %p299 = scmp.eq.s32.totalorder %s78, 0
      %p300 = por %p298, %p299
      %p301 = scmp.ne.s32.totalorder %s289, %s290
      %p302 = scmp.eq.s32.totalorder %s79, 7
      %p303 = por %p301, %p302
      %p305 = scmp.ne.s32.totalorder %s290, %s304
      %p306 = scmp.eq.s32.totalorder %s79, 0
      %p307 = por %p305, %p306
      %s308 = ssub.s32 %s81, %s88
      %p309 = scmp.eq.s32.totalorder %s308, 0
      %s311 = sadd.s32 %s310, 1
      %s312 = scalar_select %p309, %s310, %s311
      %p315 = pneg %p309
      %p316 = scmp.eq.s32.totalorder %s73, 7
      %p317 = por %p315, %p316
      %p318 = scmp.ne.s32.totalorder %s310, %s313
      %p319 = scmp.eq.s32.totalorder %s73, 0
      %p320 = por %p318, %p319
      %p321 = scmp.ne.s32.totalorder %s310, %s313
      %p322 = scmp.eq.s32.totalorder %s78, 7
      %p323 = por %p321, %p322
      %p324 = scmp.ne.s32.totalorder %s313, %s314
      %p325 = scmp.eq.s32.totalorder %s78, 0
      %p326 = por %p324, %p325
      %p327 = scmp.ne.s32.totalorder %s313, %s314
      %p328 = scmp.eq.s32.totalorder %s79, 7
      %p329 = por %p327, %p328
      %p331 = scmp.ne.s32.totalorder %s314, %s330
      %p332 = scmp.eq.s32.totalorder %s79, 0
      %p333 = por %p331, %p332
      %s334 = ssub.s32 %s81, %s88
      %p335 = scmp.eq.s32.totalorder %s334, 0
      %s337 = sadd.s32 %s336, 1
      %s338 = scalar_select %p335, %s336, %s337
      %p341 = pneg %p335
      %p342 = scmp.eq.s32.totalorder %s73, 7
      %p343 = por %p341, %p342
      %p344 = scmp.ne.s32.totalorder %s336, %s339
      %p345 = scmp.eq.s32.totalorder %s73, 0
      %p346 = por %p344, %p345
      %p347 = scmp.ne.s32.totalorder %s336, %s339
      %p348 = scmp.eq.s32.totalorder %s78, 7
      %p349 = por %p347, %p348
      %p350 = scmp.ne.s32.totalorder %s339, %s340
      %p351 = scmp.eq.s32.totalorder %s78, 0
      %p352 = por %p350, %p351
      %p353 = scmp.ne.s32.totalorder %s339, %s340
      %p354 = scmp.eq.s32.totalorder %s79, 7
      %p355 = por %p353, %p354
      %p357 = scmp.ne.s32.totalorder %s340, %s356
      %p358 = scmp.eq.s32.totalorder %s79, 0
      %p359 = por %p357, %p358
      %s360 = ssub.s32 %s81, %s88
      %p361 = scmp.eq.s32.totalorder %s360, 0
      %s363 = sadd.s32 %s362, 1
      %s364 = scalar_select %p361, %s362, %s363
      %p367 = pneg %p361
      %p368 = scmp.eq.s32.totalorder %s73, 7
      %p369 = por %p367, %p368
      %p370 = scmp.ne.s32.totalorder %s362, %s365
      %p371 = scmp.eq.s32.totalorder %s73, 0
      %p372 = por %p370, %p371
      %p373 = scmp.ne.s32.totalorder %s362, %s365
      %p374 = scmp.eq.s32.totalorder %s78, 7
      %p375 = por %p373, %p374
      %p376 = scmp.ne.s32.totalorder %s365, %s366
      %p377 = scmp.eq.s32.totalorder %s78, 0
      %p378 = por %p376, %p377
      %p379 = scmp.ne.s32.totalorder %s365, %s366
      %p380 = scmp.eq.s32.totalorder %s79, 7
      %p381 = por %p379, %p380
      %p383 = scmp.ne.s32.totalorder %s366, %s382
      %p384 = scmp.eq.s32.totalorder %s79, 0
      %p385 = por %p383, %p384
      %s386 = ssub.s32 %s81, %s88
      %p387 = scmp.eq.s32.totalorder %s386, 0
      %s389 = sadd.s32 %s388, 1
      %s390 = scalar_select %p387, %s388, %s389
      %p393 = pneg %p387
      %p394 = scmp.eq.s32.totalorder %s73, 7
      %p395 = por %p393, %p394
      %p396 = scmp.ne.s32.totalorder %s388, %s391
      %p397 = scmp.eq.s32.totalorder %s73, 0
      %p398 = por %p396, %p397
      %p399 = scmp.ne.s32.totalorder %s388, %s391
      %p400 = scmp.eq.s32.totalorder %s78, 7
      %p401 = por %p399, %p400
      %p402 = scmp.ne.s32.totalorder %s391, %s392
      %p403 = scmp.eq.s32.totalorder %s78, 0
      %p404 = por %p402, %p403
      %p405 = scmp.ne.s32.totalorder %s391, %s392
      %p406 = scmp.eq.s32.totalorder %s79, 7
      %p407 = por %p405, %p406
      %p409 = scmp.ne.s32.totalorder %s392, %s408
      %p410 = scmp.eq.s32.totalorder %s79, 0
      %p411 = por %p409, %p410
      %s412 = ssub.s32 %s81, %s88
      %p413 = scmp.eq.s32.totalorder %s412, 0
      %s415 = sadd.s32 %s414, 1
      %s416 = scalar_select %p413, %s414, %s415
      %p419 = pneg %p413
      %p420 = scmp.eq.s32.totalorder %s73, 7
      %p421 = por %p419, %p420
      %p422 = scmp.ne.s32.totalorder %s414, %s417
      %p423 = scmp.eq.s32.totalorder %s73, 0
      %p424 = por %p422, %p423
      %p425 = scmp.ne.s32.totalorder %s414, %s417
      %p426 = scmp.eq.s32.totalorder %s78, 7
      %p427 = por %p425, %p426
      %p428 = scmp.ne.s32.totalorder %s417, %s418
      %p429 = scmp.eq.s32.totalorder %s78, 0
      %p430 = por %p428, %p429
      %p431 = scmp.ne.s32.totalorder %s417, %s418
      %p432 = scmp.eq.s32.totalorder %s79, 7
      %p433 = por %p431, %p432
      %p435 = scmp.ne.s32.totalorder %s418, %s434
      %p436 = scmp.eq.s32.totalorder %s79, 0
      %p437 = por %p435, %p436
      %s438 = ssub.s32 %s81, %s88
      %p439 = scmp.eq.s32.totalorder %s438, 0
      %s441 = sadd.s32 %s440, 1
      %s442 = scalar_select %p439, %s440, %s441
      %p445 = pneg %p439
      %p446 = scmp.eq.s32.totalorder %s73, 7
      %p447 = por %p445, %p446
      %p448 = scmp.ne.s32.totalorder %s440, %s443
      %p449 = scmp.eq.s32.totalorder %s73, 0
      %p450 = por %p448, %p449
      %p451 = scmp.ne.s32.totalorder %s440, %s443
      %p452 = scmp.eq.s32.totalorder %s78, 7
      %p453 = por %p451, %p452
      %p454 = scmp.ne.s32.totalorder %s443, %s444
      %p455 = scmp.eq.s32.totalorder %s78, 0
      %p456 = por %p454, %p455
      %p457 = scmp.ne.s32.totalorder %s443, %s444
      %p458 = scmp.eq.s32.totalorder %s79, 7
      %p459 = por %p457, %p458
      %p461 = scmp.ne.s32.totalorder %s444, %s460
      %p462 = scmp.eq.s32.totalorder %s79, 0
      %p463 = por %p461, %p462
      %s464 = ssub.s32 %s81, %s88
      %p465 = scmp.eq.s32.totalorder %s464, 0
      %s467 = sadd.s32 %s466, 1
      %s468 = scalar_select %p465, %s466, %s467
      %p471 = pneg %p465
      %p472 = scmp.eq.s32.totalorder %s73, 7
      %p473 = por %p471, %p472
      %p474 = scmp.ne.s32.totalorder %s466, %s469
      %p475 = scmp.eq.s32.totalorder %s73, 0
      %p476 = por %p474, %p475
      %p477 = scmp.ne.s32.totalorder %s466, %s469
      %p478 = scmp.eq.s32.totalorder %s78, 7
      %p479 = por %p477, %p478
      %p480 = scmp.ne.s32.totalorder %s469, %s470
      %p481 = scmp.eq.s32.totalorder %s78, 0
      %p482 = por %p480, %p481
      %p483 = scmp.ne.s32.totalorder %s469, %s470
      %p484 = scmp.eq.s32.totalorder %s79, 7
      %p485 = por %p483, %p484
      %p487 = scmp.ne.s32.totalorder %s470, %s486
      %p488 = scmp.eq.s32.totalorder %s79, 0
      %p489 = por %p487, %p488
      %s490 = ssub.s32 %s81, %s88
      %p491 = scmp.eq.s32.totalorder %s490, 0
      %s493 = sadd.s32 %s492, 1
      %s494 = scalar_select %p491, %s492, %s493
      %p497 = pneg %p491
      %p498 = scmp.eq.s32.totalorder %s73, 7
      %p499 = por %p497, %p498
      %p500 = scmp.ne.s32.totalorder %s492, %s495
      %p501 = scmp.eq.s32.totalorder %s73, 0
      %p502 = por %p500, %p501
      %p503 = scmp.ne.s32.totalorder %s492, %s495
      %p504 = scmp.eq.s32.totalorder %s78, 7
      %p505 = por %p503, %p504
      %p506 = scmp.ne.s32.totalorder %s495, %s496
      %p507 = scmp.eq.s32.totalorder %s78, 0
      %p508 = por %p506, %p507
      %p509 = scmp.ne.s32.totalorder %s495, %s496
      %p510 = scmp.eq.s32.totalorder %s79, 7
      %p511 = por %p509, %p510
      %p513 = scmp.ne.s32.totalorder %s496, %s512
      %p514 = scmp.eq.s32.totalorder %s79, 0
      %p515 = por %p513, %p514
      %s516 = ssub.s32 %s81, %s88
      %p517 = scmp.eq.s32.totalorder %s516, 0
      %s519 = sadd.s32 %s518, 1
      %s520 = scalar_select %p517, %s518, %s519
      %p523 = pneg %p517
      %p524 = scmp.eq.s32.totalorder %s73, 7
      %p525 = por %p523, %p524
      %p526 = scmp.ne.s32.totalorder %s518, %s521
      %p527 = scmp.eq.s32.totalorder %s73, 0
      %p528 = por %p526, %p527
      %p529 = scmp.ne.s32.totalorder %s518, %s521
      %p530 = scmp.eq.s32.totalorder %s78, 7
      %p531 = por %p529, %p530
      %p532 = scmp.ne.s32.totalorder %s521, %s522
      %p533 = scmp.eq.s32.totalorder %s78, 0
      %p534 = por %p532, %p533
      %p535 = scmp.ne.s32.totalorder %s521, %s522
      %p536 = scmp.eq.s32.totalorder %s79, 7
      %p537 = por %p535, %p536
      %p539 = scmp.ne.s32.totalorder %s522, %s538
      %p540 = scmp.eq.s32.totalorder %s79, 0
      %p541 = por %p539, %p540
      %s542 = ssub.s32 %s81, %s88
      %p543 = scmp.eq.s32.totalorder %s542, 0
      %s545 = sadd.s32 %s544, 1
      %s546 = scalar_select %p543, %s544, %s545
      %p549 = pneg %p543
      %p550 = scmp.eq.s32.totalorder %s73, 7
      %p551 = por %p549, %p550
      %p552 = scmp.ne.s32.totalorder %s544, %s547
      %p553 = scmp.eq.s32.totalorder %s73, 0
      %p554 = por %p552, %p553
      %p555 = scmp.ne.s32.totalorder %s544, %s547
      %p556 = scmp.eq.s32.totalorder %s78, 7
      %p557 = por %p555, %p556
      %p558 = scmp.ne.s32.totalorder %s547, %s548
      %p559 = scmp.eq.s32.totalorder %s78, 0
      %p560 = por %p558, %p559
      %p561 = scmp.ne.s32.totalorder %s547, %s548
      %p562 = scmp.eq.s32.totalorder %s79, 7
      %p563 = por %p561, %p562
      %p565 = scmp.ne.s32.totalorder %s548, %s564
      %p566 = scmp.eq.s32.totalorder %s79, 0
      %p567 = por %p565, %p566
      %s568 = ssub.s32 %s81, %s88
      %p569 = scmp.eq.s32.totalorder %s568, 0
      %s571 = sadd.s32 %s570, 1
      %s572 = scalar_select %p569, %s570, %s571
      %p575 = pneg %p569
      %p576 = scmp.eq.s32.totalorder %s73, 7
      %p577 = por %p575, %p576
      %p578 = scmp.ne.s32.totalorder %s570, %s573
      %p579 = scmp.eq.s32.totalorder %s73, 0
      %p580 = por %p578, %p579
      %p581 = scmp.ne.s32.totalorder %s570, %s573
      %p582 = scmp.eq.s32.totalorder %s78, 7
      %p583 = por %p581, %p582
      %p584 = scmp.ne.s32.totalorder %s573, %s574
      %p585 = scmp.eq.s32.totalorder %s78, 0
      %p586 = por %p584, %p585
      %p587 = scmp.ne.s32.totalorder %s573, %s574
      %p588 = scmp.eq.s32.totalorder %s79, 7
      %p589 = por %p587, %p588
      %p591 = scmp.ne.s32.totalorder %s574, %s590
      %p592 = scmp.eq.s32.totalorder %s79, 0
      %p593 = por %p591, %p592
      %s594 = ssub.s32 %s81, %s88
      %p595 = scmp.eq.s32.totalorder %s594, 0
      %s597 = sadd.s32 %s596, 1
      %s598 = scalar_select %p595, %s596, %s597
      %p601 = pneg %p595
      %p602 = scmp.eq.s32.totalorder %s73, 7
      %p603 = por %p601, %p602
      %p604 = scmp.ne.s32.totalorder %s596, %s599
      %p605 = scmp.eq.s32.totalorder %s73, 0
      %p606 = por %p604, %p605
      %p607 = scmp.ne.s32.totalorder %s596, %s599
      %p608 = scmp.eq.s32.totalorder %s78, 7
      %p609 = por %p607, %p608
      %p610 = scmp.ne.s32.totalorder %s599, %s600
      %p611 = scmp.eq.s32.totalorder %s78, 0
      %p612 = por %p610, %p611
      %p613 = scmp.ne.s32.totalorder %s599, %s600
      %p614 = scmp.eq.s32.totalorder %s79, 7
      %p615 = por %p613, %p614
      %p617 = scmp.ne.s32.totalorder %s600, %s616
      %p618 = scmp.eq.s32.totalorder %s79, 0
      %p619 = por %p617, %p618
      %s621 = sadd.s32 %s620, 1
      %p624 = scmp.eq.s32.totalorder %s73, 7
      %p625 = scmp.ne.s32.totalorder %s620, %s622
      %p626 = scmp.eq.s32.totalorder %s73, 0
      %p627 = por %p625, %p626
      %p628 = scmp.ne.s32.totalorder %s620, %s622
      %p629 = scmp.eq.s32.totalorder %s78, 7
      %p630 = por %p628, %p629
      %p631 = scmp.ne.s32.totalorder %s622, %s623
      %p632 = scmp.eq.s32.totalorder %s78, 0
      %p633 = por %p631, %p632
      %p634 = scmp.ne.s32.totalorder %s622, %s623
      %p635 = scmp.eq.s32.totalorder %s79, 7
      %p636 = por %p634, %p635
      %p638 = scmp.ne.s32.totalorder %s623, %s637
      %p639 = scmp.eq.s32.totalorder %s79, 0
      %p640 = por %p638, %p639
      %s642 = sadd.s32 %s641, 1
      %p645 = scmp.eq.s32.totalorder %s73, 7
      %p646 = scmp.ne.s32.totalorder %s641, %s643
      %p647 = scmp.eq.s32.totalorder %s73, 0
      %p648 = por %p646, %p647
      %p649 = scmp.ne.s32.totalorder %s641, %s643
      %p650 = scmp.eq.s32.totalorder %s78, 7
      %p651 = por %p649, %p650
      %p652 = scmp.ne.s32.totalorder %s643, %s644
      %p653 = scmp.eq.s32.totalorder %s78, 0
      %p654 = por %p652, %p653
      %p655 = scmp.ne.s32.totalorder %s643, %s644
      %p656 = scmp.eq.s32.totalorder %s79, 7
      %p657 = por %p655, %p656
      %p659 = scmp.ne.s32.totalorder %s644, %s658
      %p660 = scmp.eq.s32.totalorder %s79, 0
      %p661 = por %p659, %p660
      %s663 = sadd.s32 %s662, 1
      %p666 = scmp.eq.s32.totalorder %s73, 7
      %p667 = scmp.ne.s32.totalorder %s662, %s664
      %p668 = scmp.eq.s32.totalorder %s73, 0
      %p669 = por %p667, %p668
      %p670 = scmp.ne.s32.totalorder %s662, %s664
      %p671 = scmp.eq.s32.totalorder %s78, 7
      %p672 = por %p670, %p671
      %p673 = scmp.ne.s32.totalorder %s664, %s665
      %p674 = scmp.eq.s32.totalorder %s78, 0
      %p675 = por %p673, %p674
      %p676 = scmp.ne.s32.totalorder %s664, %s665
      %p677 = scmp.eq.s32.totalorder %s79, 7
      %p678 = por %p676, %p677
      %p680 = scmp.ne.s32.totalorder %s665, %s679
      %p681 = scmp.eq.s32.totalorder %s79, 0
      %p682 = por %p680, %p681
      %s684 = sadd.s32 %s683, 1
      %p687 = scmp.eq.s32.totalorder %s73, 7
      %p688 = scmp.ne.s32.totalorder %s683, %s685
      %p689 = scmp.eq.s32.totalorder %s73, 0
      %p690 = por %p688, %p689
      %p691 = scmp.ne.s32.totalorder %s683, %s685
      %p692 = scmp.eq.s32.totalorder %s78, 7
      %p693 = por %p691, %p692
      %p694 = scmp.ne.s32.totalorder %s685, %s686
      %p695 = scmp.eq.s32.totalorder %s78, 0
      %p696 = por %p694, %p695
      %p697 = scmp.ne.s32.totalorder %s685, %s686
      %p698 = scmp.eq.s32.totalorder %s79, 7
      %p699 = por %p697, %p698
      %p701 = scmp.ne.s32.totalorder %s686, %s700
      %p702 = scmp.eq.s32.totalorder %s79, 0
      %p703 = por %p701, %p702
      %s705 = sadd.s32 %s704, 1
      %p708 = scmp.eq.s32.totalorder %s73, 7
      %p709 = scmp.ne.s32.totalorder %s704, %s706
      %p710 = scmp.eq.s32.totalorder %s73, 0
      %p711 = por %p709, %p710
      %p712 = scmp.ne.s32.totalorder %s704, %s706
      %p713 = scmp.eq.s32.totalorder %s78, 7
      %p714 = por %p712, %p713
      %p715 = scmp.ne.s32.totalorder %s706, %s707
      %p716 = scmp.eq.s32.totalorder %s78, 0
      %p717 = por %p715, %p716
      %p718 = scmp.ne.s32.totalorder %s706, %s707
      %p719 = scmp.eq.s32.totalorder %s79, 7
      %p720 = por %p718, %p719
      %p722 = scmp.ne.s32.totalorder %s707, %s721
      %p723 = scmp.eq.s32.totalorder %s79, 0
      %p724 = por %p722, %p723
      %s726 = sadd.s32 %s725, 1
      %p729 = scmp.eq.s32.totalorder %s73, 7
      %p730 = scmp.ne.s32.totalorder %s725, %s727
      %p731 = scmp.eq.s32.totalorder %s73, 0
      %p732 = por %p730, %p731
      %p733 = scmp.ne.s32.totalorder %s725, %s727
      %p734 = scmp.eq.s32.totalorder %s78, 7
      %p735 = por %p733, %p734
      %p736 = scmp.ne.s32.totalorder %s727, %s728
      %p737 = scmp.eq.s32.totalorder %s78, 0
      %p738 = por %p736, %p737
      %p739 = scmp.ne.s32.totalorder %s727, %s728
      %p740 = scmp.eq.s32.totalorder %s79, 7
      %p741 = por %p739, %p740
      %p743 = scmp.ne.s32.totalorder %s728, %s742
      %p744 = scmp.eq.s32.totalorder %s79, 0
      %p745 = por %p743, %p744
      %s747 = sadd.s32 %s746, 1
      %p750 = scmp.eq.s32.totalorder %s73, 7
      %p751 = scmp.ne.s32.totalorder %s746, %s748
      %p752 = scmp.eq.s32.totalorder %s73, 0
      %p753 = por %p751, %p752
      %p754 = scmp.ne.s32.totalorder %s746, %s748
      %p755 = scmp.eq.s32.totalorder %s78, 7
      %p756 = por %p754, %p755
      %p757 = scmp.ne.s32.totalorder %s748, %s749
      %p758 = scmp.eq.s32.totalorder %s78, 0
      %p759 = por %p757, %p758
      %p760 = scmp.ne.s32.totalorder %s748, %s749
      %p761 = scmp.eq.s32.totalorder %s79, 7
      %p762 = por %p760, %p761
      %p764 = scmp.ne.s32.totalorder %s749, %s763
      %p765 = scmp.eq.s32.totalorder %s79, 0
      %p766 = por %p764, %p765
      %s768 = sadd.s32 %s767, 1
      %p771 = scmp.eq.s32.totalorder %s73, 7
      %p772 = scmp.ne.s32.totalorder %s767, %s769
      %p773 = scmp.eq.s32.totalorder %s73, 0
      %p774 = por %p772, %p773
      %p775 = scmp.ne.s32.totalorder %s767, %s769
      %p776 = scmp.eq.s32.totalorder %s78, 7
      %p777 = por %p775, %p776
      %p778 = scmp.ne.s32.totalorder %s769, %s770
      %p779 = scmp.eq.s32.totalorder %s78, 0
      %p780 = por %p778, %p779
      %p781 = scmp.ne.s32.totalorder %s769, %s770
      %p782 = scmp.eq.s32.totalorder %s79, 7
      %p783 = por %p781, %p782
      %p785 = scmp.ne.s32.totalorder %s770, %s784
      %p786 = scmp.eq.s32.totalorder %s79, 0
      %p787 = por %p785, %p786
      %s788 = ssub.s32 %s80, %s92
      %p789 = scmp.eq.s32.totalorder %s788, 0
      %s791 = sadd.s32 %s790, 1
      %s792 = scalar_select %p789, %s790, %s791
      %p795 = pneg %p789
      %p796 = scmp.eq.s32.totalorder %s73, 7
      %p797 = por %p795, %p796
      %p798 = scmp.ne.s32.totalorder %s790, %s793
      %p799 = scmp.eq.s32.totalorder %s73, 0
      %p800 = por %p798, %p799
      %p801 = scmp.ne.s32.totalorder %s790, %s793
      %p802 = scmp.eq.s32.totalorder %s78, 7
      %p803 = por %p801, %p802
      %p804 = scmp.ne.s32.totalorder %s793, %s794
      %p805 = scmp.eq.s32.totalorder %s78, 0
      %p806 = por %p804, %p805
      %p807 = scmp.ne.s32.totalorder %s793, %s794
      %p808 = scmp.eq.s32.totalorder %s79, 7
      %p809 = por %p807, %p808
      %p811 = scmp.ne.s32.totalorder %s794, %s810
      %p812 = scmp.eq.s32.totalorder %s79, 0
      %p813 = por %p811, %p812
      %p814 = scmp.le.s32.totalorder 1, %s73
      %p815 = scmp.lt.s32.totalorder %s73, 9
      %p816 = pnand %p814, %p815
      %p817 = pneg %p816
      // Predicated region
      $region9: #{two_stage_forward.1} parent=5 // pred_check
        _
      $region10: #{two_stage_forward.1} parent=5 // pred_check_branch
        %819 = sbr.rel (%p816) target = $region12
      $region11: #{two_stage_forward.1} parent=5 // pred_region
        %s820 = ssub.s32 %s73, 1
        // Predicated region
        $region13: #{two_stage_forward.1} parent=11 // pred_check
          %p821 = pneg %p132
        $region14: #{two_stage_forward.1} parent=11 // pred_check_branch
          %823 = sbr.rel (%p821) target = $region16
        $region15: #{two_stage_forward.1} parent=11 // pred_region
          %825 = vsyncadd [#allocation5], 0
          %s826 = sshll.u32 %s3, 4
          %s827 = int_to_ptr.hbm [resolvable:$true] %s826
          %s828 = sshll.u32 [#allocation4], 4
          %s829 = int_to_ptr.vmem [resolvable:$true] %s828
          %834 = dma.hbm_to_vmem [thread:$0]  %s827, 128, %s829, [#allocation5], 64, 64, 4
        $region16: #{two_stage_forward.1} parent=11 // pred_fallthru
          _
        // Predicated region
        $region17: #{two_stage_forward.1} parent=11 // pred_check
          %p835 = pneg %p153
        $region18: #{two_stage_forward.1} parent=11 // pred_check_branch
          %837 = sbr.rel (%p835) target = $region20
        $region19: #{two_stage_forward.1} parent=11 // pred_region
          %839 = vsyncadd [#allocation7], 0
          %s841 = sshll.u32 %s5, 4
          %s842 = int_to_ptr.hbm [resolvable:$true] %s841
          %s843 = sshll.u32 [#allocation6], 4
          %s844 = int_to_ptr.vmem [resolvable:$true] %s843
          %846 = dma.hbm_to_vmem [thread:$0]  %s842, 16, %s844, [#allocation7]
        $region20: #{two_stage_forward.1} parent=11 // pred_fallthru
          _
        // Predicated region
        $region21: #{two_stage_forward.1} parent=11 // pred_check
          %p847 = pneg %p174
        $region22: #{two_stage_forward.1} parent=11 // pred_check_branch
          %849 = sbr.rel (%p847) target = $region24
        $region23: #{two_stage_forward.1} parent=11 // pred_region
          _
        $region24: #{two_stage_forward.1} parent=11 // pred_fallthru
          _
        // Predicated region
        $region25: #{two_stage_forward.1} parent=11 // pred_check
          %p850 = pneg %p195
        $region26: #{two_stage_forward.1} parent=11 // pred_check_branch
          %852 = sbr.rel (%p850) target = $region28
        $region27: #{two_stage_forward.1} parent=11 // pred_region
          %854 = vsyncadd [#allocation7], 0
          %s856 = sshll.u32 %s9, 4
          %s857 = int_to_ptr.hbm [resolvable:$true] %s856
          %s858 = sshll.u32 [#allocation8], 4
          %s859 = int_to_ptr.vmem [resolvable:$true] %s858
          %861 = dma.hbm_to_vmem [thread:$0]  %s857, 16, %s859, [#allocation7]
        $region28: #{two_stage_forward.1} parent=11 // pred_fallthru
          _
        // Predicated region
        $region29: #{two_stage_forward.1} parent=11 // pred_check
          %p862 = pneg %p216
        $region30: #{two_stage_forward.1} parent=11 // pred_check_branch
          %864 = sbr.rel (%p862) target = $region32
        $region31: #{two_stage_forward.1} parent=11 // pred_region
          %866 = vsyncadd [#allocation10], 0
          %s867 = sshll.u32 %s11, 4
          %s868 = int_to_ptr.hbm [resolvable:$true] %s867
          %s869 = sshll.u32 [#allocation9], 4
          %s870 = int_to_ptr.vmem [resolvable:$true] %s869
          %875 = dma.hbm_to_vmem [thread:$0]  %s868, 1024, %s870, [#allocation10], 64, 64, 4
        $region32: #{two_stage_forward.1} parent=11 // pred_fallthru
          _
        // Predicated region
        $region33: #{two_stage_forward.1} parent=11 // pred_check
          %p876 = pneg %p237
        $region34: #{two_stage_forward.1} parent=11 // pred_check_branch
          %878 = sbr.rel (%p876) target = $region36
        $region35: #{two_stage_forward.1} parent=11 // pred_region
          %880 = vsyncadd [#allocation10], 0
          %s882 = sshll.u32 %s13, 4
          %s883 = int_to_ptr.hbm [resolvable:$true] %s882
          %s884 = sshll.u32 [#allocation11], 4
          %s885 = int_to_ptr.vmem [resolvable:$true] %s884
          %887 = dma.hbm_to_vmem [thread:$0]  %s883, 16, %s885, [#allocation10]
        $region36: #{two_stage_forward.1} parent=11 // pred_fallthru
          _
        // Predicated region
        $region37: #{two_stage_forward.1} parent=11 // pred_check
          %p888 = pneg %p258
        $region38: #{two_stage_forward.1} parent=11 // pred_check_branch
          %890 = sbr.rel (%p888) target = $region40
        $region39: #{two_stage_forward.1} parent=11 // pred_region
          %892 = vsyncadd [#allocation13], 0
          %s894 = sshll.u32 %s15, 4
          %s895 = int_to_ptr.hbm [resolvable:$true] %s894
          %s896 = sshll.u32 [#allocation12], 4
          %s897 = int_to_ptr.vmem [resolvable:$true] %s896
          %899 = dma.hbm_to_vmem [thread:$0]  %s895, 16, %s897, [#allocation13]
        $region40: #{two_stage_forward.1} parent=11 // pred_fallthru
          _
        // Predicated region
        $region41: #{two_stage_forward.1} parent=11 // pred_check
          %p900 = pneg %p279
        $region42: #{two_stage_forward.1} parent=11 // pred_check_branch
          %902 = sbr.rel (%p900) target = $region44
        $region43: #{two_stage_forward.1} parent=11 // pred_region
          %904 = vsyncadd [#allocation13], 0
          %s906 = sshll.u32 %s17, 4
          %s907 = int_to_ptr.hbm [resolvable:$true] %s906
          %s908 = sshll.u32 [#allocation14], 4
          %s909 = int_to_ptr.vmem [resolvable:$true] %s908
          %911 = dma.hbm_to_vmem [thread:$0]  %s907, 16, %s909, [#allocation13]
        $region44: #{two_stage_forward.1} parent=11 // pred_fallthru
          _
        // Predicated region
        $region45: #{two_stage_forward.1} parent=11 // pred_check
          %p912 = pneg %p300
        $region46: #{two_stage_forward.1} parent=11 // pred_check_branch
          %914 = sbr.rel (%p912) target = $region48
        $region47: #{two_stage_forward.1} parent=11 // pred_region
          %916 = vsyncadd [#allocation16], 0
          %s918 = sshll.u32 %s19, 4
          %s919 = int_to_ptr.hbm [resolvable:$true] %s918
          %s920 = sshll.u32 [#allocation15], 4
          %s921 = int_to_ptr.vmem [resolvable:$true] %s920
          %923 = dma.hbm_to_vmem [thread:$0]  %s919, 128, %s921, [#allocation16]
        $region48: #{two_stage_forward.1} parent=11 // pred_fallthru
          _
        // Predicated region
        $region49: #{two_stage_forward.1} parent=11 // pred_check
          %p924 = pneg %p633
        $region50: #{two_stage_forward.1} parent=11 // pred_check_branch
          %926 = sbr.rel (%p924) target = $region52
        $region51: #{two_stage_forward.1} parent=11 // pred_region
          %928 = vsyncadd [#allocation7], 0
          %s930 = sshll.u32 %s45, 4
          %s931 = int_to_ptr.hbm [resolvable:$true] %s930
          %s932 = sshll.u32 [#allocation26], 4
          %s933 = int_to_ptr.vmem [resolvable:$true] %s932
          %935 = dma.hbm_to_vmem [thread:$0]  %s931, 16, %s933, [#allocation7]
        $region52: #{two_stage_forward.1} parent=11 // pred_fallthru
          _
        // Predicated region
        $region53: #{two_stage_forward.1} parent=11 // pred_check
          %p936 = pneg %p654
        $region54: #{two_stage_forward.1} parent=11 // pred_check_branch
          %938 = sbr.rel (%p936) target = $region56
        $region55: #{two_stage_forward.1} parent=11 // pred_region
          %940 = vsyncadd [#allocation10], 0
          %s942 = sshll.u32 %s47, 4
          %s943 = int_to_ptr.hbm [resolvable:$true] %s942
          %s944 = sshll.u32 [#allocation27], 4
          %s945 = int_to_ptr.vmem [resolvable:$true] %s944
          %947 = dma.hbm_to_vmem [thread:$0]  %s943, 16, %s945, [#allocation10]
        $region56: #{two_stage_forward.1} parent=11 // pred_fallthru
          _
        // Predicated region
        $region57: #{two_stage_forward.1} parent=11 // pred_check
          %p948 = pneg %p675
        $region58: #{two_stage_forward.1} parent=11 // pred_check_branch
          %950 = sbr.rel (%p948) target = $region60
        $region59: #{two_stage_forward.1} parent=11 // pred_region
          _
        $region60: #{two_stage_forward.1} parent=11 // pred_fallthru
          _
        // Predicated region
        $region61: #{two_stage_forward.1} parent=11 // pred_check
          %p951 = pneg %p696
        $region62: #{two_stage_forward.1} parent=11 // pred_check_branch
          %953 = sbr.rel (%p951) target = $region64
        $region63: #{two_stage_forward.1} parent=11 // pred_region
          _
        $region64: #{two_stage_forward.1} parent=11 // pred_fallthru
          _
        // Predicated region
        $region65: #{two_stage_forward.1} parent=11 // pred_check
          %p954 = pneg %p717
        $region66: #{two_stage_forward.1} parent=11 // pred_check_branch
          %956 = sbr.rel (%p954) target = $region68
        $region67: #{two_stage_forward.1} parent=11 // pred_region
          %958 = vsyncadd [#allocation13], 0
          %s960 = sshll.u32 %s53, 4
          %s961 = int_to_ptr.hbm [resolvable:$true] %s960
          %s962 = sshll.u32 [#allocation28], 4
          %s963 = int_to_ptr.vmem [resolvable:$true] %s962
          %965 = dma.hbm_to_vmem [thread:$0]  %s961, 32, %s963, [#allocation13]
        $region68: #{two_stage_forward.1} parent=11 // pred_fallthru
          _
        // Predicated region
        $region69: #{two_stage_forward.1} parent=11 // pred_check
          %p966 = pneg %p738
        $region70: #{two_stage_forward.1} parent=11 // pred_check_branch
          %968 = sbr.rel (%p966) target = $region72
        $region71: #{two_stage_forward.1} parent=11 // pred_region
          %970 = vsyncadd [#allocation16], 0
          %s972 = sshll.u32 %s55, 4
          %s973 = int_to_ptr.hbm [resolvable:$true] %s972
          %s974 = sshll.u32 [#allocation29], 4
          %s975 = int_to_ptr.vmem [resolvable:$true] %s974
          %977 = dma.hbm_to_vmem [thread:$0]  %s973, 32, %s975, [#allocation16]
        $region72: #{two_stage_forward.1} parent=11 // pred_fallthru
          _
        // Predicated region
        $region73: #{two_stage_forward.1} parent=11 // pred_check
          %p978 = pneg %p759
        $region74: #{two_stage_forward.1} parent=11 // pred_check_branch
          %980 = sbr.rel (%p978) target = $region76
        $region75: #{two_stage_forward.1} parent=11 // pred_region
          _
        $region76: #{two_stage_forward.1} parent=11 // pred_fallthru
          _
        // Predicated region
        $region77: #{two_stage_forward.1} parent=11 // pred_check
          %p981 = pneg %p780
        $region78: #{two_stage_forward.1} parent=11 // pred_check_branch
          %983 = sbr.rel (%p981) target = $region80
        $region79: #{two_stage_forward.1} parent=11 // pred_region
          %985 = vsyncadd [#allocation31], 0
          %s987 = sshll.u32 %s59, 4
          %s988 = int_to_ptr.hbm [resolvable:$true] %s987
          %s989 = sshll.u32 [#allocation30], 4
          %s990 = int_to_ptr.vmem [resolvable:$true] %s989
          %992 = dma.hbm_to_vmem [thread:$0]  %s988, 16, %s990, [#allocation31]
        $region80: #{two_stage_forward.1} parent=11 // pred_fallthru
          _
      $region12: #{two_stage_forward.1} parent=5 // pred_fallthru
        _
      %p993 = scmp.lt.s32.totalorder %s73, 8
      // Predicated region
      $region81: #{two_stage_forward.1} parent=5 // pred_check
        %p994 = pneg %p993
      $region82: #{two_stage_forward.1} parent=5 // pred_check_branch
        %996 = sbr.rel (%p994) target = $region84
      $region83: #{two_stage_forward.1} parent=5 // pred_region
        // Predicated region
        $region85: #{two_stage_forward.1} parent=83 // pred_check
          %p997 = pneg %p105
        $region86: #{two_stage_forward.1} parent=83 // pred_check_branch
          %999 = sbr.rel (%p997) target = $region88
        $region87: #{two_stage_forward.1} parent=83 // pred_region
          %s1000 = smul.u32 16, %s80
          %p1001 = scmp.lt.s32.totalorder %s1000, 31
          %s1002 = scalar_select %p1001, %s1000, 31
          %s1003 = smul.addr %s1002, 8
          %s1004 = scalar_lea.vmem %s1, %s1003
          %s1005 = smul.u32 16, %s80
        $region88: #{two_stage_forward.1} parent=83 // pred_fallthru
          _
        // Predicated region
        $region89: #{two_stage_forward.1} parent=83 // pred_check
          %p1006 = pneg %p320
        $region90: #{two_stage_forward.1} parent=83 // pred_check_branch
          %1008 = sbr.rel (%p1006) target = $region92
        $region91: #{two_stage_forward.1} parent=83 // pred_region
          %s1009 = sand.u32 %s73, 1
          %s1010 = scalar_lea.sflag [#allocation5], %s1009
          %s1011 = sand.u32 %s310, 1
          %s1012 = smul.addr %s1011, 192
          %s1013 = scalar_lea.vmem [#allocation17], %s1012
          %1015 = vsyncadd %s1010, 0
          %s1016 = smul.addr %s81, 48
          %s1017 = smul.addr %s1016, 4
          %s1018 = scalar_lea.hbm %s21, %s1017
          %s1019 = sshll.u32 %s1018, 4
          %s1020 = int_to_ptr.hbm [resolvable:$true] %s1019
          %s1021 = sshll.u32 %s1013, 4
          %s1022 = int_to_ptr.vmem [resolvable:$true] %s1021
          %1027 = dma.hbm_to_vmem [thread:$0]  %s1020, 3072, %s1022, %s1010, 192, 192, 12
        $region92: #{two_stage_forward.1} parent=83 // pred_fallthru
          _
        // Predicated region
        $region93: #{two_stage_forward.1} parent=83 // pred_check
          %p1028 = pneg %p346
        $region94: #{two_stage_forward.1} parent=83 // pred_check_branch
          %1030 = sbr.rel (%p1028) target = $region96
        $region95: #{two_stage_forward.1} parent=83 // pred_region
          %p1031 = scmp.lt.s32.totalorder %s81, 3
          %s1032 = scalar_select %p1031, %s81, 3
          %s1033 = smul.addr %s1032, 3
          %s1034 = scalar_lea.vmem %s23, %s1033
        $region96: #{two_stage_forward.1} parent=83 // pred_fallthru
          _
        // Predicated region
        $region97: #{two_stage_forward.1} parent=83 // pred_check
          %p1035 = pneg %p372
        $region98: #{two_stage_forward.1} parent=83 // pred_check_branch
          %1037 = sbr.rel (%p1035) target = $region100
        $region99: #{two_stage_forward.1} parent=83 // pred_region
          %s1038 = sand.u32 %s73, 1
          %s1039 = scalar_lea.sflag [#allocation5], %s1038
          %s1040 = sand.u32 %s362, 1
          %s1041 = smul.addr %s1040, 64
          %s1042 = scalar_lea.vmem [#allocation18], %s1041
          %1044 = vsyncadd %s1039, 0
          %s1045 = smul.addr %s81, 16
          %s1046 = smul.addr %s1045, 4
          %s1047 = scalar_lea.hbm %s25, %s1046
          %s1048 = sshll.u32 %s1047, 4
          %s1049 = int_to_ptr.hbm [resolvable:$true] %s1048
          %s1050 = sshll.u32 %s1042, 4
          %s1051 = int_to_ptr.vmem [resolvable:$true] %s1050
          %1056 = dma.hbm_to_vmem [thread:$0]  %s1049, 1024, %s1051, %s1039, 64, 64, 4
        $region100: #{two_stage_forward.1} parent=83 // pred_fallthru
          _
        // Predicated region
        $region101: #{two_stage_forward.1} parent=83 // pred_check
          %p1057 = pneg %p398
        $region102: #{two_stage_forward.1} parent=83 // pred_check_branch
          %1059 = sbr.rel (%p1057) target = $region104
        $region103: #{two_stage_forward.1} parent=83 // pred_region
          %s1060 = sand.u32 %s73, 1
          %s1061 = scalar_lea.sflag [#allocation5], %s1060
          %s1062 = sand.u32 %s388, 1
          %s1063 = scalar_lea.vmem [#allocation19], %s1062
          %1065 = vsyncadd %s1061, 0
          %s1066 = scalar_lea.hbm %s27, %s81
          %s1068 = sshll.u32 %s1066, 4
          %s1069 = int_to_ptr.hbm [resolvable:$true] %s1068
          %s1070 = sshll.u32 %s1063, 4
          %s1071 = int_to_ptr.vmem [resolvable:$true] %s1070
          %1073 = dma.hbm_to_vmem [thread:$0]  %s1069, 16, %s1071, %s1061
        $region104: #{two_stage_forward.1} parent=83 // pred_fallthru
          _
        // Predicated region
        $region105: #{two_stage_forward.1} parent=83 // pred_check
          %p1074 = pneg %p424
        $region106: #{two_stage_forward.1} parent=83 // pred_check_branch
          %1076 = sbr.rel (%p1074) target = $region108
        $region107: #{two_stage_forward.1} parent=83 // pred_region
          %s1077 = sand.u32 %s73, 1
          %s1078 = scalar_lea.sflag [#allocation5], %s1077
          %s1079 = sand.u32 %s414, 1
          %s1080 = scalar_lea.vmem [#allocation20], %s1079
          %1082 = vsyncadd %s1078, 0
          %s1083 = scalar_lea.hbm %s29, %s81
          %s1085 = sshll.u32 %s1083, 4
          %s1086 = int_to_ptr.hbm [resolvable:$true] %s1085
          %s1087 = sshll.u32 %s1080, 4
          %s1088 = int_to_ptr.vmem [resolvable:$true] %s1087
          %1090 = dma.hbm_to_vmem [thread:$0]  %s1086, 16, %s1088, %s1078
        $region108: #{two_stage_forward.1} parent=83 // pred_fallthru
          _
        // Predicated region
        $region109: #{two_stage_forward.1} parent=83 // pred_check
          %p1091 = pneg %p450
        $region110: #{two_stage_forward.1} parent=83 // pred_check_branch
          %1093 = sbr.rel (%p1091) target = $region112
        $region111: #{two_stage_forward.1} parent=83 // pred_region
          %p1094 = scmp.lt.s32.totalorder %s81, 3
          %s1095 = scalar_select %p1094, %s81, 3
          %s1096 = scalar_lea.vmem %s31, %s1095
        $region112: #{two_stage_forward.1} parent=83 // pred_fallthru
          _
        // Predicated region
        $region113: #{two_stage_forward.1} parent=83 // pred_check
          %p1097 = pneg %p476
        $region114: #{two_stage_forward.1} parent=83 // pred_check_branch
          %1099 = sbr.rel (%p1097) target = $region116
        $region115: #{two_stage_forward.1} parent=83 // pred_region
          %s1100 = sand.u32 %s73, 1
          %s1101 = scalar_lea.sflag [#allocation5], %s1100
          %s1102 = sand.u32 %s466, 1
          %s1103 = smul.addr %s1102, 256
          %s1104 = scalar_lea.vmem [#allocation21], %s1103
          %1106 = vsyncadd %s1101, 0
          %s1107 = smul.addr %s81, 64
          %s1108 = smul.addr %s1107, 4
          %s1109 = scalar_lea.hbm %s33, %s1108
          %s1110 = sshll.u32 %s1109, 4
          %s1111 = int_to_ptr.hbm [resolvable:$true] %s1110
          %s1112 = sshll.u32 %s1104, 4
          %s1113 = int_to_ptr.vmem [resolvable:$true] %s1112
          %1118 = dma.hbm_to_vmem [thread:$0]  %s1111, 4096, %s1113, %s1101, 256, 256, 16
        $region116: #{two_stage_forward.1} parent=83 // pred_fallthru
          _
        // Predicated region
        $region117: #{two_stage_forward.1} parent=83 // pred_check
          %p1119 = pneg %p502
        $region118: #{two_stage_forward.1} parent=83 // pred_check_branch
          %1121 = sbr.rel (%p1119) target = $region120
        $region119: #{two_stage_forward.1} parent=83 // pred_region
          %p1122 = scmp.lt.s32.totalorder %s81, 3
          %s1123 = scalar_select %p1122, %s81, 3
          %s1124 = smul.addr %s1123, 4
          %s1125 = scalar_lea.vmem %s35, %s1124
        $region120: #{two_stage_forward.1} parent=83 // pred_fallthru
          _
        // Predicated region
        $region121: #{two_stage_forward.1} parent=83 // pred_check
          %p1126 = pneg %p528
        $region122: #{two_stage_forward.1} parent=83 // pred_check_branch
          %1128 = sbr.rel (%p1126) target = $region124
        $region123: #{two_stage_forward.1} parent=83 // pred_region
          %s1129 = sand.u32 %s73, 1
          %s1130 = scalar_lea.sflag [#allocation5], %s1129
          %s1131 = sand.u32 %s518, 1
          %s1132 = smul.addr %s1131, 256
          %s1133 = scalar_lea.vmem [#allocation22], %s1132
          %1135 = vsyncadd %s1130, 0
          %s1136 = smul.addr %s81, 64
          %s1137 = smul.addr %s1136, 4
          %s1138 = scalar_lea.hbm %s37, %s1137
          %s1139 = sshll.u32 %s1138, 4
          %s1140 = int_to_ptr.hbm [resolvable:$true] %s1139
          %s1141 = sshll.u32 %s1133, 4
          %s1142 = int_to_ptr.vmem [resolvable:$true] %s1141
          %1147 = dma.hbm_to_vmem [thread:$0]  %s1140, 4096, %s1142, %s1130, 64, 64, 4
        $region124: #{two_stage_forward.1} parent=83 // pred_fallthru
          _
        // Predicated region
        $region125: #{two_stage_forward.1} parent=83 // pred_check
          %p1148 = pneg %p554
        $region126: #{two_stage_forward.1} parent=83 // pred_check_branch
          %1150 = sbr.rel (%p1148) target = $region128
        $region127: #{two_stage_forward.1} parent=83 // pred_region
          %s1151 = sand.u32 %s73, 1
          %s1152 = scalar_lea.sflag [#allocation5], %s1151
          %s1153 = sand.u32 %s544, 1
          %s1154 = scalar_lea.vmem [#allocation23], %s1153
          %1156 = vsyncadd %s1152, 0
          %s1157 = scalar_lea.hbm %s39, %s81
          %s1159 = sshll.u32 %s1157, 4
          %s1160 = int_to_ptr.hbm [resolvable:$true] %s1159
          %s1161 = sshll.u32 %s1154, 4
          %s1162 = int_to_ptr.vmem [resolvable:$true] %s1161
          %1164 = dma.hbm_to_vmem [thread:$0]  %s1160, 16, %s1162, %s1152
        $region128: #{two_stage_forward.1} parent=83 // pred_fallthru
          _
        // Predicated region
        $region129: #{two_stage_forward.1} parent=83 // pred_check
          %p1165 = pneg %p580
        $region130: #{two_stage_forward.1} parent=83 // pred_check_branch
          %1167 = sbr.rel (%p1165) target = $region132
        $region131: #{two_stage_forward.1} parent=83 // pred_region
          %s1168 = sand.u32 %s73, 1
          %s1169 = scalar_lea.sflag [#allocation5], %s1168
          %s1170 = sand.u32 %s570, 1
          %s1171 = scalar_lea.vmem [#allocation24], %s1170
          %1173 = vsyncadd %s1169, 0
          %s1174 = scalar_lea.hbm %s41, %s81
          %s1176 = sshll.u32 %s1174, 4
          %s1177 = int_to_ptr.hbm [resolvable:$true] %s1176
          %s1178 = sshll.u32 %s1171, 4
          %s1179 = int_to_ptr.vmem [resolvable:$true] %s1178
          %1181 = dma.hbm_to_vmem [thread:$0]  %s1177, 16, %s1179, %s1169
        $region132: #{two_stage_forward.1} parent=83 // pred_fallthru
          _
        // Predicated region
        $region133: #{two_stage_forward.1} parent=83 // pred_check
          %p1182 = pneg %p606
        $region134: #{two_stage_forward.1} parent=83 // pred_check_branch
          %1184 = sbr.rel (%p1182) target = $region136
        $region135: #{two_stage_forward.1} parent=83 // pred_region
          %s1185 = sand.u32 %s73, 1
          %s1186 = scalar_lea.sflag [#allocation5], %s1185
          %s1187 = sand.u32 %s596, 1
          %s1188 = scalar_lea.vmem [#allocation25], %s1187
          %1190 = vsyncadd %s1186, 0
          %s1191 = scalar_lea.hbm %s43, %s81
          %s1193 = sshll.u32 %s1191, 4
          %s1194 = int_to_ptr.hbm [resolvable:$true] %s1193
          %s1195 = sshll.u32 %s1188, 4
          %s1196 = int_to_ptr.vmem [resolvable:$true] %s1195
          %1198 = dma.hbm_to_vmem [thread:$0]  %s1194, 16, %s1196, %s1186
        $region136: #{two_stage_forward.1} parent=83 // pred_fallthru
          _
      $region84: #{two_stage_forward.1} parent=5 // pred_fallthru
        _
      %p1199 = scmp.le.s32.totalorder 1, %s73
      %p1200 = scmp.lt.s32.totalorder %s73, 9
      %p1201 = pnand %p1199, %p1200
      %p1202 = pneg %p1201
      // Predicated region
      $region137: #{two_stage_forward.1} parent=5 // pred_check
        _
      $region138: #{two_stage_forward.1} parent=5 // pred_check_branch
        %1204 = sbr.rel (%p1201) target = $region140
      $region139: #{two_stage_forward.1} parent=5 // pred_region
        %s1205 = ssub.s32 %s73, 1
        // Predicated region
        $region141: #{two_stage_forward.1} parent=139 // pred_check
          %p1206 = pneg %p132
        $region142: #{two_stage_forward.1} parent=139 // pred_check_branch
          %1208 = sbr.rel (%p1206) target = $region144
        $region143: #{two_stage_forward.1} parent=139 // pred_region
          %1210 = dma.done [#allocation5], 128
        $region144: #{two_stage_forward.1} parent=139 // pred_fallthru
          _
        // Predicated region
        $region145: #{two_stage_forward.1} parent=139 // pred_check
          %p1211 = pneg %p153
        $region146: #{two_stage_forward.1} parent=139 // pred_check_branch
          %1213 = sbr.rel (%p1211) target = $region148
        $region147: #{two_stage_forward.1} parent=139 // pred_region
          %1215 = dma.done [#allocation7], 16
        $region148: #{two_stage_forward.1} parent=139 // pred_fallthru
          _
        // Predicated region
        $region149: #{two_stage_forward.1} parent=139 // pred_check
          %p1216 = pneg %p195
        $region150: #{two_stage_forward.1} parent=139 // pred_check_branch
          %1218 = sbr.rel (%p1216) target = $region152
        $region151: #{two_stage_forward.1} parent=139 // pred_region
          %1220 = dma.done [#allocation7], 16
        $region152: #{two_stage_forward.1} parent=139 // pred_fallthru
          _
        // Predicated region
        $region153: #{two_stage_forward.1} parent=139 // pred_check
          %p1221 = pneg %p216
        $region154: #{two_stage_forward.1} parent=139 // pred_check_branch
          %1223 = sbr.rel (%p1221) target = $region156
        $region155: #{two_stage_forward.1} parent=139 // pred_region
          %1225 = dma.done [#allocation10], 1024
        $region156: #{two_stage_forward.1} parent=139 // pred_fallthru
          _
        // Predicated region
        $region157: #{two_stage_forward.1} parent=139 // pred_check
          %p1226 = pneg %p237
        $region158: #{two_stage_forward.1} parent=139 // pred_check_branch
          %1228 = sbr.rel (%p1226) target = $region160
        $region159: #{two_stage_forward.1} parent=139 // pred_region
          %1230 = dma.done [#allocation10], 16
        $region160: #{two_stage_forward.1} parent=139 // pred_fallthru
          _
        // Predicated region
        $region161: #{two_stage_forward.1} parent=139 // pred_check
          %p1231 = pneg %p258
        $region162: #{two_stage_forward.1} parent=139 // pred_check_branch
          %1233 = sbr.rel (%p1231) target = $region164
        $region163: #{two_stage_forward.1} parent=139 // pred_region
          %1235 = dma.done [#allocation13], 16
        $region164: #{two_stage_forward.1} parent=139 // pred_fallthru
          _
        // Predicated region
        $region165: #{two_stage_forward.1} parent=139 // pred_check
          %p1236 = pneg %p279
        $region166: #{two_stage_forward.1} parent=139 // pred_check_branch
          %1238 = sbr.rel (%p1236) target = $region168
        $region167: #{two_stage_forward.1} parent=139 // pred_region
          %1240 = dma.done [#allocation13], 16
        $region168: #{two_stage_forward.1} parent=139 // pred_fallthru
          _
        // Predicated region
        $region169: #{two_stage_forward.1} parent=139 // pred_check
          %p1241 = pneg %p300
        $region170: #{two_stage_forward.1} parent=139 // pred_check_branch
          %1243 = sbr.rel (%p1241) target = $region172
        $region171: #{two_stage_forward.1} parent=139 // pred_region
          %1245 = dma.done [#allocation16], 128
        $region172: #{two_stage_forward.1} parent=139 // pred_fallthru
          _
        %s1246 = sand.u32 %s78, 1
        %s1247 = scalar_lea.sflag [#allocation5], %s1246
        %s1248 = sand.u32 %s313, 1
        %s1249 = smul.addr %s1248, 192
        %s1250 = scalar_lea.vmem [#allocation17], %s1249
        // Predicated region
        $region173: #{two_stage_forward.1} parent=139 // pred_check
          %p1251 = pneg %p326
        $region174: #{two_stage_forward.1} parent=139 // pred_check_branch
          %1253 = sbr.rel (%p1251) target = $region176
        $region175: #{two_stage_forward.1} parent=139 // pred_region
          %1255 = dma.done %s1247, 3072
        $region176: #{two_stage_forward.1} parent=139 // pred_fallthru
          _
        %s1256 = sand.u32 %s78, 1
        %s1257 = scalar_lea.sflag [#allocation5], %s1256
        %s1258 = sand.u32 %s365, 1
        %s1259 = smul.addr %s1258, 64
        %s1260 = scalar_lea.vmem [#allocation18], %s1259
        // Predicated region
        $region177: #{two_stage_forward.1} parent=139 // pred_check
          %p1261 = pneg %p378
        $region178: #{two_stage_forward.1} parent=139 // pred_check_branch
          %1263 = sbr.rel (%p1261) target = $region180
        $region179: #{two_stage_forward.1} parent=139 // pred_region
          %1265 = dma.done %s1257, 1024
        $region180: #{two_stage_forward.1} parent=139 // pred_fallthru
          _
        %s1266 = sand.u32 %s78, 1
        %s1267 = scalar_lea.sflag [#allocation5], %s1266
        %s1268 = sand.u32 %s391, 1
        %s1269 = scalar_lea.vmem [#allocation19], %s1268
        // Predicated region
        $region181: #{two_stage_forward.1} parent=139 // pred_check
          %p1270 = pneg %p404
        $region182: #{two_stage_forward.1} parent=139 // pred_check_branch
          %1272 = sbr.rel (%p1270) target = $region184
        $region183: #{two_stage_forward.1} parent=139 // pred_region
          %1274 = dma.done %s1267, 16
        $region184: #{two_stage_forward.1} parent=139 // pred_fallthru
          _
        %s1275 = sand.u32 %s78, 1
        %s1276 = scalar_lea.sflag [#allocation5], %s1275
        %s1277 = sand.u32 %s417, 1
        %s1278 = scalar_lea.vmem [#allocation20], %s1277
        // Predicated region
        $region185: #{two_stage_forward.1} parent=139 // pred_check
          %p1279 = pneg %p430
        $region186: #{two_stage_forward.1} parent=139 // pred_check_branch
          %1281 = sbr.rel (%p1279) target = $region188
        $region187: #{two_stage_forward.1} parent=139 // pred_region
          %1283 = dma.done %s1276, 16
        $region188: #{two_stage_forward.1} parent=139 // pred_fallthru
          _
        %s1284 = sand.u32 %s78, 1
        %s1285 = scalar_lea.sflag [#allocation5], %s1284
        %s1286 = sand.u32 %s469, 1
        %s1287 = smul.addr %s1286, 256
        %s1288 = scalar_lea.vmem [#allocation21], %s1287
        // Predicated region
        $region189: #{two_stage_forward.1} parent=139 // pred_check
          %p1289 = pneg %p482
        $region190: #{two_stage_forward.1} parent=139 // pred_check_branch
          %1291 = sbr.rel (%p1289) target = $region192
        $region191: #{two_stage_forward.1} parent=139 // pred_region
          %1293 = dma.done %s1285, 4096
        $region192: #{two_stage_forward.1} parent=139 // pred_fallthru
          _
        %s1294 = sand.u32 %s78, 1
        %s1295 = scalar_lea.sflag [#allocation5], %s1294
        %s1296 = sand.u32 %s521, 1
        %s1297 = smul.addr %s1296, 256
        %s1298 = scalar_lea.vmem [#allocation22], %s1297
        // Predicated region
        $region193: #{two_stage_forward.1} parent=139 // pred_check
          %p1299 = pneg %p534
        $region194: #{two_stage_forward.1} parent=139 // pred_check_branch
          %1301 = sbr.rel (%p1299) target = $region196
        $region195: #{two_stage_forward.1} parent=139 // pred_region
          %1303 = dma.done %s1295, 4096
        $region196: #{two_stage_forward.1} parent=139 // pred_fallthru
          _
        %s1304 = sand.u32 %s78, 1
        %s1305 = scalar_lea.sflag [#allocation5], %s1304
        %s1306 = sand.u32 %s547, 1
        %s1307 = scalar_lea.vmem [#allocation23], %s1306
        // Predicated region
        $region197: #{two_stage_forward.1} parent=139 // pred_check
          %p1308 = pneg %p560
        $region198: #{two_stage_forward.1} parent=139 // pred_check_branch
          %1310 = sbr.rel (%p1308) target = $region200
        $region199: #{two_stage_forward.1} parent=139 // pred_region
          %1312 = dma.done %s1305, 16
        $region200: #{two_stage_forward.1} parent=139 // pred_fallthru
          _
        %s1313 = sand.u32 %s78, 1
        %s1314 = scalar_lea.sflag [#allocation5], %s1313
        %s1315 = sand.u32 %s573, 1
        %s1316 = scalar_lea.vmem [#allocation24], %s1315
        // Predicated region
        $region201: #{two_stage_forward.1} parent=139 // pred_check
          %p1317 = pneg %p586
        $region202: #{two_stage_forward.1} parent=139 // pred_check_branch
          %1319 = sbr.rel (%p1317) target = $region204
        $region203: #{two_stage_forward.1} parent=139 // pred_region
          %1321 = dma.done %s1314, 16
        $region204: #{two_stage_forward.1} parent=139 // pred_fallthru
          _
        %s1322 = sand.u32 %s78, 1
        %s1323 = scalar_lea.sflag [#allocation5], %s1322
        %s1324 = sand.u32 %s599, 1
        %s1325 = scalar_lea.vmem [#allocation25], %s1324
        // Predicated region
        $region205: #{two_stage_forward.1} parent=139 // pred_check
          %p1326 = pneg %p612
        $region206: #{two_stage_forward.1} parent=139 // pred_check_branch
          %1328 = sbr.rel (%p1326) target = $region208
        $region207: #{two_stage_forward.1} parent=139 // pred_region
          %1330 = dma.done %s1323, 16
        $region208: #{two_stage_forward.1} parent=139 // pred_fallthru
          _
        // Predicated region
        $region209: #{two_stage_forward.1} parent=139 // pred_check
          %p1331 = pneg %p633
        $region210: #{two_stage_forward.1} parent=139 // pred_check_branch
          %1333 = sbr.rel (%p1331) target = $region212
        $region211: #{two_stage_forward.1} parent=139 // pred_region
          %1335 = dma.done [#allocation7], 16
        $region212: #{two_stage_forward.1} parent=139 // pred_fallthru
          _
        // Predicated region
        $region213: #{two_stage_forward.1} parent=139 // pred_check
          %p1336 = pneg %p654
        $region214: #{two_stage_forward.1} parent=139 // pred_check_branch
          %1338 = sbr.rel (%p1336) target = $region216
        $region215: #{two_stage_forward.1} parent=139 // pred_region
          %1340 = dma.done [#allocation10], 16
        $region216: #{two_stage_forward.1} parent=139 // pred_fallthru
          _
        // Predicated region
        $region217: #{two_stage_forward.1} parent=139 // pred_check
          %p1341 = pneg %p717
        $region218: #{two_stage_forward.1} parent=139 // pred_check_branch
          %1343 = sbr.rel (%p1341) target = $region220
        $region219: #{two_stage_forward.1} parent=139 // pred_region
          %1345 = dma.done [#allocation13], 32
        $region220: #{two_stage_forward.1} parent=139 // pred_fallthru
          _
        // Predicated region
        $region221: #{two_stage_forward.1} parent=139 // pred_check
          %p1346 = pneg %p738
        $region222: #{two_stage_forward.1} parent=139 // pred_check_branch
          %1348 = sbr.rel (%p1346) target = $region224
        $region223: #{two_stage_forward.1} parent=139 // pred_region
          %1350 = dma.done [#allocation16], 32
        $region224: #{two_stage_forward.1} parent=139 // pred_fallthru
          _
        // Predicated region
        $region225: #{two_stage_forward.1} parent=139 // pred_check
          %p1351 = pneg %p780
        $region226: #{two_stage_forward.1} parent=139 // pred_check_branch
          %1353 = sbr.rel (%p1351) target = $region228
        $region227: #{two_stage_forward.1} parent=139 // pred_region
          %1355 = dma.done [#allocation31], 16
        $region228: #{two_stage_forward.1} parent=139 // pred_fallthru
          _
        %s1356 = smul.u32 16, %s82
        %p1357 = scmp.lt.s32.totalorder %s1356, 31
        %s1358 = scalar_select %p1357, %s1356, 31
        %s1359 = smul.addr %s1358, 8
        %s1360 = scalar_lea.vmem %s1, %s1359
        %p1361 = pneg %p111
        %p1362 = pneg %p108
        %p1363 = pneg %p132
        %p1364 = pneg %p129
        %p1365 = pneg %p153
        %p1366 = pneg %p150
        %p1367 = pneg %p174
        %p1368 = pneg %p171
        %p1369 = pneg %p195
        %p1370 = pneg %p192
        %p1371 = pneg %p216
        %p1372 = pneg %p213
        %p1373 = pneg %p237
        %p1374 = pneg %p234
        %p1375 = pneg %p258
        %p1376 = pneg %p255
        %p1377 = pneg %p279
        %p1378 = pneg %p276
        %p1379 = pneg %p300
        %p1380 = pneg %p297
        %s1381 = sand.u32 %s78, 1
        %s1382 = scalar_lea.sflag [#allocation5], %s1381
        %s1383 = sand.u32 %s313, 1
        %s1384 = smul.addr %s1383, 192
        %s1385 = scalar_lea.vmem [#allocation17], %s1384
        %p1386 = pneg %p326
        %p1387 = pneg %p323
        %p1388 = scmp.lt.s32.totalorder %s83, 3
        %s1389 = scalar_select %p1388, %s83, 3
        %s1390 = smul.addr %s1389, 3
        %s1391 = scalar_lea.vmem %s23, %s1390
        %p1392 = pneg %p352
        %p1393 = pneg %p349
        %s1394 = sand.u32 %s78, 1
        %s1395 = scalar_lea.sflag [#allocation5], %s1394
        %s1396 = sand.u32 %s365, 1
        %s1397 = smul.addr %s1396, 64
        %s1398 = scalar_lea.vmem [#allocation18], %s1397
        %p1399 = pneg %p378
        %p1400 = pneg %p375
        %s1401 = sand.u32 %s78, 1
        %s1402 = scalar_lea.sflag [#allocation5], %s1401
        %s1403 = sand.u32 %s391, 1
        %s1404 = scalar_lea.vmem [#allocation19], %s1403
        %p1405 = pneg %p404
        %p1406 = pneg %p401
        %s1407 = sand.u32 %s78, 1
        %s1408 = scalar_lea.sflag [#allocation5], %s1407
        %s1409 = sand.u32 %s417, 1
        %s1410 = scalar_lea.vmem [#allocation20], %s1409
        %p1411 = pneg %p430
        %p1412 = pneg %p427
        %p1413 = scmp.lt.s32.totalorder %s83, 3
        %s1414 = scalar_select %p1413, %s83, 3
        %s1415 = scalar_lea.vmem %s31, %s1414
        %p1416 = pneg %p456
        %p1417 = pneg %p453
        %s1418 = sand.u32 %s78, 1
        %s1419 = scalar_lea.sflag [#allocation5], %s1418
        %s1420 = sand.u32 %s469, 1
        %s1421 = smul.addr %s1420, 256
        %s1422 = scalar_lea.vmem [#allocation21], %s1421
        %p1423 = pneg %p482
        %p1424 = pneg %p479
        %p1425 = scmp.lt.s32.totalorder %s83, 3
        %s1426 = scalar_select %p1425, %s83, 3
        %s1427 = smul.addr %s1426, 4
        %s1428 = scalar_lea.vmem %s35, %s1427
        %p1429 = pneg %p508
        %p1430 = pneg %p505
        %s1431 = sand.u32 %s78, 1
        %s1432 = scalar_lea.sflag [#allocation5], %s1431
        %s1433 = sand.u32 %s521, 1
        %s1434 = smul.addr %s1433, 256
        %s1435 = scalar_lea.vmem [#allocation22], %s1434
        %p1436 = pneg %p534
        %p1437 = pneg %p531
        %s1438 = sand.u32 %s78, 1
        %s1439 = scalar_lea.sflag [#allocation5], %s1438
        %s1440 = sand.u32 %s547, 1
        %s1441 = scalar_lea.vmem [#allocation23], %s1440
        %p1442 = pneg %p560
        %p1443 = pneg %p557
        %s1444 = sand.u32 %s78, 1
        %s1445 = scalar_lea.sflag [#allocation5], %s1444
        %s1446 = sand.u32 %s573, 1
        %s1447 = scalar_lea.vmem [#allocation24], %s1446
        %p1448 = pneg %p586
        %p1449 = pneg %p583
        %s1450 = sand.u32 %s78, 1
        %s1451 = scalar_lea.sflag [#allocation5], %s1450
        %s1452 = sand.u32 %s599, 1
        %s1453 = scalar_lea.vmem [#allocation25], %s1452
        %p1454 = pneg %p612
        %p1455 = pneg %p609
        %p1456 = pneg %p633
        %p1457 = pneg %p630
        %p1458 = pneg %p654
        %p1459 = pneg %p651
        %p1460 = pneg %p675
        %p1461 = pneg %p672
        %p1462 = pneg %p696
        %p1463 = pneg %p693
        %p1464 = pneg %p717
        %p1465 = pneg %p714
        %p1466 = pneg %p738
        %p1467 = pneg %p735
        %p1468 = pneg %p759
        %p1469 = pneg %p756
        %p1470 = pneg %p780
        %p1471 = pneg %p777
        %p1472 = pneg %p806
        %p1473 = pneg %p803
        %p1474 = scmp.lt.s32.totalorder %s82, 1
        %s1475 = scalar_select %p1474, %s82, 1
        %s1476 = smul.addr %s1475, 8
        %s1477 = scalar_lea.vmem %s61, %s1476
        %s1478 = smul.u32 16, %s82
        %p1479 = scmp.lt.s32.totalorder %s1478, 31
        %s1480 = scalar_select %p1479, %s1478, 31
        %s1481 = smul.addr %s1480, 8
        %s1482 = scalar_lea.vmem %s1, %s1481
        %s1483 = smul.u32 16, %s82
        %p1484 = scmp.lt.s32.totalorder %s83, 3
        %s1485 = scalar_select %p1484, %s83, 3
        %s1486 = smul.addr %s1485, 3
        %s1487 = scalar_lea.vmem %s23, %s1486
        %p1488 = scmp.lt.s32.totalorder %s83, 3
        %s1489 = scalar_select %p1488, %s83, 3
        %s1490 = scalar_lea.vmem %s31, %s1489
        %p1491 = scmp.lt.s32.totalorder %s83, 3
        %s1492 = scalar_select %p1491, %s83, 3
        %s1493 = smul.addr %s1492, 4
        %s1494 = scalar_lea.vmem %s35, %s1493
        %p1495 = scmp.lt.s32.totalorder %s82, 1
        %s1496 = scalar_select %p1495, %s82, 1
        %s1497 = smul.addr %s1496, 8
        %s1498 = scalar_lea.vmem %s61, %s1497
        %p1500 = scmp.eq.s32.totalorder %s83, 0
        // Predicated region
        $region229: #{two_stage_forward.1} parent=139 // pred_check
          %p1501 = pneg %p1500
        $region230: #{two_stage_forward.1} parent=139 // pred_check_branch
          %1503 = sbr.rel (%p1501) target = $region232
        $region231: #{two_stage_forward.1} parent=139 // pred_region
          %v1504 = vld [vmem:[%s1482] sm:$0xff]
          %v1505 = vld [vmem:[%s1482 + $0x8] sm:$0xff]
          %v1506 = vld [vmem:[%s1482 + $0x10] sm:$0xff]
          %v1507 = vld [vmem:[%s1482 + $0x18] sm:$0xff]
          %v1508 = vld [vmem:[%s1482 + $0x20] sm:$0xff]
          %v1509 = vld [vmem:[%s1482 + $0x28] sm:$0xff]
          %v1510 = vld [vmem:[%s1482 + $0x30] sm:$0xff]
          %v1511 = vld [vmem:[%s1482 + $0x38] sm:$0xff]
          %v1512 = vld [vmem:[%s1482 + $0x40] sm:$0xff]
          %v1513 = vld [vmem:[%s1482 + $0x48] sm:$0xff]
          %v1514 = vld [vmem:[%s1482 + $0x50] sm:$0xff]
          %v1515 = vld [vmem:[%s1482 + $0x58] sm:$0xff]
          %v1516 = vld [vmem:[%s1482 + $0x60] sm:$0xff]
          %v1517 = vld [vmem:[%s1482 + $0x68] sm:$0xff]
          %v1518 = vld [vmem:[%s1482 + $0x70] sm:$0xff]
          %v1519 = vld [vmem:[%s1482 + $0x78] sm:$0xff]
          %v1520 = vld [vmem:[#allocation4] sm:$0xf]
          %v1521 = vld [vmem:[#allocation4 + $0x4] sm:$0x3]
          %v1522 = vpack.c.bf16 %v1505, %v1504
          %v1523 = vpack.c.bf16 %v1507, %v1506
          %v1524 = vpack.c.bf16 %v1509, %v1508
          %v1525 = vpack.c.bf16 %v1511, %v1510
          %v1526 = vpack.c.bf16 %v1513, %v1512
          %v1527 = vpack.c.bf16 %v1515, %v1514
          %v1528 = vpack.c.bf16 %v1517, %v1516
          %v1529 = vpack.c.bf16 %v1519, %v1518
          %v1530 = vld [vmem:[#allocation6] sm:$0x1]
          %v1532 = vperm.slane %v1530, 0
          %v1536 = vunpack.c.l.b16 %v1520
          %v1537 = vunpack.c.l.b16 %v1521
          %v1538 = vpack.c.b16 %v1537, %v1536
          %vm1539 = vcmask 89088
          %v1541 = vsel %vm1539, %v1522, 0
          %v1544 = vsel %vm1539, %v1523, 0
          %v1547 = vsel %vm1539, %v1524, 0
          %v1550 = vsel %vm1539, %v1525, 0
          %v1553 = vsel %vm1539, %v1526, 0
          %v1556 = vsel %vm1539, %v1527, 0
          %v1559 = vsel %vm1539, %v1528, 0
          %v1562 = vsel %vm1539, %v1529, 0
          %vm1564 = vcmask 1044480
          %vm1565 = vcmask 1045504
          %v1566 = vsel %vm1564, 4294967295, 65535
          %v1567 = vsel %vm1565, %v1566, 0
          %v1569 = vand.u32 %v1538, %v1567
          %1571 = vmatpush.bf16.msra.mxu0 0
          %1572 = vmatpush.bf16.msra.mxu0 0
          %1573 = vmatpush.bf16.msra.mxu0 0
          %1574 = vmatpush.bf16.msra.mxu0 0
          %1575 = vmatpush.bf16.msra.mxu0 0
          %1576 = vmatpush.bf16.msra.mxu0 0
          %1577 = vmatpush.bf16.msra.mxu0 0
          %1578 = vmatpush.bf16.msra.mxu0 %v1569
          %1579 = vmatmul.bf16.gmra.mxu0 %v1541
          %v1580 = vpop.f32.mrf.mxu0
          %v1581 = vadd.f32 %v1532, %v1580
          %v1582 = vpop.f32.mrf.mxu0
          %v1583 = vadd.f32 %v1532, %v1582
          %1584 = vmatmul.bf16.gmra.mxu0 %v1544
          %v1585 = vpop.f32.mrf.mxu0
          %v1586 = vadd.f32 %v1532, %v1585
          %v1587 = vpop.f32.mrf.mxu0
          %v1588 = vadd.f32 %v1532, %v1587
          %1589 = vmatmul.bf16.gmra.mxu0 %v1547
          %v1590 = vpop.f32.mrf.mxu0
          %v1591 = vadd.f32 %v1532, %v1590
          %v1592 = vpop.f32.mrf.mxu0
          %v1593 = vadd.f32 %v1532, %v1592
          %1594 = vmatmul.bf16.gmra.mxu0 %v1550
          %v1595 = vpop.f32.mrf.mxu0
          %v1596 = vadd.f32 %v1532, %v1595
          %v1597 = vpop.f32.mrf.mxu0
          %v1598 = vadd.f32 %v1532, %v1597
          %1599 = vmatmul.bf16.gmra.mxu0 %v1553
          %v1600 = vpop.f32.mrf.mxu0
          %v1601 = vadd.f32 %v1532, %v1600
          %v1602 = vpop.f32.mrf.mxu0
          %v1603 = vadd.f32 %v1532, %v1602
          %1604 = vmatmul.bf16.gmra.mxu0 %v1556
          %v1605 = vpop.f32.mrf.mxu0
          %v1606 = vadd.f32 %v1532, %v1605
          %v1607 = vpop.f32.mrf.mxu0
          %v1608 = vadd.f32 %v1532, %v1607
          %1609 = vmatmul.bf16.gmra.mxu0 %v1559
          %v1610 = vpop.f32.mrf.mxu0
          %v1611 = vadd.f32 %v1532, %v1610
          %v1612 = vpop.f32.mrf.mxu0
          %v1613 = vadd.f32 %v1532, %v1612
          %1614 = vmatmul.bf16.gmra.mxu0 %v1562
          %v1615 = vpop.f32.mrf.mxu0
          %v1616 = vadd.f32 %v1532, %v1615
          %v1617 = vpop.f32.mrf.mxu0
          %v1618 = vadd.f32 %v1532, %v1617
          %1619 = vdwg.mxu0
          %v1620 = vmax.f32 %v1581, 0.0
          %v1621 = vmax.f32 %v1583, 0.0
          %v1622 = vmax.f32 %v1586, 0.0
          %v1623 = vmax.f32 %v1588, 0.0
          %v1624 = vmax.f32 %v1591, 0.0
          %v1625 = vmax.f32 %v1593, 0.0
          %v1626 = vmax.f32 %v1596, 0.0
          %v1627 = vmax.f32 %v1598, 0.0
          %v1628 = vmax.f32 %v1601, 0.0
          %v1629 = vmax.f32 %v1603, 0.0
          %v1630 = vmax.f32 %v1606, 0.0
          %v1631 = vmax.f32 %v1608, 0.0
          %v1632 = vmax.f32 %v1611, 0.0
          %v1633 = vmax.f32 %v1613, 0.0
          %v1634 = vmax.f32 %v1616, 0.0
          %v1635 = vmax.f32 %v1618, 0.0
          %1636 = vst [vmem:[#allocation3] sm:$0xff] 0.0
          %1637 = vst [vmem:[#allocation3 + $0x20] sm:$0xff] 0.0
          %1638 = vst [vmem:[#allocation3 + $0x40] sm:$0xff] 0.0
          %1639 = vst [vmem:[#allocation3 + $0x60] sm:$0xff] 0.0
          %1640 = vst [vmem:[#allocation3 + $0x80] sm:$0xff] 0.0
          %1641 = vst [vmem:[#allocation3 + $0xa0] sm:$0xff] 0.0
          %1642 = vst [vmem:[#allocation3 + $0xc0] sm:$0xff] 0.0
          %1643 = vst [vmem:[#allocation3 + $0xe0] sm:$0xff] 0.0
          %1644 = vst [vmem:[#allocation3 + $0x18] sm:$0xff] 0.0
          %1645 = vst [vmem:[#allocation3 + $0x38] sm:$0xff] 0.0
          %1646 = vst [vmem:[#allocation3 + $0x58] sm:$0xff] 0.0
          %1647 = vst [vmem:[#allocation3 + $0x78] sm:$0xff] 0.0
          %1648 = vst [vmem:[#allocation3 + $0x98] sm:$0xff] 0.0
          %1649 = vst [vmem:[#allocation3 + $0xb8] sm:$0xff] 0.0
          %1650 = vst [vmem:[#allocation3 + $0xd8] sm:$0xff] 0.0
          %1651 = vst [vmem:[#allocation3 + $0xf8] sm:$0xff] 0.0
          %1652 = vst [vmem:[#allocation3 + $0x8] sm:$0xff] %v1620
          %1653 = vst [vmem:[#allocation3 + $0x10] sm:$0xff] %v1621
          %1654 = vst [vmem:[#allocation3 + $0x28] sm:$0xff] %v1622
          %1655 = vst [vmem:[#allocation3 + $0x30] sm:$0xff] %v1623
          %1656 = vst [vmem:[#allocation3 + $0x48] sm:$0xff] %v1624
          %1657 = vst [vmem:[#allocation3 + $0x50] sm:$0xff] %v1625
          %1658 = vst [vmem:[#allocation3 + $0x68] sm:$0xff] %v1626
          %1659 = vst [vmem:[#allocation3 + $0x70] sm:$0xff] %v1627
          %1660 = vst [vmem:[#allocation3 + $0x88] sm:$0xff] %v1628
          %1661 = vst [vmem:[#allocation3 + $0x90] sm:$0xff] %v1629
          %1662 = vst [vmem:[#allocation3 + $0xa8] sm:$0xff] %v1630
          %1663 = vst [vmem:[#allocation3 + $0xb0] sm:$0xff] %v1631
          %1664 = vst [vmem:[#allocation3 + $0xc8] sm:$0xff] %v1632
          %1665 = vst [vmem:[#allocation3 + $0xd0] sm:$0xff] %v1633
          %1666 = vst [vmem:[#allocation3 + $0xe8] sm:$0xff] %v1634
          %1667 = vst [vmem:[#allocation3 + $0xf0] sm:$0xff] %v1635
          %v1668 = vld [vmem:[#allocation3 + $0x3] sm:$0xff]
          %v1669 = vld [vmem:[#allocation3 + $0xb] sm:$0xff]
          %v1670 = vld [vmem:[#allocation3 + $0x23] sm:$0xff]
          %v1671 = vld [vmem:[#allocation3 + $0x2b] sm:$0xff]
          %v1672 = vld [vmem:[#allocation3 + $0x43] sm:$0xff]
          %v1673 = vld [vmem:[#allocation3 + $0x4b] sm:$0xff]
          %v1674 = vld [vmem:[#allocation3 + $0x63] sm:$0xff]
          %v1675 = vld [vmem:[#allocation3 + $0x6b] sm:$0xff]
          %v1676 = vld [vmem:[#allocation3 + $0x83] sm:$0xff]
          %v1677 = vld [vmem:[#allocation3 + $0x8b] sm:$0xff]
          %v1678 = vld [vmem:[#allocation3 + $0xa3] sm:$0xff]
          %v1679 = vld [vmem:[#allocation3 + $0xab] sm:$0xff]
          %v1680 = vld [vmem:[#allocation3 + $0xc3] sm:$0xff]
          %v1681 = vld [vmem:[#allocation3 + $0xcb] sm:$0xff]
          %v1682 = vld [vmem:[#allocation3 + $0xe3] sm:$0xff]
          %v1683 = vld [vmem:[#allocation3 + $0xeb] sm:$0xff]
          %v1684 = vld [vmem:[%s7] sm:$0xf]
          %v1685 = vld [vmem:[%s7 + $0x4] sm:$0xf]
          %v1686 = vld [vmem:[%s7 + $0x8] sm:$0xf]
          %v1687 = vld [vmem:[%s7 + $0xc] sm:$0xf]
          %v1688 = vld [vmem:[%s7 + $0x10] sm:$0xf]
          %v1689 = vld [vmem:[%s7 + $0x14] sm:$0xf]
          %v1690 = vld [vmem:[%s7 + $0x18] sm:$0xf]
          %v1691 = vld [vmem:[%s7 + $0x1c] sm:$0xf]
          %v1692 = vld [vmem:[%s7 + $0x20] sm:$0xf]
          %v1693 = vld [vmem:[%s7 + $0x24] sm:$0xf]
          %v1694 = vld [vmem:[%s7 + $0x28] sm:$0xf]
          %v1695 = vld [vmem:[%s7 + $0x2c] sm:$0xf]
          %v1696 = vld [vmem:[%s7 + $0x30] sm:$0xf]
          %v1697 = vld [vmem:[%s7 + $0x34] sm:$0xf]
          %v1698 = vld [vmem:[%s7 + $0x38] sm:$0xf]
          %v1699 = vld [vmem:[%s7 + $0x3c] sm:$0xf]
          %v1700 = vpack.c.bf16 %v1669, %v1668
          %v1701 = vpack.c.bf16 %v1671, %v1670
          %v1702 = vpack.c.bf16 %v1673, %v1672
          %v1703 = vpack.c.bf16 %v1675, %v1674
          %v1704 = vpack.c.bf16 %v1677, %v1676
          %v1705 = vpack.c.bf16 %v1679, %v1678
          %v1706 = vpack.c.bf16 %v1681, %v1680
          %v1707 = vpack.c.bf16 %v1683, %v1682
          %v1708 = vld [vmem:[#allocation3 + $0x4] sm:$0xff]
          %v1709 = vld [vmem:[#allocation3 + $0xc] sm:$0xff]
          %v1710 = vld [vmem:[#allocation3 + $0x24] sm:$0xff]
          %v1711 = vld [vmem:[#allocation3 + $0x2c] sm:$0xff]
          %v1712 = vld [vmem:[#allocation3 + $0x44] sm:$0xff]
          %v1713 = vld [vmem:[#allocation3 + $0x4c] sm:$0xff]
          %v1714 = vld [vmem:[#allocation3 + $0x64] sm:$0xff]
          %v1715 = vld [vmem:[#allocation3 + $0x6c] sm:$0xff]
          %v1716 = vld [vmem:[#allocation3 + $0x84] sm:$0xff]
          %v1717 = vld [vmem:[#allocation3 + $0x8c] sm:$0xff]
          %v1718 = vld [vmem:[#allocation3 + $0xa4] sm:$0xff]
          %v1719 = vld [vmem:[#allocation3 + $0xac] sm:$0xff]
          %v1720 = vld [vmem:[#allocation3 + $0xc4] sm:$0xff]
          %v1721 = vld [vmem:[#allocation3 + $0xcc] sm:$0xff]
          %v1722 = vld [vmem:[#allocation3 + $0xe4] sm:$0xff]
          %v1723 = vld [vmem:[#allocation3 + $0xec] sm:$0xff]
          %s1724 = scalar_lea.vmem %s7, 64
          %v1725 = vld [vmem:[%s1724] sm:$0xf]
          %v1726 = vld [vmem:[%s1724 + $0x4] sm:$0xf]
          %v1727 = vld [vmem:[%s1724 + $0x8] sm:$0xf]
          %v1728 = vld [vmem:[%s1724 + $0xc] sm:$0xf]
          %v1729 = vld [vmem:[%s1724 + $0x10] sm:$0xf]
          %v1730 = vld [vmem:[%s1724 + $0x14] sm:$0xf]
          %v1731 = vld [vmem:[%s1724 + $0x18] sm:$0xf]
          %v1732 = vld [vmem:[%s1724 + $0x1c] sm:$0xf]
          %v1733 = vld [vmem:[%s1724 + $0x20] sm:$0xf]
          %v1734 = vld [vmem:[%s1724 + $0x24] sm:$0xf]
          %v1735 = vld [vmem:[%s1724 + $0x28] sm:$0xf]
          %v1736 = vld [vmem:[%s1724 + $0x2c] sm:$0xf]
          %v1737 = vld [vmem:[%s1724 + $0x30] sm:$0xf]
          %v1738 = vld [vmem:[%s1724 + $0x34] sm:$0xf]
          %v1739 = vld [vmem:[%s1724 + $0x38] sm:$0xf]
          %v1740 = vld [vmem:[%s1724 + $0x3c] sm:$0xf]
          %v1741 = vpack.c.bf16 %v1709, %v1708
          %v1742 = vpack.c.bf16 %v1711, %v1710
          %v1743 = vpack.c.bf16 %v1713, %v1712
          %v1744 = vpack.c.bf16 %v1715, %v1714
          %v1745 = vpack.c.bf16 %v1717, %v1716
          %v1746 = vpack.c.bf16 %v1719, %v1718
          %v1747 = vpack.c.bf16 %v1721, %v1720
          %v1748 = vpack.c.bf16 %v1723, %v1722
          %v1765 = vunpack.c.l.b16 %v1725
          %v1766 = vunpack.c.l.b16 %v1726
          %v1767 = vunpack.c.l.b16 %v1727
          %v1768 = vunpack.c.l.b16 %v1728
          %v1769 = vunpack.c.l.b16 %v1729
          %v1770 = vunpack.c.l.b16 %v1730
          %v1771 = vunpack.c.l.b16 %v1731
          %v1772 = vunpack.c.l.b16 %v1732
          %v1773 = vunpack.c.l.b16 %v1733
          %v1774 = vunpack.c.l.b16 %v1734
          %v1775 = vunpack.c.l.b16 %v1735
          %v1776 = vunpack.c.l.b16 %v1736
          %v1777 = vunpack.c.l.b16 %v1737
          %v1778 = vunpack.c.l.b16 %v1738
          %v1779 = vunpack.c.l.b16 %v1739
          %v1780 = vunpack.c.l.b16 %v1740
          %v1781 = vpack.c.b16 %v1766, %v1765
          %v1782 = vpack.c.b16 %v1768, %v1767
          %v1783 = vpack.c.b16 %v1770, %v1769
          %v1784 = vpack.c.b16 %v1772, %v1771
          %v1785 = vpack.c.b16 %v1774, %v1773
          %v1786 = vpack.c.b16 %v1776, %v1775
          %v1787 = vpack.c.b16 %v1778, %v1777
          %v1788 = vpack.c.b16 %v1780, %v1779
          %1797 = vmatpush.bf16.msra.mxu0 %v1788
          %1798 = vmatpush.bf16.msra.mxu0 %v1787
          %1799 = vmatpush.bf16.msra.mxu0 %v1786
          %1800 = vmatpush.bf16.msra.mxu0 %v1785
          %1801 = vmatpush.bf16.msra.mxu0 %v1784
          %1802 = vmatpush.bf16.msra.mxu0 %v1783
          %1803 = vmatpush.bf16.msra.mxu0 %v1782
          %1804 = vmatpush.bf16.msra.mxu0 %v1781
          %1805 = vmatmul.bf16.gmra.mxu0 %v1741
          %v1806 = vpop.f32.mrf.mxu0
          %v1807 = vadd.f32 0.0, %v1806
          %v1808 = vpop.f32.mrf.mxu0
          %v1809 = vadd.f32 0.0, %v1808
          %1810 = vmatmul.bf16.gmra.mxu0 %v1742
          %v1811 = vpop.f32.mrf.mxu0
          %v1812 = vadd.f32 0.0, %v1811
          %v1813 = vpop.f32.mrf.mxu0
          %v1814 = vadd.f32 0.0, %v1813
          %1815 = vmatmul.bf16.gmra.mxu0 %v1743
          %v1816 = vpop.f32.mrf.mxu0
          %v1817 = vadd.f32 0.0, %v1816
          %v1818 = vpop.f32.mrf.mxu0
          %v1819 = vadd.f32 0.0, %v1818
          %1820 = vmatmul.bf16.gmra.mxu0 %v1744
          %v1821 = vpop.f32.mrf.mxu0
          %v1822 = vadd.f32 0.0, %v1821
          %v1823 = vpop.f32.mrf.mxu0
          %v1824 = vadd.f32 0.0, %v1823
          %1825 = vmatmul.bf16.gmra.mxu0 %v1745
          %v1826 = vpop.f32.mrf.mxu0
          %v1827 = vadd.f32 0.0, %v1826
          %v1828 = vpop.f32.mrf.mxu0
          %v1829 = vadd.f32 0.0, %v1828
          %1830 = vmatmul.bf16.gmra.mxu0 %v1746
          %v1831 = vpop.f32.mrf.mxu0
          %v1832 = vadd.f32 0.0, %v1831
          %v1833 = vpop.f32.mrf.mxu0
          %v1834 = vadd.f32 0.0, %v1833
          %1835 = vmatmul.bf16.gmra.mxu0 %v1747
          %v1836 = vpop.f32.mrf.mxu0
          %v1837 = vadd.f32 0.0, %v1836
          %v1838 = vpop.f32.mrf.mxu0
          %v1839 = vadd.f32 0.0, %v1838
          %1840 = vmatmul.bf16.gmra.mxu0 %v1748
          %v1841 = vpop.f32.mrf.mxu0
          %v1842 = vadd.f32 0.0, %v1841
          %v1843 = vpop.f32.mrf.mxu0
          %v1844 = vadd.f32 0.0, %v1843
          %1845 = vdwg.mxu0
          %v1862 = vunpack.c.l.b16 %v1684
          %v1863 = vunpack.c.l.b16 %v1685
          %v1864 = vunpack.c.l.b16 %v1686
          %v1865 = vunpack.c.l.b16 %v1687
          %v1866 = vunpack.c.l.b16 %v1688
          %v1867 = vunpack.c.l.b16 %v1689
          %v1868 = vunpack.c.l.b16 %v1690
          %v1869 = vunpack.c.l.b16 %v1691
          %v1870 = vunpack.c.l.b16 %v1692
          %v1871 = vunpack.c.l.b16 %v1693
          %v1872 = vunpack.c.l.b16 %v1694
          %v1873 = vunpack.c.l.b16 %v1695
          %v1874 = vunpack.c.l.b16 %v1696
          %v1875 = vunpack.c.l.b16 %v1697
          %v1876 = vunpack.c.l.b16 %v1698
          %v1877 = vunpack.c.l.b16 %v1699
          %v1878 = vpack.c.b16 %v1863, %v1862
          %v1879 = vpack.c.b16 %v1865, %v1864
          %v1880 = vpack.c.b16 %v1867, %v1866
          %v1881 = vpack.c.b16 %v1869, %v1868
          %v1882 = vpack.c.b16 %v1871, %v1870
          %v1883 = vpack.c.b16 %v1873, %v1872
          %v1884 = vpack.c.b16 %v1875, %v1874
          %v1885 = vpack.c.b16 %v1877, %v1876
          %1894 = vmatpush.bf16.msra.mxu0 %v1885
          %1895 = vmatpush.bf16.msra.mxu0 %v1884
          %1896 = vmatpush.bf16.msra.mxu0 %v1883
          %1897 = vmatpush.bf16.msra.mxu0 %v1882
          %1898 = vmatpush.bf16.msra.mxu0 %v1881
          %1899 = vmatpush.bf16.msra.mxu0 %v1880
          %1900 = vmatpush.bf16.msra.mxu0 %v1879
          %1901 = vmatpush.bf16.msra.mxu0 %v1878
          %1902 = vmatmul.bf16.gmra.mxu0 %v1700
          %v1903 = vpop.f32.mrf.mxu0
          %v1904 = vadd.f32 %v1807, %v1903
          %v1905 = vpop.f32.mrf.mxu0
          %v1906 = vadd.f32 %v1809, %v1905
          %1907 = vmatmul.bf16.gmra.mxu0 %v1701
          %v1908 = vpop.f32.mrf.mxu0
          %v1909 = vadd.f32 %v1812, %v1908
          %v1910 = vpop.f32.mrf.mxu0
          %v1911 = vadd.f32 %v1814, %v1910
          %1912 = vmatmul.bf16.gmra.mxu0 %v1702
          %v1913 = vpop.f32.mrf.mxu0
          %v1914 = vadd.f32 %v1817, %v1913
          %v1915 = vpop.f32.mrf.mxu0
          %v1916 = vadd.f32 %v1819, %v1915
          %1917 = vmatmul.bf16.gmra.mxu0 %v1703
          %v1918 = vpop.f32.mrf.mxu0
          %v1919 = vadd.f32 %v1822, %v1918
          %v1920 = vpop.f32.mrf.mxu0
          %v1921 = vadd.f32 %v1824, %v1920
          %1922 = vmatmul.bf16.gmra.mxu0 %v1704
          %v1923 = vpop.f32.mrf.mxu0
          %v1924 = vadd.f32 %v1827, %v1923
          %v1925 = vpop.f32.mrf.mxu0
          %v1926 = vadd.f32 %v1829, %v1925
          %1927 = vmatmul.bf16.gmra.mxu0 %v1705
          %v1928 = vpop.f32.mrf.mxu0
          %v1929 = vadd.f32 %v1832, %v1928
          %v1930 = vpop.f32.mrf.mxu0
          %v1931 = vadd.f32 %v1834, %v1930
          %1932 = vmatmul.bf16.gmra.mxu0 %v1706
          %v1933 = vpop.f32.mrf.mxu0
          %v1934 = vadd.f32 %v1837, %v1933
          %v1935 = vpop.f32.mrf.mxu0
          %v1936 = vadd.f32 %v1839, %v1935
          %1937 = vmatmul.bf16.gmra.mxu0 %v1707
          %v1938 = vpop.f32.mrf.mxu0
          %v1939 = vadd.f32 %v1842, %v1938
          %v1940 = vpop.f32.mrf.mxu0
          %v1941 = vadd.f32 %v1844, %v1940
          %1942 = vdwg.mxu0
          %v1943 = vld [vmem:[#allocation3 + $0x5] sm:$0xff]
          %v1944 = vld [vmem:[#allocation3 + $0xd] sm:$0xff]
          %v1945 = vld [vmem:[#allocation3 + $0x25] sm:$0xff]
          %v1946 = vld [vmem:[#allocation3 + $0x2d] sm:$0xff]
          %v1947 = vld [vmem:[#allocation3 + $0x45] sm:$0xff]
          %v1948 = vld [vmem:[#allocation3 + $0x4d] sm:$0xff]
          %v1949 = vld [vmem:[#allocation3 + $0x65] sm:$0xff]
          %v1950 = vld [vmem:[#allocation3 + $0x6d] sm:$0xff]
          %v1951 = vld [vmem:[#allocation3 + $0x85] sm:$0xff]
          %v1952 = vld [vmem:[#allocation3 + $0x8d] sm:$0xff]
          %v1953 = vld [vmem:[#allocation3 + $0xa5] sm:$0xff]
          %v1954 = vld [vmem:[#allocation3 + $0xad] sm:$0xff]
          %v1955 = vld [vmem:[#allocation3 + $0xc5] sm:$0xff]
          %v1956 = vld [vmem:[#allocation3 + $0xcd] sm:$0xff]
          %v1957 = vld [vmem:[#allocation3 + $0xe5] sm:$0xff]
          %v1958 = vld [vmem:[#allocation3 + $0xed] sm:$0xff]
          %s1959 = scalar_lea.vmem %s7, 128
          %v1960 = vld [vmem:[%s1959] sm:$0xf]
          %v1961 = vld [vmem:[%s1959 + $0x4] sm:$0xf]
          %v1962 = vld [vmem:[%s1959 + $0x8] sm:$0xf]
          %v1963 = vld [vmem:[%s1959 + $0xc] sm:$0xf]
          %v1964 = vld [vmem:[%s1959 + $0x10] sm:$0xf]
          %v1965 = vld [vmem:[%s1959 + $0x14] sm:$0xf]
          %v1966 = vld [vmem:[%s1959 + $0x18] sm:$0xf]
          %v1967 = vld [vmem:[%s1959 + $0x1c] sm:$0xf]
          %v1968 = vld [vmem:[%s1959 + $0x20] sm:$0xf]
          %v1969 = vld [vmem:[%s1959 + $0x24] sm:$0xf]
          %v1970 = vld [vmem:[%s1959 + $0x28] sm:$0xf]
          %v1971 = vld [vmem:[%s1959 + $0x2c] sm:$0xf]
          %v1972 = vld [vmem:[%s1959 + $0x30] sm:$0xf]
          %v1973 = vld [vmem:[%s1959 + $0x34] sm:$0xf]
          %v1974 = vld [vmem:[%s1959 + $0x38] sm:$0xf]
          %v1975 = vld [vmem:[%s1959 + $0x3c] sm:$0xf]
          %v1976 = vpack.c.bf16 %v1944, %v1943
          %v1977 = vpack.c.bf16 %v1946, %v1945
          %v1978 = vpack.c.bf16 %v1948, %v1947
          %v1979 = vpack.c.bf16 %v1950, %v1949
          %v1980 = vpack.c.bf16 %v1952, %v1951
          %v1981 = vpack.c.bf16 %v1954, %v1953
          %v1982 = vpack.c.bf16 %v1956, %v1955
          %v1983 = vpack.c.bf16 %v1958, %v1957
          %v2000 = vunpack.c.l.b16 %v1960
          %v2001 = vunpack.c.l.b16 %v1961
          %v2002 = vunpack.c.l.b16 %v1962
          %v2003 = vunpack.c.l.b16 %v1963
          %v2004 = vunpack.c.l.b16 %v1964
          %v2005 = vunpack.c.l.b16 %v1965
          %v2006 = vunpack.c.l.b16 %v1966
          %v2007 = vunpack.c.l.b16 %v1967
          %v2008 = vunpack.c.l.b16 %v1968
          %v2009 = vunpack.c.l.b16 %v1969
          %v2010 = vunpack.c.l.b16 %v1970
          %v2011 = vunpack.c.l.b16 %v1971
          %v2012 = vunpack.c.l.b16 %v1972
          %v2013 = vunpack.c.l.b16 %v1973
          %v2014 = vunpack.c.l.b16 %v1974
          %v2015 = vunpack.c.l.b16 %v1975
          %v2016 = vpack.c.b16 %v2001, %v2000
          %v2017 = vpack.c.b16 %v2003, %v2002
          %v2018 = vpack.c.b16 %v2005, %v2004
          %v2019 = vpack.c.b16 %v2007, %v2006
          %v2020 = vpack.c.b16 %v2009, %v2008
          %v2021 = vpack.c.b16 %v2011, %v2010
          %v2022 = vpack.c.b16 %v2013, %v2012
          %v2023 = vpack.c.b16 %v2015, %v2014
          %2032 = vmatpush.bf16.msra.mxu0 %v2023
          %2033 = vmatpush.bf16.msra.mxu0 %v2022
          %2034 = vmatpush.bf16.msra.mxu0 %v2021
          %2035 = vmatpush.bf16.msra.mxu0 %v2020
          %2036 = vmatpush.bf16.msra.mxu0 %v2019
          %2037 = vmatpush.bf16.msra.mxu0 %v2018
          %2038 = vmatpush.bf16.msra.mxu0 %v2017
          %2039 = vmatpush.bf16.msra.mxu0 %v2016
          %2040 = vmatmul.bf16.gmra.mxu0 %v1976
          %v2041 = vpop.f32.mrf.mxu0
          %v2042 = vadd.f32 0.0, %v2041
          %v2043 = vpop.f32.mrf.mxu0
          %v2044 = vadd.f32 0.0, %v2043
          %2045 = vmatmul.bf16.gmra.mxu0 %v1977
          %v2046 = vpop.f32.mrf.mxu0
          %v2047 = vadd.f32 0.0, %v2046
          %v2048 = vpop.f32.mrf.mxu0
          %v2049 = vadd.f32 0.0, %v2048
          %2050 = vmatmul.bf16.gmra.mxu0 %v1978
          %v2051 = vpop.f32.mrf.mxu0
          %v2052 = vadd.f32 0.0, %v2051
          %v2053 = vpop.f32.mrf.mxu0
          %v2054 = vadd.f32 0.0, %v2053
          %2055 = vmatmul.bf16.gmra.mxu0 %v1979
          %v2056 = vpop.f32.mrf.mxu0
          %v2057 = vadd.f32 0.0, %v2056
          %v2058 = vpop.f32.mrf.mxu0
          %v2059 = vadd.f32 0.0, %v2058
          %2060 = vmatmul.bf16.gmra.mxu0 %v1980
          %v2061 = vpop.f32.mrf.mxu0
          %v2062 = vadd.f32 0.0, %v2061
          %v2063 = vpop.f32.mrf.mxu0
          %v2064 = vadd.f32 0.0, %v2063
          %2065 = vmatmul.bf16.gmra.mxu0 %v1981
          %v2066 = vpop.f32.mrf.mxu0
          %v2067 = vadd.f32 0.0, %v2066
          %v2068 = vpop.f32.mrf.mxu0
          %v2069 = vadd.f32 0.0, %v2068
          %2070 = vmatmul.bf16.gmra.mxu0 %v1982
          %v2071 = vpop.f32.mrf.mxu0
          %v2072 = vadd.f32 0.0, %v2071
          %v2073 = vpop.f32.mrf.mxu0
          %v2074 = vadd.f32 0.0, %v2073
          %2075 = vmatmul.bf16.gmra.mxu0 %v1983
          %v2076 = vpop.f32.mrf.mxu0
          %v2077 = vadd.f32 0.0, %v2076
          %v2078 = vpop.f32.mrf.mxu0
          %v2079 = vadd.f32 0.0, %v2078
          %2080 = vdwg.mxu0
          %v2081 = vadd.f32 %v1904, %v2042
          %v2082 = vadd.f32 %v1906, %v2044
          %v2083 = vadd.f32 %v1909, %v2047
          %v2084 = vadd.f32 %v1911, %v2049
          %v2085 = vadd.f32 %v1914, %v2052
          %v2086 = vadd.f32 %v1916, %v2054
          %v2087 = vadd.f32 %v1919, %v2057
          %v2088 = vadd.f32 %v1921, %v2059
          %v2089 = vadd.f32 %v1924, %v2062
          %v2090 = vadd.f32 %v1926, %v2064
          %v2091 = vadd.f32 %v1929, %v2067
          %v2092 = vadd.f32 %v1931, %v2069
          %v2093 = vadd.f32 %v1934, %v2072
          %v2094 = vadd.f32 %v1936, %v2074
          %v2095 = vadd.f32 %v1939, %v2077
          %v2096 = vadd.f32 %v1941, %v2079
          %v2097 = vld [vmem:[#allocation3 + $0x6] sm:$0xff]
          %v2098 = vld [vmem:[#allocation3 + $0xe] sm:$0xff]
          %v2099 = vld [vmem:[#allocation3 + $0x26] sm:$0xff]
          %v2100 = vld [vmem:[#allocation3 + $0x2e] sm:$0xff]
          %v2101 = vld [vmem:[#allocation3 + $0x46] sm:$0xff]
          %v2102 = vld [vmem:[#allocation3 + $0x4e] sm:$0xff]
          %v2103 = vld [vmem:[#allocation3 + $0x66] sm:$0xff]
          %v2104 = vld [vmem:[#allocation3 + $0x6e] sm:$0xff]
          %v2105 = vld [vmem:[#allocation3 + $0x86] sm:$0xff]
          %v2106 = vld [vmem:[#allocation3 + $0x8e] sm:$0xff]
          %v2107 = vld [vmem:[#allocation3 + $0xa6] sm:$0xff]
          %v2108 = vld [vmem:[#allocation3 + $0xae] sm:$0xff]
          %v2109 = vld [vmem:[#allocation3 + $0xc6] sm:$0xff]
          %v2110 = vld [vmem:[#allocation3 + $0xce] sm:$0xff]
          %v2111 = vld [vmem:[#allocation3 + $0xe6] sm:$0xff]
          %v2112 = vld [vmem:[#allocation3 + $0xee] sm:$0xff]
          %s2113 = scalar_lea.vmem %s7, 192
          %v2114 = vld [vmem:[%s2113] sm:$0xf]
          %v2115 = vld [vmem:[%s2113 + $0x4] sm:$0xf]
          %v2116 = vld [vmem:[%s2113 + $0x8] sm:$0xf]
          %v2117 = vld [vmem:[%s2113 + $0xc] sm:$0xf]
          %v2118 = vld [vmem:[%s2113 + $0x10] sm:$0xf]
          %v2119 = vld [vmem:[%s2113 + $0x14] sm:$0xf]
          %v2120 = vld [vmem:[%s2113 + $0x18] sm:$0xf]
          %v2121 = vld [vmem:[%s2113 + $0x1c] sm:$0xf]
          %v2122 = vld [vmem:[%s2113 + $0x20] sm:$0xf]
          %v2123 = vld [vmem:[%s2113 + $0x24] sm:$0xf]
          %v2124 = vld [vmem:[%s2113 + $0x28] sm:$0xf]
          %v2125 = vld [vmem:[%s2113 + $0x2c] sm:$0xf]
          %v2126 = vld [vmem:[%s2113 + $0x30] sm:$0xf]
          %v2127 = vld [vmem:[%s2113 + $0x34] sm:$0xf]
          %v2128 = vld [vmem:[%s2113 + $0x38] sm:$0xf]
          %v2129 = vld [vmem:[%s2113 + $0x3c] sm:$0xf]
          %v2130 = vpack.c.bf16 %v2098, %v2097
          %v2131 = vpack.c.bf16 %v2100, %v2099
          %v2132 = vpack.c.bf16 %v2102, %v2101
          %v2133 = vpack.c.bf16 %v2104, %v2103
          %v2134 = vpack.c.bf16 %v2106, %v2105
          %v2135 = vpack.c.bf16 %v2108, %v2107
          %v2136 = vpack.c.bf16 %v2110, %v2109
          %v2137 = vpack.c.bf16 %v2112, %v2111
          %v2154 = vunpack.c.l.b16 %v2114
          %v2155 = vunpack.c.l.b16 %v2115
          %v2156 = vunpack.c.l.b16 %v2116
          %v2157 = vunpack.c.l.b16 %v2117
          %v2158 = vunpack.c.l.b16 %v2118
          %v2159 = vunpack.c.l.b16 %v2119
          %v2160 = vunpack.c.l.b16 %v2120
          %v2161 = vunpack.c.l.b16 %v2121
          %v2162 = vunpack.c.l.b16 %v2122
          %v2163 = vunpack.c.l.b16 %v2123
          %v2164 = vunpack.c.l.b16 %v2124
          %v2165 = vunpack.c.l.b16 %v2125
          %v2166 = vunpack.c.l.b16 %v2126
          %v2167 = vunpack.c.l.b16 %v2127
          %v2168 = vunpack.c.l.b16 %v2128
          %v2169 = vunpack.c.l.b16 %v2129
          %v2170 = vpack.c.b16 %v2155, %v2154
          %v2171 = vpack.c.b16 %v2157, %v2156
          %v2172 = vpack.c.b16 %v2159, %v2158
          %v2173 = vpack.c.b16 %v2161, %v2160
          %v2174 = vpack.c.b16 %v2163, %v2162
          %v2175 = vpack.c.b16 %v2165, %v2164
          %v2176 = vpack.c.b16 %v2167, %v2166
          %v2177 = vpack.c.b16 %v2169, %v2168
          %2186 = vmatpush.bf16.msra.mxu0 %v2177
          %2187 = vmatpush.bf16.msra.mxu0 %v2176
          %2188 = vmatpush.bf16.msra.mxu0 %v2175
          %2189 = vmatpush.bf16.msra.mxu0 %v2174
          %2190 = vmatpush.bf16.msra.mxu0 %v2173
          %2191 = vmatpush.bf16.msra.mxu0 %v2172
          %2192 = vmatpush.bf16.msra.mxu0 %v2171
          %2193 = vmatpush.bf16.msra.mxu0 %v2170
          %2194 = vmatmul.bf16.gmra.mxu0 %v2130
          %v2195 = vpop.f32.mrf.mxu0
          %v2196 = vadd.f32 0.0, %v2195
          %v2197 = vpop.f32.mrf.mxu0
          %v2198 = vadd.f32 0.0, %v2197
          %2199 = vmatmul.bf16.gmra.mxu0 %v2131
          %v2200 = vpop.f32.mrf.mxu0
          %v2201 = vadd.f32 0.0, %v2200
          %v2202 = vpop.f32.mrf.mxu0
          %v2203 = vadd.f32 0.0, %v2202
          %2204 = vmatmul.bf16.gmra.mxu0 %v2132
          %v2205 = vpop.f32.mrf.mxu0
          %v2206 = vadd.f32 0.0, %v2205
          %v2207 = vpop.f32.mrf.mxu0
          %v2208 = vadd.f32 0.0, %v2207
          %2209 = vmatmul.bf16.gmra.mxu0 %v2133
          %v2210 = vpop.f32.mrf.mxu0
          %v2211 = vadd.f32 0.0, %v2210
          %v2212 = vpop.f32.mrf.mxu0
          %v2213 = vadd.f32 0.0, %v2212
          %2214 = vmatmul.bf16.gmra.mxu0 %v2134
          %v2215 = vpop.f32.mrf.mxu0
          %v2216 = vadd.f32 0.0, %v2215
          %v2217 = vpop.f32.mrf.mxu0
          %v2218 = vadd.f32 0.0, %v2217
          %2219 = vmatmul.bf16.gmra.mxu0 %v2135
          %v2220 = vpop.f32.mrf.mxu0
          %v2221 = vadd.f32 0.0, %v2220
          %v2222 = vpop.f32.mrf.mxu0
          %v2223 = vadd.f32 0.0, %v2222
          %2224 = vmatmul.bf16.gmra.mxu0 %v2136
          %v2225 = vpop.f32.mrf.mxu0
          %v2226 = vadd.f32 0.0, %v2225
          %v2227 = vpop.f32.mrf.mxu0
          %v2228 = vadd.f32 0.0, %v2227
          %2229 = vmatmul.bf16.gmra.mxu0 %v2137
          %v2230 = vpop.f32.mrf.mxu0
          %v2231 = vadd.f32 0.0, %v2230
          %v2232 = vpop.f32.mrf.mxu0
          %v2233 = vadd.f32 0.0, %v2232
          %2234 = vdwg.mxu0
          %v2235 = vadd.f32 %v2081, %v2196
          %v2236 = vadd.f32 %v2082, %v2198
          %v2237 = vadd.f32 %v2083, %v2201
          %v2238 = vadd.f32 %v2084, %v2203
          %v2239 = vadd.f32 %v2085, %v2206
          %v2240 = vadd.f32 %v2086, %v2208
          %v2241 = vadd.f32 %v2087, %v2211
          %v2242 = vadd.f32 %v2088, %v2213
          %v2243 = vadd.f32 %v2089, %v2216
          %v2244 = vadd.f32 %v2090, %v2218
          %v2245 = vadd.f32 %v2091, %v2221
          %v2246 = vadd.f32 %v2092, %v2223
          %v2247 = vadd.f32 %v2093, %v2226
          %v2248 = vadd.f32 %v2094, %v2228
          %v2249 = vadd.f32 %v2095, %v2231
          %v2250 = vadd.f32 %v2096, %v2233
          %v2251 = vld [vmem:[#allocation3 + $0x7] sm:$0xff]
          %v2252 = vld [vmem:[#allocation3 + $0xf] sm:$0xff]
          %v2253 = vld [vmem:[#allocation3 + $0x27] sm:$0xff]
          %v2254 = vld [vmem:[#allocation3 + $0x2f] sm:$0xff]
          %v2255 = vld [vmem:[#allocation3 + $0x47] sm:$0xff]
          %v2256 = vld [vmem:[#allocation3 + $0x4f] sm:$0xff]
          %v2257 = vld [vmem:[#allocation3 + $0x67] sm:$0xff]
          %v2258 = vld [vmem:[#allocation3 + $0x6f] sm:$0xff]
          %v2259 = vld [vmem:[#allocation3 + $0x87] sm:$0xff]
          %v2260 = vld [vmem:[#allocation3 + $0x8f] sm:$0xff]
          %v2261 = vld [vmem:[#allocation3 + $0xa7] sm:$0xff]
          %v2262 = vld [vmem:[#allocation3 + $0xaf] sm:$0xff]
          %v2263 = vld [vmem:[#allocation3 + $0xc7] sm:$0xff]
          %v2264 = vld [vmem:[#allocation3 + $0xcf] sm:$0xff]
          %v2265 = vld [vmem:[#allocation3 + $0xe7] sm:$0xff]
          %v2266 = vld [vmem:[#allocation3 + $0xef] sm:$0xff]
          %s2267 = scalar_lea.vmem %s7, 256
          %v2268 = vld [vmem:[%s2267] sm:$0xf]
          %v2269 = vld [vmem:[%s2267 + $0x4] sm:$0xf]
          %v2270 = vld [vmem:[%s2267 + $0x8] sm:$0xf]
          %v2271 = vld [vmem:[%s2267 + $0xc] sm:$0xf]
          %v2272 = vld [vmem:[%s2267 + $0x10] sm:$0xf]
          %v2273 = vld [vmem:[%s2267 + $0x14] sm:$0xf]
          %v2274 = vld [vmem:[%s2267 + $0x18] sm:$0xf]
          %v2275 = vld [vmem:[%s2267 + $0x1c] sm:$0xf]
          %v2276 = vld [vmem:[%s2267 + $0x20] sm:$0xf]
          %v2277 = vld [vmem:[%s2267 + $0x24] sm:$0xf]
          %v2278 = vld [vmem:[%s2267 + $0x28] sm:$0xf]
          %v2279 = vld [vmem:[%s2267 + $0x2c] sm:$0xf]
          %v2280 = vld [vmem:[%s2267 + $0x30] sm:$0xf]
          %v2281 = vld [vmem:[%s2267 + $0x34] sm:$0xf]
          %v2282 = vld [vmem:[%s2267 + $0x38] sm:$0xf]
          %v2283 = vld [vmem:[%s2267 + $0x3c] sm:$0xf]
          %v2284 = vpack.c.bf16 %v2252, %v2251
          %v2285 = vpack.c.bf16 %v2254, %v2253
          %v2286 = vpack.c.bf16 %v2256, %v2255
          %v2287 = vpack.c.bf16 %v2258, %v2257
          %v2288 = vpack.c.bf16 %v2260, %v2259
          %v2289 = vpack.c.bf16 %v2262, %v2261
          %v2290 = vpack.c.bf16 %v2264, %v2263
          %v2291 = vpack.c.bf16 %v2266, %v2265
          %v2308 = vunpack.c.l.b16 %v2268
          %v2309 = vunpack.c.l.b16 %v2269
          %v2310 = vunpack.c.l.b16 %v2270
          %v2311 = vunpack.c.l.b16 %v2271
          %v2312 = vunpack.c.l.b16 %v2272
          %v2313 = vunpack.c.l.b16 %v2273
          %v2314 = vunpack.c.l.b16 %v2274
          %v2315 = vunpack.c.l.b16 %v2275
          %v2316 = vunpack.c.l.b16 %v2276
          %v2317 = vunpack.c.l.b16 %v2277
          %v2318 = vunpack.c.l.b16 %v2278
          %v2319 = vunpack.c.l.b16 %v2279
          %v2320 = vunpack.c.l.b16 %v2280
          %v2321 = vunpack.c.l.b16 %v2281
          %v2322 = vunpack.c.l.b16 %v2282
          %v2323 = vunpack.c.l.b16 %v2283
          %v2324 = vpack.c.b16 %v2309, %v2308
          %v2325 = vpack.c.b16 %v2311, %v2310
          %v2326 = vpack.c.b16 %v2313, %v2312
          %v2327 = vpack.c.b16 %v2315, %v2314
          %v2328 = vpack.c.b16 %v2317, %v2316
          %v2329 = vpack.c.b16 %v2319, %v2318
          %v2330 = vpack.c.b16 %v2321, %v2320
          %v2331 = vpack.c.b16 %v2323, %v2322
          %2340 = vmatpush.bf16.msra.mxu0 %v2331
          %2341 = vmatpush.bf16.msra.mxu0 %v2330
          %2342 = vmatpush.bf16.msra.mxu0 %v2329
          %2343 = vmatpush.bf16.msra.mxu0 %v2328
          %2344 = vmatpush.bf16.msra.mxu0 %v2327
          %2345 = vmatpush.bf16.msra.mxu0 %v2326
          %2346 = vmatpush.bf16.msra.mxu0 %v2325
          %2347 = vmatpush.bf16.msra.mxu0 %v2324
          %2348 = vmatmul.bf16.gmra.mxu0 %v2284
          %v2349 = vpop.f32.mrf.mxu0
          %v2350 = vadd.f32 0.0, %v2349
          %v2351 = vpop.f32.mrf.mxu0
          %v2352 = vadd.f32 0.0, %v2351
          %2353 = vmatmul.bf16.gmra.mxu0 %v2285
          %v2354 = vpop.f32.mrf.mxu0
          %v2355 = vadd.f32 0.0, %v2354
          %v2356 = vpop.f32.mrf.mxu0
          %v2357 = vadd.f32 0.0, %v2356
          %2358 = vmatmul.bf16.gmra.mxu0 %v2286
          %v2359 = vpop.f32.mrf.mxu0
          %v2360 = vadd.f32 0.0, %v2359
          %v2361 = vpop.f32.mrf.mxu0
          %v2362 = vadd.f32 0.0, %v2361
          %2363 = vmatmul.bf16.gmra.mxu0 %v2287
          %v2364 = vpop.f32.mrf.mxu0
          %v2365 = vadd.f32 0.0, %v2364
          %v2366 = vpop.f32.mrf.mxu0
          %v2367 = vadd.f32 0.0, %v2366
          %2368 = vmatmul.bf16.gmra.mxu0 %v2288
          %v2369 = vpop.f32.mrf.mxu0
          %v2370 = vadd.f32 0.0, %v2369
          %v2371 = vpop.f32.mrf.mxu0
          %v2372 = vadd.f32 0.0, %v2371
          %2373 = vmatmul.bf16.gmra.mxu0 %v2289
          %v2374 = vpop.f32.mrf.mxu0
          %v2375 = vadd.f32 0.0, %v2374
          %v2376 = vpop.f32.mrf.mxu0
          %v2377 = vadd.f32 0.0, %v2376
          %2378 = vmatmul.bf16.gmra.mxu0 %v2290
          %v2379 = vpop.f32.mrf.mxu0
          %v2380 = vadd.f32 0.0, %v2379
          %v2381 = vpop.f32.mrf.mxu0
          %v2382 = vadd.f32 0.0, %v2381
          %2383 = vmatmul.bf16.gmra.mxu0 %v2291
          %v2384 = vpop.f32.mrf.mxu0
          %v2385 = vadd.f32 0.0, %v2384
          %v2386 = vpop.f32.mrf.mxu0
          %v2387 = vadd.f32 0.0, %v2386
          %2388 = vdwg.mxu0
          %v2389 = vadd.f32 %v2235, %v2350
          %v2390 = vadd.f32 %v2236, %v2352
          %v2391 = vadd.f32 %v2237, %v2355
          %v2392 = vadd.f32 %v2238, %v2357
          %v2393 = vadd.f32 %v2239, %v2360
          %v2394 = vadd.f32 %v2240, %v2362
          %v2395 = vadd.f32 %v2241, %v2365
          %v2396 = vadd.f32 %v2242, %v2367
          %v2397 = vadd.f32 %v2243, %v2370
          %v2398 = vadd.f32 %v2244, %v2372
          %v2399 = vadd.f32 %v2245, %v2375
          %v2400 = vadd.f32 %v2246, %v2377
          %v2401 = vadd.f32 %v2247, %v2380
          %v2402 = vadd.f32 %v2248, %v2382
          %v2403 = vadd.f32 %v2249, %v2385
          %v2404 = vadd.f32 %v2250, %v2387
          %v2405 = vld [vmem:[#allocation3 + $0x8] sm:$0xff]
          %v2406 = vld [vmem:[#allocation3 + $0x10] sm:$0xff]
          %v2407 = vld [vmem:[#allocation3 + $0x28] sm:$0xff]
          %v2408 = vld [vmem:[#allocation3 + $0x30] sm:$0xff]
          %v2409 = vld [vmem:[#allocation3 + $0x48] sm:$0xff]
          %v2410 = vld [vmem:[#allocation3 + $0x50] sm:$0xff]
          %v2411 = vld [vmem:[#allocation3 + $0x68] sm:$0xff]
          %v2412 = vld [vmem:[#allocation3 + $0x70] sm:$0xff]
          %v2413 = vld [vmem:[#allocation3 + $0x88] sm:$0xff]
          %v2414 = vld [vmem:[#allocation3 + $0x90] sm:$0xff]
          %v2415 = vld [vmem:[#allocation3 + $0xa8] sm:$0xff]
          %v2416 = vld [vmem:[#allocation3 + $0xb0] sm:$0xff]
          %v2417 = vld [vmem:[#allocation3 + $0xc8] sm:$0xff]
          %v2418 = vld [vmem:[#allocation3 + $0xd0] sm:$0xff]
          %v2419 = vld [vmem:[#allocation3 + $0xe8] sm:$0xff]
          %v2420 = vld [vmem:[#allocation3 + $0xf0] sm:$0xff]
          %s2421 = scalar_lea.vmem %s7, 320
          %v2422 = vld [vmem:[%s2421] sm:$0xf]
          %v2423 = vld [vmem:[%s2421 + $0x4] sm:$0xf]
          %v2424 = vld [vmem:[%s2421 + $0x8] sm:$0xf]
          %v2425 = vld [vmem:[%s2421 + $0xc] sm:$0xf]
          %v2426 = vld [vmem:[%s2421 + $0x10] sm:$0xf]
          %v2427 = vld [vmem:[%s2421 + $0x14] sm:$0xf]
          %v2428 = vld [vmem:[%s2421 + $0x18] sm:$0xf]
          %v2429 = vld [vmem:[%s2421 + $0x1c] sm:$0xf]
          %v2430 = vld [vmem:[%s2421 + $0x20] sm:$0xf]
          %v2431 = vld [vmem:[%s2421 + $0x24] sm:$0xf]
          %v2432 = vld [vmem:[%s2421 + $0x28] sm:$0xf]
          %v2433 = vld [vmem:[%s2421 + $0x2c] sm:$0xf]
          %v2434 = vld [vmem:[%s2421 + $0x30] sm:$0xf]
          %v2435 = vld [vmem:[%s2421 + $0x34] sm:$0xf]
          %v2436 = vld [vmem:[%s2421 + $0x38] sm:$0xf]
          %v2437 = vld [vmem:[%s2421 + $0x3c] sm:$0xf]
          %v2438 = vpack.c.bf16 %v2406, %v2405
          %v2439 = vpack.c.bf16 %v2408, %v2407
          %v2440 = vpack.c.bf16 %v2410, %v2409
          %v2441 = vpack.c.bf16 %v2412, %v2411
          %v2442 = vpack.c.bf16 %v2414, %v2413
          %v2443 = vpack.c.bf16 %v2416, %v2415
          %v2444 = vpack.c.bf16 %v2418, %v2417
          %v2445 = vpack.c.bf16 %v2420, %v2419
          %v2462 = vunpack.c.l.b16 %v2422
          %v2463 = vunpack.c.l.b16 %v2423
          %v2464 = vunpack.c.l.b16 %v2424
          %v2465 = vunpack.c.l.b16 %v2425
          %v2466 = vunpack.c.l.b16 %v2426
          %v2467 = vunpack.c.l.b16 %v2427
          %v2468 = vunpack.c.l.b16 %v2428
          %v2469 = vunpack.c.l.b16 %v2429
          %v2470 = vunpack.c.l.b16 %v2430
          %v2471 = vunpack.c.l.b16 %v2431
          %v2472 = vunpack.c.l.b16 %v2432
          %v2473 = vunpack.c.l.b16 %v2433
          %v2474 = vunpack.c.l.b16 %v2434
          %v2475 = vunpack.c.l.b16 %v2435
          %v2476 = vunpack.c.l.b16 %v2436
          %v2477 = vunpack.c.l.b16 %v2437
          %v2478 = vpack.c.b16 %v2463, %v2462
          %v2479 = vpack.c.b16 %v2465, %v2464
          %v2480 = vpack.c.b16 %v2467, %v2466
          %v2481 = vpack.c.b16 %v2469, %v2468
          %v2482 = vpack.c.b16 %v2471, %v2470
          %v2483 = vpack.c.b16 %v2473, %v2472
          %v2484 = vpack.c.b16 %v2475, %v2474
          %v2485 = vpack.c.b16 %v2477, %v2476
          %2494 = vmatpush.bf16.msra.mxu0 %v2485
          %2495 = vmatpush.bf16.msra.mxu0 %v2484
          %2496 = vmatpush.bf16.msra.mxu0 %v2483
          %2497 = vmatpush.bf16.msra.mxu0 %v2482
          %2498 = vmatpush.bf16.msra.mxu0 %v2481
          %2499 = vmatpush.bf16.msra.mxu0 %v2480
          %2500 = vmatpush.bf16.msra.mxu0 %v2479
          %2501 = vmatpush.bf16.msra.mxu0 %v2478
          %2502 = vmatmul.bf16.gmra.mxu0 %v2438
          %v2503 = vpop.f32.mrf.mxu0
          %v2504 = vadd.f32 0.0, %v2503
          %v2505 = vpop.f32.mrf.mxu0
          %v2506 = vadd.f32 0.0, %v2505
          %2507 = vmatmul.bf16.gmra.mxu0 %v2439
          %v2508 = vpop.f32.mrf.mxu0
          %v2509 = vadd.f32 0.0, %v2508
          %v2510 = vpop.f32.mrf.mxu0
          %v2511 = vadd.f32 0.0, %v2510
          %2512 = vmatmul.bf16.gmra.mxu0 %v2440
          %v2513 = vpop.f32.mrf.mxu0
          %v2514 = vadd.f32 0.0, %v2513
          %v2515 = vpop.f32.mrf.mxu0
          %v2516 = vadd.f32 0.0, %v2515
          %2517 = vmatmul.bf16.gmra.mxu0 %v2441
          %v2518 = vpop.f32.mrf.mxu0
          %v2519 = vadd.f32 0.0, %v2518
          %v2520 = vpop.f32.mrf.mxu0
          %v2521 = vadd.f32 0.0, %v2520
          %2522 = vmatmul.bf16.gmra.mxu0 %v2442
          %v2523 = vpop.f32.mrf.mxu0
          %v2524 = vadd.f32 0.0, %v2523
          %v2525 = vpop.f32.mrf.mxu0
          %v2526 = vadd.f32 0.0, %v2525
          %2527 = vmatmul.bf16.gmra.mxu0 %v2443
          %v2528 = vpop.f32.mrf.mxu0
          %v2529 = vadd.f32 0.0, %v2528
          %v2530 = vpop.f32.mrf.mxu0
          %v2531 = vadd.f32 0.0, %v2530
          %2532 = vmatmul.bf16.gmra.mxu0 %v2444
          %v2533 = vpop.f32.mrf.mxu0
          %v2534 = vadd.f32 0.0, %v2533
          %v2535 = vpop.f32.mrf.mxu0
          %v2536 = vadd.f32 0.0, %v2535
          %2537 = vmatmul.bf16.gmra.mxu0 %v2445
          %v2538 = vpop.f32.mrf.mxu0
          %v2539 = vadd.f32 0.0, %v2538
          %v2540 = vpop.f32.mrf.mxu0
          %v2541 = vadd.f32 0.0, %v2540
          %2542 = vdwg.mxu0
          %v2543 = vadd.f32 %v2389, %v2504
          %v2544 = vadd.f32 %v2390, %v2506
          %v2545 = vadd.f32 %v2391, %v2509
          %v2546 = vadd.f32 %v2392, %v2511
          %v2547 = vadd.f32 %v2393, %v2514
          %v2548 = vadd.f32 %v2394, %v2516
          %v2549 = vadd.f32 %v2395, %v2519
          %v2550 = vadd.f32 %v2396, %v2521
          %v2551 = vadd.f32 %v2397, %v2524
          %v2552 = vadd.f32 %v2398, %v2526
          %v2553 = vadd.f32 %v2399, %v2529
          %v2554 = vadd.f32 %v2400, %v2531
          %v2555 = vadd.f32 %v2401, %v2534
          %v2556 = vadd.f32 %v2402, %v2536
          %v2557 = vadd.f32 %v2403, %v2539
          %v2558 = vadd.f32 %v2404, %v2541
          %v2559 = vld [vmem:[#allocation3 + $0x9] sm:$0xff]
          %v2560 = vld [vmem:[#allocation3 + $0x11] sm:$0xff]
          %v2561 = vld [vmem:[#allocation3 + $0x29] sm:$0xff]
          %v2562 = vld [vmem:[#allocation3 + $0x31] sm:$0xff]
          %v2563 = vld [vmem:[#allocation3 + $0x49] sm:$0xff]
          %v2564 = vld [vmem:[#allocation3 + $0x51] sm:$0xff]
          %v2565 = vld [vmem:[#allocation3 + $0x69] sm:$0xff]
          %v2566 = vld [vmem:[#allocation3 + $0x71] sm:$0xff]
          %v2567 = vld [vmem:[#allocation3 + $0x89] sm:$0xff]
          %v2568 = vld [vmem:[#allocation3 + $0x91] sm:$0xff]
          %v2569 = vld [vmem:[#allocation3 + $0xa9] sm:$0xff]
          %v2570 = vld [vmem:[#allocation3 + $0xb1] sm:$0xff]
          %v2571 = vld [vmem:[#allocation3 + $0xc9] sm:$0xff]
          %v2572 = vld [vmem:[#allocation3 + $0xd1] sm:$0xff]
          %v2573 = vld [vmem:[#allocation3 + $0xe9] sm:$0xff]
          %v2574 = vld [vmem:[#allocation3 + $0xf1] sm:$0xff]
          %s2575 = scalar_lea.vmem %s7, 384
          %v2576 = vld [vmem:[%s2575] sm:$0xf]
          %v2577 = vld [vmem:[%s2575 + $0x4] sm:$0xf]
          %v2578 = vld [vmem:[%s2575 + $0x8] sm:$0xf]
          %v2579 = vld [vmem:[%s2575 + $0xc] sm:$0xf]
          %v2580 = vld [vmem:[%s2575 + $0x10] sm:$0xf]
          %v2581 = vld [vmem:[%s2575 + $0x14] sm:$0xf]
          %v2582 = vld [vmem:[%s2575 + $0x18] sm:$0xf]
          %v2583 = vld [vmem:[%s2575 + $0x1c] sm:$0xf]
          %v2584 = vld [vmem:[%s2575 + $0x20] sm:$0xf]
          %v2585 = vld [vmem:[%s2575 + $0x24] sm:$0xf]
          %v2586 = vld [vmem:[%s2575 + $0x28] sm:$0xf]
          %v2587 = vld [vmem:[%s2575 + $0x2c] sm:$0xf]
          %v2588 = vld [vmem:[%s2575 + $0x30] sm:$0xf]
          %v2589 = vld [vmem:[%s2575 + $0x34] sm:$0xf]
          %v2590 = vld [vmem:[%s2575 + $0x38] sm:$0xf]
          %v2591 = vld [vmem:[%s2575 + $0x3c] sm:$0xf]
          %v2592 = vpack.c.bf16 %v2560, %v2559
          %v2593 = vpack.c.bf16 %v2562, %v2561
          %v2594 = vpack.c.bf16 %v2564, %v2563
          %v2595 = vpack.c.bf16 %v2566, %v2565
          %v2596 = vpack.c.bf16 %v2568, %v2567
          %v2597 = vpack.c.bf16 %v2570, %v2569
          %v2598 = vpack.c.bf16 %v2572, %v2571
          %v2599 = vpack.c.bf16 %v2574, %v2573
          %v2616 = vunpack.c.l.b16 %v2576
          %v2617 = vunpack.c.l.b16 %v2577
          %v2618 = vunpack.c.l.b16 %v2578
          %v2619 = vunpack.c.l.b16 %v2579
          %v2620 = vunpack.c.l.b16 %v2580
          %v2621 = vunpack.c.l.b16 %v2581
          %v2622 = vunpack.c.l.b16 %v2582
          %v2623 = vunpack.c.l.b16 %v2583
          %v2624 = vunpack.c.l.b16 %v2584
          %v2625 = vunpack.c.l.b16 %v2585
          %v2626 = vunpack.c.l.b16 %v2586
          %v2627 = vunpack.c.l.b16 %v2587
          %v2628 = vunpack.c.l.b16 %v2588
          %v2629 = vunpack.c.l.b16 %v2589
          %v2630 = vunpack.c.l.b16 %v2590
          %v2631 = vunpack.c.l.b16 %v2591
          %v2632 = vpack.c.b16 %v2617, %v2616
          %v2633 = vpack.c.b16 %v2619, %v2618
          %v2634 = vpack.c.b16 %v2621, %v2620
          %v2635 = vpack.c.b16 %v2623, %v2622
          %v2636 = vpack.c.b16 %v2625, %v2624
          %v2637 = vpack.c.b16 %v2627, %v2626
          %v2638 = vpack.c.b16 %v2629, %v2628
          %v2639 = vpack.c.b16 %v2631, %v2630
          %2648 = vmatpush.bf16.msra.mxu0 %v2639
          %2649 = vmatpush.bf16.msra.mxu0 %v2638
          %2650 = vmatpush.bf16.msra.mxu0 %v2637
          %2651 = vmatpush.bf16.msra.mxu0 %v2636
          %2652 = vmatpush.bf16.msra.mxu0 %v2635
          %2653 = vmatpush.bf16.msra.mxu0 %v2634
          %2654 = vmatpush.bf16.msra.mxu0 %v2633
          %2655 = vmatpush.bf16.msra.mxu0 %v2632
          %2656 = vmatmul.bf16.gmra.mxu0 %v2592
          %v2657 = vpop.f32.mrf.mxu0
          %v2658 = vadd.f32 0.0, %v2657
          %v2659 = vpop.f32.mrf.mxu0
          %v2660 = vadd.f32 0.0, %v2659
          %2661 = vmatmul.bf16.gmra.mxu0 %v2593
          %v2662 = vpop.f32.mrf.mxu0
          %v2663 = vadd.f32 0.0, %v2662
          %v2664 = vpop.f32.mrf.mxu0
          %v2665 = vadd.f32 0.0, %v2664
          %2666 = vmatmul.bf16.gmra.mxu0 %v2594
          %v2667 = vpop.f32.mrf.mxu0
          %v2668 = vadd.f32 0.0, %v2667
          %v2669 = vpop.f32.mrf.mxu0
          %v2670 = vadd.f32 0.0, %v2669
          %2671 = vmatmul.bf16.gmra.mxu0 %v2595
          %v2672 = vpop.f32.mrf.mxu0
          %v2673 = vadd.f32 0.0, %v2672
          %v2674 = vpop.f32.mrf.mxu0
          %v2675 = vadd.f32 0.0, %v2674
          %2676 = vmatmul.bf16.gmra.mxu0 %v2596
          %v2677 = vpop.f32.mrf.mxu0
          %v2678 = vadd.f32 0.0, %v2677
          %v2679 = vpop.f32.mrf.mxu0
          %v2680 = vadd.f32 0.0, %v2679
          %2681 = vmatmul.bf16.gmra.mxu0 %v2597
          %v2682 = vpop.f32.mrf.mxu0
          %v2683 = vadd.f32 0.0, %v2682
          %v2684 = vpop.f32.mrf.mxu0
          %v2685 = vadd.f32 0.0, %v2684
          %2686 = vmatmul.bf16.gmra.mxu0 %v2598
          %v2687 = vpop.f32.mrf.mxu0
          %v2688 = vadd.f32 0.0, %v2687
          %v2689 = vpop.f32.mrf.mxu0
          %v2690 = vadd.f32 0.0, %v2689
          %2691 = vmatmul.bf16.gmra.mxu0 %v2599
          %v2692 = vpop.f32.mrf.mxu0
          %v2693 = vadd.f32 0.0, %v2692
          %v2694 = vpop.f32.mrf.mxu0
          %v2695 = vadd.f32 0.0, %v2694
          %2696 = vdwg.mxu0
          %v2697 = vadd.f32 %v2543, %v2658
          %v2698 = vadd.f32 %v2544, %v2660
          %v2699 = vadd.f32 %v2545, %v2663
          %v2700 = vadd.f32 %v2546, %v2665
          %v2701 = vadd.f32 %v2547, %v2668
          %v2702 = vadd.f32 %v2548, %v2670
          %v2703 = vadd.f32 %v2549, %v2673
          %v2704 = vadd.f32 %v2550, %v2675
          %v2705 = vadd.f32 %v2551, %v2678
          %v2706 = vadd.f32 %v2552, %v2680
          %v2707 = vadd.f32 %v2553, %v2683
          %v2708 = vadd.f32 %v2554, %v2685
          %v2709 = vadd.f32 %v2555, %v2688
          %v2710 = vadd.f32 %v2556, %v2690
          %v2711 = vadd.f32 %v2557, %v2693
          %v2712 = vadd.f32 %v2558, %v2695
          %v2713 = vld [vmem:[#allocation3 + $0xa] sm:$0xff]
          %v2714 = vld [vmem:[#allocation3 + $0x12] sm:$0xff]
          %v2715 = vld [vmem:[#allocation3 + $0x2a] sm:$0xff]
          %v2716 = vld [vmem:[#allocation3 + $0x32] sm:$0xff]
          %v2717 = vld [vmem:[#allocation3 + $0x4a] sm:$0xff]
          %v2718 = vld [vmem:[#allocation3 + $0x52] sm:$0xff]
          %v2719 = vld [vmem:[#allocation3 + $0x6a] sm:$0xff]
          %v2720 = vld [vmem:[#allocation3 + $0x72] sm:$0xff]
          %v2721 = vld [vmem:[#allocation3 + $0x8a] sm:$0xff]
          %v2722 = vld [vmem:[#allocation3 + $0x92] sm:$0xff]
          %v2723 = vld [vmem:[#allocation3 + $0xaa] sm:$0xff]
          %v2724 = vld [vmem:[#allocation3 + $0xb2] sm:$0xff]
          %v2725 = vld [vmem:[#allocation3 + $0xca] sm:$0xff]
          %v2726 = vld [vmem:[#allocation3 + $0xd2] sm:$0xff]
          %v2727 = vld [vmem:[#allocation3 + $0xea] sm:$0xff]
          %v2728 = vld [vmem:[#allocation3 + $0xf2] sm:$0xff]
          %s2729 = scalar_lea.vmem %s7, 448
          %v2730 = vld [vmem:[%s2729] sm:$0xf]
          %v2731 = vld [vmem:[%s2729 + $0x4] sm:$0xf]
          %v2732 = vld [vmem:[%s2729 + $0x8] sm:$0xf]
          %v2733 = vld [vmem:[%s2729 + $0xc] sm:$0xf]
          %v2734 = vld [vmem:[%s2729 + $0x10] sm:$0xf]
          %v2735 = vld [vmem:[%s2729 + $0x14] sm:$0xf]
          %v2736 = vld [vmem:[%s2729 + $0x18] sm:$0xf]
          %v2737 = vld [vmem:[%s2729 + $0x1c] sm:$0xf]
          %v2738 = vld [vmem:[%s2729 + $0x20] sm:$0xf]
          %v2739 = vld [vmem:[%s2729 + $0x24] sm:$0xf]
          %v2740 = vld [vmem:[%s2729 + $0x28] sm:$0xf]
          %v2741 = vld [vmem:[%s2729 + $0x2c] sm:$0xf]
          %v2742 = vld [vmem:[%s2729 + $0x30] sm:$0xf]
          %v2743 = vld [vmem:[%s2729 + $0x34] sm:$0xf]
          %v2744 = vld [vmem:[%s2729 + $0x38] sm:$0xf]
          %v2745 = vld [vmem:[%s2729 + $0x3c] sm:$0xf]
          %v2746 = vpack.c.bf16 %v2714, %v2713
          %v2747 = vpack.c.bf16 %v2716, %v2715
          %v2748 = vpack.c.bf16 %v2718, %v2717
          %v2749 = vpack.c.bf16 %v2720, %v2719
          %v2750 = vpack.c.bf16 %v2722, %v2721
          %v2751 = vpack.c.bf16 %v2724, %v2723
          %v2752 = vpack.c.bf16 %v2726, %v2725
          %v2753 = vpack.c.bf16 %v2728, %v2727
          %v2770 = vunpack.c.l.b16 %v2730
          %v2771 = vunpack.c.l.b16 %v2731
          %v2772 = vunpack.c.l.b16 %v2732
          %v2773 = vunpack.c.l.b16 %v2733
          %v2774 = vunpack.c.l.b16 %v2734
          %v2775 = vunpack.c.l.b16 %v2735
          %v2776 = vunpack.c.l.b16 %v2736
          %v2777 = vunpack.c.l.b16 %v2737
          %v2778 = vunpack.c.l.b16 %v2738
          %v2779 = vunpack.c.l.b16 %v2739
          %v2780 = vunpack.c.l.b16 %v2740
          %v2781 = vunpack.c.l.b16 %v2741
          %v2782 = vunpack.c.l.b16 %v2742
          %v2783 = vunpack.c.l.b16 %v2743
          %v2784 = vunpack.c.l.b16 %v2744
          %v2785 = vunpack.c.l.b16 %v2745
          %v2786 = vpack.c.b16 %v2771, %v2770
          %v2787 = vpack.c.b16 %v2773, %v2772
          %v2788 = vpack.c.b16 %v2775, %v2774
          %v2789 = vpack.c.b16 %v2777, %v2776
          %v2790 = vpack.c.b16 %v2779, %v2778
          %v2791 = vpack.c.b16 %v2781, %v2780
          %v2792 = vpack.c.b16 %v2783, %v2782
          %v2793 = vpack.c.b16 %v2785, %v2784
          %2802 = vmatpush.bf16.msra.mxu0 %v2793
          %2803 = vmatpush.bf16.msra.mxu0 %v2792
          %2804 = vmatpush.bf16.msra.mxu0 %v2791
          %2805 = vmatpush.bf16.msra.mxu0 %v2790
          %2806 = vmatpush.bf16.msra.mxu0 %v2789
          %2807 = vmatpush.bf16.msra.mxu0 %v2788
          %2808 = vmatpush.bf16.msra.mxu0 %v2787
          %2809 = vmatpush.bf16.msra.mxu0 %v2786
          %2810 = vmatmul.bf16.gmra.mxu0 %v2746
          %v2811 = vpop.f32.mrf.mxu0
          %v2812 = vadd.f32 0.0, %v2811
          %v2813 = vpop.f32.mrf.mxu0
          %v2814 = vadd.f32 0.0, %v2813
          %2815 = vmatmul.bf16.gmra.mxu0 %v2747
          %v2816 = vpop.f32.mrf.mxu0
          %v2817 = vadd.f32 0.0, %v2816
          %v2818 = vpop.f32.mrf.mxu0
          %v2819 = vadd.f32 0.0, %v2818
          %2820 = vmatmul.bf16.gmra.mxu0 %v2748
          %v2821 = vpop.f32.mrf.mxu0
          %v2822 = vadd.f32 0.0, %v2821
          %v2823 = vpop.f32.mrf.mxu0
          %v2824 = vadd.f32 0.0, %v2823
          %2825 = vmatmul.bf16.gmra.mxu0 %v2749
          %v2826 = vpop.f32.mrf.mxu0
          %v2827 = vadd.f32 0.0, %v2826
          %v2828 = vpop.f32.mrf.mxu0
          %v2829 = vadd.f32 0.0, %v2828
          %2830 = vmatmul.bf16.gmra.mxu0 %v2750
          %v2831 = vpop.f32.mrf.mxu0
          %v2832 = vadd.f32 0.0, %v2831
          %v2833 = vpop.f32.mrf.mxu0
          %v2834 = vadd.f32 0.0, %v2833
          %2835 = vmatmul.bf16.gmra.mxu0 %v2751
          %v2836 = vpop.f32.mrf.mxu0
          %v2837 = vadd.f32 0.0, %v2836
          %v2838 = vpop.f32.mrf.mxu0
          %v2839 = vadd.f32 0.0, %v2838
          %2840 = vmatmul.bf16.gmra.mxu0 %v2752
          %v2841 = vpop.f32.mrf.mxu0
          %v2842 = vadd.f32 0.0, %v2841
          %v2843 = vpop.f32.mrf.mxu0
          %v2844 = vadd.f32 0.0, %v2843
          %2845 = vmatmul.bf16.gmra.mxu0 %v2753
          %v2846 = vpop.f32.mrf.mxu0
          %v2847 = vadd.f32 0.0, %v2846
          %v2848 = vpop.f32.mrf.mxu0
          %v2849 = vadd.f32 0.0, %v2848
          %2850 = vdwg.mxu0
          %v2851 = vadd.f32 %v2697, %v2812
          %v2852 = vadd.f32 %v2698, %v2814
          %v2853 = vadd.f32 %v2699, %v2817
          %v2854 = vadd.f32 %v2700, %v2819
          %v2855 = vadd.f32 %v2701, %v2822
          %v2856 = vadd.f32 %v2702, %v2824
          %v2857 = vadd.f32 %v2703, %v2827
          %v2858 = vadd.f32 %v2704, %v2829
          %v2859 = vadd.f32 %v2705, %v2832
          %v2860 = vadd.f32 %v2706, %v2834
          %v2861 = vadd.f32 %v2707, %v2837
          %v2862 = vadd.f32 %v2708, %v2839
          %v2863 = vadd.f32 %v2709, %v2842
          %v2864 = vadd.f32 %v2710, %v2844
          %v2865 = vadd.f32 %v2711, %v2847
          %v2866 = vadd.f32 %v2712, %v2849
          %v2867 = vld [vmem:[#allocation3 + $0xb] sm:$0xff]
          %v2868 = vld [vmem:[#allocation3 + $0x13] sm:$0xff]
          %v2869 = vld [vmem:[#allocation3 + $0x2b] sm:$0xff]
          %v2870 = vld [vmem:[#allocation3 + $0x33] sm:$0xff]
          %v2871 = vld [vmem:[#allocation3 + $0x4b] sm:$0xff]
          %v2872 = vld [vmem:[#allocation3 + $0x53] sm:$0xff]
          %v2873 = vld [vmem:[#allocation3 + $0x6b] sm:$0xff]
          %v2874 = vld [vmem:[#allocation3 + $0x73] sm:$0xff]
          %v2875 = vld [vmem:[#allocation3 + $0x8b] sm:$0xff]
          %v2876 = vld [vmem:[#allocation3 + $0x93] sm:$0xff]
          %v2877 = vld [vmem:[#allocation3 + $0xab] sm:$0xff]
          %v2878 = vld [vmem:[#allocation3 + $0xb3] sm:$0xff]
          %v2879 = vld [vmem:[#allocation3 + $0xcb] sm:$0xff]
          %v2880 = vld [vmem:[#allocation3 + $0xd3] sm:$0xff]
          %v2881 = vld [vmem:[#allocation3 + $0xeb] sm:$0xff]
          %v2882 = vld [vmem:[#allocation3 + $0xf3] sm:$0xff]
          %s2883 = scalar_lea.vmem %s7, 512
          %v2884 = vld [vmem:[%s2883] sm:$0xf]
          %v2885 = vld [vmem:[%s2883 + $0x4] sm:$0xf]
          %v2886 = vld [vmem:[%s2883 + $0x8] sm:$0xf]
          %v2887 = vld [vmem:[%s2883 + $0xc] sm:$0xf]
          %v2888 = vld [vmem:[%s2883 + $0x10] sm:$0xf]
          %v2889 = vld [vmem:[%s2883 + $0x14] sm:$0xf]
          %v2890 = vld [vmem:[%s2883 + $0x18] sm:$0xf]
          %v2891 = vld [vmem:[%s2883 + $0x1c] sm:$0xf]
          %v2892 = vld [vmem:[%s2883 + $0x20] sm:$0xf]
          %v2893 = vld [vmem:[%s2883 + $0x24] sm:$0xf]
          %v2894 = vld [vmem:[%s2883 + $0x28] sm:$0xf]
          %v2895 = vld [vmem:[%s2883 + $0x2c] sm:$0xf]
          %v2896 = vld [vmem:[%s2883 + $0x30] sm:$0xf]
          %v2897 = vld [vmem:[%s2883 + $0x34] sm:$0xf]
          %v2898 = vld [vmem:[%s2883 + $0x38] sm:$0xf]
          %v2899 = vld [vmem:[%s2883 + $0x3c] sm:$0xf]
          %v2900 = vpack.c.bf16 %v2868, %v2867
          %v2901 = vpack.c.bf16 %v2870, %v2869
          %v2902 = vpack.c.bf16 %v2872, %v2871
          %v2903 = vpack.c.bf16 %v2874, %v2873
          %v2904 = vpack.c.bf16 %v2876, %v2875
          %v2905 = vpack.c.bf16 %v2878, %v2877
          %v2906 = vpack.c.bf16 %v2880, %v2879
          %v2907 = vpack.c.bf16 %v2882, %v2881
          %v2924 = vunpack.c.l.b16 %v2884
          %v2925 = vunpack.c.l.b16 %v2885
          %v2926 = vunpack.c.l.b16 %v2886
          %v2927 = vunpack.c.l.b16 %v2887
          %v2928 = vunpack.c.l.b16 %v2888
          %v2929 = vunpack.c.l.b16 %v2889
          %v2930 = vunpack.c.l.b16 %v2890
          %v2931 = vunpack.c.l.b16 %v2891
          %v2932 = vunpack.c.l.b16 %v2892
          %v2933 = vunpack.c.l.b16 %v2893
          %v2934 = vunpack.c.l.b16 %v2894
          %v2935 = vunpack.c.l.b16 %v2895
          %v2936 = vunpack.c.l.b16 %v2896
          %v2937 = vunpack.c.l.b16 %v2897
          %v2938 = vunpack.c.l.b16 %v2898
          %v2939 = vunpack.c.l.b16 %v2899
          %v2940 = vpack.c.b16 %v2925, %v2924
          %v2941 = vpack.c.b16 %v2927, %v2926
          %v2942 = vpack.c.b16 %v2929, %v2928
          %v2943 = vpack.c.b16 %v2931, %v2930
          %v2944 = vpack.c.b16 %v2933, %v2932
          %v2945 = vpack.c.b16 %v2935, %v2934
          %v2946 = vpack.c.b16 %v2937, %v2936
          %v2947 = vpack.c.b16 %v2939, %v2938
          %2956 = vmatpush.bf16.msra.mxu0 %v2947
          %2957 = vmatpush.bf16.msra.mxu0 %v2946
          %2958 = vmatpush.bf16.msra.mxu0 %v2945
          %2959 = vmatpush.bf16.msra.mxu0 %v2944
          %2960 = vmatpush.bf16.msra.mxu0 %v2943
          %2961 = vmatpush.bf16.msra.mxu0 %v2942
          %2962 = vmatpush.bf16.msra.mxu0 %v2941
          %2963 = vmatpush.bf16.msra.mxu0 %v2940
          %2964 = vmatmul.bf16.gmra.mxu0 %v2900
          %v2965 = vpop.f32.mrf.mxu0
          %v2966 = vadd.f32 0.0, %v2965
          %v2967 = vpop.f32.mrf.mxu0
          %v2968 = vadd.f32 0.0, %v2967
          %2969 = vmatmul.bf16.gmra.mxu0 %v2901
          %v2970 = vpop.f32.mrf.mxu0
          %v2971 = vadd.f32 0.0, %v2970
          %v2972 = vpop.f32.mrf.mxu0
          %v2973 = vadd.f32 0.0, %v2972
          %2974 = vmatmul.bf16.gmra.mxu0 %v2902
          %v2975 = vpop.f32.mrf.mxu0
          %v2976 = vadd.f32 0.0, %v2975
          %v2977 = vpop.f32.mrf.mxu0
          %v2978 = vadd.f32 0.0, %v2977
          %2979 = vmatmul.bf16.gmra.mxu0 %v2903
          %v2980 = vpop.f32.mrf.mxu0
          %v2981 = vadd.f32 0.0, %v2980
          %v2982 = vpop.f32.mrf.mxu0
          %v2983 = vadd.f32 0.0, %v2982
          %2984 = vmatmul.bf16.gmra.mxu0 %v2904
          %v2985 = vpop.f32.mrf.mxu0
          %v2986 = vadd.f32 0.0, %v2985
          %v2987 = vpop.f32.mrf.mxu0
          %v2988 = vadd.f32 0.0, %v2987
          %2989 = vmatmul.bf16.gmra.mxu0 %v2905
          %v2990 = vpop.f32.mrf.mxu0
          %v2991 = vadd.f32 0.0, %v2990
          %v2992 = vpop.f32.mrf.mxu0
          %v2993 = vadd.f32 0.0, %v2992
          %2994 = vmatmul.bf16.gmra.mxu0 %v2906
          %v2995 = vpop.f32.mrf.mxu0
          %v2996 = vadd.f32 0.0, %v2995
          %v2997 = vpop.f32.mrf.mxu0
          %v2998 = vadd.f32 0.0, %v2997
          %2999 = vmatmul.bf16.gmra.mxu0 %v2907
          %v3000 = vpop.f32.mrf.mxu0
          %v3001 = vadd.f32 0.0, %v3000
          %v3002 = vpop.f32.mrf.mxu0
          %v3003 = vadd.f32 0.0, %v3002
          %3004 = vdwg.mxu0
          %v3005 = vadd.f32 %v2851, %v2966
          %v3006 = vadd.f32 %v2852, %v2968
          %v3007 = vadd.f32 %v2853, %v2971
          %v3008 = vadd.f32 %v2854, %v2973
          %v3009 = vadd.f32 %v2855, %v2976
          %v3010 = vadd.f32 %v2856, %v2978
          %v3011 = vadd.f32 %v2857, %v2981
          %v3012 = vadd.f32 %v2858, %v2983
          %v3013 = vadd.f32 %v2859, %v2986
          %v3014 = vadd.f32 %v2860, %v2988
          %v3015 = vadd.f32 %v2861, %v2991
          %v3016 = vadd.f32 %v2862, %v2993
          %v3017 = vadd.f32 %v2863, %v2996
          %v3018 = vadd.f32 %v2864, %v2998
          %v3019 = vadd.f32 %v2865, %v3001
          %v3020 = vadd.f32 %v2866, %v3003
          %v3021 = vld [vmem:[#allocation3 + $0xc] sm:$0xff]
          %v3022 = vld [vmem:[#allocation3 + $0x14] sm:$0xff]
          %v3023 = vld [vmem:[#allocation3 + $0x2c] sm:$0xff]
          %v3024 = vld [vmem:[#allocation3 + $0x34] sm:$0xff]
          %v3025 = vld [vmem:[#allocation3 + $0x4c] sm:$0xff]
          %v3026 = vld [vmem:[#allocation3 + $0x54] sm:$0xff]
          %v3027 = vld [vmem:[#allocation3 + $0x6c] sm:$0xff]
          %v3028 = vld [vmem:[#allocation3 + $0x74] sm:$0xff]
          %v3029 = vld [vmem:[#allocation3 + $0x8c] sm:$0xff]
          %v3030 = vld [vmem:[#allocation3 + $0x94] sm:$0xff]
          %v3031 = vld [vmem:[#allocation3 + $0xac] sm:$0xff]
          %v3032 = vld [vmem:[#allocation3 + $0xb4] sm:$0xff]
          %v3033 = vld [vmem:[#allocation3 + $0xcc] sm:$0xff]
          %v3034 = vld [vmem:[#allocation3 + $0xd4] sm:$0xff]
          %v3035 = vld [vmem:[#allocation3 + $0xec] sm:$0xff]
          %v3036 = vld [vmem:[#allocation3 + $0xf4] sm:$0xff]
          %s3037 = scalar_lea.vmem %s7, 576
          %v3038 = vld [vmem:[%s3037] sm:$0xf]
          %v3039 = vld [vmem:[%s3037 + $0x4] sm:$0xf]
          %v3040 = vld [vmem:[%s3037 + $0x8] sm:$0xf]
          %v3041 = vld [vmem:[%s3037 + $0xc] sm:$0xf]
          %v3042 = vld [vmem:[%s3037 + $0x10] sm:$0xf]
          %v3043 = vld [vmem:[%s3037 + $0x14] sm:$0xf]
          %v3044 = vld [vmem:[%s3037 + $0x18] sm:$0xf]
          %v3045 = vld [vmem:[%s3037 + $0x1c] sm:$0xf]
          %v3046 = vld [vmem:[%s3037 + $0x20] sm:$0xf]
          %v3047 = vld [vmem:[%s3037 + $0x24] sm:$0xf]
          %v3048 = vld [vmem:[%s3037 + $0x28] sm:$0xf]
          %v3049 = vld [vmem:[%s3037 + $0x2c] sm:$0xf]
          %v3050 = vld [vmem:[%s3037 + $0x30] sm:$0xf]
          %v3051 = vld [vmem:[%s3037 + $0x34] sm:$0xf]
          %v3052 = vld [vmem:[%s3037 + $0x38] sm:$0xf]
          %v3053 = vld [vmem:[%s3037 + $0x3c] sm:$0xf]
          %v3054 = vpack.c.bf16 %v3022, %v3021
          %v3055 = vpack.c.bf16 %v3024, %v3023
          %v3056 = vpack.c.bf16 %v3026, %v3025
          %v3057 = vpack.c.bf16 %v3028, %v3027
          %v3058 = vpack.c.bf16 %v3030, %v3029
          %v3059 = vpack.c.bf16 %v3032, %v3031
          %v3060 = vpack.c.bf16 %v3034, %v3033
          %v3061 = vpack.c.bf16 %v3036, %v3035
          %v3078 = vunpack.c.l.b16 %v3038
          %v3079 = vunpack.c.l.b16 %v3039
          %v3080 = vunpack.c.l.b16 %v3040
          %v3081 = vunpack.c.l.b16 %v3041
          %v3082 = vunpack.c.l.b16 %v3042
          %v3083 = vunpack.c.l.b16 %v3043
          %v3084 = vunpack.c.l.b16 %v3044
          %v3085 = vunpack.c.l.b16 %v3045
          %v3086 = vunpack.c.l.b16 %v3046
          %v3087 = vunpack.c.l.b16 %v3047
          %v3088 = vunpack.c.l.b16 %v3048
          %v3089 = vunpack.c.l.b16 %v3049
          %v3090 = vunpack.c.l.b16 %v3050
          %v3091 = vunpack.c.l.b16 %v3051
          %v3092 = vunpack.c.l.b16 %v3052
          %v3093 = vunpack.c.l.b16 %v3053
          %v3094 = vpack.c.b16 %v3079, %v3078
          %v3095 = vpack.c.b16 %v3081, %v3080
          %v3096 = vpack.c.b16 %v3083, %v3082
          %v3097 = vpack.c.b16 %v3085, %v3084
          %v3098 = vpack.c.b16 %v3087, %v3086
          %v3099 = vpack.c.b16 %v3089, %v3088
          %v3100 = vpack.c.b16 %v3091, %v3090
          %v3101 = vpack.c.b16 %v3093, %v3092
          %3110 = vmatpush.bf16.msra.mxu0 %v3101
          %3111 = vmatpush.bf16.msra.mxu0 %v3100
          %3112 = vmatpush.bf16.msra.mxu0 %v3099
          %3113 = vmatpush.bf16.msra.mxu0 %v3098
          %3114 = vmatpush.bf16.msra.mxu0 %v3097
          %3115 = vmatpush.bf16.msra.mxu0 %v3096
          %3116 = vmatpush.bf16.msra.mxu0 %v3095
          %3117 = vmatpush.bf16.msra.mxu0 %v3094
          %3118 = vmatmul.bf16.gmra.mxu0 %v3054
          %v3119 = vpop.f32.mrf.mxu0
          %v3120 = vadd.f32 0.0, %v3119
          %v3121 = vpop.f32.mrf.mxu0
          %v3122 = vadd.f32 0.0, %v3121
          %3123 = vmatmul.bf16.gmra.mxu0 %v3055
          %v3124 = vpop.f32.mrf.mxu0
          %v3125 = vadd.f32 0.0, %v3124
          %v3126 = vpop.f32.mrf.mxu0
          %v3127 = vadd.f32 0.0, %v3126
          %3128 = vmatmul.bf16.gmra.mxu0 %v3056
          %v3129 = vpop.f32.mrf.mxu0
          %v3130 = vadd.f32 0.0, %v3129
          %v3131 = vpop.f32.mrf.mxu0
          %v3132 = vadd.f32 0.0, %v3131
          %3133 = vmatmul.bf16.gmra.mxu0 %v3057
          %v3134 = vpop.f32.mrf.mxu0
          %v3135 = vadd.f32 0.0, %v3134
          %v3136 = vpop.f32.mrf.mxu0
          %v3137 = vadd.f32 0.0, %v3136
          %3138 = vmatmul.bf16.gmra.mxu0 %v3058
          %v3139 = vpop.f32.mrf.mxu0
          %v3140 = vadd.f32 0.0, %v3139
          %v3141 = vpop.f32.mrf.mxu0
          %v3142 = vadd.f32 0.0, %v3141
          %3143 = vmatmul.bf16.gmra.mxu0 %v3059
          %v3144 = vpop.f32.mrf.mxu0
          %v3145 = vadd.f32 0.0, %v3144
          %v3146 = vpop.f32.mrf.mxu0
          %v3147 = vadd.f32 0.0, %v3146
          %3148 = vmatmul.bf16.gmra.mxu0 %v3060
          %v3149 = vpop.f32.mrf.mxu0
          %v3150 = vadd.f32 0.0, %v3149
          %v3151 = vpop.f32.mrf.mxu0
          %v3152 = vadd.f32 0.0, %v3151
          %3153 = vmatmul.bf16.gmra.mxu0 %v3061
          %v3154 = vpop.f32.mrf.mxu0
          %v3155 = vadd.f32 0.0, %v3154
          %v3156 = vpop.f32.mrf.mxu0
          %v3157 = vadd.f32 0.0, %v3156
          %3158 = vdwg.mxu0
          %v3159 = vadd.f32 %v3005, %v3120
          %v3160 = vadd.f32 %v3006, %v3122
          %v3161 = vadd.f32 %v3007, %v3125
          %v3162 = vadd.f32 %v3008, %v3127
          %v3163 = vadd.f32 %v3009, %v3130
          %v3164 = vadd.f32 %v3010, %v3132
          %v3165 = vadd.f32 %v3011, %v3135
          %v3166 = vadd.f32 %v3012, %v3137
          %v3167 = vadd.f32 %v3013, %v3140
          %v3168 = vadd.f32 %v3014, %v3142
          %v3169 = vadd.f32 %v3015, %v3145
          %v3170 = vadd.f32 %v3016, %v3147
          %v3171 = vadd.f32 %v3017, %v3150
          %v3172 = vadd.f32 %v3018, %v3152
          %v3173 = vadd.f32 %v3019, %v3155
          %v3174 = vadd.f32 %v3020, %v3157
          %v3175 = vld [vmem:[#allocation3 + $0xd] sm:$0xff]
          %v3176 = vld [vmem:[#allocation3 + $0x15] sm:$0xff]
          %v3177 = vld [vmem:[#allocation3 + $0x2d] sm:$0xff]
          %v3178 = vld [vmem:[#allocation3 + $0x35] sm:$0xff]
          %v3179 = vld [vmem:[#allocation3 + $0x4d] sm:$0xff]
          %v3180 = vld [vmem:[#allocation3 + $0x55] sm:$0xff]
          %v3181 = vld [vmem:[#allocation3 + $0x6d] sm:$0xff]
          %v3182 = vld [vmem:[#allocation3 + $0x75] sm:$0xff]
          %v3183 = vld [vmem:[#allocation3 + $0x8d] sm:$0xff]
          %v3184 = vld [vmem:[#allocation3 + $0x95] sm:$0xff]
          %v3185 = vld [vmem:[#allocation3 + $0xad] sm:$0xff]
          %v3186 = vld [vmem:[#allocation3 + $0xb5] sm:$0xff]
          %v3187 = vld [vmem:[#allocation3 + $0xcd] sm:$0xff]
          %v3188 = vld [vmem:[#allocation3 + $0xd5] sm:$0xff]
          %v3189 = vld [vmem:[#allocation3 + $0xed] sm:$0xff]
          %v3190 = vld [vmem:[#allocation3 + $0xf5] sm:$0xff]
          %s3191 = scalar_lea.vmem %s7, 640
          %v3192 = vld [vmem:[%s3191] sm:$0xf]
          %v3193 = vld [vmem:[%s3191 + $0x4] sm:$0xf]
          %v3194 = vld [vmem:[%s3191 + $0x8] sm:$0xf]
          %v3195 = vld [vmem:[%s3191 + $0xc] sm:$0xf]
          %v3196 = vld [vmem:[%s3191 + $0x10] sm:$0xf]
          %v3197 = vld [vmem:[%s3191 + $0x14] sm:$0xf]
          %v3198 = vld [vmem:[%s3191 + $0x18] sm:$0xf]
          %v3199 = vld [vmem:[%s3191 + $0x1c] sm:$0xf]
          %v3200 = vld [vmem:[%s3191 + $0x20] sm:$0xf]
          %v3201 = vld [vmem:[%s3191 + $0x24] sm:$0xf]
          %v3202 = vld [vmem:[%s3191 + $0x28] sm:$0xf]
          %v3203 = vld [vmem:[%s3191 + $0x2c] sm:$0xf]
          %v3204 = vld [vmem:[%s3191 + $0x30] sm:$0xf]
          %v3205 = vld [vmem:[%s3191 + $0x34] sm:$0xf]
          %v3206 = vld [vmem:[%s3191 + $0x38] sm:$0xf]
          %v3207 = vld [vmem:[%s3191 + $0x3c] sm:$0xf]
          %v3208 = vpack.c.bf16 %v3176, %v3175
          %v3209 = vpack.c.bf16 %v3178, %v3177
          %v3210 = vpack.c.bf16 %v3180, %v3179
          %v3211 = vpack.c.bf16 %v3182, %v3181
          %v3212 = vpack.c.bf16 %v3184, %v3183
          %v3213 = vpack.c.bf16 %v3186, %v3185
          %v3214 = vpack.c.bf16 %v3188, %v3187
          %v3215 = vpack.c.bf16 %v3190, %v3189
          %v3232 = vunpack.c.l.b16 %v3192
          %v3233 = vunpack.c.l.b16 %v3193
          %v3234 = vunpack.c.l.b16 %v3194
          %v3235 = vunpack.c.l.b16 %v3195
          %v3236 = vunpack.c.l.b16 %v3196
          %v3237 = vunpack.c.l.b16 %v3197
          %v3238 = vunpack.c.l.b16 %v3198
          %v3239 = vunpack.c.l.b16 %v3199
          %v3240 = vunpack.c.l.b16 %v3200
          %v3241 = vunpack.c.l.b16 %v3201
          %v3242 = vunpack.c.l.b16 %v3202
          %v3243 = vunpack.c.l.b16 %v3203
          %v3244 = vunpack.c.l.b16 %v3204
          %v3245 = vunpack.c.l.b16 %v3205
          %v3246 = vunpack.c.l.b16 %v3206
          %v3247 = vunpack.c.l.b16 %v3207
          %v3248 = vpack.c.b16 %v3233, %v3232
          %v3249 = vpack.c.b16 %v3235, %v3234
          %v3250 = vpack.c.b16 %v3237, %v3236
          %v3251 = vpack.c.b16 %v3239, %v3238
          %v3252 = vpack.c.b16 %v3241, %v3240
          %v3253 = vpack.c.b16 %v3243, %v3242
          %v3254 = vpack.c.b16 %v3245, %v3244
          %v3255 = vpack.c.b16 %v3247, %v3246
          %3264 = vmatpush.bf16.msra.mxu0 %v3255
          %3265 = vmatpush.bf16.msra.mxu0 %v3254
          %3266 = vmatpush.bf16.msra.mxu0 %v3253
          %3267 = vmatpush.bf16.msra.mxu0 %v3252
          %3268 = vmatpush.bf16.msra.mxu0 %v3251
          %3269 = vmatpush.bf16.msra.mxu0 %v3250
          %3270 = vmatpush.bf16.msra.mxu0 %v3249
          %3271 = vmatpush.bf16.msra.mxu0 %v3248
          %3272 = vmatmul.bf16.gmra.mxu0 %v3208
          %v3273 = vpop.f32.mrf.mxu0
          %v3274 = vadd.f32 0.0, %v3273
          %v3275 = vpop.f32.mrf.mxu0
          %v3276 = vadd.f32 0.0, %v3275
          %3277 = vmatmul.bf16.gmra.mxu0 %v3209
          %v3278 = vpop.f32.mrf.mxu0
          %v3279 = vadd.f32 0.0, %v3278
          %v3280 = vpop.f32.mrf.mxu0
          %v3281 = vadd.f32 0.0, %v3280
          %3282 = vmatmul.bf16.gmra.mxu0 %v3210
          %v3283 = vpop.f32.mrf.mxu0
          %v3284 = vadd.f32 0.0, %v3283
          %v3285 = vpop.f32.mrf.mxu0
          %v3286 = vadd.f32 0.0, %v3285
          %3287 = vmatmul.bf16.gmra.mxu0 %v3211
          %v3288 = vpop.f32.mrf.mxu0
          %v3289 = vadd.f32 0.0, %v3288
          %v3290 = vpop.f32.mrf.mxu0
          %v3291 = vadd.f32 0.0, %v3290
          %3292 = vmatmul.bf16.gmra.mxu0 %v3212
          %v3293 = vpop.f32.mrf.mxu0
          %v3294 = vadd.f32 0.0, %v3293
          %v3295 = vpop.f32.mrf.mxu0
          %v3296 = vadd.f32 0.0, %v3295
          %3297 = vmatmul.bf16.gmra.mxu0 %v3213
          %v3298 = vpop.f32.mrf.mxu0
          %v3299 = vadd.f32 0.0, %v3298
          %v3300 = vpop.f32.mrf.mxu0
          %v3301 = vadd.f32 0.0, %v3300
          %3302 = vmatmul.bf16.gmra.mxu0 %v3214
          %v3303 = vpop.f32.mrf.mxu0
          %v3304 = vadd.f32 0.0, %v3303
          %v3305 = vpop.f32.mrf.mxu0
          %v3306 = vadd.f32 0.0, %v3305
          %3307 = vmatmul.bf16.gmra.mxu0 %v3215
          %v3308 = vpop.f32.mrf.mxu0
          %v3309 = vadd.f32 0.0, %v3308
          %v3310 = vpop.f32.mrf.mxu0
          %v3311 = vadd.f32 0.0, %v3310
          %3312 = vdwg.mxu0
          %v3313 = vadd.f32 %v3159, %v3274
          %v3314 = vadd.f32 %v3160, %v3276
          %v3315 = vadd.f32 %v3161, %v3279
          %v3316 = vadd.f32 %v3162, %v3281
          %v3317 = vadd.f32 %v3163, %v3284
          %v3318 = vadd.f32 %v3164, %v3286
          %v3319 = vadd.f32 %v3165, %v3289
          %v3320 = vadd.f32 %v3166, %v3291
          %v3321 = vadd.f32 %v3167, %v3294
          %v3322 = vadd.f32 %v3168, %v3296
          %v3323 = vadd.f32 %v3169, %v3299
          %v3324 = vadd.f32 %v3170, %v3301
          %v3325 = vadd.f32 %v3171, %v3304
          %v3326 = vadd.f32 %v3172, %v3306
          %v3327 = vadd.f32 %v3173, %v3309
          %v3328 = vadd.f32 %v3174, %v3311
          %v3329 = vld [vmem:[#allocation8] sm:$0x1]
          %v3331 = vperm.slane %v3329, 0
          %v3333 = vadd.f32 %v3313, %v3331
          %v3334 = vadd.f32 %v3314, %v3331
          %v3335 = vadd.f32 %v3315, %v3331
          %v3336 = vadd.f32 %v3316, %v3331
          %v3337 = vadd.f32 %v3317, %v3331
          %v3338 = vadd.f32 %v3318, %v3331
          %v3339 = vadd.f32 %v3319, %v3331
          %v3340 = vadd.f32 %v3320, %v3331
          %v3341 = vadd.f32 %v3321, %v3331
          %v3342 = vadd.f32 %v3322, %v3331
          %v3343 = vadd.f32 %v3323, %v3331
          %v3344 = vadd.f32 %v3324, %v3331
          %v3345 = vadd.f32 %v3325, %v3331
          %v3346 = vadd.f32 %v3326, %v3331
          %v3347 = vadd.f32 %v3327, %v3331
          %v3348 = vadd.f32 %v3328, %v3331
          %v3349 = vmax.f32 %v3333, 0.0
          %v3350 = vmax.f32 %v3334, 0.0
          %v3351 = vmax.f32 %v3335, 0.0
          %v3352 = vmax.f32 %v3336, 0.0
          %v3353 = vmax.f32 %v3337, 0.0
          %v3354 = vmax.f32 %v3338, 0.0
          %v3355 = vmax.f32 %v3339, 0.0
          %v3356 = vmax.f32 %v3340, 0.0
          %v3357 = vmax.f32 %v3341, 0.0
          %v3358 = vmax.f32 %v3342, 0.0
          %v3359 = vmax.f32 %v3343, 0.0
          %v3360 = vmax.f32 %v3344, 0.0
          %v3361 = vmax.f32 %v3345, 0.0
          %v3362 = vmax.f32 %v3346, 0.0
          %v3363 = vmax.f32 %v3347, 0.0
          %v3364 = vmax.f32 %v3348, 0.0
          %v3365 = vadd.f32 %v3349, %v3350
          %v3366 = vrot.slane %v3365, 4
          %v3367 = vadd.f32 %v3365, %v3366
          %v3368 = vrot.slane %v3367, 2
          %v3369 = vadd.f32 %v3367, %v3368
          %v3370 = vrot.slane %v3369, 1
          %v3371 = vadd.f32 %v3369, %v3370
          %v3372 = vadd.f32 %v3351, %v3352
          %v3373 = vrot.slane %v3372, 4
          %v3374 = vadd.f32 %v3372, %v3373
          %v3375 = vrot.slane %v3374, 2
          %v3376 = vadd.f32 %v3374, %v3375
          %v3377 = vrot.slane %v3376, 1
          %v3378 = vadd.f32 %v3376, %v3377
          %v3379 = vadd.f32 %v3353, %v3354
          %v3380 = vrot.slane %v3379, 4
          %v3381 = vadd.f32 %v3379, %v3380
          %v3382 = vrot.slane %v3381, 2
          %v3383 = vadd.f32 %v3381, %v3382
          %v3384 = vrot.slane %v3383, 1
          %v3385 = vadd.f32 %v3383, %v3384
          %v3386 = vadd.f32 %v3355, %v3356
          %v3387 = vrot.slane %v3386, 4
          %v3388 = vadd.f32 %v3386, %v3387
          %v3389 = vrot.slane %v3388, 2
          %v3390 = vadd.f32 %v3388, %v3389
          %v3391 = vrot.slane %v3390, 1
          %v3392 = vadd.f32 %v3390, %v3391
          %v3393 = vadd.f32 %v3357, %v3358
          %v3394 = vrot.slane %v3393, 4
          %v3395 = vadd.f32 %v3393, %v3394
          %v3396 = vrot.slane %v3395, 2
          %v3397 = vadd.f32 %v3395, %v3396
          %v3398 = vrot.slane %v3397, 1
          %v3399 = vadd.f32 %v3397, %v3398
          %v3400 = vadd.f32 %v3359, %v3360
          %v3401 = vrot.slane %v3400, 4
          %v3402 = vadd.f32 %v3400, %v3401
          %v3403 = vrot.slane %v3402, 2
          %v3404 = vadd.f32 %v3402, %v3403
          %v3405 = vrot.slane %v3404, 1
          %v3406 = vadd.f32 %v3404, %v3405
          %v3407 = vadd.f32 %v3361, %v3362
          %v3408 = vrot.slane %v3407, 4
          %v3409 = vadd.f32 %v3407, %v3408
          %v3410 = vrot.slane %v3409, 2
          %v3411 = vadd.f32 %v3409, %v3410
          %v3412 = vrot.slane %v3411, 1
          %v3413 = vadd.f32 %v3411, %v3412
          %v3414 = vadd.f32 %v3363, %v3364
          %v3415 = vrot.slane %v3414, 4
          %v3416 = vadd.f32 %v3414, %v3415
          %v3417 = vrot.slane %v3416, 2
          %v3418 = vadd.f32 %v3416, %v3417
          %v3419 = vrot.slane %v3418, 1
          %v3420 = vadd.f32 %v3418, %v3419
          %v3421 = vrcp.pop 16.0
          %v3422 = vmul.f32 16.0, %v3421
          %v3423 = vsub.f32 1.0, %v3422
          %v3424 = vmul.f32 %v3421, %v3423
          %v3425 = vadd.f32 %v3421, %v3424
          %vm3426 = vweird.f32 %v3421
          %v3427 = vsel %vm3426, %v3421, %v3425
          %v3428 = vmul.f32 %v3371, %v3427
          %v3429 = vmul.f32 %v3378, %v3427
          %v3430 = vmul.f32 %v3385, %v3427
          %v3431 = vmul.f32 %v3392, %v3427
          %v3432 = vmul.f32 %v3399, %v3427
          %v3433 = vmul.f32 %v3406, %v3427
          %v3434 = vmul.f32 %v3413, %v3427
          %v3435 = vmul.f32 %v3420, %v3427
          %v3436 = vld [vmem:[#allocation9] sm:$0xf]
          %v3437 = vld [vmem:[#allocation9 + $0x4] sm:$0xf]
          %v3438 = vld [vmem:[#allocation9 + $0x8] sm:$0xf]
          %v3439 = vld [vmem:[#allocation9 + $0xc] sm:$0xf]
          %v3440 = vld [vmem:[#allocation9 + $0x10] sm:$0xf]
          %v3441 = vld [vmem:[#allocation9 + $0x14] sm:$0xf]
          %v3442 = vld [vmem:[#allocation9 + $0x18] sm:$0xf]
          %v3443 = vld [vmem:[#allocation9 + $0x1c] sm:$0xf]
          %v3444 = vld [vmem:[#allocation9 + $0x20] sm:$0xf]
          %v3445 = vld [vmem:[#allocation9 + $0x24] sm:$0xf]
          %v3446 = vld [vmem:[#allocation9 + $0x28] sm:$0xf]
          %v3447 = vld [vmem:[#allocation9 + $0x2c] sm:$0xf]
          %v3448 = vld [vmem:[#allocation9 + $0x30] sm:$0xf]
          %v3449 = vld [vmem:[#allocation9 + $0x34] sm:$0xf]
          %v3450 = vld [vmem:[#allocation9 + $0x38] sm:$0xf]
          %v3451 = vld [vmem:[#allocation9 + $0x3c] sm:$0xf]
          %v3452 = vpack.c.bf16 %v3428, %v3428
          %v3453 = vpack.c.bf16 %v3429, %v3429
          %v3454 = vpack.c.bf16 %v3430, %v3430
          %v3455 = vpack.c.bf16 %v3431, %v3431
          %v3456 = vpack.c.bf16 %v3432, %v3432
          %v3457 = vpack.c.bf16 %v3433, %v3433
          %v3458 = vpack.c.bf16 %v3434, %v3434
          %v3459 = vpack.c.bf16 %v3435, %v3435
          %v3460 = vld [vmem:[#allocation11] sm:$0x1]
          %v3462 = vperm.slane %v3460, 0
          %v3472 = vunpack.c.l.b16 %v3452
          %v3473 = vunpack.c.l.b16 %v3453
          %v3474 = vunpack.c.l.b16 %v3454
          %v3475 = vunpack.c.l.b16 %v3455
          %v3476 = vunpack.c.l.b16 %v3456
          %v3477 = vunpack.c.l.b16 %v3457
          %v3478 = vunpack.c.l.b16 %v3458
          %v3479 = vunpack.c.l.b16 %v3459
          %vm3480 = vcmask 1041409
          %v3481 = vsel %vm3480, %v3473, %v3472
          %vm3482 = vcmask 1042434
          %v3483 = vsel %vm3482, %v3474, %v3481
          %vm3484 = vcmask 1043459
          %v3485 = vsel %vm3484, %v3475, %v3483
          %vm3486 = vcmask 1044484
          %v3487 = vsel %vm3486, %v3476, %v3485
          %vm3488 = vcmask 1045509
          %v3489 = vsel %vm3488, %v3477, %v3487
          %vm3490 = vcmask 1046534
          %v3491 = vsel %vm3490, %v3478, %v3489
          %vm3492 = vcmask 1047559
          %v3493 = vsel %vm3492, %v3479, %v3491
          %v3494 = vpack.c.b16 %v3493, %v3493
          %v3512 = vunpack.c.l.b16 %v3436
          %v3513 = vunpack.c.l.b16 %v3437
          %v3514 = vunpack.c.l.b16 %v3438
          %v3515 = vunpack.c.l.b16 %v3439
          %v3516 = vunpack.c.l.b16 %v3440
          %v3517 = vunpack.c.l.b16 %v3441
          %v3518 = vunpack.c.l.b16 %v3442
          %v3519 = vunpack.c.l.b16 %v3443
          %v3520 = vunpack.c.l.b16 %v3444
          %v3521 = vunpack.c.l.b16 %v3445
          %v3522 = vunpack.c.l.b16 %v3446
          %v3523 = vunpack.c.l.b16 %v3447
          %v3524 = vunpack.c.l.b16 %v3448
          %v3525 = vunpack.c.l.b16 %v3449
          %v3526 = vunpack.c.l.b16 %v3450
          %v3527 = vunpack.c.l.b16 %v3451
          %v3528 = vpack.c.b16 %v3513, %v3512
          %v3529 = vpack.c.b16 %v3515, %v3514
          %v3530 = vpack.c.b16 %v3517, %v3516
          %v3531 = vpack.c.b16 %v3519, %v3518
          %v3532 = vpack.c.b16 %v3521, %v3520
          %v3533 = vpack.c.b16 %v3523, %v3522
          %v3534 = vpack.c.b16 %v3525, %v3524
          %v3535 = vpack.c.b16 %v3527, %v3526
          %3544 = vmatpush.bf16.msra.mxu0 %v3535
          %3545 = vmatpush.bf16.msra.mxu0 %v3534
          %3546 = vmatpush.bf16.msra.mxu0 %v3533
          %3547 = vmatpush.bf16.msra.mxu0 %v3532
          %3548 = vmatpush.bf16.msra.mxu0 %v3531
          %3549 = vmatpush.bf16.msra.mxu0 %v3530
          %3550 = vmatpush.bf16.msra.mxu0 %v3529
          %3551 = vmatpush.bf16.msra.mxu0 %v3528
          %3552 = vmatmul.bf16.gmra.mxu0 %v3494
          %v3553 = vpop.f32.mrf.mxu0
          %v3554 = vadd.f32 %v3462, %v3553
          %v3555 = vpop.f32.mrf.mxu0
          %3556 = vdwg.mxu0
          %v3557 = vld [vmem:[#allocation12] sm:$0x1]
          %v3558 = vld [vmem:[#allocation14] sm:$0x1]
          %3559 = vadd.xlane.f32.xlu0 %v3554
          %v3560 = vpop.xlane.xlu0 %3559
          %v3561 = vrcp.pop 128.0
          %v3562 = vmul.f32 128.0, %v3561
          %v3563 = vsub.f32 1.0, %v3562
          %v3564 = vmul.f32 %v3561, %v3563
          %v3565 = vadd.f32 %v3561, %v3564
          %vm3566 = vweird.f32 %v3561
          %v3567 = vsel %vm3566, %v3561, %v3565
          %v3568 = vmul.f32 %v3560, %v3567
          %v3569 = vsub.f32 %v3554, %v3568
          %v3570 = vmul.f32 %v3569, %v3569
          %3571 = vadd.xlane.f32.xlu0 %v3570
          %v3572 = vpop.xlane.xlu0 %3571
          %v3573 = vmul.f32 %v3572, %v3567
          %v3574 = vadd.f32 %v3573, 1e-05
          %v3575 = vrsqrt.pop %v3574
          %v3576 = vmul.f32 %v3575, %v3574
          %v3577 = vmul.f32 %v3576, %v3575
          %v3578 = vmul.f32 0.5, %v3577
          %v3579 = vsub.f32 1.5, %v3578
          %v3580 = vmul.f32 %v3575, %v3579
          %vm3581 = vweird.f32 %v3574
          %vm3582 = vweird.f32 %v3575
          %vm3583 = vmor %vm3581, %vm3582
          %v3584 = vsel %vm3583, %v3575, %v3580
          %v3585 = vmul.f32 %v3569, %v3584
          %v3587 = vperm.slane %v3557, 0
          %v3589 = vmul.f32 %v3585, %v3587
          %v3591 = vperm.slane %v3558, 0
          %v3593 = vadd.f32 %v3589, %v3591
          %v3594 = vld [vmem:[#allocation15] sm:$0xff]
          %v3595 = vadd.f32 %v3593, %v3594
          %3596 = vst [vmem:[#allocation2] sm:$0xff] %v3595
        $region232: #{two_stage_forward.1} parent=139 // pred_fallthru
          _
        %v3597 = vld [vmem:[#allocation2] sm:$0xff]
        %v3598 = vld [vmem:[%s1250] sm:$0xff]
        %v3599 = vld [vmem:[%s1250 + $0x8] sm:$0xf]
        %v3600 = vld [vmem:[%s1250 + $0xc] sm:$0xff]
        %v3601 = vld [vmem:[%s1250 + $0x14] sm:$0xf]
        %v3602 = vld [vmem:[%s1250 + $0x18] sm:$0xff]
        %v3603 = vld [vmem:[%s1250 + $0x20] sm:$0xf]
        %v3604 = vld [vmem:[%s1250 + $0x24] sm:$0xff]
        %v3605 = vld [vmem:[%s1250 + $0x2c] sm:$0xf]
        %v3606 = vld [vmem:[%s1250 + $0x30] sm:$0xff]
        %v3607 = vld [vmem:[%s1250 + $0x38] sm:$0xf]
        %v3608 = vld [vmem:[%s1250 + $0x3c] sm:$0xff]
        %v3609 = vld [vmem:[%s1250 + $0x44] sm:$0xf]
        %v3610 = vld [vmem:[%s1250 + $0x48] sm:$0xff]
        %v3611 = vld [vmem:[%s1250 + $0x50] sm:$0xf]
        %v3612 = vld [vmem:[%s1250 + $0x54] sm:$0xff]
        %v3613 = vld [vmem:[%s1250 + $0x5c] sm:$0xf]
        %v3614 = vld [vmem:[%s1250 + $0x60] sm:$0xff]
        %v3615 = vld [vmem:[%s1250 + $0x68] sm:$0xf]
        %v3616 = vld [vmem:[%s1250 + $0x6c] sm:$0xff]
        %v3617 = vld [vmem:[%s1250 + $0x74] sm:$0xf]
        %v3618 = vld [vmem:[%s1250 + $0x78] sm:$0xff]
        %v3619 = vld [vmem:[%s1250 + $0x80] sm:$0xf]
        %v3620 = vld [vmem:[%s1250 + $0x84] sm:$0xff]
        %v3621 = vld [vmem:[%s1250 + $0x8c] sm:$0xf]
        %v3622 = vld [vmem:[%s1250 + $0x90] sm:$0xff]
        %v3623 = vld [vmem:[%s1250 + $0x98] sm:$0xf]
        %v3624 = vld [vmem:[%s1250 + $0x9c] sm:$0xff]
        %v3625 = vld [vmem:[%s1250 + $0xa4] sm:$0xf]
        %v3626 = vld [vmem:[%s1250 + $0xa8] sm:$0xff]
        %v3627 = vld [vmem:[%s1250 + $0xb0] sm:$0xf]
        %v3628 = vld [vmem:[%s1250 + $0xb4] sm:$0xff]
        %v3629 = vld [vmem:[%s1250 + $0xbc] sm:$0xf]
        %v3630 = vpack.c.bf16 %v3597, %v3597
        %v3631 = vld [vmem:[%s1487] sm:$0x7]
        %v3633 = vperm.slane %v3631, 0
        %v3634 = vperm.slane %v3631, 1
        %v3635 = vperm.slane %v3631, 2
        %v3671 = vunpack.c.l.b16 %v3598
        %v3672 = vunpack.c.h.b16 %v3598
        %v3673 = vunpack.c.l.b16 %v3599
        %v3674 = vunpack.c.l.b16 %v3600
        %v3675 = vunpack.c.h.b16 %v3600
        %v3676 = vunpack.c.l.b16 %v3601
        %v3677 = vunpack.c.l.b16 %v3602
        %v3678 = vunpack.c.h.b16 %v3602
        %v3679 = vunpack.c.l.b16 %v3603
        %v3680 = vunpack.c.l.b16 %v3604
        %v3681 = vunpack.c.h.b16 %v3604
        %v3682 = vunpack.c.l.b16 %v3605
        %v3683 = vunpack.c.l.b16 %v3606
        %v3684 = vunpack.c.h.b16 %v3606
        %v3685 = vunpack.c.l.b16 %v3607
        %v3686 = vunpack.c.l.b16 %v3608
        %v3687 = vunpack.c.h.b16 %v3608
        %v3688 = vunpack.c.l.b16 %v3609
        %v3689 = vunpack.c.l.b16 %v3610
        %v3690 = vunpack.c.h.b16 %v3610
        %v3691 = vunpack.c.l.b16 %v3611
        %v3692 = vunpack.c.l.b16 %v3612
        %v3693 = vunpack.c.h.b16 %v3612
        %v3694 = vunpack.c.l.b16 %v3613
        %v3695 = vunpack.c.l.b16 %v3614
        %v3696 = vunpack.c.h.b16 %v3614
        %v3697 = vunpack.c.l.b16 %v3615
        %v3698 = vunpack.c.l.b16 %v3616
        %v3699 = vunpack.c.h.b16 %v3616
        %v3700 = vunpack.c.l.b16 %v3617
        %v3701 = vunpack.c.l.b16 %v3618
        %v3702 = vunpack.c.h.b16 %v3618
        %v3703 = vunpack.c.l.b16 %v3619
        %v3704 = vunpack.c.l.b16 %v3620
        %v3705 = vunpack.c.h.b16 %v3620
        %v3706 = vunpack.c.l.b16 %v3621
        %v3707 = vunpack.c.l.b16 %v3622
        %v3708 = vunpack.c.h.b16 %v3622
        %v3709 = vunpack.c.l.b16 %v3623
        %v3710 = vunpack.c.l.b16 %v3624
        %v3711 = vunpack.c.h.b16 %v3624
        %v3712 = vunpack.c.l.b16 %v3625
        %v3713 = vunpack.c.l.b16 %v3626
        %v3714 = vunpack.c.h.b16 %v3626
        %v3715 = vunpack.c.l.b16 %v3627
        %v3716 = vunpack.c.l.b16 %v3628
        %v3717 = vunpack.c.h.b16 %v3628
        %v3718 = vunpack.c.l.b16 %v3629
        %v3719 = vpack.c.b16 %v3674, %v3671
        %v3720 = vpack.c.b16 %v3675, %v3672
        %v3721 = vpack.c.b16 %v3676, %v3673
        %v3722 = vpack.c.b16 %v3680, %v3677
        %v3723 = vpack.c.b16 %v3681, %v3678
        %v3724 = vpack.c.b16 %v3682, %v3679
        %v3725 = vpack.c.b16 %v3686, %v3683
        %v3726 = vpack.c.b16 %v3687, %v3684
        %v3727 = vpack.c.b16 %v3688, %v3685
        %v3728 = vpack.c.b16 %v3692, %v3689
        %v3729 = vpack.c.b16 %v3693, %v3690
        %v3730 = vpack.c.b16 %v3694, %v3691
        %v3731 = vpack.c.b16 %v3698, %v3695
        %v3732 = vpack.c.b16 %v3699, %v3696
        %v3733 = vpack.c.b16 %v3700, %v3697
        %v3734 = vpack.c.b16 %v3704, %v3701
        %v3735 = vpack.c.b16 %v3705, %v3702
        %v3736 = vpack.c.b16 %v3706, %v3703
        %v3737 = vpack.c.b16 %v3710, %v3707
        %v3738 = vpack.c.b16 %v3711, %v3708
        %v3739 = vpack.c.b16 %v3712, %v3709
        %v3740 = vpack.c.b16 %v3716, %v3713
        %v3741 = vpack.c.b16 %v3717, %v3714
        %v3742 = vpack.c.b16 %v3718, %v3715
        %3767 = vmatpush.bf16.msra.mxu0 %v3740
        %3768 = vmatpush.bf16.msra.mxu0 %v3737
        %3769 = vmatpush.bf16.msra.mxu0 %v3734
        %3770 = vmatpush.bf16.msra.mxu0 %v3731
        %3771 = vmatpush.bf16.msra.mxu0 %v3728
        %3772 = vmatpush.bf16.msra.mxu0 %v3725
        %3773 = vmatpush.bf16.msra.mxu0 %v3722
        %3774 = vmatpush.bf16.msra.mxu0 %v3719
        %3775 = vmatmul.bf16.gmra.mxu0 %v3630
        %v3776 = vpop.f32.mrf.mxu0
        %v3777 = vadd.f32 %v3633, %v3776
        %v3778 = vpop.f32.mrf.mxu0
        %3779 = vdwg.mxu0
        %3780 = vmatpush.bf16.msra.mxu0 %v3741
        %3781 = vmatpush.bf16.msra.mxu0 %v3738
        %3782 = vmatpush.bf16.msra.mxu0 %v3735
        %3783 = vmatpush.bf16.msra.mxu0 %v3732
        %3784 = vmatpush.bf16.msra.mxu0 %v3729
        %3785 = vmatpush.bf16.msra.mxu0 %v3726
        %3786 = vmatpush.bf16.msra.mxu0 %v3723
        %3787 = vmatpush.bf16.msra.mxu0 %v3720
        %3788 = vmatmul.bf16.gmra.mxu0 %v3630
        %v3789 = vpop.f32.mrf.mxu0
        %v3790 = vadd.f32 %v3634, %v3789
        %v3791 = vpop.f32.mrf.mxu0
        %3792 = vdwg.mxu0
        %3793 = vmatpush.bf16.msra.mxu0 %v3742
        %3794 = vmatpush.bf16.msra.mxu0 %v3739
        %3795 = vmatpush.bf16.msra.mxu0 %v3736
        %3796 = vmatpush.bf16.msra.mxu0 %v3733
        %3797 = vmatpush.bf16.msra.mxu0 %v3730
        %3798 = vmatpush.bf16.msra.mxu0 %v3727
        %3799 = vmatpush.bf16.msra.mxu0 %v3724
        %3800 = vmatpush.bf16.msra.mxu0 %v3721
        %3801 = vmatmul.bf16.gmra.mxu0 %v3630
        %v3802 = vpop.f32.mrf.mxu0
        %v3803 = vadd.f32 %v3635, %v3802
        %v3804 = vpop.f32.mrf.mxu0
        %3805 = vdwg.mxu0
        %3807 = vrot.lane.b32.xlu0 %v3777, 112
        %v3808 = vpop.permute.xlu0 %3807
        %3810 = vrot.lane.b32.xlu0 %v3777, 96
        %v3811 = vpop.permute.xlu0 %3810
        %3813 = vrot.lane.b32.xlu0 %v3777, 80
        %v3814 = vpop.permute.xlu0 %3813
        %3816 = vrot.lane.b32.xlu0 %v3777, 64
        %v3817 = vpop.permute.xlu0 %3816
        %3819 = vrot.lane.b32.xlu0 %v3777, 48
        %v3820 = vpop.permute.xlu0 %3819
        %3822 = vrot.lane.b32.xlu0 %v3777, 32
        %v3823 = vpop.permute.xlu0 %3822
        %3825 = vrot.lane.b32.xlu0 %v3777, 16
        %v3826 = vpop.permute.xlu0 %3825
        %3829 = vrot.lane.b32.xlu0 %v3790, 112
        %v3830 = vpop.permute.xlu0 %3829
        %3832 = vrot.lane.b32.xlu0 %v3790, 96
        %v3833 = vpop.permute.xlu0 %3832
        %3835 = vrot.lane.b32.xlu0 %v3790, 80
        %v3836 = vpop.permute.xlu0 %3835
        %3838 = vrot.lane.b32.xlu0 %v3790, 64
        %v3839 = vpop.permute.xlu0 %3838
        %3841 = vrot.lane.b32.xlu0 %v3790, 48
        %v3842 = vpop.permute.xlu0 %3841
        %3844 = vrot.lane.b32.xlu0 %v3790, 32
        %v3845 = vpop.permute.xlu0 %3844
        %3847 = vrot.lane.b32.xlu0 %v3790, 16
        %v3848 = vpop.permute.xlu0 %3847
        %3851 = vrot.lane.b32.xlu0 %v3803, 112
        %v3852 = vpop.permute.xlu0 %3851
        %3854 = vrot.lane.b32.xlu0 %v3803, 96
        %v3855 = vpop.permute.xlu0 %3854
        %3857 = vrot.lane.b32.xlu0 %v3803, 80
        %v3858 = vpop.permute.xlu0 %3857
        %3860 = vrot.lane.b32.xlu0 %v3803, 64
        %v3861 = vpop.permute.xlu0 %3860
        %3863 = vrot.lane.b32.xlu0 %v3803, 48
        %v3864 = vpop.permute.xlu0 %3863
        %3866 = vrot.lane.b32.xlu0 %v3803, 32
        %v3867 = vpop.permute.xlu0 %3866
        %3869 = vrot.lane.b32.xlu0 %v3803, 16
        %v3870 = vpop.permute.xlu0 %3869
        %v3872 = vpack.c.bf16 %v3777, %v3777
        %v3873 = vpack.c.bf16 %v3808, %v3808
        %v3874 = vpack.c.bf16 %v3811, %v3811
        %v3875 = vpack.c.bf16 %v3814, %v3814
        %v3876 = vpack.c.bf16 %v3817, %v3817
        %v3877 = vpack.c.bf16 %v3820, %v3820
        %v3878 = vpack.c.bf16 %v3823, %v3823
        %v3879 = vpack.c.bf16 %v3826, %v3826
        %v3880 = vpack.c.bf16 %v3790, %v3790
        %v3881 = vpack.c.bf16 %v3830, %v3830
        %v3882 = vpack.c.bf16 %v3833, %v3833
        %v3883 = vpack.c.bf16 %v3836, %v3836
        %v3884 = vpack.c.bf16 %v3839, %v3839
        %v3885 = vpack.c.bf16 %v3842, %v3842
        %v3886 = vpack.c.bf16 %v3845, %v3845
        %v3887 = vpack.c.bf16 %v3848, %v3848
        %vm3888 = vcmask 130048
        %v3890 = vsel %vm3888, %v3872, 0
        %v3893 = vsel %vm3888, %v3880, 0
        %3895 = vmatpush.bf16.xpose.msra.mxu0 0
        %3896 = vmatpush.bf16.xpose.msra.mxu0 0
        %3897 = vmatpush.bf16.xpose.msra.mxu0 0
        %3898 = vmatpush.bf16.xpose.msra.mxu0 0
        %3899 = vmatpush.bf16.xpose.msra.mxu0 0
        %3900 = vmatpush.bf16.xpose.msra.mxu0 0
        %3901 = vmatpush.bf16.xpose.msra.mxu0 0
        %3902 = vmatpush.bf16.xpose.msra.mxu0 %v3893
        %3903 = vmatmul.bf16.gmra.mxu0 %v3890
        %v3904 = vpop.f32.mrf.mxu0
        %v3905 = vadd.f32 0.0, %v3904
        %v3906 = vpop.f32.mrf.mxu0
        %3907 = vdwg.mxu0
        %v3909 = vsel %vm3888, %v3873, 0
        %v3912 = vsel %vm3888, %v3881, 0
        %3914 = vmatpush.bf16.xpose.msra.mxu0 0
        %3915 = vmatpush.bf16.xpose.msra.mxu0 0
        %3916 = vmatpush.bf16.xpose.msra.mxu0 0
        %3917 = vmatpush.bf16.xpose.msra.mxu0 0
        %3918 = vmatpush.bf16.xpose.msra.mxu0 0
        %3919 = vmatpush.bf16.xpose.msra.mxu0 0
        %3920 = vmatpush.bf16.xpose.msra.mxu0 0
        %3921 = vmatpush.bf16.xpose.msra.mxu0 %v3912
        %3922 = vmatmul.bf16.gmra.mxu0 %v3909
        %v3923 = vpop.f32.mrf.mxu0
        %v3924 = vadd.f32 0.0, %v3923
        %v3925 = vpop.f32.mrf.mxu0
        %3926 = vdwg.mxu0
        %v3928 = vsel %vm3888, %v3874, 0
        %v3931 = vsel %vm3888, %v3882, 0
        %3933 = vmatpush.bf16.xpose.msra.mxu0 0
        %3934 = vmatpush.bf16.xpose.msra.mxu0 0
        %3935 = vmatpush.bf16.xpose.msra.mxu0 0
        %3936 = vmatpush.bf16.xpose.msra.mxu0 0
        %3937 = vmatpush.bf16.xpose.msra.mxu0 0
        %3938 = vmatpush.bf16.xpose.msra.mxu0 0
        %3939 = vmatpush.bf16.xpose.msra.mxu0 0
        %3940 = vmatpush.bf16.xpose.msra.mxu0 %v3931
        %3941 = vmatmul.bf16.gmra.mxu0 %v3928
        %v3942 = vpop.f32.mrf.mxu0
        %v3943 = vadd.f32 0.0, %v3942
        %v3944 = vpop.f32.mrf.mxu0
        %3945 = vdwg.mxu0
        %v3947 = vsel %vm3888, %v3875, 0
        %v3950 = vsel %vm3888, %v3883, 0
        %3952 = vmatpush.bf16.xpose.msra.mxu0 0
        %3953 = vmatpush.bf16.xpose.msra.mxu0 0
        %3954 = vmatpush.bf16.xpose.msra.mxu0 0
        %3955 = vmatpush.bf16.xpose.msra.mxu0 0
        %3956 = vmatpush.bf16.xpose.msra.mxu0 0
        %3957 = vmatpush.bf16.xpose.msra.mxu0 0
        %3958 = vmatpush.bf16.xpose.msra.mxu0 0
        %3959 = vmatpush.bf16.xpose.msra.mxu0 %v3950
        %3960 = vmatmul.bf16.gmra.mxu0 %v3947
        %v3961 = vpop.f32.mrf.mxu0
        %v3962 = vadd.f32 0.0, %v3961
        %v3963 = vpop.f32.mrf.mxu0
        %3964 = vdwg.mxu0
        %v3966 = vsel %vm3888, %v3876, 0
        %v3969 = vsel %vm3888, %v3884, 0
        %3971 = vmatpush.bf16.xpose.msra.mxu0 0
        %3972 = vmatpush.bf16.xpose.msra.mxu0 0
        %3973 = vmatpush.bf16.xpose.msra.mxu0 0
        %3974 = vmatpush.bf16.xpose.msra.mxu0 0
        %3975 = vmatpush.bf16.xpose.msra.mxu0 0
        %3976 = vmatpush.bf16.xpose.msra.mxu0 0
        %3977 = vmatpush.bf16.xpose.msra.mxu0 0
        %3978 = vmatpush.bf16.xpose.msra.mxu0 %v3969
        %3979 = vmatmul.bf16.gmra.mxu0 %v3966
        %v3980 = vpop.f32.mrf.mxu0
        %v3981 = vadd.f32 0.0, %v3980
        %v3982 = vpop.f32.mrf.mxu0
        %3983 = vdwg.mxu0
        %v3985 = vsel %vm3888, %v3877, 0
        %v3988 = vsel %vm3888, %v3885, 0
        %3990 = vmatpush.bf16.xpose.msra.mxu0 0
        %3991 = vmatpush.bf16.xpose.msra.mxu0 0
        %3992 = vmatpush.bf16.xpose.msra.mxu0 0
        %3993 = vmatpush.bf16.xpose.msra.mxu0 0
        %3994 = vmatpush.bf16.xpose.msra.mxu0 0
        %3995 = vmatpush.bf16.xpose.msra.mxu0 0
        %3996 = vmatpush.bf16.xpose.msra.mxu0 0
        %3997 = vmatpush.bf16.xpose.msra.mxu0 %v3988
        %3998 = vmatmul.bf16.gmra.mxu0 %v3985
        %v3999 = vpop.f32.mrf.mxu0
        %v4000 = vadd.f32 0.0, %v3999
        %v4001 = vpop.f32.mrf.mxu0
        %4002 = vdwg.mxu0
        %v4004 = vsel %vm3888, %v3878, 0
        %v4007 = vsel %vm3888, %v3886, 0
        %4009 = vmatpush.bf16.xpose.msra.mxu0 0
        %4010 = vmatpush.bf16.xpose.msra.mxu0 0
        %4011 = vmatpush.bf16.xpose.msra.mxu0 0
        %4012 = vmatpush.bf16.xpose.msra.mxu0 0
        %4013 = vmatpush.bf16.xpose.msra.mxu0 0
        %4014 = vmatpush.bf16.xpose.msra.mxu0 0
        %4015 = vmatpush.bf16.xpose.msra.mxu0 0
        %4016 = vmatpush.bf16.xpose.msra.mxu0 %v4007
        %4017 = vmatmul.bf16.gmra.mxu0 %v4004
        %v4018 = vpop.f32.mrf.mxu0
        %v4019 = vadd.f32 0.0, %v4018
        %v4020 = vpop.f32.mrf.mxu0
        %4021 = vdwg.mxu0
        %v4023 = vsel %vm3888, %v3879, 0
        %v4026 = vsel %vm3888, %v3887, 0
        %4028 = vmatpush.bf16.xpose.msra.mxu0 0
        %4029 = vmatpush.bf16.xpose.msra.mxu0 0
        %4030 = vmatpush.bf16.xpose.msra.mxu0 0
        %4031 = vmatpush.bf16.xpose.msra.mxu0 0
        %4032 = vmatpush.bf16.xpose.msra.mxu0 0
        %4033 = vmatpush.bf16.xpose.msra.mxu0 0
        %4034 = vmatpush.bf16.xpose.msra.mxu0 0
        %4035 = vmatpush.bf16.xpose.msra.mxu0 %v4026
        %4036 = vmatmul.bf16.gmra.mxu0 %v4023
        %v4037 = vpop.f32.mrf.mxu0
        %v4038 = vadd.f32 0.0, %v4037
        %v4039 = vpop.f32.mrf.mxu0
        %4040 = vdwg.mxu0
        %vm4041 = vcmask 64512
        %v4042 = vsel %vm4041, %v3905, -inf
        %4043 = vmax.xlane.f32.xlu0 %v4042
        %v4044 = vpop.xlane.xlu0 %4043
        %v4045 = vsel %vm4041, %v3924, -inf
        %4046 = vmax.xlane.f32.xlu0 %v4045
        %v4047 = vpop.xlane.xlu0 %4046
        %v4048 = vsel %vm4041, %v3943, -inf
        %4049 = vmax.xlane.f32.xlu0 %v4048
        %v4050 = vpop.xlane.xlu0 %4049
        %v4051 = vsel %vm4041, %v3962, -inf
        %4052 = vmax.xlane.f32.xlu0 %v4051
        %v4053 = vpop.xlane.xlu0 %4052
        %v4054 = vsel %vm4041, %v3981, -inf
        %4055 = vmax.xlane.f32.xlu0 %v4054
        %v4056 = vpop.xlane.xlu0 %4055
        %v4057 = vsel %vm4041, %v4000, -inf
        %4058 = vmax.xlane.f32.xlu0 %v4057
        %v4059 = vpop.xlane.xlu0 %4058
        %v4060 = vsel %vm4041, %v4019, -inf
        %4061 = vmax.xlane.f32.xlu0 %v4060
        %v4062 = vpop.xlane.xlu0 %4061
        %v4063 = vsel %vm4041, %v4038, -inf
        %4064 = vmax.xlane.f32.xlu0 %v4063
        %v4065 = vpop.xlane.xlu0 %4064
        %v4066 = vsub.f32 %v3905, %v4044
        %v4067 = vsub.f32 %v3924, %v4047
        %v4068 = vsub.f32 %v3943, %v4050
        %v4069 = vsub.f32 %v3962, %v4053
        %v4070 = vsub.f32 %v3981, %v4056
        %v4071 = vsub.f32 %v4000, %v4059
        %v4072 = vsub.f32 %v4019, %v4062
        %v4073 = vsub.f32 %v4038, %v4065
        %v4074 = vmul.f32 %v4066, 1.442695
        %v4075 = vpow.pop %v4074
        %v4076 = vmul.f32 %v4067, 1.442695
        %v4077 = vpow.pop %v4076
        %v4078 = vmul.f32 %v4068, 1.442695
        %v4079 = vpow.pop %v4078
        %v4080 = vmul.f32 %v4069, 1.442695
        %v4081 = vpow.pop %v4080
        %v4082 = vmul.f32 %v4070, 1.442695
        %v4083 = vpow.pop %v4082
        %v4084 = vmul.f32 %v4071, 1.442695
        %v4085 = vpow.pop %v4084
        %v4086 = vmul.f32 %v4072, 1.442695
        %v4087 = vpow.pop %v4086
        %v4088 = vmul.f32 %v4073, 1.442695
        %v4089 = vpow.pop %v4088
        %v4090 = vsel %vm4041, %v4075, 0.0
        %4091 = vadd.xlane.f32.xlu0 %v4090
        %v4092 = vpop.xlane.xlu0 %4091
        %v4093 = vsel %vm4041, %v4077, 0.0
        %4094 = vadd.xlane.f32.xlu0 %v4093
        %v4095 = vpop.xlane.xlu0 %4094
        %v4096 = vsel %vm4041, %v4079, 0.0
        %4097 = vadd.xlane.f32.xlu0 %v4096
        %v4098 = vpop.xlane.xlu0 %4097
        %v4099 = vsel %vm4041, %v4081, 0.0
        %4100 = vadd.xlane.f32.xlu0 %v4099
        %v4101 = vpop.xlane.xlu0 %4100
        %v4102 = vsel %vm4041, %v4083, 0.0
        %4103 = vadd.xlane.f32.xlu0 %v4102
        %v4104 = vpop.xlane.xlu0 %4103
        %v4105 = vsel %vm4041, %v4085, 0.0
        %4106 = vadd.xlane.f32.xlu0 %v4105
        %v4107 = vpop.xlane.xlu0 %4106
        %v4108 = vsel %vm4041, %v4087, 0.0
        %4109 = vadd.xlane.f32.xlu0 %v4108
        %v4110 = vpop.xlane.xlu0 %4109
        %v4111 = vsel %vm4041, %v4089, 0.0
        %4112 = vadd.xlane.f32.xlu0 %v4111
        %v4113 = vpop.xlane.xlu0 %4112
        %v4114 = vrcp.pop %v4092
        %v4115 = vmul.f32 %v4092, %v4114
        %v4116 = vsub.f32 1.0, %v4115
        %v4117 = vmul.f32 %v4114, %v4116
        %v4118 = vadd.f32 %v4114, %v4117
        %vm4119 = vweird.f32 %v4092
        %vm4120 = vweird.f32 %v4114
        %vm4121 = vmor %vm4119, %vm4120
        %v4122 = vsel %vm4121, %v4114, %v4118
        %v4123 = vand.u32 2147483647, %v4092
        %vm4124 = vcmp.eq.f32.partialorder %v4123, 8.507059e+37
        %v4125 = vand.u32 %v4092, 2147483648
        %v4126 = vor.u32 1.1754944e-38, %v4125
        %v4127 = vsel %vm4124, %v4126, %v4122
        %v4128 = vmul.f32 %v4075, %v4127
        %v4129 = vrcp.pop %v4095
        %v4130 = vmul.f32 %v4095, %v4129
        %v4131 = vsub.f32 1.0, %v4130
        %v4132 = vmul.f32 %v4129, %v4131
        %v4133 = vadd.f32 %v4129, %v4132
        %vm4134 = vweird.f32 %v4095
        %vm4135 = vweird.f32 %v4129
        %vm4136 = vmor %vm4134, %vm4135
        %v4137 = vsel %vm4136, %v4129, %v4133
        %v4138 = vand.u32 2147483647, %v4095
        %vm4139 = vcmp.eq.f32.partialorder %v4138, 8.507059e+37
        %v4140 = vand.u32 %v4095, 2147483648
        %v4141 = vor.u32 1.1754944e-38, %v4140
        %v4142 = vsel %vm4139, %v4141, %v4137
        %v4143 = vmul.f32 %v4077, %v4142
        %v4144 = vrcp.pop %v4098
        %v4145 = vmul.f32 %v4098, %v4144
        %v4146 = vsub.f32 1.0, %v4145
        %v4147 = vmul.f32 %v4144, %v4146
        %v4148 = vadd.f32 %v4144, %v4147
        %vm4149 = vweird.f32 %v4098
        %vm4150 = vweird.f32 %v4144
        %vm4151 = vmor %vm4149, %vm4150
        %v4152 = vsel %vm4151, %v4144, %v4148
        %v4153 = vand.u32 2147483647, %v4098
        %vm4154 = vcmp.eq.f32.partialorder %v4153, 8.507059e+37
        %v4155 = vand.u32 %v4098, 2147483648
        %v4156 = vor.u32 1.1754944e-38, %v4155
        %v4157 = vsel %vm4154, %v4156, %v4152
        %v4158 = vmul.f32 %v4079, %v4157
        %v4159 = vrcp.pop %v4101
        %v4160 = vmul.f32 %v4101, %v4159
        %v4161 = vsub.f32 1.0, %v4160
        %v4162 = vmul.f32 %v4159, %v4161
        %v4163 = vadd.f32 %v4159, %v4162
        %vm4164 = vweird.f32 %v4101
        %vm4165 = vweird.f32 %v4159
        %vm4166 = vmor %vm4164, %vm4165
        %v4167 = vsel %vm4166, %v4159, %v4163
        %v4168 = vand.u32 2147483647, %v4101
        %vm4169 = vcmp.eq.f32.partialorder %v4168, 8.507059e+37
        %v4170 = vand.u32 %v4101, 2147483648
        %v4171 = vor.u32 1.1754944e-38, %v4170
        %v4172 = vsel %vm4169, %v4171, %v4167
        %v4173 = vmul.f32 %v4081, %v4172
        %v4174 = vrcp.pop %v4104
        %v4175 = vmul.f32 %v4104, %v4174
        %v4176 = vsub.f32 1.0, %v4175
        %v4177 = vmul.f32 %v4174, %v4176
        %v4178 = vadd.f32 %v4174, %v4177
        %vm4179 = vweird.f32 %v4104
        %vm4180 = vweird.f32 %v4174
        %vm4181 = vmor %vm4179, %vm4180
        %v4182 = vsel %vm4181, %v4174, %v4178
        %v4183 = vand.u32 2147483647, %v4104
        %vm4184 = vcmp.eq.f32.partialorder %v4183, 8.507059e+37
        %v4185 = vand.u32 %v4104, 2147483648
        %v4186 = vor.u32 1.1754944e-38, %v4185
        %v4187 = vsel %vm4184, %v4186, %v4182
        %v4188 = vmul.f32 %v4083, %v4187
        %v4189 = vrcp.pop %v4107
        %v4190 = vmul.f32 %v4107, %v4189
        %v4191 = vsub.f32 1.0, %v4190
        %v4192 = vmul.f32 %v4189, %v4191
        %v4193 = vadd.f32 %v4189, %v4192
        %vm4194 = vweird.f32 %v4107
        %vm4195 = vweird.f32 %v4189
        %vm4196 = vmor %vm4194, %vm4195
        %v4197 = vsel %vm4196, %v4189, %v4193
        %v4198 = vand.u32 2147483647, %v4107
        %vm4199 = vcmp.eq.f32.partialorder %v4198, 8.507059e+37
        %v4200 = vand.u32 %v4107, 2147483648
        %v4201 = vor.u32 1.1754944e-38, %v4200
        %v4202 = vsel %vm4199, %v4201, %v4197
        %v4203 = vmul.f32 %v4085, %v4202
        %v4204 = vrcp.pop %v4110
        %v4205 = vmul.f32 %v4110, %v4204
        %v4206 = vsub.f32 1.0, %v4205
        %v4207 = vmul.f32 %v4204, %v4206
        %v4208 = vadd.f32 %v4204, %v4207
        %vm4209 = vweird.f32 %v4110
        %vm4210 = vweird.f32 %v4204
        %vm4211 = vmor %vm4209, %vm4210
        %v4212 = vsel %vm4211, %v4204, %v4208
        %v4213 = vand.u32 2147483647, %v4110
        %vm4214 = vcmp.eq.f32.partialorder %v4213, 8.507059e+37
        %v4215 = vand.u32 %v4110, 2147483648
        %v4216 = vor.u32 1.1754944e-38, %v4215
        %v4217 = vsel %vm4214, %v4216, %v4212
        %v4218 = vmul.f32 %v4087, %v4217
        %v4219 = vrcp.pop %v4113
        %v4220 = vmul.f32 %v4113, %v4219
        %v4221 = vsub.f32 1.0, %v4220
        %v4222 = vmul.f32 %v4219, %v4221
        %v4223 = vadd.f32 %v4219, %v4222
        %vm4224 = vweird.f32 %v4113
        %vm4225 = vweird.f32 %v4219
        %vm4226 = vmor %vm4224, %vm4225
        %v4227 = vsel %vm4226, %v4219, %v4223
        %v4228 = vand.u32 2147483647, %v4113
        %vm4229 = vcmp.eq.f32.partialorder %v4228, 8.507059e+37
        %v4230 = vand.u32 %v4113, 2147483648
        %v4231 = vor.u32 1.1754944e-38, %v4230
        %v4232 = vsel %vm4229, %v4231, %v4227
        %v4233 = vmul.f32 %v4089, %v4232
        %v4234 = vpack.c.bf16 %v4128, %v4128
        %v4235 = vpack.c.bf16 %v4143, %v4143
        %v4236 = vpack.c.bf16 %v4158, %v4158
        %v4237 = vpack.c.bf16 %v4173, %v4173
        %v4238 = vpack.c.bf16 %v4188, %v4188
        %v4239 = vpack.c.bf16 %v4203, %v4203
        %v4240 = vpack.c.bf16 %v4218, %v4218
        %v4241 = vpack.c.bf16 %v4233, %v4233
        %v4242 = vpack.c.bf16 %v3803, %v3803
        %v4243 = vpack.c.bf16 %v3852, %v3852
        %v4244 = vpack.c.bf16 %v3855, %v3855
        %v4245 = vpack.c.bf16 %v3858, %v3858
        %v4246 = vpack.c.bf16 %v3861, %v3861
        %v4247 = vpack.c.bf16 %v3864, %v3864
        %v4248 = vpack.c.bf16 %v3867, %v3867
        %v4249 = vpack.c.bf16 %v3870, %v3870
        %v4251 = vsel %vm4041, %v4234, 0
        %vm4253 = vcmask 1043456
        %v4255 = vsel %vm4253, %v4242, 0
        %4257 = vmatpush.bf16.msra.mxu0 0
        %4258 = vmatpush.bf16.msra.mxu0 0
        %4259 = vmatpush.bf16.msra.mxu0 0
        %4260 = vmatpush.bf16.msra.mxu0 0
        %4261 = vmatpush.bf16.msra.mxu0 0
        %4262 = vmatpush.bf16.msra.mxu0 0
        %4263 = vmatpush.bf16.msra.mxu0 0
        %4264 = vmatpush.bf16.msra.mxu0 %v4255
        %4265 = vmatmul.bf16.gmra.mxu0 %v4251
        %v4266 = vpop.f32.mrf.mxu0
        %v4267 = vadd.f32 0.0, %v4266
        %v4268 = vpop.f32.mrf.mxu0
        %4269 = vdwg.mxu0
        %v4271 = vsel %vm4041, %v4235, 0
        %v4274 = vsel %vm4253, %v4243, 0
        %4276 = vmatpush.bf16.msra.mxu0 0
        %4277 = vmatpush.bf16.msra.mxu0 0
        %4278 = vmatpush.bf16.msra.mxu0 0
        %4279 = vmatpush.bf16.msra.mxu0 0
        %4280 = vmatpush.bf16.msra.mxu0 0
        %4281 = vmatpush.bf16.msra.mxu0 0
        %4282 = vmatpush.bf16.msra.mxu0 0
        %4283 = vmatpush.bf16.msra.mxu0 %v4274
        %4284 = vmatmul.bf16.gmra.mxu0 %v4271
        %v4285 = vpop.f32.mrf.mxu0
        %v4286 = vadd.f32 0.0, %v4285
        %v4287 = vpop.f32.mrf.mxu0
        %4288 = vdwg.mxu0
        %v4290 = vsel %vm4041, %v4236, 0
        %v4293 = vsel %vm4253, %v4244, 0
        %4295 = vmatpush.bf16.msra.mxu0 0
        %4296 = vmatpush.bf16.msra.mxu0 0
        %4297 = vmatpush.bf16.msra.mxu0 0
        %4298 = vmatpush.bf16.msra.mxu0 0
        %4299 = vmatpush.bf16.msra.mxu0 0
        %4300 = vmatpush.bf16.msra.mxu0 0
        %4301 = vmatpush.bf16.msra.mxu0 0
        %4302 = vmatpush.bf16.msra.mxu0 %v4293
        %4303 = vmatmul.bf16.gmra.mxu0 %v4290
        %v4304 = vpop.f32.mrf.mxu0
        %v4305 = vadd.f32 0.0, %v4304
        %v4306 = vpop.f32.mrf.mxu0
        %4307 = vdwg.mxu0
        %v4309 = vsel %vm4041, %v4237, 0
        %v4312 = vsel %vm4253, %v4245, 0
        %4314 = vmatpush.bf16.msra.mxu0 0
        %4315 = vmatpush.bf16.msra.mxu0 0
        %4316 = vmatpush.bf16.msra.mxu0 0
        %4317 = vmatpush.bf16.msra.mxu0 0
        %4318 = vmatpush.bf16.msra.mxu0 0
        %4319 = vmatpush.bf16.msra.mxu0 0
        %4320 = vmatpush.bf16.msra.mxu0 0
        %4321 = vmatpush.bf16.msra.mxu0 %v4312
        %4322 = vmatmul.bf16.gmra.mxu0 %v4309
        %v4323 = vpop.f32.mrf.mxu0
        %v4324 = vadd.f32 0.0, %v4323
        %v4325 = vpop.f32.mrf.mxu0
        %4326 = vdwg.mxu0
        %v4328 = vsel %vm4041, %v4238, 0
        %v4331 = vsel %vm4253, %v4246, 0
        %4333 = vmatpush.bf16.msra.mxu0 0
        %4334 = vmatpush.bf16.msra.mxu0 0
        %4335 = vmatpush.bf16.msra.mxu0 0
        %4336 = vmatpush.bf16.msra.mxu0 0
        %4337 = vmatpush.bf16.msra.mxu0 0
        %4338 = vmatpush.bf16.msra.mxu0 0
        %4339 = vmatpush.bf16.msra.mxu0 0
        %4340 = vmatpush.bf16.msra.mxu0 %v4331
        %4341 = vmatmul.bf16.gmra.mxu0 %v4328
        %v4342 = vpop.f32.mrf.mxu0
        %v4343 = vadd.f32 0.0, %v4342
        %v4344 = vpop.f32.mrf.mxu0
        %4345 = vdwg.mxu0
        %v4347 = vsel %vm4041, %v4239, 0
        %v4350 = vsel %vm4253, %v4247, 0
        %4352 = vmatpush.bf16.msra.mxu0 0
        %4353 = vmatpush.bf16.msra.mxu0 0
        %4354 = vmatpush.bf16.msra.mxu0 0
        %4355 = vmatpush.bf16.msra.mxu0 0
        %4356 = vmatpush.bf16.msra.mxu0 0
        %4357 = vmatpush.bf16.msra.mxu0 0
        %4358 = vmatpush.bf16.msra.mxu0 0
        %4359 = vmatpush.bf16.msra.mxu0 %v4350
        %4360 = vmatmul.bf16.gmra.mxu0 %v4347
        %v4361 = vpop.f32.mrf.mxu0
        %v4362 = vadd.f32 0.0, %v4361
        %v4363 = vpop.f32.mrf.mxu0
        %4364 = vdwg.mxu0
        %v4366 = vsel %vm4041, %v4240, 0
        %v4369 = vsel %vm4253, %v4248, 0
        %4371 = vmatpush.bf16.msra.mxu0 0
        %4372 = vmatpush.bf16.msra.mxu0 0
        %4373 = vmatpush.bf16.msra.mxu0 0
        %4374 = vmatpush.bf16.msra.mxu0 0
        %4375 = vmatpush.bf16.msra.mxu0 0
        %4376 = vmatpush.bf16.msra.mxu0 0
        %4377 = vmatpush.bf16.msra.mxu0 0
        %4378 = vmatpush.bf16.msra.mxu0 %v4369
        %4379 = vmatmul.bf16.gmra.mxu0 %v4366
        %v4380 = vpop.f32.mrf.mxu0
        %v4381 = vadd.f32 0.0, %v4380
        %v4382 = vpop.f32.mrf.mxu0
        %4383 = vdwg.mxu0
        %v4385 = vsel %vm4041, %v4241, 0
        %v4388 = vsel %vm4253, %v4249, 0
        %4390 = vmatpush.bf16.msra.mxu0 0
        %4391 = vmatpush.bf16.msra.mxu0 0
        %4392 = vmatpush.bf16.msra.mxu0 0
        %4393 = vmatpush.bf16.msra.mxu0 0
        %4394 = vmatpush.bf16.msra.mxu0 0
        %4395 = vmatpush.bf16.msra.mxu0 0
        %4396 = vmatpush.bf16.msra.mxu0 0
        %4397 = vmatpush.bf16.msra.mxu0 %v4388
        %4398 = vmatmul.bf16.gmra.mxu0 %v4385
        %v4399 = vpop.f32.mrf.mxu0
        %v4400 = vadd.f32 0.0, %v4399
        %v4401 = vpop.f32.mrf.mxu0
        %4402 = vdwg.mxu0
        %4404 = vrot.lane.b32.xlu0 %v4286, 16
        %v4405 = vpop.permute.xlu0 %4404
        %4408 = vrot.lane.b32.xlu0 %v4305, 32
        %v4409 = vpop.permute.xlu0 %4408
        %4412 = vrot.lane.b32.xlu0 %v4324, 48
        %v4413 = vpop.permute.xlu0 %4412
        %4416 = vrot.lane.b32.xlu0 %v4343, 64
        %v4417 = vpop.permute.xlu0 %4416
        %4420 = vrot.lane.b32.xlu0 %v4362, 80
        %v4421 = vpop.permute.xlu0 %4420
        %4424 = vrot.lane.b32.xlu0 %v4381, 96
        %v4425 = vpop.permute.xlu0 %4424
        %4428 = vrot.lane.b32.xlu0 %v4400, 112
        %v4429 = vpop.permute.xlu0 %4428
        %v4431 = vsel %vm3888, %v4267, %v4405
        %vm4432 = vcmask 261120
        %v4433 = vsel %vm4432, %v4431, %v4409
        %vm4434 = vcmask 392192
        %v4435 = vsel %vm4434, %v4433, %v4413
        %vm4436 = vcmask 523264
        %v4437 = vsel %vm4436, %v4435, %v4417
        %vm4438 = vcmask 654336
        %v4439 = vsel %vm4438, %v4437, %v4421
        %vm4440 = vcmask 785408
        %v4441 = vsel %vm4440, %v4439, %v4425
        %vm4442 = vcmask 916480
        %v4443 = vsel %vm4442, %v4441, %v4429
        %v4444 = vld [vmem:[%s1260] sm:$0xf]
        %v4445 = vld [vmem:[%s1260 + $0x4] sm:$0xf]
        %v4446 = vld [vmem:[%s1260 + $0x8] sm:$0xf]
        %v4447 = vld [vmem:[%s1260 + $0xc] sm:$0xf]
        %v4448 = vld [vmem:[%s1260 + $0x10] sm:$0xf]
        %v4449 = vld [vmem:[%s1260 + $0x14] sm:$0xf]
        %v4450 = vld [vmem:[%s1260 + $0x18] sm:$0xf]
        %v4451 = vld [vmem:[%s1260 + $0x1c] sm:$0xf]
        %v4452 = vld [vmem:[%s1260 + $0x20] sm:$0xf]
        %v4453 = vld [vmem:[%s1260 + $0x24] sm:$0xf]
        %v4454 = vld [vmem:[%s1260 + $0x28] sm:$0xf]
        %v4455 = vld [vmem:[%s1260 + $0x2c] sm:$0xf]
        %v4456 = vld [vmem:[%s1260 + $0x30] sm:$0xf]
        %v4457 = vld [vmem:[%s1260 + $0x34] sm:$0xf]
        %v4458 = vld [vmem:[%s1260 + $0x38] sm:$0xf]
        %v4459 = vld [vmem:[%s1260 + $0x3c] sm:$0xf]
        %v4460 = vpack.c.bf16 %v4443, %v4443
        %v4461 = vld [vmem:[%s1269] sm:$0x1]
        %v4463 = vperm.slane %v4461, 0
        %v4481 = vunpack.c.l.b16 %v4444
        %v4482 = vunpack.c.l.b16 %v4445
        %v4483 = vunpack.c.l.b16 %v4446
        %v4484 = vunpack.c.l.b16 %v4447
        %v4485 = vunpack.c.l.b16 %v4448
        %v4486 = vunpack.c.l.b16 %v4449
        %v4487 = vunpack.c.l.b16 %v4450
        %v4488 = vunpack.c.l.b16 %v4451
        %v4489 = vunpack.c.l.b16 %v4452
        %v4490 = vunpack.c.l.b16 %v4453
        %v4491 = vunpack.c.l.b16 %v4454
        %v4492 = vunpack.c.l.b16 %v4455
        %v4493 = vunpack.c.l.b16 %v4456
        %v4494 = vunpack.c.l.b16 %v4457
        %v4495 = vunpack.c.l.b16 %v4458
        %v4496 = vunpack.c.l.b16 %v4459
        %v4497 = vpack.c.b16 %v4482, %v4481
        %v4498 = vpack.c.b16 %v4484, %v4483
        %v4499 = vpack.c.b16 %v4486, %v4485
        %v4500 = vpack.c.b16 %v4488, %v4487
        %v4501 = vpack.c.b16 %v4490, %v4489
        %v4502 = vpack.c.b16 %v4492, %v4491
        %v4503 = vpack.c.b16 %v4494, %v4493
        %v4504 = vpack.c.b16 %v4496, %v4495
        %4513 = vmatpush.bf16.msra.mxu0 %v4504
        %4514 = vmatpush.bf16.msra.mxu0 %v4503
        %4515 = vmatpush.bf16.msra.mxu0 %v4502
        %4516 = vmatpush.bf16.msra.mxu0 %v4501
        %4517 = vmatpush.bf16.msra.mxu0 %v4500
        %4518 = vmatpush.bf16.msra.mxu0 %v4499
        %4519 = vmatpush.bf16.msra.mxu0 %v4498
        %4520 = vmatpush.bf16.msra.mxu0 %v4497
        %4521 = vmatmul.bf16.gmra.mxu0 %v4460
        %v4522 = vpop.f32.mrf.mxu0
        %v4523 = vadd.f32 %v4463, %v4522
        %v4524 = vpop.f32.mrf.mxu0
        %4525 = vdwg.mxu0
        %v4526 = vadd.f32 %v3597, %v4523
        %v4527 = vld [vmem:[%s1278] sm:$0x1]
        %v4528 = vld [vmem:[%s1490] sm:$0x1]
        %4529 = vadd.xlane.f32.xlu0 %v4526
        %v4530 = vpop.xlane.xlu0 %4529
        %v4531 = vrcp.pop 128.0
        %v4532 = vmul.f32 128.0, %v4531
        %v4533 = vsub.f32 1.0, %v4532
        %v4534 = vmul.f32 %v4531, %v4533
        %v4535 = vadd.f32 %v4531, %v4534
        %vm4536 = vweird.f32 %v4531
        %v4537 = vsel %vm4536, %v4531, %v4535
        %v4538 = vmul.f32 %v4530, %v4537
        %v4539 = vsub.f32 %v4526, %v4538
        %v4540 = vmul.f32 %v4539, %v4539
        %4541 = vadd.xlane.f32.xlu0 %v4540
        %v4542 = vpop.xlane.xlu0 %4541
        %v4543 = vmul.f32 %v4542, %v4537
        %v4544 = vadd.f32 %v4543, 1e-05
        %v4545 = vrsqrt.pop %v4544
        %v4546 = vmul.f32 %v4545, %v4544
        %v4547 = vmul.f32 %v4546, %v4545
        %v4548 = vmul.f32 0.5, %v4547
        %v4549 = vsub.f32 1.5, %v4548
        %v4550 = vmul.f32 %v4545, %v4549
        %vm4551 = vweird.f32 %v4544
        %vm4552 = vweird.f32 %v4545
        %vm4553 = vmor %vm4551, %vm4552
        %v4554 = vsel %vm4553, %v4545, %v4550
        %v4555 = vmul.f32 %v4539, %v4554
        %v4557 = vperm.slane %v4527, 0
        %v4559 = vmul.f32 %v4555, %v4557
        %v4561 = vperm.slane %v4528, 0
        %v4563 = vadd.f32 %v4559, %v4561
        %v4564 = vld [vmem:[%s1288] sm:$0xff]
        %v4565 = vld [vmem:[%s1288 + $0x8] sm:$0xff]
        %v4566 = vld [vmem:[%s1288 + $0x10] sm:$0xff]
        %v4567 = vld [vmem:[%s1288 + $0x18] sm:$0xff]
        %v4568 = vld [vmem:[%s1288 + $0x20] sm:$0xff]
        %v4569 = vld [vmem:[%s1288 + $0x28] sm:$0xff]
        %v4570 = vld [vmem:[%s1288 + $0x30] sm:$0xff]
        %v4571 = vld [vmem:[%s1288 + $0x38] sm:$0xff]
        %v4572 = vld [vmem:[%s1288 + $0x40] sm:$0xff]
        %v4573 = vld [vmem:[%s1288 + $0x48] sm:$0xff]
        %v4574 = vld [vmem:[%s1288 + $0x50] sm:$0xff]
        %v4575 = vld [vmem:[%s1288 + $0x58] sm:$0xff]
        %v4576 = vld [vmem:[%s1288 + $0x60] sm:$0xff]
        %v4577 = vld [vmem:[%s1288 + $0x68] sm:$0xff]
        %v4578 = vld [vmem:[%s1288 + $0x70] sm:$0xff]
        %v4579 = vld [vmem:[%s1288 + $0x78] sm:$0xff]
        %v4580 = vld [vmem:[%s1288 + $0x80] sm:$0xff]
        %v4581 = vld [vmem:[%s1288 + $0x88] sm:$0xff]
        %v4582 = vld [vmem:[%s1288 + $0x90] sm:$0xff]
        %v4583 = vld [vmem:[%s1288 + $0x98] sm:$0xff]
        %v4584 = vld [vmem:[%s1288 + $0xa0] sm:$0xff]
        %v4585 = vld [vmem:[%s1288 + $0xa8] sm:$0xff]
        %v4586 = vld [vmem:[%s1288 + $0xb0] sm:$0xff]
        %v4587 = vld [vmem:[%s1288 + $0xb8] sm:$0xff]
        %v4588 = vld [vmem:[%s1288 + $0xc0] sm:$0xff]
        %v4589 = vld [vmem:[%s1288 + $0xc8] sm:$0xff]
        %v4590 = vld [vmem:[%s1288 + $0xd0] sm:$0xff]
        %v4591 = vld [vmem:[%s1288 + $0xd8] sm:$0xff]
        %v4592 = vld [vmem:[%s1288 + $0xe0] sm:$0xff]
        %v4593 = vld [vmem:[%s1288 + $0xe8] sm:$0xff]
        %v4594 = vld [vmem:[%s1288 + $0xf0] sm:$0xff]
        %v4595 = vld [vmem:[%s1288 + $0xf8] sm:$0xff]
        %v4596 = vpack.c.bf16 %v4563, %v4563
        %v4597 = vld [vmem:[%s1494] sm:$0xf]
        %v4599 = vperm.slane %v4597, 0
        %v4600 = vperm.slane %v4597, 1
        %v4601 = vperm.slane %v4597, 2
        %v4602 = vperm.slane %v4597, 3
        %v4639 = vunpack.c.l.b16 %v4564
        %v4640 = vunpack.c.h.b16 %v4564
        %v4641 = vunpack.c.l.b16 %v4565
        %v4642 = vunpack.c.h.b16 %v4565
        %v4643 = vunpack.c.l.b16 %v4566
        %v4644 = vunpack.c.h.b16 %v4566
        %v4645 = vunpack.c.l.b16 %v4567
        %v4646 = vunpack.c.h.b16 %v4567
        %v4647 = vunpack.c.l.b16 %v4568
        %v4648 = vunpack.c.h.b16 %v4568
        %v4649 = vunpack.c.l.b16 %v4569
        %v4650 = vunpack.c.h.b16 %v4569
        %v4651 = vunpack.c.l.b16 %v4570
        %v4652 = vunpack.c.h.b16 %v4570
        %v4653 = vunpack.c.l.b16 %v4571
        %v4654 = vunpack.c.h.b16 %v4571
        %v4655 = vunpack.c.l.b16 %v4572
        %v4656 = vunpack.c.h.b16 %v4572
        %v4657 = vunpack.c.l.b16 %v4573
        %v4658 = vunpack.c.h.b16 %v4573
        %v4659 = vunpack.c.l.b16 %v4574
        %v4660 = vunpack.c.h.b16 %v4574
        %v4661 = vunpack.c.l.b16 %v4575
        %v4662 = vunpack.c.h.b16 %v4575
        %v4663 = vunpack.c.l.b16 %v4576
        %v4664 = vunpack.c.h.b16 %v4576
        %v4665 = vunpack.c.l.b16 %v4577
        %v4666 = vunpack.c.h.b16 %v4577
        %v4667 = vunpack.c.l.b16 %v4578
        %v4668 = vunpack.c.h.b16 %v4578
        %v4669 = vunpack.c.l.b16 %v4579
        %v4670 = vunpack.c.h.b16 %v4579
        %v4671 = vunpack.c.l.b16 %v4580
        %v4672 = vunpack.c.h.b16 %v4580
        %v4673 = vunpack.c.l.b16 %v4581
        %v4674 = vunpack.c.h.b16 %v4581
        %v4675 = vunpack.c.l.b16 %v4582
        %v4676 = vunpack.c.h.b16 %v4582
        %v4677 = vunpack.c.l.b16 %v4583
        %v4678 = vunpack.c.h.b16 %v4583
        %v4679 = vunpack.c.l.b16 %v4584
        %v4680 = vunpack.c.h.b16 %v4584
        %v4681 = vunpack.c.l.b16 %v4585
        %v4682 = vunpack.c.h.b16 %v4585
        %v4683 = vunpack.c.l.b16 %v4586
        %v4684 = vunpack.c.h.b16 %v4586
        %v4685 = vunpack.c.l.b16 %v4587
        %v4686 = vunpack.c.h.b16 %v4587
        %v4687 = vunpack.c.l.b16 %v4588
        %v4688 = vunpack.c.h.b16 %v4588
        %v4689 = vunpack.c.l.b16 %v4589
        %v4690 = vunpack.c.h.b16 %v4589
        %v4691 = vunpack.c.l.b16 %v4590
        %v4692 = vunpack.c.h.b16 %v4590
        %v4693 = vunpack.c.l.b16 %v4591
        %v4694 = vunpack.c.h.b16 %v4591
        %v4695 = vunpack.c.l.b16 %v4592
        %v4696 = vunpack.c.h.b16 %v4592
        %v4697 = vunpack.c.l.b16 %v4593
        %v4698 = vunpack.c.h.b16 %v4593
        %v4699 = vunpack.c.l.b16 %v4594
        %v4700 = vunpack.c.h.b16 %v4594
        %v4701 = vunpack.c.l.b16 %v4595
        %v4702 = vunpack.c.h.b16 %v4595
        %v4703 = vpack.c.b16 %v4643, %v4639
        %v4704 = vpack.c.b16 %v4644, %v4640
        %v4705 = vpack.c.b16 %v4645, %v4641
        %v4706 = vpack.c.b16 %v4646, %v4642
        %v4707 = vpack.c.b16 %v4651, %v4647
        %v4708 = vpack.c.b16 %v4652, %v4648
        %v4709 = vpack.c.b16 %v4653, %v4649
        %v4710 = vpack.c.b16 %v4654, %v4650
        %v4711 = vpack.c.b16 %v4659, %v4655
        %v4712 = vpack.c.b16 %v4660, %v4656
        %v4713 = vpack.c.b16 %v4661, %v4657
        %v4714 = vpack.c.b16 %v4662, %v4658
        %v4715 = vpack.c.b16 %v4667, %v4663
        %v4716 = vpack.c.b16 %v4668, %v4664
        %v4717 = vpack.c.b16 %v4669, %v4665
        %v4718 = vpack.c.b16 %v4670, %v4666
        %v4719 = vpack.c.b16 %v4675, %v4671
        %v4720 = vpack.c.b16 %v4676, %v4672
        %v4721 = vpack.c.b16 %v4677, %v4673
        %v4722 = vpack.c.b16 %v4678, %v4674
        %v4723 = vpack.c.b16 %v4683, %v4679
        %v4724 = vpack.c.b16 %v4684, %v4680
        %v4725 = vpack.c.b16 %v4685, %v4681
        %v4726 = vpack.c.b16 %v4686, %v4682
        %v4727 = vpack.c.b16 %v4691, %v4687
        %v4728 = vpack.c.b16 %v4692, %v4688
        %v4729 = vpack.c.b16 %v4693, %v4689
        %v4730 = vpack.c.b16 %v4694, %v4690
        %v4731 = vpack.c.b16 %v4699, %v4695
        %v4732 = vpack.c.b16 %v4700, %v4696
        %v4733 = vpack.c.b16 %v4701, %v4697
        %v4734 = vpack.c.b16 %v4702, %v4698
        %4767 = vmatpush.bf16.msra.mxu0 %v4731
        %4768 = vmatpush.bf16.msra.mxu0 %v4727
        %4769 = vmatpush.bf16.msra.mxu0 %v4723
        %4770 = vmatpush.bf16.msra.mxu0 %v4719
        %4771 = vmatpush.bf16.msra.mxu0 %v4715
        %4772 = vmatpush.bf16.msra.mxu0 %v4711
        %4773 = vmatpush.bf16.msra.mxu0 %v4707
        %4774 = vmatpush.bf16.msra.mxu0 %v4703
        %4775 = vmatmul.bf16.gmra.mxu0 %v4596
        %v4776 = vpop.f32.mrf.mxu0
        %v4777 = vadd.f32 %v4599, %v4776
        %v4778 = vpop.f32.mrf.mxu0
        %4779 = vdwg.mxu0
        %4780 = vmatpush.bf16.msra.mxu0 %v4732
        %4781 = vmatpush.bf16.msra.mxu0 %v4728
        %4782 = vmatpush.bf16.msra.mxu0 %v4724
        %4783 = vmatpush.bf16.msra.mxu0 %v4720
        %4784 = vmatpush.bf16.msra.mxu0 %v4716
        %4785 = vmatpush.bf16.msra.mxu0 %v4712
        %4786 = vmatpush.bf16.msra.mxu0 %v4708
        %4787 = vmatpush.bf16.msra.mxu0 %v4704
        %4788 = vmatmul.bf16.gmra.mxu0 %v4596
        %v4789 = vpop.f32.mrf.mxu0
        %v4790 = vadd.f32 %v4600, %v4789
        %v4791 = vpop.f32.mrf.mxu0
        %4792 = vdwg.mxu0
        %4793 = vmatpush.bf16.msra.mxu0 %v4733
        %4794 = vmatpush.bf16.msra.mxu0 %v4729
        %4795 = vmatpush.bf16.msra.mxu0 %v4725
        %4796 = vmatpush.bf16.msra.mxu0 %v4721
        %4797 = vmatpush.bf16.msra.mxu0 %v4717
        %4798 = vmatpush.bf16.msra.mxu0 %v4713
        %4799 = vmatpush.bf16.msra.mxu0 %v4709
        %4800 = vmatpush.bf16.msra.mxu0 %v4705
        %4801 = vmatmul.bf16.gmra.mxu0 %v4596
        %v4802 = vpop.f32.mrf.mxu0
        %v4803 = vadd.f32 %v4601, %v4802
        %v4804 = vpop.f32.mrf.mxu0
        %4805 = vdwg.mxu0
        %4806 = vmatpush.bf16.msra.mxu0 %v4734
        %4807 = vmatpush.bf16.msra.mxu0 %v4730
        %4808 = vmatpush.bf16.msra.mxu0 %v4726
        %4809 = vmatpush.bf16.msra.mxu0 %v4722
        %4810 = vmatpush.bf16.msra.mxu0 %v4718
        %4811 = vmatpush.bf16.msra.mxu0 %v4714
        %4812 = vmatpush.bf16.msra.mxu0 %v4710
        %4813 = vmatpush.bf16.msra.mxu0 %v4706
        %4814 = vmatmul.bf16.gmra.mxu0 %v4596
        %v4815 = vpop.f32.mrf.mxu0
        %v4816 = vadd.f32 %v4602, %v4815
        %v4817 = vpop.f32.mrf.mxu0
        %4818 = vdwg.mxu0
        %v4819 = vmax.f32 %v4777, 0.0
        %v4820 = vmax.f32 %v4790, 0.0
        %v4821 = vmax.f32 %v4803, 0.0
        %v4822 = vmax.f32 %v4816, 0.0
        %v4823 = vld [vmem:[%s1298] sm:$0xf]
        %v4824 = vld [vmem:[%s1298 + $0x4] sm:$0xf]
        %v4825 = vld [vmem:[%s1298 + $0x8] sm:$0xf]
        %v4826 = vld [vmem:[%s1298 + $0xc] sm:$0xf]
        %v4827 = vld [vmem:[%s1298 + $0x10] sm:$0xf]
        %v4828 = vld [vmem:[%s1298 + $0x14] sm:$0xf]
        %v4829 = vld [vmem:[%s1298 + $0x18] sm:$0xf]
        %v4830 = vld [vmem:[%s1298 + $0x1c] sm:$0xf]
        %v4831 = vld [vmem:[%s1298 + $0x20] sm:$0xf]
        %v4832 = vld [vmem:[%s1298 + $0x24] sm:$0xf]
        %v4833 = vld [vmem:[%s1298 + $0x28] sm:$0xf]
        %v4834 = vld [vmem:[%s1298 + $0x2c] sm:$0xf]
        %v4835 = vld [vmem:[%s1298 + $0x30] sm:$0xf]
        %v4836 = vld [vmem:[%s1298 + $0x34] sm:$0xf]
        %v4837 = vld [vmem:[%s1298 + $0x38] sm:$0xf]
        %v4838 = vld [vmem:[%s1298 + $0x3c] sm:$0xf]
        %v4839 = vld [vmem:[%s1298 + $0x40] sm:$0xf]
        %v4840 = vld [vmem:[%s1298 + $0x44] sm:$0xf]
        %v4841 = vld [vmem:[%s1298 + $0x48] sm:$0xf]
        %v4842 = vld [vmem:[%s1298 + $0x4c] sm:$0xf]
        %v4843 = vld [vmem:[%s1298 + $0x50] sm:$0xf]
        %v4844 = vld [vmem:[%s1298 + $0x54] sm:$0xf]
        %v4845 = vld [vmem:[%s1298 + $0x58] sm:$0xf]
        %v4846 = vld [vmem:[%s1298 + $0x5c] sm:$0xf]
        %v4847 = vld [vmem:[%s1298 + $0x60] sm:$0xf]
        %v4848 = vld [vmem:[%s1298 + $0x64] sm:$0xf]
        %v4849 = vld [vmem:[%s1298 + $0x68] sm:$0xf]
        %v4850 = vld [vmem:[%s1298 + $0x6c] sm:$0xf]
        %v4851 = vld [vmem:[%s1298 + $0x70] sm:$0xf]
        %v4852 = vld [vmem:[%s1298 + $0x74] sm:$0xf]
        %v4853 = vld [vmem:[%s1298 + $0x78] sm:$0xf]
        %v4854 = vld [vmem:[%s1298 + $0x7c] sm:$0xf]
        %v4855 = vld [vmem:[%s1298 + $0x80] sm:$0xf]
        %v4856 = vld [vmem:[%s1298 + $0x84] sm:$0xf]
        %v4857 = vld [vmem:[%s1298 + $0x88] sm:$0xf]
        %v4858 = vld [vmem:[%s1298 + $0x8c] sm:$0xf]
        %v4859 = vld [vmem:[%s1298 + $0x90] sm:$0xf]
        %v4860 = vld [vmem:[%s1298 + $0x94] sm:$0xf]
        %v4861 = vld [vmem:[%s1298 + $0x98] sm:$0xf]
        %v4862 = vld [vmem:[%s1298 + $0x9c] sm:$0xf]
        %v4863 = vld [vmem:[%s1298 + $0xa0] sm:$0xf]
        %v4864 = vld [vmem:[%s1298 + $0xa4] sm:$0xf]
        %v4865 = vld [vmem:[%s1298 + $0xa8] sm:$0xf]
        %v4866 = vld [vmem:[%s1298 + $0xac] sm:$0xf]
        %v4867 = vld [vmem:[%s1298 + $0xb0] sm:$0xf]
        %v4868 = vld [vmem:[%s1298 + $0xb4] sm:$0xf]
        %v4869 = vld [vmem:[%s1298 + $0xb8] sm:$0xf]
        %v4870 = vld [vmem:[%s1298 + $0xbc] sm:$0xf]
        %v4871 = vld [vmem:[%s1298 + $0xc0] sm:$0xf]
        %v4872 = vld [vmem:[%s1298 + $0xc4] sm:$0xf]
        %v4873 = vld [vmem:[%s1298 + $0xc8] sm:$0xf]
        %v4874 = vld [vmem:[%s1298 + $0xcc] sm:$0xf]
        %v4875 = vld [vmem:[%s1298 + $0xd0] sm:$0xf]
        %v4876 = vld [vmem:[%s1298 + $0xd4] sm:$0xf]
        %v4877 = vld [vmem:[%s1298 + $0xd8] sm:$0xf]
        %v4878 = vld [vmem:[%s1298 + $0xdc] sm:$0xf]
        %v4879 = vld [vmem:[%s1298 + $0xe0] sm:$0xf]
        %v4880 = vld [vmem:[%s1298 + $0xe4] sm:$0xf]
        %v4881 = vld [vmem:[%s1298 + $0xe8] sm:$0xf]
        %v4882 = vld [vmem:[%s1298 + $0xec] sm:$0xf]
        %v4883 = vld [vmem:[%s1298 + $0xf0] sm:$0xf]
        %v4884 = vld [vmem:[%s1298 + $0xf4] sm:$0xf]
        %v4885 = vld [vmem:[%s1298 + $0xf8] sm:$0xf]
        %v4886 = vld [vmem:[%s1298 + $0xfc] sm:$0xf]
        %v4887 = vpack.c.bf16 %v4819, %v4819
        %v4888 = vpack.c.bf16 %v4820, %v4820
        %v4889 = vpack.c.bf16 %v4821, %v4821
        %v4890 = vpack.c.bf16 %v4822, %v4822
        %v4891 = vld [vmem:[%s1307] sm:$0x1]
        %v4893 = vperm.slane %v4891, 0
        %v4959 = vunpack.c.l.b16 %v4823
        %v4960 = vunpack.c.l.b16 %v4824
        %v4961 = vunpack.c.l.b16 %v4825
        %v4962 = vunpack.c.l.b16 %v4826
        %v4963 = vunpack.c.l.b16 %v4827
        %v4964 = vunpack.c.l.b16 %v4828
        %v4965 = vunpack.c.l.b16 %v4829
        %v4966 = vunpack.c.l.b16 %v4830
        %v4967 = vunpack.c.l.b16 %v4831
        %v4968 = vunpack.c.l.b16 %v4832
        %v4969 = vunpack.c.l.b16 %v4833
        %v4970 = vunpack.c.l.b16 %v4834
        %v4971 = vunpack.c.l.b16 %v4835
        %v4972 = vunpack.c.l.b16 %v4836
        %v4973 = vunpack.c.l.b16 %v4837
        %v4974 = vunpack.c.l.b16 %v4838
        %v4975 = vunpack.c.l.b16 %v4839
        %v4976 = vunpack.c.l.b16 %v4840
        %v4977 = vunpack.c.l.b16 %v4841
        %v4978 = vunpack.c.l.b16 %v4842
        %v4979 = vunpack.c.l.b16 %v4843
        %v4980 = vunpack.c.l.b16 %v4844
        %v4981 = vunpack.c.l.b16 %v4845
        %v4982 = vunpack.c.l.b16 %v4846
        %v4983 = vunpack.c.l.b16 %v4847
        %v4984 = vunpack.c.l.b16 %v4848
        %v4985 = vunpack.c.l.b16 %v4849
        %v4986 = vunpack.c.l.b16 %v4850
        %v4987 = vunpack.c.l.b16 %v4851
        %v4988 = vunpack.c.l.b16 %v4852
        %v4989 = vunpack.c.l.b16 %v4853
        %v4990 = vunpack.c.l.b16 %v4854
        %v4991 = vunpack.c.l.b16 %v4855
        %v4992 = vunpack.c.l.b16 %v4856
        %v4993 = vunpack.c.l.b16 %v4857
        %v4994 = vunpack.c.l.b16 %v4858
        %v4995 = vunpack.c.l.b16 %v4859
        %v4996 = vunpack.c.l.b16 %v4860
        %v4997 = vunpack.c.l.b16 %v4861
        %v4998 = vunpack.c.l.b16 %v4862
        %v4999 = vunpack.c.l.b16 %v4863
        %v5000 = vunpack.c.l.b16 %v4864
        %v5001 = vunpack.c.l.b16 %v4865
        %v5002 = vunpack.c.l.b16 %v4866
        %v5003 = vunpack.c.l.b16 %v4867
        %v5004 = vunpack.c.l.b16 %v4868
        %v5005 = vunpack.c.l.b16 %v4869
        %v5006 = vunpack.c.l.b16 %v4870
        %v5007 = vunpack.c.l.b16 %v4871
        %v5008 = vunpack.c.l.b16 %v4872
        %v5009 = vunpack.c.l.b16 %v4873
        %v5010 = vunpack.c.l.b16 %v4874
        %v5011 = vunpack.c.l.b16 %v4875
        %v5012 = vunpack.c.l.b16 %v4876
        %v5013 = vunpack.c.l.b16 %v4877
        %v5014 = vunpack.c.l.b16 %v4878
        %v5015 = vunpack.c.l.b16 %v4879
        %v5016 = vunpack.c.l.b16 %v4880
        %v5017 = vunpack.c.l.b16 %v4881
        %v5018 = vunpack.c.l.b16 %v4882
        %v5019 = vunpack.c.l.b16 %v4883
        %v5020 = vunpack.c.l.b16 %v4884
        %v5021 = vunpack.c.l.b16 %v4885
        %v5022 = vunpack.c.l.b16 %v4886
        %v5023 = vpack.c.b16 %v4960, %v4959
        %v5024 = vpack.c.b16 %v4962, %v4961
        %v5025 = vpack.c.b16 %v4964, %v4963
        %v5026 = vpack.c.b16 %v4966, %v4965
        %v5027 = vpack.c.b16 %v4968, %v4967
        %v5028 = vpack.c.b16 %v4970, %v4969
        %v5029 = vpack.c.b16 %v4972, %v4971
        %v5030 = vpack.c.b16 %v4974, %v4973
        %v5031 = vpack.c.b16 %v4976, %v4975
        %v5032 = vpack.c.b16 %v4978, %v4977
        %v5033 = vpack.c.b16 %v4980, %v4979
        %v5034 = vpack.c.b16 %v4982, %v4981
        %v5035 = vpack.c.b16 %v4984, %v4983
        %v5036 = vpack.c.b16 %v4986, %v4985
        %v5037 = vpack.c.b16 %v4988, %v4987
        %v5038 = vpack.c.b16 %v4990, %v4989
        %v5039 = vpack.c.b16 %v4992, %v4991
        %v5040 = vpack.c.b16 %v4994, %v4993
        %v5041 = vpack.c.b16 %v4996, %v4995
        %v5042 = vpack.c.b16 %v4998, %v4997
        %v5043 = vpack.c.b16 %v5000, %v4999
        %v5044 = vpack.c.b16 %v5002, %v5001
        %v5045 = vpack.c.b16 %v5004, %v5003
        %v5046 = vpack.c.b16 %v5006, %v5005
        %v5047 = vpack.c.b16 %v5008, %v5007
        %v5048 = vpack.c.b16 %v5010, %v5009
        %v5049 = vpack.c.b16 %v5012, %v5011
        %v5050 = vpack.c.b16 %v5014, %v5013
        %v5051 = vpack.c.b16 %v5016, %v5015
        %v5052 = vpack.c.b16 %v5018, %v5017
        %v5053 = vpack.c.b16 %v5020, %v5019
        %v5054 = vpack.c.b16 %v5022, %v5021
        %5087 = vmatpush.bf16.msra.mxu0 %v5030
        %5088 = vmatpush.bf16.msra.mxu0 %v5029
        %5089 = vmatpush.bf16.msra.mxu0 %v5028
        %5090 = vmatpush.bf16.msra.mxu0 %v5027
        %5091 = vmatpush.bf16.msra.mxu0 %v5026
        %5092 = vmatpush.bf16.msra.mxu0 %v5025
        %5093 = vmatpush.bf16.msra.mxu0 %v5024
        %5094 = vmatpush.bf16.msra.mxu0 %v5023
        %5095 = vmatmul.bf16.gmra.mxu0 %v4887
        %v5096 = vpop.f32.mrf.mxu0
        %v5097 = vadd.f32 %v4893, %v5096
        %v5098 = vpop.f32.mrf.mxu0
        %5099 = vdwg.mxu0
        %5100 = vmatpush.bf16.msra.mxu0 %v5038
        %5101 = vmatpush.bf16.msra.mxu0 %v5037
        %5102 = vmatpush.bf16.msra.mxu0 %v5036
        %5103 = vmatpush.bf16.msra.mxu0 %v5035
        %5104 = vmatpush.bf16.msra.mxu0 %v5034
        %5105 = vmatpush.bf16.msra.mxu0 %v5033
        %5106 = vmatpush.bf16.msra.mxu0 %v5032
        %5107 = vmatpush.bf16.msra.mxu0 %v5031
        %5108 = vmatmul.bf16.gmra.mxu0 %v4888
        %v5109 = vpop.f32.mrf.mxu0
        %v5110 = vadd.f32 %v5097, %v5109
        %v5111 = vpop.f32.mrf.mxu0
        %5112 = vdwg.mxu0
        %5113 = vmatpush.bf16.msra.mxu0 %v5046
        %5114 = vmatpush.bf16.msra.mxu0 %v5045
        %5115 = vmatpush.bf16.msra.mxu0 %v5044
        %5116 = vmatpush.bf16.msra.mxu0 %v5043
        %5117 = vmatpush.bf16.msra.mxu0 %v5042
        %5118 = vmatpush.bf16.msra.mxu0 %v5041
        %5119 = vmatpush.bf16.msra.mxu0 %v5040
        %5120 = vmatpush.bf16.msra.mxu0 %v5039
        %5121 = vmatmul.bf16.gmra.mxu0 %v4889
        %v5122 = vpop.f32.mrf.mxu0
        %v5123 = vadd.f32 %v5110, %v5122
        %v5124 = vpop.f32.mrf.mxu0
        %5125 = vdwg.mxu0
        %5126 = vmatpush.bf16.msra.mxu0 %v5054
        %5127 = vmatpush.bf16.msra.mxu0 %v5053
        %5128 = vmatpush.bf16.msra.mxu0 %v5052
        %5129 = vmatpush.bf16.msra.mxu0 %v5051
        %5130 = vmatpush.bf16.msra.mxu0 %v5050
        %5131 = vmatpush.bf16.msra.mxu0 %v5049
        %5132 = vmatpush.bf16.msra.mxu0 %v5048
        %5133 = vmatpush.bf16.msra.mxu0 %v5047
        %5134 = vmatmul.bf16.gmra.mxu0 %v4890
        %v5135 = vpop.f32.mrf.mxu0
        %v5136 = vadd.f32 %v5123, %v5135
        %v5137 = vpop.f32.mrf.mxu0
        %5138 = vdwg.mxu0
        %v5139 = vadd.f32 %v4563, %v5136
        %v5140 = vld [vmem:[%s1316] sm:$0x1]
        %v5141 = vld [vmem:[%s1325] sm:$0x1]
        %5142 = vadd.xlane.f32.xlu0 %v5139
        %v5143 = vpop.xlane.xlu0 %5142
        %v5144 = vmul.f32 %v5143, %v4537
        %v5145 = vsub.f32 %v5139, %v5144
        %v5146 = vmul.f32 %v5145, %v5145
        %5147 = vadd.xlane.f32.xlu0 %v5146
        %v5148 = vpop.xlane.xlu0 %5147
        %v5149 = vmul.f32 %v5148, %v4537
        %v5150 = vadd.f32 %v5149, 1e-05
        %v5151 = vrsqrt.pop %v5150
        %v5152 = vmul.f32 %v5151, %v5150
        %v5153 = vmul.f32 %v5152, %v5151
        %v5154 = vmul.f32 0.5, %v5153
        %v5155 = vsub.f32 1.5, %v5154
        %v5156 = vmul.f32 %v5151, %v5155
        %vm5157 = vweird.f32 %v5150
        %vm5158 = vweird.f32 %v5151
        %vm5159 = vmor %vm5157, %vm5158
        %v5160 = vsel %vm5159, %v5151, %v5156
        %v5161 = vmul.f32 %v5145, %v5160
        %v5163 = vperm.slane %v5140, 0
        %v5165 = vmul.f32 %v5161, %v5163
        %v5167 = vperm.slane %v5141, 0
        %v5169 = vadd.f32 %v5165, %v5167
        %5170 = vst [vmem:[#allocation2] sm:$0xff] %v5169
        %p5171 = scmp.eq.s32.totalorder %s83, 3
        // Predicated region
        $region233: #{two_stage_forward.1} parent=139 // pred_check
          %p5172 = pneg %p5171
        $region234: #{two_stage_forward.1} parent=139 // pred_check_branch
          %5174 = sbr.rel (%p5172) target = $region236
        $region235: #{two_stage_forward.1} parent=139 // pred_region
          %v5175 = vld [vmem:[#allocation26] sm:$0x1]
          %v5176 = vld [vmem:[#allocation27] sm:$0x1]
          %5177 = vadd.xlane.f32.xlu0 %v5169
          %v5178 = vpop.xlane.xlu0 %5177
          %v5179 = vmul.f32 %v5178, %v4537
          %v5180 = vsub.f32 %v5169, %v5179
          %v5181 = vmul.f32 %v5180, %v5180
          %5182 = vadd.xlane.f32.xlu0 %v5181
          %v5183 = vpop.xlane.xlu0 %5182
          %v5184 = vmul.f32 %v5183, %v4537
          %v5185 = vadd.f32 %v5184, 1e-05
          %v5186 = vrsqrt.pop %v5185
          %v5187 = vmul.f32 %v5186, %v5185
          %v5188 = vmul.f32 %v5187, %v5186
          %v5189 = vmul.f32 0.5, %v5188
          %v5190 = vsub.f32 1.5, %v5189
          %v5191 = vmul.f32 %v5186, %v5190
          %vm5192 = vweird.f32 %v5185
          %vm5193 = vweird.f32 %v5186
          %vm5194 = vmor %vm5192, %vm5193
          %v5195 = vsel %vm5194, %v5186, %v5191
          %v5196 = vmul.f32 %v5180, %v5195
          %v5198 = vperm.slane %v5175, 0
          %v5200 = vmul.f32 %v5196, %v5198
          %v5202 = vperm.slane %v5176, 0
          %v5204 = vadd.f32 %v5200, %v5202
          %v5205 = vld [vmem:[%s49] sm:$0xff]
          %v5206 = vld [vmem:[%s49 + $0x8] sm:$0xff]
          %v5207 = vld [vmem:[%s49 + $0x10] sm:$0xff]
          %v5208 = vld [vmem:[%s49 + $0x18] sm:$0xff]
          %v5209 = vld [vmem:[%s49 + $0x20] sm:$0xff]
          %v5210 = vld [vmem:[%s49 + $0x28] sm:$0xff]
          %v5211 = vld [vmem:[%s49 + $0x30] sm:$0xff]
          %v5212 = vld [vmem:[%s49 + $0x38] sm:$0xff]
          %v5213 = vld [vmem:[%s49 + $0x40] sm:$0xff]
          %v5214 = vld [vmem:[%s49 + $0x48] sm:$0xff]
          %v5215 = vld [vmem:[%s49 + $0x50] sm:$0xff]
          %v5216 = vld [vmem:[%s49 + $0x58] sm:$0xff]
          %v5217 = vld [vmem:[%s49 + $0x60] sm:$0xff]
          %v5218 = vld [vmem:[%s49 + $0x68] sm:$0xff]
          %v5219 = vld [vmem:[%s49 + $0x70] sm:$0xff]
          %v5220 = vld [vmem:[%s49 + $0x78] sm:$0xff]
          %v5221 = vpack.c.bf16 %v5204, %v5204
          %v5222 = vld [vmem:[%s51] sm:$0x3]
          %v5224 = vperm.slane %v5222, 0
          %v5225 = vperm.slane %v5222, 1
          %v5244 = vunpack.c.l.b16 %v5205
          %v5245 = vunpack.c.h.b16 %v5205
          %v5246 = vunpack.c.l.b16 %v5206
          %v5247 = vunpack.c.h.b16 %v5206
          %v5248 = vunpack.c.l.b16 %v5207
          %v5249 = vunpack.c.h.b16 %v5207
          %v5250 = vunpack.c.l.b16 %v5208
          %v5251 = vunpack.c.h.b16 %v5208
          %v5252 = vunpack.c.l.b16 %v5209
          %v5253 = vunpack.c.h.b16 %v5209
          %v5254 = vunpack.c.l.b16 %v5210
          %v5255 = vunpack.c.h.b16 %v5210
          %v5256 = vunpack.c.l.b16 %v5211
          %v5257 = vunpack.c.h.b16 %v5211
          %v5258 = vunpack.c.l.b16 %v5212
          %v5259 = vunpack.c.h.b16 %v5212
          %v5260 = vunpack.c.l.b16 %v5213
          %v5261 = vunpack.c.h.b16 %v5213
          %v5262 = vunpack.c.l.b16 %v5214
          %v5263 = vunpack.c.h.b16 %v5214
          %v5264 = vunpack.c.l.b16 %v5215
          %v5265 = vunpack.c.h.b16 %v5215
          %v5266 = vunpack.c.l.b16 %v5216
          %v5267 = vunpack.c.h.b16 %v5216
          %v5268 = vunpack.c.l.b16 %v5217
          %v5269 = vunpack.c.h.b16 %v5217
          %v5270 = vunpack.c.l.b16 %v5218
          %v5271 = vunpack.c.h.b16 %v5218
          %v5272 = vunpack.c.l.b16 %v5219
          %v5273 = vunpack.c.h.b16 %v5219
          %v5274 = vunpack.c.l.b16 %v5220
          %v5275 = vunpack.c.h.b16 %v5220
          %v5276 = vpack.c.b16 %v5246, %v5244
          %v5277 = vpack.c.b16 %v5247, %v5245
          %v5278 = vpack.c.b16 %v5250, %v5248
          %v5279 = vpack.c.b16 %v5251, %v5249
          %v5280 = vpack.c.b16 %v5254, %v5252
          %v5281 = vpack.c.b16 %v5255, %v5253
          %v5282 = vpack.c.b16 %v5258, %v5256
          %v5283 = vpack.c.b16 %v5259, %v5257
          %v5284 = vpack.c.b16 %v5262, %v5260
          %v5285 = vpack.c.b16 %v5263, %v5261
          %v5286 = vpack.c.b16 %v5266, %v5264
          %v5287 = vpack.c.b16 %v5267, %v5265
          %v5288 = vpack.c.b16 %v5270, %v5268
          %v5289 = vpack.c.b16 %v5271, %v5269
          %v5290 = vpack.c.b16 %v5274, %v5272
          %v5291 = vpack.c.b16 %v5275, %v5273
          %5308 = vmatpush.bf16.msra.mxu0 %v5290
          %5309 = vmatpush.bf16.msra.mxu0 %v5288
          %5310 = vmatpush.bf16.msra.mxu0 %v5286
          %5311 = vmatpush.bf16.msra.mxu0 %v5284
          %5312 = vmatpush.bf16.msra.mxu0 %v5282
          %5313 = vmatpush.bf16.msra.mxu0 %v5280
          %5314 = vmatpush.bf16.msra.mxu0 %v5278
          %5315 = vmatpush.bf16.msra.mxu0 %v5276
          %5316 = vmatmul.bf16.gmra.mxu0 %v5221
          %v5317 = vpop.f32.mrf.mxu0
          %v5318 = vadd.f32 %v5224, %v5317
          %v5319 = vpop.f32.mrf.mxu0
          %5320 = vdwg.mxu0
          %5321 = vmatpush.bf16.msra.mxu0 %v5291
          %5322 = vmatpush.bf16.msra.mxu0 %v5289
          %5323 = vmatpush.bf16.msra.mxu0 %v5287
          %5324 = vmatpush.bf16.msra.mxu0 %v5285
          %5325 = vmatpush.bf16.msra.mxu0 %v5283
          %5326 = vmatpush.bf16.msra.mxu0 %v5281
          %5327 = vmatpush.bf16.msra.mxu0 %v5279
          %5328 = vmatpush.bf16.msra.mxu0 %v5277
          %5329 = vmatmul.bf16.gmra.mxu0 %v5221
          %v5330 = vpop.f32.mrf.mxu0
          %v5331 = vadd.f32 %v5225, %v5330
          %v5332 = vpop.f32.mrf.mxu0
          %5333 = vdwg.mxu0
          %v5334 = vsel %vm4436, %v5318, 0.0
          %5335 = vadd.xlane.f32.xlu0 %v5334
          %v5336 = vpop.xlane.xlu0 %5335
          %v5337 = vrcp.pop 64.0
          %v5338 = vmul.f32 64.0, %v5337
          %v5339 = vsub.f32 1.0, %v5338
          %v5340 = vmul.f32 %v5337, %v5339
          %v5341 = vadd.f32 %v5337, %v5340
          %vm5342 = vweird.f32 %v5337
          %v5343 = vsel %vm5342, %v5337, %v5341
          %v5344 = vmul.f32 %v5336, %v5343
          %v5345 = vsub.f32 %v5318, %v5344
          %v5346 = vmul.f32 %v5345, %v5345
          %v5347 = vsel %vm4436, %v5346, 0.0
          %5348 = vadd.xlane.f32.xlu0 %v5347
          %v5349 = vpop.xlane.xlu0 %5348
          %v5350 = vmul.f32 %v5349, %v5343
          %v5351 = vadd.f32 %v5350, 1e-05
          %v5352 = vrsqrt.pop %v5351
          %v5353 = vmul.f32 %v5352, %v5351
          %v5354 = vmul.f32 %v5353, %v5352
          %v5355 = vmul.f32 0.5, %v5354
          %v5356 = vsub.f32 1.5, %v5355
          %v5357 = vmul.f32 %v5352, %v5356
          %vm5358 = vweird.f32 %v5351
          %vm5359 = vweird.f32 %v5352
          %vm5360 = vmor %vm5358, %vm5359
          %v5361 = vsel %vm5360, %v5352, %v5357
          %v5362 = vmul.f32 %v5345, %v5361
          %5364 = vrot.lane.b32.xlu0 %v5318, 64
          %v5365 = vpop.permute.xlu0 %5364
          %v5367 = vsel %vm4436, %v5365, 0.0
          %5368 = vadd.xlane.f32.xlu0 %v5367
          %v5369 = vpop.xlane.xlu0 %5368
          %v5370 = vmul.f32 %v5369, %v5343
          %v5371 = vsub.f32 %v5318, %v5370
          %v5372 = vmul.f32 %v5371, %v5371
          %5374 = vrot.lane.b32.xlu0 %v5372, 64
          %v5375 = vpop.permute.xlu0 %5374
          %v5377 = vsel %vm4436, %v5375, 0.0
          %5378 = vadd.xlane.f32.xlu0 %v5377
          %v5379 = vpop.xlane.xlu0 %5378
          %v5380 = vmul.f32 %v5379, %v5343
          %v5381 = vadd.f32 %v5380, 1e-05
          %v5382 = vrsqrt.pop %v5381
          %v5383 = vmul.f32 %v5382, %v5381
          %v5384 = vmul.f32 %v5383, %v5382
          %v5385 = vmul.f32 0.5, %v5384
          %v5386 = vsub.f32 1.5, %v5385
          %v5387 = vmul.f32 %v5382, %v5386
          %vm5388 = vweird.f32 %v5381
          %vm5389 = vweird.f32 %v5382
          %vm5390 = vmor %vm5388, %vm5389
          %v5391 = vsel %vm5390, %v5382, %v5387
          %v5392 = vmul.f32 %v5371, %v5391
          %v5393 = vsel %vm4436, %v5331, 0.0
          %5394 = vadd.xlane.f32.xlu0 %v5393
          %v5395 = vpop.xlane.xlu0 %5394
          %v5396 = vmul.f32 %v5395, %v5343
          %v5397 = vsub.f32 %v5331, %v5396
          %v5398 = vmul.f32 %v5397, %v5397
          %v5399 = vsel %vm4436, %v5398, 0.0
          %5400 = vadd.xlane.f32.xlu0 %v5399
          %v5401 = vpop.xlane.xlu0 %5400
          %v5402 = vmul.f32 %v5401, %v5343
          %v5403 = vadd.f32 %v5402, 1e-05
          %v5404 = vrsqrt.pop %v5403
          %v5405 = vmul.f32 %v5404, %v5403
          %v5406 = vmul.f32 %v5405, %v5404
          %v5407 = vmul.f32 0.5, %v5406
          %v5408 = vsub.f32 1.5, %v5407
          %v5409 = vmul.f32 %v5404, %v5408
          %vm5410 = vweird.f32 %v5403
          %vm5411 = vweird.f32 %v5404
          %vm5412 = vmor %vm5410, %vm5411
          %v5413 = vsel %vm5412, %v5404, %v5409
          %v5414 = vmul.f32 %v5397, %v5413
          %5416 = vrot.lane.b32.xlu0 %v5331, 64
          %v5417 = vpop.permute.xlu0 %5416
          %v5419 = vsel %vm4436, %v5417, 0.0
          %5420 = vadd.xlane.f32.xlu0 %v5419
          %v5421 = vpop.xlane.xlu0 %5420
          %v5422 = vmul.f32 %v5421, %v5343
          %v5423 = vsub.f32 %v5331, %v5422
          %v5424 = vmul.f32 %v5423, %v5423
          %5426 = vrot.lane.b32.xlu0 %v5424, 64
          %v5427 = vpop.permute.xlu0 %5426
          %v5429 = vsel %vm4436, %v5427, 0.0
          %5430 = vadd.xlane.f32.xlu0 %v5429
          %v5431 = vpop.xlane.xlu0 %5430
          %v5432 = vmul.f32 %v5431, %v5343
          %v5433 = vadd.f32 %v5432, 1e-05
          %v5434 = vrsqrt.pop %v5433
          %v5435 = vmul.f32 %v5434, %v5433
          %v5436 = vmul.f32 %v5435, %v5434
          %v5437 = vmul.f32 0.5, %v5436
          %v5438 = vsub.f32 1.5, %v5437
          %v5439 = vmul.f32 %v5434, %v5438
          %vm5440 = vweird.f32 %v5433
          %vm5441 = vweird.f32 %v5434
          %vm5442 = vmor %vm5440, %vm5441
          %v5443 = vsel %vm5442, %v5434, %v5439
          %v5444 = vmul.f32 %v5423, %v5443
          %v5445 = vsel %vm4436, %v5362, %v5392
          %v5446 = vsel %vm4436, %v5414, %v5444
          %v5447 = vld [vmem:[#allocation28] sm:$0x3]
          %v5449 = vperm.slane %v5447, 0
          %v5450 = vperm.slane %v5447, 1
          %v5453 = vmul.f32 %v5445, %v5449
          %v5454 = vmul.f32 %v5446, %v5450
          %v5455 = vld [vmem:[#allocation29] sm:$0x3]
          %v5457 = vperm.slane %v5455, 0
          %v5458 = vperm.slane %v5455, 1
          %v5461 = vadd.f32 %v5453, %v5457
          %v5462 = vadd.f32 %v5454, %v5458
          %v5463 = vmax.f32 %v5461, 0.0
          %v5464 = vmax.f32 %v5462, 0.0
          %v5465 = vld [vmem:[%s57] sm:$0xf]
          %v5466 = vld [vmem:[%s57 + $0x4] sm:$0xf]
          %v5467 = vld [vmem:[%s57 + $0x8] sm:$0xf]
          %v5468 = vld [vmem:[%s57 + $0xc] sm:$0xf]
          %v5469 = vld [vmem:[%s57 + $0x10] sm:$0xf]
          %v5470 = vld [vmem:[%s57 + $0x14] sm:$0xf]
          %v5471 = vld [vmem:[%s57 + $0x18] sm:$0xf]
          %v5472 = vld [vmem:[%s57 + $0x1c] sm:$0xf]
          %v5473 = vld [vmem:[%s57 + $0x20] sm:$0xf]
          %v5474 = vld [vmem:[%s57 + $0x24] sm:$0xf]
          %v5475 = vld [vmem:[%s57 + $0x28] sm:$0xf]
          %v5476 = vld [vmem:[%s57 + $0x2c] sm:$0xf]
          %v5477 = vld [vmem:[%s57 + $0x30] sm:$0xf]
          %v5478 = vld [vmem:[%s57 + $0x34] sm:$0xf]
          %v5479 = vld [vmem:[%s57 + $0x38] sm:$0xf]
          %v5480 = vld [vmem:[%s57 + $0x3c] sm:$0xf]
          %v5481 = vld [vmem:[%s57 + $0x40] sm:$0xf]
          %v5482 = vld [vmem:[%s57 + $0x44] sm:$0xf]
          %v5483 = vld [vmem:[%s57 + $0x48] sm:$0xf]
          %v5484 = vld [vmem:[%s57 + $0x4c] sm:$0xf]
          %v5485 = vld [vmem:[%s57 + $0x50] sm:$0xf]
          %v5486 = vld [vmem:[%s57 + $0x54] sm:$0xf]
          %v5487 = vld [vmem:[%s57 + $0x58] sm:$0xf]
          %v5488 = vld [vmem:[%s57 + $0x5c] sm:$0xf]
          %v5489 = vld [vmem:[%s57 + $0x60] sm:$0xf]
          %v5490 = vld [vmem:[%s57 + $0x64] sm:$0xf]
          %v5491 = vld [vmem:[%s57 + $0x68] sm:$0xf]
          %v5492 = vld [vmem:[%s57 + $0x6c] sm:$0xf]
          %v5493 = vld [vmem:[%s57 + $0x70] sm:$0xf]
          %v5494 = vld [vmem:[%s57 + $0x74] sm:$0xf]
          %v5495 = vld [vmem:[%s57 + $0x78] sm:$0xf]
          %v5496 = vld [vmem:[%s57 + $0x7c] sm:$0xf]
          %v5497 = vpack.c.bf16 %v5463, %v5463
          %v5498 = vpack.c.bf16 %v5464, %v5464
          %v5499 = vld [vmem:[#allocation30] sm:$0x1]
          %v5501 = vperm.slane %v5499, 0
          %v5535 = vunpack.c.l.b16 %v5465
          %v5536 = vunpack.c.l.b16 %v5466
          %v5537 = vunpack.c.l.b16 %v5467
          %v5538 = vunpack.c.l.b16 %v5468
          %v5539 = vunpack.c.l.b16 %v5469
          %v5540 = vunpack.c.l.b16 %v5470
          %v5541 = vunpack.c.l.b16 %v5471
          %v5542 = vunpack.c.l.b16 %v5472
          %v5543 = vunpack.c.l.b16 %v5473
          %v5544 = vunpack.c.l.b16 %v5474
          %v5545 = vunpack.c.l.b16 %v5475
          %v5546 = vunpack.c.l.b16 %v5476
          %v5547 = vunpack.c.l.b16 %v5477
          %v5548 = vunpack.c.l.b16 %v5478
          %v5549 = vunpack.c.l.b16 %v5479
          %v5550 = vunpack.c.l.b16 %v5480
          %v5551 = vunpack.c.l.b16 %v5481
          %v5552 = vunpack.c.l.b16 %v5482
          %v5553 = vunpack.c.l.b16 %v5483
          %v5554 = vunpack.c.l.b16 %v5484
          %v5555 = vunpack.c.l.b16 %v5485
          %v5556 = vunpack.c.l.b16 %v5486
          %v5557 = vunpack.c.l.b16 %v5487
          %v5558 = vunpack.c.l.b16 %v5488
          %v5559 = vunpack.c.l.b16 %v5489
          %v5560 = vunpack.c.l.b16 %v5490
          %v5561 = vunpack.c.l.b16 %v5491
          %v5562 = vunpack.c.l.b16 %v5492
          %v5563 = vunpack.c.l.b16 %v5493
          %v5564 = vunpack.c.l.b16 %v5494
          %v5565 = vunpack.c.l.b16 %v5495
          %v5566 = vunpack.c.l.b16 %v5496
          %v5567 = vpack.c.b16 %v5536, %v5535
          %v5568 = vpack.c.b16 %v5538, %v5537
          %v5569 = vpack.c.b16 %v5540, %v5539
          %v5570 = vpack.c.b16 %v5542, %v5541
          %v5571 = vpack.c.b16 %v5544, %v5543
          %v5572 = vpack.c.b16 %v5546, %v5545
          %v5573 = vpack.c.b16 %v5548, %v5547
          %v5574 = vpack.c.b16 %v5550, %v5549
          %v5575 = vpack.c.b16 %v5552, %v5551
          %v5576 = vpack.c.b16 %v5554, %v5553
          %v5577 = vpack.c.b16 %v5556, %v5555
          %v5578 = vpack.c.b16 %v5558, %v5557
          %v5579 = vpack.c.b16 %v5560, %v5559
          %v5580 = vpack.c.b16 %v5562, %v5561
          %v5581 = vpack.c.b16 %v5564, %v5563
          %v5582 = vpack.c.b16 %v5566, %v5565
          %5599 = vmatpush.bf16.msra.mxu0 %v5574
          %5600 = vmatpush.bf16.msra.mxu0 %v5573
          %5601 = vmatpush.bf16.msra.mxu0 %v5572
          %5602 = vmatpush.bf16.msra.mxu0 %v5571
          %5603 = vmatpush.bf16.msra.mxu0 %v5570
          %5604 = vmatpush.bf16.msra.mxu0 %v5569
          %5605 = vmatpush.bf16.msra.mxu0 %v5568
          %5606 = vmatpush.bf16.msra.mxu0 %v5567
          %5607 = vmatmul.bf16.gmra.mxu0 %v5497
          %v5608 = vpop.f32.mrf.mxu0
          %v5609 = vadd.f32 %v5501, %v5608
          %v5610 = vpop.f32.mrf.mxu0
          %5611 = vdwg.mxu0
          %5612 = vmatpush.bf16.msra.mxu0 %v5582
          %5613 = vmatpush.bf16.msra.mxu0 %v5581
          %5614 = vmatpush.bf16.msra.mxu0 %v5580
          %5615 = vmatpush.bf16.msra.mxu0 %v5579
          %5616 = vmatpush.bf16.msra.mxu0 %v5578
          %5617 = vmatpush.bf16.msra.mxu0 %v5577
          %5618 = vmatpush.bf16.msra.mxu0 %v5576
          %5619 = vmatpush.bf16.msra.mxu0 %v5575
          %5620 = vmatmul.bf16.gmra.mxu0 %v5498
          %v5621 = vpop.f32.mrf.mxu0
          %v5622 = vadd.f32 %v5609, %v5621
          %v5623 = vpop.f32.mrf.mxu0
          %5624 = vdwg.mxu0
          %vm5625 = vcmp.gt.f32.partialorder %v5622, 20.0
          %v5626 = vmin.f32 %v5622, 20.0
          %v5627 = vmul.f32 %v5626, 1.442695
          %v5628 = vpow.pop %v5627
          %v5629 = vadd.f32 %v5628, 1.0
          %v5630 = vlog2.pop %v5629
          %v5631 = vmul.f32 %v5630, 0.6931472
          %v5632 = vmul.f32 -0.5, %v5628
          %v5633 = vadd.f32 %v5632, 1.0
          %v5634 = vmul.f32 %v5633, %v5628
          %v5635 = vand.u32 2147483647, %v5628
          %vm5636 = vcmp.lt.f32.partialorder %v5635, 0.0004427343
          %v5637 = vsel %vm5636, %v5634, %v5631
          %v5638 = vsel %vm5625, %v5622, %v5637
          %v5639 = vadd.f32 %v5638, 1e-06
          %v5640 = vsub.f32 0.0, %v5622
          %v5641 = vmul.f32 %v5640, 1.442695
          %v5642 = vpow.pop %v5641
          %v5643 = vadd.f32 %v5642, 1.0
          %v5644 = vrcp.pop %v5643
          %v5645 = vmul.f32 %v5643, %v5644
          %v5646 = vsub.f32 1.0, %v5645
          %v5647 = vmul.f32 %v5644, %v5646
          %v5648 = vadd.f32 %v5644, %v5647
          %vm5649 = vweird.f32 %v5643
          %vm5650 = vweird.f32 %v5644
          %vm5651 = vmor %vm5649, %vm5650
          %v5652 = vsel %vm5651, %v5644, %v5648
          %v5653 = vand.u32 2147483647, %v5643
          %vm5654 = vcmp.eq.f32.partialorder %v5653, 8.507059e+37
          %v5655 = vand.u32 %v5643, 2147483648
          %v5656 = vor.u32 1.1754944e-38, %v5655
          %v5657 = vsel %vm5654, %v5656, %v5652
          %v5658 = vmul.f32 1.0, %v5657
          %vm5659 = vcmask 15360
          %v5660 = vsel %vm5659, %v5622, -inf
          %5661 = vmax.xlane.f32.xlu0 %v5660
          %v5662 = vpop.xlane.xlu0 %5661
          %v5663 = vsub.f32 %v5622, %v5662
          %v5664 = vmul.f32 %v5663, 1.442695
          %v5665 = vpow.pop %v5664
          %v5666 = vsel %vm5659, %v5665, 0.0
          %5667 = vadd.xlane.f32.xlu0 %v5666
          %v5668 = vpop.xlane.xlu0 %5667
          %v5669 = vrcp.pop %v5668
          %v5670 = vmul.f32 %v5668, %v5669
          %v5671 = vsub.f32 1.0, %v5670
          %v5672 = vmul.f32 %v5669, %v5671
          %v5673 = vadd.f32 %v5669, %v5672
          %vm5674 = vweird.f32 %v5668
          %vm5675 = vweird.f32 %v5669
          %vm5676 = vmor %vm5674, %vm5675
          %v5677 = vsel %vm5676, %v5669, %v5673
          %v5678 = vand.u32 2147483647, %v5668
          %vm5679 = vcmp.eq.f32.partialorder %v5678, 8.507059e+37
          %v5680 = vand.u32 %v5668, 2147483648
          %v5681 = vor.u32 1.1754944e-38, %v5680
          %v5682 = vsel %vm5679, %v5681, %v5677
          %v5683 = vmul.f32 %v5665, %v5682
          %5685 = vset.pattern.permute.xlu0 1
          %5686 = vperm.xlu0 %5685, %v5683
          %v5687 = vpop.permute.xlu0 %5686
          %v5689 = vmul.f32 %v5658, %v5687
          %5690 = vrot.lane.b32.xlu0 %v5683, 2
          %v5691 = vpop.permute.xlu0 %5690
          %5694 = vrot.lane.b32.xlu0 %v5639, 2
          %v5695 = vpop.permute.xlu0 %5694
          %5698 = vrot.lane.b32.xlu0 %v5689, 2
          %v5699 = vpop.permute.xlu0 %5698
          %v5701 = vsel %vm5659, %v5622, %v5691
          %vm5702 = vcmask 31744
          %v5703 = vsel %vm5702, %v5701, %v5695
          %vm5704 = vcmask 48128
          %v5705 = vsel %vm5704, %v5703, %v5699
          %v5706 = vsel %vm4041, %v5705, %v5695
          %vm5707 = vcmask 80896
          %v5708 = vsel %vm5707, %v5706, 0.0
          %5709 = vst [vmem:[%s1498] sm:$0xff] %v5708
        $region236: #{two_stage_forward.1} parent=139 // pred_fallthru
          _
        %p5710 = scmp.lt.s32.totalorder %s82, 1
        %s5711 = scalar_select %p5710, %s82, 1
        %s5712 = smul.addr %s5711, 8
        %s5713 = scalar_lea.vmem %s61, %s5712
        // Predicated region
        $region237: #{two_stage_forward.1} parent=139 // pred_check
          %p5714 = pneg %p803
        $region238: #{two_stage_forward.1} parent=139 // pred_check_branch
          %5716 = sbr.rel (%p5714) target = $region240
        $region239: #{two_stage_forward.1} parent=139 // pred_region
          _
        $region240: #{two_stage_forward.1} parent=139 // pred_fallthru
          _
      $region140: #{two_stage_forward.1} parent=5 // pred_fallthru
        _
      %p5717 = scmp.le.s32.totalorder 2, %s73
      // Predicated region
      $region241: #{two_stage_forward.1} parent=5 // pred_check
        %p5718 = pneg %p5717
      $region242: #{two_stage_forward.1} parent=5 // pred_check_branch
        %5720 = sbr.rel (%p5718) target = $region244
      $region243: #{two_stage_forward.1} parent=5 // pred_region
        %s5721 = ssub.s32 %s73, 2
        // Predicated region
        $region245: #{two_stage_forward.1} parent=243 // pred_check
          %p5722 = pneg %p809
        $region246: #{two_stage_forward.1} parent=243 // pred_check_branch
          %5724 = sbr.rel (%p5722) target = $region248
        $region247: #{two_stage_forward.1} parent=243 // pred_region
          %p5725 = scmp.lt.s32.totalorder %s84, 1
          %s5726 = scalar_select %p5725, %s84, 1
          %s5727 = smul.addr %s5726, 8
          %s5728 = scalar_lea.vmem %s61, %s5727
        $region248: #{two_stage_forward.1} parent=243 // pred_fallthru
          _
      $region244: #{two_stage_forward.1} parent=5 // pred_fallthru
        _
    $region6: #{two_stage_forward.1} parent=1 // loop_footer
      %s77 = sadd.s32 1, %s73
    $region7: #{two_stage_forward.1} parent=1 // loop_footer_branch
      %72 = sbr.rel target = $region3
    $region8: #{two_stage_forward.1} parent=1 // loop_exit
      _
    %5729 = vsyncpa [#allocation5], 1
    %s5730 = scalar_lea.sflag [#allocation5], 1
    %5731 = vsyncpa %s5730, 1
    %5732 = vsyncpa [#allocation7], 1
    %5733 = vsyncpa [#allocation10], 1
    %5734 = vsyncpa [#allocation13], 1
    %5735 = vsyncpa [#allocation16], 1
    %5736 = vsyncpa [#allocation31], 1

</llo_original>
